<compile_context>
chip_gen: v5e
topology: v5e:2x2
jax: 0.10.0
libtpu: 0.0.40
codegen_flags: <defaults>
</compile_context>

<pallas_src>
import numpy as np
import jax
import jax.numpy as jnp
from jax import lax
from jax.experimental import pallas as pl
from jax.experimental.pallas import tpu as pltpu

# ----------------------------- sizes --------------------------------------
FN = 8      # node feature dim   [cx, cy, cz, mean_val, size, 0, 0, 0]
FE = 4      # edge feature dim   [dx, dy, dz, dist]
H  = 64     # gnn_model node_output_feats (default 64)
HT = 128    # type_net / momentum_net num_hidden (default 128)
TN = 512    # voxel tile
TE = 512    # edge tile
CHUNK_C = 512   # cluster-axis chunk for the node-head finalize

NEG_SLOPE = 0.01   # torch.nn.LeakyReLU default


def _leaky(h):
    return jnp.where(h > 0, h, NEG_SLOPE * h)


def _const2d(shape):
    return pl.BlockSpec(shape, lambda t: (0, 0))


def _pad_to(n, m):
    return ((n + m - 1) // m) * m


# --------------------------- fused kernel ----------------------------------
def make_grappa_kernel(nv_tiles):
    """nv_tiles voxel tiles (phase 1) followed by edge tiles (phase 2)."""

    def kernel(vox_ref, eidx_ref,
               we1_ref, be1_ref, wep_ref, bep_ref,
               wn1_ref, bn1_ref, wh1_ref, bh1_ref, wh2_ref, bh2_ref,
               xenc_ref, eout_ref, nout_ref, nfeat_ref,
               agg_ref):
        """
        vox_ref  : (TN, FN) f32   [x, y, z, value, 1, cluster_id(float, -1=pad), 0, 0]
        eidx_ref : (TE, 2) int32  [src, dst] cluster index per edge (-1 = pad)
        xenc_ref : (C_pad, FN)    encoded node features (resident accumulator)
        eout_ref : (8, TE)        lane-dense edge slab [geo(4) | edge_pred(2) | 0 | 0]^T
        nout_ref : (C_pad, 8)     [node_pred(2) | type(5) | p(1)]   (resident)
        nfeat_ref: (C_pad, H)     gnn node features                 (resident)
        agg_ref  : (C_pad, H)     VMEM scratch, message accumulator
        """
        t = pl.program_id(0)
        c_pad = xenc_ref.shape[0]
        tn = vox_ref.shape[0]
        te = eidx_ref.shape[0]

        @pl.when(t == 0)
        def _():
            xenc_ref[...] = jnp.zeros_like(xenc_ref)
            agg_ref[...] = jnp.zeros_like(agg_ref)

        # ----------------- phase 1: node encoder (segment sums) -----------
        @pl.when(t < nv_tiles)
        def _():
            voxp = vox_ref[...]                                   # (TN, FN)
            vid = voxp[:, 5:6].astype(jnp.int32)                  # packed id, -1 = pad
            colv = lax.broadcasted_iota(jnp.int32, (tn, c_pad), 1)
            memb = (colv == vid).astype(jnp.float32)              # one-hot, pad -> 0
            xenc_ref[...] += lax.dot_general(
                memb, voxp, dimension_numbers=(((0,), (0,)), ((), ())),
                preferred_element_type=jnp.float32)

        @pl.when(t == nv_tiles - 1)
        def _():
            # normalize: [centroid(3), mean_value, size, 0, 0, 0]
            sums = xenc_ref[...]
            inv = 1.0 / jnp.maximum(sums[:, 4:5], 1.0)
            xenc_ref[...] = jnp.concatenate(
                [sums[:, 0:4] * inv, sums[:, 4:5],
                 jnp.zeros((c_pad, FN - 5), jnp.float32)], axis=-1)

        # ----------------- phase 2: edge update + aggregation --------------
        @pl.when(t >= nv_tiles)
        def _():
            x = xenc_ref[...]                                     # (C_pad, FN) f32
            idx = eidx_ref[...]                                   # (TE, 2)
            # combined src/dst one-hot: one gather matmul for both endpoints
            idx_cat = jnp.concatenate([idx[:, 0:1], idx[:, 1:2]], axis=0)   # (2TE,1)
            col = lax.broadcasted_iota(jnp.int32, (2 * te, c_pad), 1)
            oh = (col == idx_cat).astype(jnp.float32)             # pad rows -> 0
            xx = jnp.dot(oh, x, preferred_element_type=jnp.float32)  # (2TE, FN) f32
            x_src, x_dst = xx[:te], xx[te:]

            # geometric edge encoder: centroid displacement + length (f32)
            disp = x_dst[:, 0:3] - x_src[:, 0:3]
            dist = jnp.sqrt(jnp.sum(disp * disp, axis=-1, keepdims=True))
            e_geo = jnp.concatenate([disp, dist], axis=-1)        # (TE, FE)

            # fused edge update MLP (bf16 operands, f32 accumulate)
            e_in = jnp.concatenate([x_src, x_dst, e_geo], axis=-1)    # (TE, 20)
            eh = _leaky(jnp.dot(e_in.astype(jnp.bfloat16), we1_ref[...],
                                preferred_element_type=jnp.float32) + be1_ref[...])
            eh_b = eh.astype(jnp.bfloat16)
            epred = jnp.dot(eh_b, wep_ref[...],
                            preferred_element_type=jnp.float32) + bep_ref[...]

            # lane-dense edge output: transpose [e_geo | epred] -> (8, TE) on the
            # MXU via a tiny one-hot selector (rows 6,7 stay zero).
            feat = jnp.concatenate([e_geo, epred], axis=-1)       # (TE, 6)
            r_i = lax.broadcasted_iota(jnp.int32, (8, 6), 0)
            c_i = lax.broadcasted_iota(jnp.int32, (8, 6), 1)
            sel = (r_i == c_i).astype(jnp.float32)                # (8, 6)
            eout_ref[...] = lax.dot_general(
                sel, feat, dimension_numbers=(((1,), (1,)), ((), ())),
                preferred_element_type=jnp.float32)               # (8, TE)

            # scatter edge messages onto destination nodes (contract edge axis).
            # TODO(synk): bf16 operands here too once the transposed-contraction
            # bf16 path is verified on the target toolchain.
            d_oh = oh[te:, :]                                     # (TE, C_pad) f32
            agg_ref[...] += lax.dot_general(
                d_oh, eh, dimension_numbers=(((0,), (0,)), ((), ())),
                preferred_element_type=jnp.float32)               # (C_pad, H)

        # ----------------- node heads on the last step ----------------------
        @pl.when(t == pl.num_programs(0) - 1)
        def _():
            wn1, bn1 = wn1_ref[...], bn1_ref[...]
            wh1, bh1 = wh1_ref[...], bh1_ref[...]
            wh2, bh2 = wh2_ref[...], bh2_ref[...]
            # chunk the cluster axis so (C, 258)/(C, 256) intermediates stay small
            for s in range(0, c_pad, CHUNK_C):
                sz = min(CHUNK_C, c_pad - s)
                n_in = jnp.concatenate(
                    [xenc_ref[s:s + sz, :], agg_ref[s:s + sz, :]], axis=-1)   # (sz, FN+H)
                nh = _leaky(jnp.dot(n_in.astype(jnp.bfloat16), wn1,
                                    preferred_element_type=jnp.float32) + bn1)
                nfeat_ref[s:s + sz, :] = nh

                # fused level-1 heads: nh @ [wt1 | wp1 | wnp] -> (sz, 2*HT + 2)
                lvl1 = jnp.dot(nh.astype(jnp.bfloat16), wh1,
                               preferred_element_type=jnp.float32) + bh1
                hid = _leaky(lvl1[:, :2 * HT])                    # (sz, 256)
                npred = lvl1[:, 2 * HT:2 * HT + 2]                # node_pred: single Linear(H,2)

                # fused level-2 heads: block-diag [wt2 ; wp2] -> [type(5) | p(1)]
                out2 = jnp.dot(hid.astype(jnp.bfloat16), wh2,
                               preferred_element_type=jnp.float32) + bh2
                nout_ref[s:s + sz, :] = jnp.concatenate([npred, out2], axis=-1)

    return kernel


def run_grappa(vox, eidx, params, c_pad):
    n_pad, e_pad = vox.shape[0], eidx.shape[0]
    nv, ne = n_pad // TN, e_pad // TE
    kernel = make_grappa_kernel(nv)

    # phase-clamped index maps: voxel tiles first, then edge tiles
    vmap = lambda t: (jnp.minimum(t, nv - 1), 0)
    emap = lambda t: (jnp.maximum(t - nv, 0), 0)
    eomap = lambda t: (0, jnp.maximum(t - nv, 0))

    # TODO(synk): pipeline_mode=pl.Buffered(1) on the resident/constant-index
    # operands and 2-D (edge x cluster) tiling for C_pad > ~20k on v7x.
    in_specs = [
        pl.BlockSpec((TN, FN), vmap),                             # packed voxels
        pl.BlockSpec((TE, 2), emap),                              # edge indices
        _const2d(params['w_e1'].shape), _const2d(params['b_e1'].shape),
        _const2d(params['w_ep'].shape), _const2d(params['b_ep'].shape),
        _const2d(params['w_n1'].shape), _const2d(params['b_n1'].shape),
        _const2d(params['w_h1'].shape), _const2d(params['b_h1'].shape),
        _const2d(params['w_h2'].shape), _const2d(params['b_h2'].shape),
    ]
    out_shapes = (
        jax.ShapeDtypeStruct((c_pad, FN), jnp.float32),           # encoded node feats
        jax.ShapeDtypeStruct((8, e_pad), jnp.float32),            # edge slab (transposed)
        jax.ShapeDtypeStruct((c_pad, 8), jnp.float32),            # node slab
        jax.ShapeDtypeStruct((c_pad, H), jnp.float32),            # gnn node features
    )
    out_specs = (
        pl.BlockSpec((c_pad, FN), lambda t: (0, 0)),
        pl.BlockSpec((8, TE), eomap),
        pl.BlockSpec((c_pad, 8), lambda t: (0, 0)),
        pl.BlockSpec((c_pad, H), lambda t: (0, 0)),
    )
    # TODO(synk): on v7x, split the edge phase across both TensorCores with a
    # leading parallel axis and per-core agg partials + a small reduce kernel.
    return pl.pallas_call(
        kernel,
        out_shape=out_shapes,
        grid=(nv + ne,),
        in_specs=in_specs,
        out_specs=out_specs,
        scratch_shapes=[pltpu.VMEM((c_pad, H), jnp.float32)],
        compiler_params=pltpu.CompilerParams(
            dimension_semantics=("arbitrary",),
            vmem_limit_bytes=64 * 1024 * 1024),
    )(vox, eidx,
      params['w_e1'], params['b_e1'], params['w_ep'], params['b_ep'],
      params['w_n1'], params['b_n1'], params['w_h1'], params['b_h1'],
      params['w_h2'], params['b_h2'])


# --------------------------- parameters -------------------------------------
def init_params(key):
    ks = jax.random.split(key, 11)
    w = lambda k, shape: (0.1 * jax.random.normal(k, shape)).astype(jnp.float32)
    z = lambda shape: jnp.zeros(shape, jnp.float32)
    we_s, we_d, we_e = w(ks[0], (FN, H)), w(ks[1], (FN, H)), w(ks[2], (FE, H))
    wn_s, wn_a = w(ks[3], (FN, H)), w(ks[4], (H, H))
    wep = w(ks[5], (H, 2))
    wnp = w(ks[6], (H, 2))
    wt1, wt2 = w(ks[7], (H, HT)), w(ks[8], (HT, 5))
    wp1, wp2 = w(ks[9], (H, HT)), w(ks[10], (HT, 1))

    # block-diagonal second level of the heads: [type(5) | p(1)]
    w_h2 = jnp.zeros((2 * HT, 6), jnp.float32)
    w_h2 = w_h2.at[:HT, 0:5].set(wt2).at[HT:, 5:6].set(wp2)

    bf = jnp.bfloat16
    return dict(
        w_e1=jnp.concatenate([we_s, we_d, we_e], axis=0).astype(bf),  # (20, H)
        b_e1=z((1, H)),
        w_ep=wep.astype(bf), b_ep=z((1, 2)),
        w_n1=jnp.concatenate([wn_s, wn_a], axis=0).astype(bf),        # (FN+H, H)
        b_n1=z((1, H)),
        w_h1=jnp.concatenate([wt1, wp1, wnp], axis=1).astype(bf),     # (H, 2*HT+2)
        b_h1=z((1, 2 * HT + 2)),
        w_h2=w_h2.astype(bf), b_h2=z((1, 6)),
    )


# ---------------------- host-side graph construction ------------------------
def build_graph(cluster_data_np, batch_col=0, source_col=5):
    # TODO(synk): DBSCAN / form_clusters / complete_graph are data-dependent
    # host-side graph construction with no Pallas equivalent; done in numpy.
    clust_labels = np.unique(cluster_data_np[:, source_col])
    clusts = [np.where(cluster_data_np[:, source_col] == c)[0] for c in clust_labels]
    batch_ids = np.array([int(cluster_data_np[c[0], batch_col]) for c in clusts])
    edges = []
    for i in range(len(clusts)):
        for j in range(i + 1, len(clusts)):
            if batch_ids[i] == batch_ids[j]:      # 'complete' network within batch
                edges.append((i, j))
    edge_index = (np.array(edges, dtype=np.int64).T
                  if edges else np.empty((2, 0), np.int64))
    return clusts, batch_ids, edge_index


# ------------------------------ forward -------------------------------------
def grappa_forward(cluster_data_np, params):
    N = cluster_data_np.shape[0]
    clusts, batch_ids, edge_index = build_graph(cluster_data_np)
    C, E = len(clusts), edge_index.shape[1]
    C_pad = max(_pad_to(C, 8), 8)
    N_pad = max(_pad_to(N, TN), TN)
    E_pad = max(_pad_to(E, TE), TE)

    # packed voxel slab: [x, y, z, value, 1, cluster_id, 0, 0]; padded rows
    # are zero with cluster_id = -1 so they contribute exactly nothing.
    vox = np.zeros((N_pad, FN), np.float32)
    vox[:N, 0:3] = cluster_data_np[:, 1:4]       # coords
    vox[:N, 3] = cluster_data_np[:, 4]           # value
    vox[:N, 4] = 1.0                             # count
    vox[:, 5] = -1.0
    for i, c in enumerate(clusts):
        vox[c, 5] = float(i)

    # per-edge (src, dst) cluster indices; padded edges point nowhere (-1)
    eidx = np.full((E_pad, 2), -1, np.int32)
    eidx[:E, 0] = edge_index[0]
    eidx[:E, 1] = edge_index[1]

    # --- device compute: one fused pallas_call ---
    x_enc, e_out, n_out, n_feat = run_grappa(
        jnp.asarray(vox), jnp.asarray(eidx), params, C_pad)

    # --- host-side unpack + batch-wise splitting (split_clusts / split_edge_index) ---
    batches = np.unique(cluster_data_np[:, 0]).astype(np.int64)
    cbids = [np.where(batch_ids == b)[0] for b in batches]
    ebids = [np.where(batch_ids[edge_index[0]] == b)[0] for b in batches] \
        if E else [np.array([], np.int64) for _ in batches]

    x_np = np.asarray(x_enc)[:C]
    e_np = np.asarray(e_out)[:, :E].T            # (E, 8): [geo(4) | edge_pred(2) | pad]
    n_np = np.asarray(n_out)[:C]
    nf_np = np.asarray(n_feat)[:C]

    e_feat = e_np[:, 0:4]
    epred = e_np[:, 4:6]
    npred = n_np[:, 0:2]
    ntype = n_np[:, 2:7]
    nmom = n_np[:, 7:8]

    result = {
        'clusts': [[[clusts[i] for i in cb] for cb in cbids]],
        'edge_index': [[edge_index[:, eb] for eb in ebids]],
        'input_node_features': [[x_np[cb] for cb in cbids]],
        'input_edge_features': [[e_feat[eb] for eb in ebids]],
        'node_pred': [[npred[cb] for cb in cbids]],
        'edge_pred': [[epred[eb] for eb in ebids]],
        'node_pred_type': [[ntype[cb] for cb in cbids]],
        'node_pred_p': [[nmom[cb] for cb in cbids]],
        'node_features': [[nf_np[cb] for cb in cbids]],
    }
    # TODO(synk): vertex_mlp (default False), EDL momentum variant, merge_batch
    # and start-point/direction extra features are omitted (defaults disabled).
    return result, (x_enc, e_out, n_out, n_feat)


# -------------------------------- main --------------------------------------
if __name__ == "__main__":
    key = jax.random.PRNGKey(0)
    k_coord, k_val, k_par = jax.random.split(key, 3)

    # synthetic cluster_data: 64 voxels, 2 batches, 4 clusters of 8 voxels per batch
    N = 64
    coords = np.asarray(jax.random.normal(k_coord, (N, 3)), np.float32)
    values = np.asarray(jax.random.uniform(k_val, (N,)), np.float32)
    batch_id = np.repeat(np.arange(2), 32).astype(np.float32)
    clust_id = np.repeat(np.arange(8), 8).astype(np.float32)
    cluster_data = np.concatenate(
        [batch_id[:, None], coords, values[:, None], clust_id[:, None]], axis=1
    ).astype(np.float32)   # (64, 6): [batch, x, y, z, value, cluster_id]

    params = init_params(k_par)
    result, device_outs = grappa_forward(cluster_data, params)
    jax.block_until_ready(device_outs)

    assert result['node_pred'][0][0].shape == (4, 2)
    assert result['edge_pred'][0][0].shape == (6, 2)
    assert result['node_pred_type'][0][0].shape == (4, 5)
    assert result['node_pred_p'][0][0].shape == (4, 1)
    assert result['node_features'][0][0].shape == (4, H)
    assert result['input_edge_features'][0][0].shape == (6, 4)
    print("KERNEL_OK")
</pallas_src>

<mosaic_0001>
module attributes {stable_mosaic.version = 11 : i64} {
  func.func @kernel(%arg0: i32, %arg1: memref<512x8xf32, #tpu.memory_space<vmem>>, %arg2: memref<512x2xi32, #tpu.memory_space<vmem>>, %arg3: memref<20x64xbf16, #tpu.memory_space<vmem>>, %arg4: memref<1x64xf32, #tpu.memory_space<vmem>>, %arg5: memref<64x2xbf16, #tpu.memory_space<vmem>>, %arg6: memref<1x2xf32, #tpu.memory_space<vmem>>, %arg7: memref<72x64xbf16, #tpu.memory_space<vmem>>, %arg8: memref<1x64xf32, #tpu.memory_space<vmem>>, %arg9: memref<64x258xbf16, #tpu.memory_space<vmem>>, %arg10: memref<1x258xf32, #tpu.memory_space<vmem>>, %arg11: memref<256x6xbf16, #tpu.memory_space<vmem>>, %arg12: memref<1x6xf32, #tpu.memory_space<vmem>>, %arg13: memref<8x8xf32, #tpu.memory_space<vmem>>, %arg14: memref<8x512xf32, #tpu.memory_space<vmem>>, %arg15: memref<8x8xf32, #tpu.memory_space<vmem>>, %arg16: memref<8x64xf32, #tpu.memory_space<vmem>>, %arg17: memref<8x64xf32, #tpu.memory_space<vmem>>) attributes {dimension_semantics = [#tpu.dimension_semantics<arbitrary>], iteration_bounds = array<i64: 2>, scalar_prefetch = 0 : i64, scratch_operands = 1 : i64, tpu.core_type = #tpu.core_type<tc>, window_params = [{transform_indices = @transform_0, window_bounds = array<i64: 512, 8>}, {transform_indices = @transform_1, window_bounds = array<i64: 512, 2>}, {pipeline_mode = #tpu.pipeline_mode<synchronous>, transform_indices = @transform_2, window_bounds = array<i64: 20, 64>}, {pipeline_mode = #tpu.pipeline_mode<synchronous>, transform_indices = @transform_3, window_bounds = array<i64: 1, 64>}, {pipeline_mode = #tpu.pipeline_mode<synchronous>, transform_indices = @transform_4, window_bounds = array<i64: 64, 2>}, {pipeline_mode = #tpu.pipeline_mode<synchronous>, transform_indices = @transform_5, window_bounds = array<i64: 1, 2>}, {pipeline_mode = #tpu.pipeline_mode<synchronous>, transform_indices = @transform_6, window_bounds = array<i64: 72, 64>}, {pipeline_mode = #tpu.pipeline_mode<synchronous>, transform_indices = @transform_7, window_bounds = array<i64: 1, 64>}, {pipeline_mode = #tpu.pipeline_mode<synchronous>, transform_indices = @transform_8, window_bounds = array<i64: 64, 258>}, {pipeline_mode = #tpu.pipeline_mode<synchronous>, transform_indices = @transform_9, window_bounds = array<i64: 1, 258>}, {pipeline_mode = #tpu.pipeline_mode<synchronous>, transform_indices = @transform_10, window_bounds = array<i64: 256, 6>}, {pipeline_mode = #tpu.pipeline_mode<synchronous>, transform_indices = @transform_11, window_bounds = array<i64: 1, 6>}, {pipeline_mode = #tpu.pipeline_mode<synchronous>, transform_indices = @transform_12, window_bounds = array<i64: 8, 8>}, {transform_indices = @transform_13, window_bounds = array<i64: 8, 512>}, {pipeline_mode = #tpu.pipeline_mode<synchronous>, transform_indices = @transform_14, window_bounds = array<i64: 8, 8>}, {pipeline_mode = #tpu.pipeline_mode<synchronous>, transform_indices = @transform_15, window_bounds = array<i64: 8, 64>}]} {
    %c0_i32 = arith.constant 0 : i32
    %0 = arith.cmpi eq, %arg0, %c0_i32 : i32
    %1 = arith.extui %0 : i1 to i32
    %c0_i32_0 = arith.constant 0 : i32
    %2 = arith.cmpi ne, %1, %c0_i32_0 : i32
    scf.if %2 {
      %cst = arith.constant 0.000000e+00 : f32
      %15 = vector.broadcast %cst : f32 to vector<8x8xf32>
      %c0 = arith.constant 0 : index
      %c0_8 = arith.constant 0 : index
      %16 = vector.load %arg13[%c0, %c0_8] : memref<8x8xf32, #tpu.memory_space<vmem>>, vector<8x8xf32>
      tpu.vector_store %arg13[%c0, %c0_8], %15 {strides = array<i32>} : memref<8x8xf32, #tpu.memory_space<vmem>>, vector<8x8xf32>,
      %cst_9 = arith.constant 0.000000e+00 : f32
      %17 = vector.broadcast %cst_9 : f32 to vector<8x64xf32>
      %c0_10 = arith.constant 0 : index
      %c0_11 = arith.constant 0 : index
      %18 = vector.load %arg17[%c0_10, %c0_11] : memref<8x64xf32, #tpu.memory_space<vmem>>, vector<8x64xf32>
      tpu.vector_store %arg17[%c0_10, %c0_11], %17 {strides = array<i32>} : memref<8x64xf32, #tpu.memory_space<vmem>>, vector<8x64xf32>,
    } else {
    }
    %c1_i32 = arith.constant 1 : i32
    %3 = arith.cmpi slt, %arg0, %c1_i32 : i32
    %4 = arith.extui %3 : i1 to i32
    %c0_i32_1 = arith.constant 0 : i32
    %5 = arith.cmpi ne, %4, %c0_i32_1 : i32
    scf.if %5 {
      %c0 = arith.constant 0 : index
      %c0_8 = arith.constant 0 : index
      %15 = vector.load %arg1[%c0, %c0_8] : memref<512x8xf32, #tpu.memory_space<vmem>>, vector<512x8xf32>
      %16 = vector.extract_strided_slice %15 {offsets = [0, 5], sizes = [512, 1], strides = [1, 1]} : vector<512x8xf32> to vector<512x1xf32>
      %17 = arith.fptosi %16 : vector<512x1xf32> to vector<512x1xi32>
      %18 = tpu.iota {dimensions = array<i32: 1>} : vector<512x8xi32>
      %19 = vector.broadcast %17 : vector<512x1xi32> to vector<512x8xi32>
      %20 = arith.cmpi eq, %18, %19 : vector<512x8xi32>
      %21 = arith.extui %20 : vector<512x8xi1> to vector<512x8xi32>
      %22 = arith.sitofp %21 : vector<512x8xi32> to vector<512x8xf32>
      %c0_9 = arith.constant 0 : index
      %c0_10 = arith.constant 0 : index
      %23 = vector.load %arg13[%c0_9, %c0_10] : memref<8x8xf32, #tpu.memory_space<vmem>>, vector<8x8xf32>
      %cst = arith.constant dense<0.000000e+00> : vector<8x8xf32>
      %24 = tpu.matmul %22, %15, %cst {dimension_numbers = #tpu.dot_dimension_numbers<[0], [0], [1], [1], [0, 1, 1, 1], [], []>} : vector<512x8xf32>, vector<512x8xf32>, vector<8x8xf32> -> vector<8x8xf32>
      %25 = arith.addf %23, %24 : vector<8x8xf32>
      %c0_11 = arith.constant 0 : index
      %c0_12 = arith.constant 0 : index
      %26 = vector.load %arg13[%c0_11, %c0_12] : memref<8x8xf32, #tpu.memory_space<vmem>>, vector<8x8xf32>
      tpu.vector_store %arg13[%c0_11, %c0_12], %25 {strides = array<i32>} : memref<8x8xf32, #tpu.memory_space<vmem>>, vector<8x8xf32>,
    } else {
    }
    %c0_i32_2 = arith.constant 0 : i32
    %6 = arith.cmpi eq, %arg0, %c0_i32_2 : i32
    %7 = arith.extui %6 : i1 to i32
    %c0_i32_3 = arith.constant 0 : i32
    %8 = arith.cmpi ne, %7, %c0_i32_3 : i32
    scf.if %8 {
      %c0 = arith.constant 0 : index
      %c0_8 = arith.constant 0 : index
      %15 = vector.load %arg13[%c0, %c0_8] : memref<8x8xf32, #tpu.memory_space<vmem>>, vector<8x8xf32>
      %16 = vector.extract_strided_slice %15 {offsets = [0, 4], sizes = [8, 1], strides = [1, 1]} : vector<8x8xf32> to vector<8x1xf32>
      %cst = arith.constant 1.000000e+00 : f32
      %17 = vector.broadcast %cst : f32 to vector<8x1xf32>
      %18 = arith.maximumf %16, %17 : vector<8x1xf32>
      %cst_9 = arith.constant 1.000000e+00 : f32
      %19 = vector.broadcast %cst_9 : f32 to vector<8x1xf32>
      %20 = arith.divf %19, %18 : vector<8x1xf32>
      %21 = vector.extract_strided_slice %15 {offsets = [0, 0], sizes = [8, 4], strides = [1, 1]} : vector<8x8xf32> to vector<8x4xf32>
      %22 = vector.broadcast %20 : vector<8x1xf32> to vector<8x4xf32>
      %23 = arith.mulf %21, %22 : vector<8x4xf32>
      %24 = vector.extract_strided_slice %15 {offsets = [0, 4], sizes = [8, 1], strides = [1, 1]} : vector<8x8xf32> to vector<8x1xf32>
      %cst_10 = arith.constant 0.000000e+00 : f32
      %25 = vector.broadcast %cst_10 : f32 to vector<8x3xf32>
      %26 = tpu.concatenate %23, %24, %25 in 1 : vector<8x4xf32>, vector<8x1xf32>, vector<8x3xf32> -> vector<8x8xf32>
      %c0_11 = arith.constant 0 : index
      %c0_12 = arith.constant 0 : index
      %27 = vector.load %arg13[%c0_11, %c0_12] : memref<8x8xf32, #tpu.memory_space<vmem>>, vector<8x8xf32>
      tpu.vector_store %arg13[%c0_11, %c0_12], %26 {strides = array<i32>} : memref<8x8xf32, #tpu.memory_space<vmem>>, vector<8x8xf32>,
    } else {
    }
    %c1_i32_4 = arith.constant 1 : i32
    %9 = arith.cmpi sge, %arg0, %c1_i32_4 : i32
    %10 = arith.extui %9 : i1 to i32
    %c0_i32_5 = arith.constant 0 : i32
    %11 = arith.cmpi ne, %10, %c0_i32_5 : i32
    scf.if %11 {
      %c0 = arith.constant 0 : index
      %c0_8 = arith.constant 0 : index
      %15 = vector.load %arg13[%c0, %c0_8] : memref<8x8xf32, #tpu.memory_space<vmem>>, vector<8x8xf32>
      %c0_9 = arith.constant 0 : index
      %c0_10 = arith.constant 0 : index
      %16 = vector.load %arg2[%c0_9, %c0_10] : memref<512x2xi32, #tpu.memory_space<vmem>>, vector<512x2xi32>
      %17 = vector.extract_strided_slice %16 {offsets = [0, 0], sizes = [512, 1], strides = [1, 1]} : vector<512x2xi32> to vector<512x1xi32>
      %18 = vector.extract_strided_slice %16 {offsets = [0, 1], sizes = [512, 1], strides = [1, 1]} : vector<512x2xi32> to vector<512x1xi32>
      %19 = tpu.concatenate %17, %18 in 0 : vector<512x1xi32>, vector<512x1xi32> -> vector<1024x1xi32>
      %20 = tpu.iota {dimensions = array<i32: 1>} : vector<1024x8xi32>
      %21 = vector.broadcast %19 : vector<1024x1xi32> to vector<1024x8xi32>
      %22 = arith.cmpi eq, %20, %21 : vector<1024x8xi32>
      %23 = arith.extui %22 : vector<1024x8xi1> to vector<1024x8xi32>
      %24 = arith.sitofp %23 : vector<1024x8xi32> to vector<1024x8xf32>
      %cst = arith.constant dense<0.000000e+00> : vector<1024x8xf32>
      %25 = tpu.matmul %24, %15, %cst {dimension_numbers = #tpu.dot_dimension_numbers<[1], [0], [0], [1], [0, 0, 1, 1], [], []>} : vector<1024x8xf32>, vector<8x8xf32>, vector<1024x8xf32> -> vector<1024x8xf32>
      %26 = vector.extract_strided_slice %25 {offsets = [0, 0], sizes = [512, 8], strides = [1, 1]} : vector<1024x8xf32> to vector<512x8xf32>
      %27 = vector.extract_strided_slice %25 {offsets = [512, 0], sizes = [512, 8], strides = [1, 1]} : vector<1024x8xf32> to vector<512x8xf32>
      %28 = vector.extract_strided_slice %27 {offsets = [0, 0], sizes = [512, 3], strides = [1, 1]} : vector<512x8xf32> to vector<512x3xf32>
      %29 = vector.extract_strided_slice %26 {offsets = [0, 0], sizes = [512, 3], strides = [1, 1]} : vector<512x8xf32> to vector<512x3xf32>
      %30 = arith.subf %28, %29 : vector<512x3xf32>
      %31 = arith.mulf %30, %30 : vector<512x3xf32>
      %cst_11 = arith.constant dense<0.000000e+00> : vector<512xf32>
      %32 = vector.multi_reduction <add>, %31, %cst_11 [1] : vector<512x3xf32> to vector<512xf32>
      %33 = vector.shape_cast %32 : vector<512xf32> to vector<512x1xf32>
      %34 = math.sqrt %33 : vector<512x1xf32>
      %35 = tpu.concatenate %30, %34 in 1 : vector<512x3xf32>, vector<512x1xf32> -> vector<512x4xf32>
      %36 = tpu.concatenate %26, %27, %35 in 1 : vector<512x8xf32>, vector<512x8xf32>, vector<512x4xf32> -> vector<512x20xf32>
      %37 = arith.truncf %36 : vector<512x20xf32> to vector<512x20xbf16>
      %c0_12 = arith.constant 0 : index
      %c0_13 = arith.constant 0 : index
      %38 = vector.load %arg3[%c0_12, %c0_13] : memref<20x64xbf16, #tpu.memory_space<vmem>>, vector<20x64xbf16>
      %cst_14 = arith.constant dense<0.000000e+00> : vector<512x64xf32>
      %39 = tpu.matmul %37, %38, %cst_14 {dimension_numbers = #tpu.dot_dimension_numbers<[1], [0], [0], [1], [0, 0, 1, 1], [], []>} : vector<512x20xbf16>, vector<20x64xbf16>, vector<512x64xf32> -> vector<512x64xf32>
      %c0_15 = arith.constant 0 : index
      %c0_16 = arith.constant 0 : index
      %40 = vector.load %arg4[%c0_15, %c0_16] : memref<1x64xf32, #tpu.memory_space<vmem>>, vector<1x64xf32>
      %41 = vector.broadcast %40 : vector<1x64xf32> to vector<512x64xf32>
      %42 = arith.addf %39, %41 : vector<512x64xf32>
      %cst_17 = arith.constant 0.000000e+00 : f32
      %43 = vector.broadcast %cst_17 : f32 to vector<512x64xf32>
      %44 = arith.cmpf ogt, %42, %43 : vector<512x64xf32>
      %cst_18 = arith.constant 0.00999999977 : f32
      %45 = vector.broadcast %cst_18 : f32 to vector<512x64xf32>
      %46 = arith.mulf %45, %42 : vector<512x64xf32>
      %47 = arith.select %44, %42, %46 : vector<512x64xi1>, vector<512x64xf32>
      %48 = arith.truncf %47 : vector<512x64xf32> to vector<512x64xbf16>
      %c0_19 = arith.constant 0 : index
      %c0_20 = arith.constant 0 : index
      %49 = vector.load %arg5[%c0_19, %c0_20] : memref<64x2xbf16, #tpu.memory_space<vmem>>, vector<64x2xbf16>
      %cst_21 = arith.constant dense<0.000000e+00> : vector<512x2xf32>
      %50 = tpu.matmul %48, %49, %cst_21 {dimension_numbers = #tpu.dot_dimension_numbers<[1], [0], [0], [1], [0, 0, 1, 1], [], []>} : vector<512x64xbf16>, vector<64x2xbf16>, vector<512x2xf32> -> vector<512x2xf32>
      %c0_22 = arith.constant 0 : index
      %c0_23 = arith.constant 0 : index
      %51 = vector.load %arg6[%c0_22, %c0_23] : memref<1x2xf32, #tpu.memory_space<vmem>>, vector<1x2xf32>
      %52 = vector.broadcast %51 : vector<1x2xf32> to vector<512x2xf32>
      %53 = arith.addf %50, %52 : vector<512x2xf32>
      %54 = tpu.concatenate %35, %53 in 1 : vector<512x4xf32>, vector<512x2xf32> -> vector<512x6xf32>
      %55 = tpu.iota {dimensions = array<i32: 0>} : vector<8x6xi32>
      %56 = tpu.iota {dimensions = array<i32: 1>} : vector<8x6xi32>
      %57 = arith.cmpi eq, %55, %56 : vector<8x6xi32>
      %58 = arith.extui %57 : vector<8x6xi1> to vector<8x6xi32>
      %59 = arith.sitofp %58 : vector<8x6xi32> to vector<8x6xf32>
      %cst_24 = arith.constant dense<0.000000e+00> : vector<8x512xf32>
      %60 = tpu.matmul %59, %54, %cst_24 {dimension_numbers = #tpu.dot_dimension_numbers<[1], [1], [0], [0], [0, 0, 1, 0], [], []>} : vector<8x6xf32>, vector<512x6xf32>, vector<8x512xf32> -> vector<8x512xf32>
      %c0_25 = arith.constant 0 : index
      %c0_26 = arith.constant 0 : index
      %61 = vector.load %arg14[%c0_25, %c0_26] : memref<8x512xf32, #tpu.memory_space<vmem>>, vector<8x512xf32>
      tpu.vector_store %arg14[%c0_25, %c0_26], %60 {strides = array<i32>} : memref<8x512xf32, #tpu.memory_space<vmem>>, vector<8x512xf32>,
      %62 = vector.extract_strided_slice %24 {offsets = [512, 0], sizes = [512, 8], strides = [1, 1]} : vector<1024x8xf32> to vector<512x8xf32>
      %c0_27 = arith.constant 0 : index
      %c0_28 = arith.constant 0 : index
      %63 = vector.load %arg17[%c0_27, %c0_28] : memref<8x64xf32, #tpu.memory_space<vmem>>, vector<8x64xf32>
      %cst_29 = arith.constant dense<0.000000e+00> : vector<8x64xf32>
      %64 = tpu.matmul %62, %47, %cst_29 {dimension_numbers = #tpu.dot_dimension_numbers<[0], [0], [1], [1], [0, 1, 1, 1], [], []>} : vector<512x8xf32>, vector<512x64xf32>, vector<8x64xf32> -> vector<8x64xf32>
      %65 = arith.addf %63, %64 : vector<8x64xf32>
      %c0_30 = arith.constant 0 : index
      %c0_31 = arith.constant 0 : index
      %66 = vector.load %arg17[%c0_30, %c0_31] : memref<8x64xf32, #tpu.memory_space<vmem>>, vector<8x64xf32>
      tpu.vector_store %arg17[%c0_30, %c0_31], %65 {strides = array<i32>} : memref<8x64xf32, #tpu.memory_space<vmem>>, vector<8x64xf32>,
    } else {
    }
    %c1_i32_6 = arith.constant 1 : i32
    %12 = arith.cmpi eq, %arg0, %c1_i32_6 : i32
    %13 = arith.extui %12 : i1 to i32
    %c0_i32_7 = arith.constant 0 : i32
    %14 = arith.cmpi ne, %13, %c0_i32_7 : i32
    scf.if %14 {
      %c0 = arith.constant 0 : index
      %c0_8 = arith.constant 0 : index
      %15 = vector.load %arg7[%c0, %c0_8] : memref<72x64xbf16, #tpu.memory_space<vmem>>, vector<72x64xbf16>
      %c0_9 = arith.constant 0 : index
      %c0_10 = arith.constant 0 : index
      %16 = vector.load %arg8[%c0_9, %c0_10] : memref<1x64xf32, #tpu.memory_space<vmem>>, vector<1x64xf32>
      %c0_11 = arith.constant 0 : index
      %c0_12 = arith.constant 0 : index
      %17 = vector.load %arg9[%c0_11, %c0_12] : memref<64x258xbf16, #tpu.memory_space<vmem>>, vector<64x258xbf16>
      %c0_13 = arith.constant 0 : index
      %c0_14 = arith.constant 0 : index
      %18 = vector.load %arg10[%c0_13, %c0_14] : memref<1x258xf32, #tpu.memory_space<vmem>>, vector<1x258xf32>
      %c0_15 = arith.constant 0 : index
      %c0_16 = arith.constant 0 : index
      %19 = vector.load %arg11[%c0_15, %c0_16] : memref<256x6xbf16, #tpu.memory_space<vmem>>, vector<256x6xbf16>
      %c0_17 = arith.constant 0 : index
      %c0_18 = arith.constant 0 : index
      %20 = vector.load %arg12[%c0_17, %c0_18] : memref<1x6xf32, #tpu.memory_space<vmem>>, vector<1x6xf32>
      %c0_19 = arith.constant 0 : index
      %c0_20 = arith.constant 0 : index
      %21 = vector.load %arg13[%c0_19, %c0_20] : memref<8x8xf32, #tpu.memory_space<vmem>>, vector<8x8xf32>
      %c0_21 = arith.constant 0 : index
      %c0_22 = arith.constant 0 : index
      %22 = vector.load %arg17[%c0_21, %c0_22] : memref<8x64xf32, #tpu.memory_space<vmem>>, vector<8x64xf32>
      %23 = tpu.concatenate %21, %22 in 1 : vector<8x8xf32>, vector<8x64xf32> -> vector<8x72xf32>
      %24 = arith.truncf %23 : vector<8x72xf32> to vector<8x72xbf16>
      %cst = arith.constant dense<0.000000e+00> : vector<8x64xf32>
      %25 = tpu.matmul %24, %15, %cst {dimension_numbers = #tpu.dot_dimension_numbers<[1], [0], [0], [1], [0, 0, 1, 1], [], []>} : vector<8x72xbf16>, vector<72x64xbf16>, vector<8x64xf32> -> vector<8x64xf32>
      %26 = vector.broadcast %16 : vector<1x64xf32> to vector<8x64xf32>
      %27 = arith.addf %25, %26 : vector<8x64xf32>
      %cst_23 = arith.constant 0.000000e+00 : f32
      %28 = vector.broadcast %cst_23 : f32 to vector<8x64xf32>
      %29 = arith.cmpf ogt, %27, %28 : vector<8x64xf32>
      %cst_24 = arith.constant 0.00999999977 : f32
      %30 = vector.broadcast %cst_24 : f32 to vector<8x64xf32>
      %31 = arith.mulf %30, %27 : vector<8x64xf32>
      %32 = arith.select %29, %27, %31 : vector<8x64xi1>, vector<8x64xf32>
      %c0_25 = arith.constant 0 : index
      %c0_26 = arith.constant 0 : index
      %33 = vector.load %arg16[%c0_25, %c0_26] : memref<8x64xf32, #tpu.memory_space<vmem>>, vector<8x64xf32>
      tpu.vector_store %arg16[%c0_25, %c0_26], %32 {strides = array<i32>} : memref<8x64xf32, #tpu.memory_space<vmem>>, vector<8x64xf32>,
      %34 = arith.truncf %32 : vector<8x64xf32> to vector<8x64xbf16>
      %cst_27 = arith.constant dense<0.000000e+00> : vector<8x258xf32>
      %35 = tpu.matmul %34, %17, %cst_27 {dimension_numbers = #tpu.dot_dimension_numbers<[1], [0], [0], [1], [0, 0, 1, 1], [], []>} : vector<8x64xbf16>, vector<64x258xbf16>, vector<8x258xf32> -> vector<8x258xf32>
      %36 = vector.broadcast %18 : vector<1x258xf32> to vector<8x258xf32>
      %37 = arith.addf %35, %36 : vector<8x258xf32>
      %38 = vector.extract_strided_slice %37 {offsets = [0, 0], sizes = [8, 256], strides = [1, 1]} : vector<8x258xf32> to vector<8x256xf32>
      %cst_28 = arith.constant 0.000000e+00 : f32
      %39 = vector.broadcast %cst_28 : f32 to vector<8x256xf32>
      %40 = arith.cmpf ogt, %38, %39 : vector<8x256xf32>
      %cst_29 = arith.constant 0.00999999977 : f32
      %41 = vector.broadcast %cst_29 : f32 to vector<8x256xf32>
      %42 = arith.mulf %41, %38 : vector<8x256xf32>
      %43 = arith.select %40, %38, %42 : vector<8x256xi1>, vector<8x256xf32>
      %44 = vector.extract_strided_slice %37 {offsets = [0, 256], sizes = [8, 2], strides = [1, 1]} : vector<8x258xf32> to vector<8x2xf32>
      %45 = arith.truncf %43 : vector<8x256xf32> to vector<8x256xbf16>
      %cst_30 = arith.constant dense<0.000000e+00> : vector<8x6xf32>
      %46 = tpu.matmul %45, %19, %cst_30 {dimension_numbers = #tpu.dot_dimension_numbers<[1], [0], [0], [1], [0, 0, 1, 1], [], []>} : vector<8x256xbf16>, vector<256x6xbf16>, vector<8x6xf32> -> vector<8x6xf32>
      %47 = vector.broadcast %20 : vector<1x6xf32> to vector<8x6xf32>
      %48 = arith.addf %46, %47 : vector<8x6xf32>
      %49 = tpu.concatenate %44, %48 in 1 : vector<8x2xf32>, vector<8x6xf32> -> vector<8x8xf32>
      %c0_31 = arith.constant 0 : index
      %c0_32 = arith.constant 0 : index
      %50 = vector.load %arg15[%c0_31, %c0_32] : memref<8x8xf32, #tpu.memory_space<vmem>>, vector<8x8xf32>
      tpu.vector_store %arg15[%c0_31, %c0_32], %49 {strides = array<i32>} : memref<8x8xf32, #tpu.memory_space<vmem>>, vector<8x8xf32>,
    } else {
    }
    return
  }
  func.func @transform_0(%arg0: i32) -> (i32, i32) {
    %c0_i32 = arith.constant 0 : i32
    %0 = arith.minsi %arg0, %c0_i32 : i32
    %c0_i32_0 = arith.constant 0 : i32
    %c0_i32_1 = arith.constant 0 : i32
    return %0, %c0_i32_0 : i32, i32
  }
  func.func @transform_1(%arg0: i32) -> (i32, i32) {
    %c1_i32 = arith.constant 1 : i32
    %0 = arith.subi %arg0, %c1_i32 : i32
    %c0_i32 = arith.constant 0 : i32
    %1 = arith.maxsi %0, %c0_i32 : i32
    %c0_i32_0 = arith.constant 0 : i32
    %c0_i32_1 = arith.constant 0 : i32
    return %1, %c0_i32_0 : i32, i32
  }
  func.func @transform_2(%arg0: i32) -> (i32, i32) {
    %c0_i32 = arith.constant 0 : i32
    %c0_i32_0 = arith.constant 0 : i32
    %c0_i32_1 = arith.constant 0 : i32
    return %c0_i32, %c0_i32_0 : i32, i32
  }
  func.func @transform_3(%arg0: i32) -> (i32, i32) {
    %c0_i32 = arith.constant 0 : i32
    %c0_i32_0 = arith.constant 0 : i32
    %c0_i32_1 = arith.constant 0 : i32
    return %c0_i32, %c0_i32_0 : i32, i32
  }
  func.func @transform_4(%arg0: i32) -> (i32, i32) {
    %c0_i32 = arith.constant 0 : i32
    %c0_i32_0 = arith.constant 0 : i32
    %c0_i32_1 = arith.constant 0 : i32
    return %c0_i32, %c0_i32_0 : i32, i32
  }
  func.func @transform_5(%arg0: i32) -> (i32, i32) {
    %c0_i32 = arith.constant 0 : i32
    %c0_i32_0 = arith.constant 0 : i32
    %c0_i32_1 = arith.constant 0 : i32
    return %c0_i32, %c0_i32_0 : i32, i32
  }
  func.func @transform_6(%arg0: i32) -> (i32, i32) {
    %c0_i32 = arith.constant 0 : i32
    %c0_i32_0 = arith.constant 0 : i32
    %c0_i32_1 = arith.constant 0 : i32
    return %c0_i32, %c0_i32_0 : i32, i32
  }
  func.func @transform_7(%arg0: i32) -> (i32, i32) {
    %c0_i32 = arith.constant 0 : i32
    %c0_i32_0 = arith.constant 0 : i32
    %c0_i32_1 = arith.constant 0 : i32
    return %c0_i32, %c0_i32_0 : i32, i32
  }
  func.func @transform_8(%arg0: i32) -> (i32, i32) {
    %c0_i32 = arith.constant 0 : i32
    %c0_i32_0 = arith.constant 0 : i32
    %c0_i32_1 = arith.constant 0 : i32
    return %c0_i32, %c0_i32_0 : i32, i32
  }
  func.func @transform_9(%arg0: i32) -> (i32, i32) {
    %c0_i32 = arith.constant 0 : i32
    %c0_i32_0 = arith.constant 0 : i32
    %c0_i32_1 = arith.constant 0 : i32
    return %c0_i32, %c0_i32_0 : i32, i32
  }
  func.func @transform_10(%arg0: i32) -> (i32, i32) {
    %c0_i32 = arith.constant 0 : i32
    %c0_i32_0 = arith.constant 0 : i32
    %c0_i32_1 = arith.constant 0 : i32
    return %c0_i32, %c0_i32_0 : i32, i32
  }
  func.func @transform_11(%arg0: i32) -> (i32, i32) {
    %c0_i32 = arith.constant 0 : i32
    %c0_i32_0 = arith.constant 0 : i32
    %c0_i32_1 = arith.constant 0 : i32
    return %c0_i32, %c0_i32_0 : i32, i32
  }
  func.func @transform_12(%arg0: i32) -> (i32, i32) {
    %c0_i32 = arith.constant 0 : i32
    %c0_i32_0 = arith.constant 0 : i32
    %c0_i32_1 = arith.constant 0 : i32
    return %c0_i32, %c0_i32_0 : i32, i32
  }
  func.func @transform_13(%arg0: i32) -> (i32, i32) {
    %c1_i32 = arith.constant 1 : i32
    %0 = arith.subi %arg0, %c1_i32 : i32
    %c0_i32 = arith.constant 0 : i32
    %1 = arith.maxsi %0, %c0_i32 : i32
    %c0_i32_0 = arith.constant 0 : i32
    %c0_i32_1 = arith.constant 0 : i32
    return %c0_i32_0, %1 : i32, i32
  }
  func.func @transform_14(%arg0: i32) -> (i32, i32) {
    %c0_i32 = arith.constant 0 : i32
    %c0_i32_0 = arith.constant 0 : i32
    %c0_i32_1 = arith.constant 0 : i32
    return %c0_i32, %c0_i32_0 : i32, i32
  }
  func.func @transform_15(%arg0: i32) -> (i32, i32) {
    %c0_i32 = arith.constant 0 : i32
    %c0_i32_0 = arith.constant 0 : i32
    %c0_i32_1 = arith.constant 0 : i32
    return %c0_i32, %c0_i32_0 : i32, i32
  }
}

</mosaic_0001>

<llo_original>
// kernel: tpu_custom_call.1
$region0: #{tpu_custom_call.1}
  #allocation0 [shape = 'u32[]', space=smem, size = 0x4, offset = 0x4, fixed_abs, tag = 'smem constant byte address 0x4 - core index']
  #allocation1 [shape = 'u32[72,128]{1,0:T(1,128)}', space=vmem, size = 0x9000, scoped, tag = 'internal scratch']
  #allocation2 [shape = 'f32[8,64]{1,0:T(8,128)}', space=vmem, size = 0x1000, scoped, tag = 'scratch operand']
  %s0 = inlined_call_operand.vmem [shape: f32[512,8], index: 0, kind: input, shape index: {}]
  %s1 = inlined_call_operand.vmem [shape: s32[512,2], index: 1, kind: input, shape index: {}]
  %s2 = inlined_call_operand.vmem [shape: bf16[20,64], index: 2, kind: input, shape index: {}]
  %s3 = inlined_call_operand.vmem [shape: f32[1,64], index: 3, kind: input, shape index: {}]
  %s4 = inlined_call_operand.vmem [shape: bf16[64,2], index: 4, kind: input, shape index: {}]
  %s5 = inlined_call_operand.vmem [shape: f32[1,2], index: 5, kind: input, shape index: {}]
  %s6 = inlined_call_operand.vmem [shape: bf16[72,64], index: 6, kind: input, shape index: {}]
  %s7 = inlined_call_operand.vmem [shape: f32[1,64], index: 7, kind: input, shape index: {}]
  %s8 = inlined_call_operand.vmem [shape: bf16[64,258], index: 8, kind: input, shape index: {}]
  %s9 = inlined_call_operand.vmem [shape: f32[1,258], index: 9, kind: input, shape index: {}]
  %s10 = inlined_call_operand.vmem [shape: bf16[256,6], index: 10, kind: input, shape index: {}]
  %s11 = inlined_call_operand.vmem [shape: f32[1,6], index: 11, kind: input, shape index: {}]
  %s12 = inlined_call_operand.hbm [shape: f32[8,8], index: 12, kind: output, shape index: {0}]
  %s13 = inlined_call_operand.hbm [shape: f32[8,512], index: 13, kind: output, shape index: {1}]
  %s14 = inlined_call_operand.hbm [shape: f32[8,8], index: 14, kind: output, shape index: {2}]
  %s15 = inlined_call_operand.hbm [shape: f32[8,64], index: 15, kind: output, shape index: {3}]
  %16 = xla_tuple %s12, %s13, %s14, %s15
  %s17 = sld [smem:[#allocation0]]
  $region125: #{tpu_custom_call.1} parent=0
    _
  %s19 = ssub.s32 1, %s17
  %s20 = scalar_select 0, %s19, %s17
  $region1: #{tpu_custom_call.1} parent=0
    #allocation3 [shape = 'u8[4096]{0}', space=vmem, size = 0x1000, scoped, tag = 'output window, operand 0, single buffered']
    #allocation4 [shape = 's32[2]{0}', space=sflag, size = 0x8, scoped, tag = 'scoped memory for tpu_custom_call.1']
    #allocation5 [shape = 'u8[32768]{0}', space=vmem, size = 0x8000, scoped, tag = 'output window, operand 1']
    #allocation6 [shape = 's32[2]{0}', space=sflag, size = 0x8, scoped, tag = 'scoped memory for tpu_custom_call.1']
    #allocation7 [shape = 'u8[4096]{0}', space=vmem, size = 0x1000, scoped, tag = 'output window, operand 2, single buffered']
    #allocation8 [shape = 'u8[4096]{0}', space=vmem, size = 0x1000, scoped, tag = 'output window, operand 3, single buffered']
    #allocation9 [shape = 's32[1]{0}', space=sflag, size = 0x4, scoped, tag = 'scoped memory for tpu_custom_call.1']
    %21 = vsyncpa [#allocation4], 0
    %22 = vsyncpa [#allocation6], 0
    %s23 = scalar_lea.sflag [#allocation6], 1
    %24 = vsyncpa %s23, 0
    %25 = vsyncpa [#allocation9], 0
    loop: start=0, step=1, limit=4
    $region2: #{tpu_custom_call.1} parent=1 // loop_pre_header
      _
    $region3: #{tpu_custom_call.1} parent=1 // loop_header
      %s27 = sphi 0, %s31
      %p28 = scmp.ge.s32.totalorder %s27, 4
      %s41 = sphi 0, %s43
      %s44 = sphi 0, %s41
      %s45 = sphi 0, %s44
      %s61 = sphi 0, %s45
      %s73 = sphi 0, %s75
      %s76 = sphi 0, %s73
      %s77 = sphi 0, %s76
      %s93 = sphi 0, %s77
      %s97 = sphi 0, %s97
      %s99 = sphi 0, %s97
      %s100 = sphi 0, %s99
      %s114 = sphi 0, %s100
      %s118 = sphi 0, %s118
      %s120 = sphi 0, %s118
      %s121 = sphi 0, %s120
      %s135 = sphi 0, %s121
      %s139 = sphi 0, %s139
      %s141 = sphi 0, %s139
      %s142 = sphi 0, %s141
      %s156 = sphi 0, %s142
      %s160 = sphi 0, %s160
      %s162 = sphi 0, %s160
      %s163 = sphi 0, %s162
      %s177 = sphi 0, %s163
      %s181 = sphi 0, %s181
      %s183 = sphi 0, %s181
      %s184 = sphi 0, %s183
      %s198 = sphi 0, %s184
      %s202 = sphi 0, %s202
      %s204 = sphi 0, %s202
      %s205 = sphi 0, %s204
      %s219 = sphi 0, %s205
      %s223 = sphi 0, %s223
      %s225 = sphi 0, %s223
      %s226 = sphi 0, %s225
      %s240 = sphi 0, %s226
      %s244 = sphi 0, %s244
      %s246 = sphi 0, %s244
      %s247 = sphi 0, %s246
      %s261 = sphi 0, %s247
      %s265 = sphi 0, %s265
      %s267 = sphi 0, %s265
      %s268 = sphi 0, %s267
      %s282 = sphi 0, %s268
      %s286 = sphi 0, %s286
      %s288 = sphi 0, %s286
      %s289 = sphi 0, %s288
      %s303 = sphi 0, %s289
      %s307 = sphi 0, %s307
      %s309 = sphi 0, %s307
      %s310 = sphi 0, %s309
      %s324 = sphi 0, %s310
      %s336 = sphi 0, %s338
      %s339 = sphi 0, %s336
      %s340 = sphi 0, %s339
      %s356 = sphi 0, %s340
      %s360 = sphi 0, %s360
      %s362 = sphi 0, %s360
      %s363 = sphi 0, %s362
      %s377 = sphi 0, %s363
      %s381 = sphi 0, %s381
      %s383 = sphi 0, %s381
      %s384 = sphi 0, %s383
      %s398 = sphi 0, %s384
    $region4: #{tpu_custom_call.1} parent=1 // loop_header_branch
      %30 = sbr.rel (%p28) target = $region8
    $region5: #{tpu_custom_call.1} parent=1 // loop_body
      %s32 = ssub.s32 %s27, 1
      %s33 = ssub.s32 %s27, 2
      %s34 = sadd.s32 %s27, 1
      %p35 = scmp.lt.s32.totalorder %s27, 0
      %s36 = scalar_select %p35, %s27, 0
      %p37 = scmp.lt.s32.totalorder %s34, 0
      %s38 = scalar_select %p37, %s34, 0
      %s39 = ssub.s32 %s36, %s38
      %p40 = scmp.eq.s32.totalorder %s39, 0
      %s42 = sadd.s32 %s41, 1
      %s43 = scalar_select %p40, %s41, %s42
      %p46 = pneg %p40
      %p47 = scmp.eq.s32.totalorder %s27, 1
      %p48 = por %p46, %p47
      %p49 = scmp.ne.s32.totalorder %s41, %s44
      %p50 = scmp.eq.s32.totalorder %s27, 0
      %p51 = por %p49, %p50
      %p52 = scmp.ne.s32.totalorder %s41, %s44
      %p53 = scmp.eq.s32.totalorder %s32, 1
      %p54 = por %p52, %p53
      %p55 = scmp.ne.s32.totalorder %s44, %s45
      %p56 = scmp.eq.s32.totalorder %s32, 0
      %p57 = por %p55, %p56
      %p58 = scmp.ne.s32.totalorder %s44, %s45
      %p59 = scmp.eq.s32.totalorder %s33, 1
      %p60 = por %p58, %p59
      %p62 = scmp.ne.s32.totalorder %s45, %s61
      %p63 = scmp.eq.s32.totalorder %s33, 0
      %p64 = por %p62, %p63
      %s65 = ssub.s32 %s27, 1
      %p66 = scmp.gt.s32.totalorder %s65, 0
      %s67 = scalar_select %p66, %s65, 0
      %s68 = ssub.s32 %s34, 1
      %p69 = scmp.gt.s32.totalorder %s68, 0
      %s70 = scalar_select %p69, %s68, 0
      %s71 = ssub.s32 %s67, %s70
      %p72 = scmp.eq.s32.totalorder %s71, 0
      %s74 = sadd.s32 %s73, 1
      %s75 = scalar_select %p72, %s73, %s74
      %p78 = pneg %p72
      %p79 = scmp.eq.s32.totalorder %s27, 1
      %p80 = por %p78, %p79
      %p81 = scmp.ne.s32.totalorder %s73, %s76
      %p82 = scmp.eq.s32.totalorder %s27, 0
      %p83 = por %p81, %p82
      %p84 = scmp.ne.s32.totalorder %s73, %s76
      %p85 = scmp.eq.s32.totalorder %s32, 1
      %p86 = por %p84, %p85
      %p87 = scmp.ne.s32.totalorder %s76, %s77
      %p88 = scmp.eq.s32.totalorder %s32, 0
      %p89 = por %p87, %p88
      %p90 = scmp.ne.s32.totalorder %s76, %s77
      %p91 = scmp.eq.s32.totalorder %s33, 1
      %p92 = por %p90, %p91
      %p94 = scmp.ne.s32.totalorder %s77, %s93
      %p95 = scmp.eq.s32.totalorder %s33, 0
      %p96 = por %p94, %p95
      %s98 = sadd.s32 %s97, 1
      %p101 = scmp.eq.s32.totalorder %s27, 1
      %p102 = scmp.ne.s32.totalorder %s97, %s99
      %p103 = scmp.eq.s32.totalorder %s27, 0
      %p104 = por %p102, %p103
      %p105 = scmp.ne.s32.totalorder %s97, %s99
      %p106 = scmp.eq.s32.totalorder %s32, 1
      %p107 = por %p105, %p106
      %p108 = scmp.ne.s32.totalorder %s99, %s100
      %p109 = scmp.eq.s32.totalorder %s32, 0
      %p110 = por %p108, %p109
      %p111 = scmp.ne.s32.totalorder %s99, %s100
      %p112 = scmp.eq.s32.totalorder %s33, 1
      %p113 = por %p111, %p112
      %p115 = scmp.ne.s32.totalorder %s100, %s114
      %p116 = scmp.eq.s32.totalorder %s33, 0
      %p117 = por %p115, %p116
      %s119 = sadd.s32 %s118, 1
      %p122 = scmp.eq.s32.totalorder %s27, 1
      %p123 = scmp.ne.s32.totalorder %s118, %s120
      %p124 = scmp.eq.s32.totalorder %s27, 0
      %p125 = por %p123, %p124
      %p126 = scmp.ne.s32.totalorder %s118, %s120
      %p127 = scmp.eq.s32.totalorder %s32, 1
      %p128 = por %p126, %p127
      %p129 = scmp.ne.s32.totalorder %s120, %s121
      %p130 = scmp.eq.s32.totalorder %s32, 0
      %p131 = por %p129, %p130
      %p132 = scmp.ne.s32.totalorder %s120, %s121
      %p133 = scmp.eq.s32.totalorder %s33, 1
      %p134 = por %p132, %p133
      %p136 = scmp.ne.s32.totalorder %s121, %s135
      %p137 = scmp.eq.s32.totalorder %s33, 0
      %p138 = por %p136, %p137
      %s140 = sadd.s32 %s139, 1
      %p143 = scmp.eq.s32.totalorder %s27, 1
      %p144 = scmp.ne.s32.totalorder %s139, %s141
      %p145 = scmp.eq.s32.totalorder %s27, 0
      %p146 = por %p144, %p145
      %p147 = scmp.ne.s32.totalorder %s139, %s141
      %p148 = scmp.eq.s32.totalorder %s32, 1
      %p149 = por %p147, %p148
      %p150 = scmp.ne.s32.totalorder %s141, %s142
      %p151 = scmp.eq.s32.totalorder %s32, 0
      %p152 = por %p150, %p151
      %p153 = scmp.ne.s32.totalorder %s141, %s142
      %p154 = scmp.eq.s32.totalorder %s33, 1
      %p155 = por %p153, %p154
      %p157 = scmp.ne.s32.totalorder %s142, %s156
      %p158 = scmp.eq.s32.totalorder %s33, 0
      %p159 = por %p157, %p158
      %s161 = sadd.s32 %s160, 1
      %p164 = scmp.eq.s32.totalorder %s27, 1
      %p165 = scmp.ne.s32.totalorder %s160, %s162
      %p166 = scmp.eq.s32.totalorder %s27, 0
      %p167 = por %p165, %p166
      %p168 = scmp.ne.s32.totalorder %s160, %s162
      %p169 = scmp.eq.s32.totalorder %s32, 1
      %p170 = por %p168, %p169
      %p171 = scmp.ne.s32.totalorder %s162, %s163
      %p172 = scmp.eq.s32.totalorder %s32, 0
      %p173 = por %p171, %p172
      %p174 = scmp.ne.s32.totalorder %s162, %s163
      %p175 = scmp.eq.s32.totalorder %s33, 1
      %p176 = por %p174, %p175
      %p178 = scmp.ne.s32.totalorder %s163, %s177
      %p179 = scmp.eq.s32.totalorder %s33, 0
      %p180 = por %p178, %p179
      %s182 = sadd.s32 %s181, 1
      %p185 = scmp.eq.s32.totalorder %s27, 1
      %p186 = scmp.ne.s32.totalorder %s181, %s183
      %p187 = scmp.eq.s32.totalorder %s27, 0
      %p188 = por %p186, %p187
      %p189 = scmp.ne.s32.totalorder %s181, %s183
      %p190 = scmp.eq.s32.totalorder %s32, 1
      %p191 = por %p189, %p190
      %p192 = scmp.ne.s32.totalorder %s183, %s184
      %p193 = scmp.eq.s32.totalorder %s32, 0
      %p194 = por %p192, %p193
      %p195 = scmp.ne.s32.totalorder %s183, %s184
      %p196 = scmp.eq.s32.totalorder %s33, 1
      %p197 = por %p195, %p196
      %p199 = scmp.ne.s32.totalorder %s184, %s198
      %p200 = scmp.eq.s32.totalorder %s33, 0
      %p201 = por %p199, %p200
      %s203 = sadd.s32 %s202, 1
      %p206 = scmp.eq.s32.totalorder %s27, 1
      %p207 = scmp.ne.s32.totalorder %s202, %s204
      %p208 = scmp.eq.s32.totalorder %s27, 0
      %p209 = por %p207, %p208
      %p210 = scmp.ne.s32.totalorder %s202, %s204
      %p211 = scmp.eq.s32.totalorder %s32, 1
      %p212 = por %p210, %p211
      %p213 = scmp.ne.s32.totalorder %s204, %s205
      %p214 = scmp.eq.s32.totalorder %s32, 0
      %p215 = por %p213, %p214
      %p216 = scmp.ne.s32.totalorder %s204, %s205
      %p217 = scmp.eq.s32.totalorder %s33, 1
      %p218 = por %p216, %p217
      %p220 = scmp.ne.s32.totalorder %s205, %s219
      %p221 = scmp.eq.s32.totalorder %s33, 0
      %p222 = por %p220, %p221
      %s224 = sadd.s32 %s223, 1
      %p227 = scmp.eq.s32.totalorder %s27, 1
      %p228 = scmp.ne.s32.totalorder %s223, %s225
      %p229 = scmp.eq.s32.totalorder %s27, 0
      %p230 = por %p228, %p229
      %p231 = scmp.ne.s32.totalorder %s223, %s225
      %p232 = scmp.eq.s32.totalorder %s32, 1
      %p233 = por %p231, %p232
      %p234 = scmp.ne.s32.totalorder %s225, %s226
      %p235 = scmp.eq.s32.totalorder %s32, 0
      %p236 = por %p234, %p235
      %p237 = scmp.ne.s32.totalorder %s225, %s226
      %p238 = scmp.eq.s32.totalorder %s33, 1
      %p239 = por %p237, %p238
      %p241 = scmp.ne.s32.totalorder %s226, %s240
      %p242 = scmp.eq.s32.totalorder %s33, 0
      %p243 = por %p241, %p242
      %s245 = sadd.s32 %s244, 1
      %p248 = scmp.eq.s32.totalorder %s27, 1
      %p249 = scmp.ne.s32.totalorder %s244, %s246
      %p250 = scmp.eq.s32.totalorder %s27, 0
      %p251 = por %p249, %p250
      %p252 = scmp.ne.s32.totalorder %s244, %s246
      %p253 = scmp.eq.s32.totalorder %s32, 1
      %p254 = por %p252, %p253
      %p255 = scmp.ne.s32.totalorder %s246, %s247
      %p256 = scmp.eq.s32.totalorder %s32, 0
      %p257 = por %p255, %p256
      %p258 = scmp.ne.s32.totalorder %s246, %s247
      %p259 = scmp.eq.s32.totalorder %s33, 1
      %p260 = por %p258, %p259
      %p262 = scmp.ne.s32.totalorder %s247, %s261
      %p263 = scmp.eq.s32.totalorder %s33, 0
      %p264 = por %p262, %p263
      %s266 = sadd.s32 %s265, 1
      %p269 = scmp.eq.s32.totalorder %s27, 1
      %p270 = scmp.ne.s32.totalorder %s265, %s267
      %p271 = scmp.eq.s32.totalorder %s27, 0
      %p272 = por %p270, %p271
      %p273 = scmp.ne.s32.totalorder %s265, %s267
      %p274 = scmp.eq.s32.totalorder %s32, 1
      %p275 = por %p273, %p274
      %p276 = scmp.ne.s32.totalorder %s267, %s268
      %p277 = scmp.eq.s32.totalorder %s32, 0
      %p278 = por %p276, %p277
      %p279 = scmp.ne.s32.totalorder %s267, %s268
      %p280 = scmp.eq.s32.totalorder %s33, 1
      %p281 = por %p279, %p280
      %p283 = scmp.ne.s32.totalorder %s268, %s282
      %p284 = scmp.eq.s32.totalorder %s33, 0
      %p285 = por %p283, %p284
      %s287 = sadd.s32 %s286, 1
      %p290 = scmp.eq.s32.totalorder %s27, 1
      %p291 = scmp.ne.s32.totalorder %s286, %s288
      %p292 = scmp.eq.s32.totalorder %s27, 0
      %p293 = por %p291, %p292
      %p294 = scmp.ne.s32.totalorder %s286, %s288
      %p295 = scmp.eq.s32.totalorder %s32, 1
      %p296 = por %p294, %p295
      %p297 = scmp.ne.s32.totalorder %s288, %s289
      %p298 = scmp.eq.s32.totalorder %s32, 0
      %p299 = por %p297, %p298
      %p300 = scmp.ne.s32.totalorder %s288, %s289
      %p301 = scmp.eq.s32.totalorder %s33, 1
      %p302 = por %p300, %p301
      %p304 = scmp.ne.s32.totalorder %s289, %s303
      %p305 = scmp.eq.s32.totalorder %s33, 0
      %p306 = por %p304, %p305
      %s308 = sadd.s32 %s307, 1
      %p311 = scmp.eq.s32.totalorder %s27, 1
      %p312 = scmp.ne.s32.totalorder %s307, %s309
      %p313 = scmp.eq.s32.totalorder %s27, 0
      %p314 = por %p312, %p313
      %p315 = scmp.ne.s32.totalorder %s307, %s309
      %p316 = scmp.eq.s32.totalorder %s32, 1
      %p317 = por %p315, %p316
      %p318 = scmp.ne.s32.totalorder %s309, %s310
      %p319 = scmp.eq.s32.totalorder %s32, 0
      %p320 = por %p318, %p319
      %p321 = scmp.ne.s32.totalorder %s309, %s310
      %p322 = scmp.eq.s32.totalorder %s33, 1
      %p323 = por %p321, %p322
      %p325 = scmp.ne.s32.totalorder %s310, %s324
      %p326 = scmp.eq.s32.totalorder %s33, 0
      %p327 = por %p325, %p326
      %s328 = ssub.s32 %s27, 1
      %p329 = scmp.gt.s32.totalorder %s328, 0
      %s330 = scalar_select %p329, %s328, 0
      %s331 = ssub.s32 %s34, 1
      %p332 = scmp.gt.s32.totalorder %s331, 0
      %s333 = scalar_select %p332, %s331, 0
      %s334 = ssub.s32 %s330, %s333
      %p335 = scmp.eq.s32.totalorder %s334, 0
      %s337 = sadd.s32 %s336, 1
      %s338 = scalar_select %p335, %s336, %s337
      %p341 = pneg %p335
      %p342 = scmp.eq.s32.totalorder %s27, 1
      %p343 = por %p341, %p342
      %p344 = scmp.ne.s32.totalorder %s336, %s339
      %p345 = scmp.eq.s32.totalorder %s27, 0
      %p346 = por %p344, %p345
      %p347 = scmp.ne.s32.totalorder %s336, %s339
      %p348 = scmp.eq.s32.totalorder %s32, 1
      %p349 = por %p347, %p348
      %p350 = scmp.ne.s32.totalorder %s339, %s340
      %p351 = scmp.eq.s32.totalorder %s32, 0
      %p352 = por %p350, %p351
      %p353 = scmp.ne.s32.totalorder %s339, %s340
      %p354 = scmp.eq.s32.totalorder %s33, 1
      %p355 = por %p353, %p354
      %p357 = scmp.ne.s32.totalorder %s340, %s356
      %p358 = scmp.eq.s32.totalorder %s33, 0
      %p359 = por %p357, %p358
      %s361 = sadd.s32 %s360, 1
      %p364 = scmp.eq.s32.totalorder %s27, 1
      %p365 = scmp.ne.s32.totalorder %s360, %s362
      %p366 = scmp.eq.s32.totalorder %s27, 0
      %p367 = por %p365, %p366
      %p368 = scmp.ne.s32.totalorder %s360, %s362
      %p369 = scmp.eq.s32.totalorder %s32, 1
      %p370 = por %p368, %p369
      %p371 = scmp.ne.s32.totalorder %s362, %s363
      %p372 = scmp.eq.s32.totalorder %s32, 0
      %p373 = por %p371, %p372
      %p374 = scmp.ne.s32.totalorder %s362, %s363
      %p375 = scmp.eq.s32.totalorder %s33, 1
      %p376 = por %p374, %p375
      %p378 = scmp.ne.s32.totalorder %s363, %s377
      %p379 = scmp.eq.s32.totalorder %s33, 0
      %p380 = por %p378, %p379
      %s382 = sadd.s32 %s381, 1
      %p385 = scmp.eq.s32.totalorder %s27, 1
      %p386 = scmp.ne.s32.totalorder %s381, %s383
      %p387 = scmp.eq.s32.totalorder %s27, 0
      %p388 = por %p386, %p387
      %p389 = scmp.ne.s32.totalorder %s381, %s383
      %p390 = scmp.eq.s32.totalorder %s32, 1
      %p391 = por %p389, %p390
      %p392 = scmp.ne.s32.totalorder %s383, %s384
      %p393 = scmp.eq.s32.totalorder %s32, 0
      %p394 = por %p392, %p393
      %p395 = scmp.ne.s32.totalorder %s383, %s384
      %p396 = scmp.eq.s32.totalorder %s33, 1
      %p397 = por %p395, %p396
      %p399 = scmp.ne.s32.totalorder %s384, %s398
      %p400 = scmp.eq.s32.totalorder %s33, 0
      %p401 = por %p399, %p400
      %p402 = scmp.le.s32.totalorder 1, %s27
      %p403 = scmp.lt.s32.totalorder %s27, 3
      %p404 = pnand %p402, %p403
      %p405 = pneg %p404
      // Predicated region
      $region9: #{tpu_custom_call.1} parent=5 // pred_check
        _
      $region10: #{tpu_custom_call.1} parent=5 // pred_check_branch
        %407 = sbr.rel (%p404) target = $region12
      $region11: #{tpu_custom_call.1} parent=5 // pred_region
        %s408 = ssub.s32 %s27, 1
        // Predicated region
        $region13: #{tpu_custom_call.1} parent=11 // pred_check
          %p409 = pneg %p110
        $region14: #{tpu_custom_call.1} parent=11 // pred_check_branch
          %411 = sbr.rel (%p409) target = $region16
        $region15: #{tpu_custom_call.1} parent=11 // pred_region
          _
        $region16: #{tpu_custom_call.1} parent=11 // pred_fallthru
          _
        // Predicated region
        $region17: #{tpu_custom_call.1} parent=11 // pred_check
          %p412 = pneg %p131
        $region18: #{tpu_custom_call.1} parent=11 // pred_check_branch
          %414 = sbr.rel (%p412) target = $region20
        $region19: #{tpu_custom_call.1} parent=11 // pred_region
          _
        $region20: #{tpu_custom_call.1} parent=11 // pred_fallthru
          _
        // Predicated region
        $region21: #{tpu_custom_call.1} parent=11 // pred_check
          %p415 = pneg %p152
        $region22: #{tpu_custom_call.1} parent=11 // pred_check_branch
          %417 = sbr.rel (%p415) target = $region24
        $region23: #{tpu_custom_call.1} parent=11 // pred_region
          _
        $region24: #{tpu_custom_call.1} parent=11 // pred_fallthru
          _
        // Predicated region
        $region25: #{tpu_custom_call.1} parent=11 // pred_check
          %p418 = pneg %p173
        $region26: #{tpu_custom_call.1} parent=11 // pred_check_branch
          %420 = sbr.rel (%p418) target = $region28
        $region27: #{tpu_custom_call.1} parent=11 // pred_region
          _
        $region28: #{tpu_custom_call.1} parent=11 // pred_fallthru
          _
        // Predicated region
        $region29: #{tpu_custom_call.1} parent=11 // pred_check
          %p421 = pneg %p194
        $region30: #{tpu_custom_call.1} parent=11 // pred_check_branch
          %423 = sbr.rel (%p421) target = $region32
        $region31: #{tpu_custom_call.1} parent=11 // pred_region
          _
        $region32: #{tpu_custom_call.1} parent=11 // pred_fallthru
          _
        // Predicated region
        $region33: #{tpu_custom_call.1} parent=11 // pred_check
          %p424 = pneg %p215
        $region34: #{tpu_custom_call.1} parent=11 // pred_check_branch
          %426 = sbr.rel (%p424) target = $region36
        $region35: #{tpu_custom_call.1} parent=11 // pred_region
          _
        $region36: #{tpu_custom_call.1} parent=11 // pred_fallthru
          _
        // Predicated region
        $region37: #{tpu_custom_call.1} parent=11 // pred_check
          %p427 = pneg %p236
        $region38: #{tpu_custom_call.1} parent=11 // pred_check_branch
          %429 = sbr.rel (%p427) target = $region40
        $region39: #{tpu_custom_call.1} parent=11 // pred_region
          _
        $region40: #{tpu_custom_call.1} parent=11 // pred_fallthru
          _
        // Predicated region
        $region41: #{tpu_custom_call.1} parent=11 // pred_check
          %p430 = pneg %p257
        $region42: #{tpu_custom_call.1} parent=11 // pred_check_branch
          %432 = sbr.rel (%p430) target = $region44
        $region43: #{tpu_custom_call.1} parent=11 // pred_region
          _
        $region44: #{tpu_custom_call.1} parent=11 // pred_fallthru
          _
        // Predicated region
        $region45: #{tpu_custom_call.1} parent=11 // pred_check
          %p433 = pneg %p278
        $region46: #{tpu_custom_call.1} parent=11 // pred_check_branch
          %435 = sbr.rel (%p433) target = $region48
        $region47: #{tpu_custom_call.1} parent=11 // pred_region
          _
        $region48: #{tpu_custom_call.1} parent=11 // pred_fallthru
          _
        // Predicated region
        $region49: #{tpu_custom_call.1} parent=11 // pred_check
          %p436 = pneg %p299
        $region50: #{tpu_custom_call.1} parent=11 // pred_check_branch
          %438 = sbr.rel (%p436) target = $region52
        $region51: #{tpu_custom_call.1} parent=11 // pred_region
          _
        $region52: #{tpu_custom_call.1} parent=11 // pred_fallthru
          _
      $region12: #{tpu_custom_call.1} parent=5 // pred_fallthru
        _
      %p439 = scmp.lt.s32.totalorder %s27, 2
      // Predicated region
      $region53: #{tpu_custom_call.1} parent=5 // pred_check
        %p440 = pneg %p439
      $region54: #{tpu_custom_call.1} parent=5 // pred_check_branch
        %442 = sbr.rel (%p440) target = $region56
      $region55: #{tpu_custom_call.1} parent=5 // pred_region
        // Predicated region
        $region57: #{tpu_custom_call.1} parent=55 // pred_check
          %p443 = pneg %p51
        $region58: #{tpu_custom_call.1} parent=55 // pred_check_branch
          %445 = sbr.rel (%p443) target = $region60
        $region59: #{tpu_custom_call.1} parent=55 // pred_region
          %p446 = scmp.lt.s32.totalorder %s27, 0
          %s447 = scalar_select %p446, %s27, 0
          %s448 = smul.u32 64, %s447
          %p449 = scmp.lt.s32.totalorder %s448, 63
          %s450 = scalar_select %p449, %s448, 63
          %s451 = smul.addr %s450, 8
          %s452 = scalar_lea.vmem %s0, %s451
          %p453 = scmp.lt.s32.totalorder %s27, 0
          %s454 = scalar_select %p453, %s27, 0
          %s455 = smul.u32 64, %s454
        $region60: #{tpu_custom_call.1} parent=55 // pred_fallthru
          _
        // Predicated region
        $region61: #{tpu_custom_call.1} parent=55 // pred_check
          %p456 = pneg %p83
        $region62: #{tpu_custom_call.1} parent=55 // pred_check_branch
          %458 = sbr.rel (%p456) target = $region64
        $region63: #{tpu_custom_call.1} parent=55 // pred_region
          %s459 = ssub.s32 %s27, 1
          %p460 = scmp.gt.s32.totalorder %s459, 0
          %s461 = scalar_select %p460, %s459, 0
          %s462 = smul.u32 64, %s461
          %p463 = scmp.lt.s32.totalorder %s462, 63
          %s464 = scalar_select %p463, %s462, 63
          %s465 = smul.addr %s464, 8
          %s466 = scalar_lea.vmem %s1, %s465
          %s467 = ssub.s32 %s27, 1
          %p468 = scmp.gt.s32.totalorder %s467, 0
          %s469 = scalar_select %p468, %s467, 0
          %s470 = smul.u32 64, %s469
        $region64: #{tpu_custom_call.1} parent=55 // pred_fallthru
          _
      $region56: #{tpu_custom_call.1} parent=5 // pred_fallthru
        _
      %p471 = scmp.le.s32.totalorder 1, %s27
      %p472 = scmp.lt.s32.totalorder %s27, 3
      %p473 = pnand %p471, %p472
      %p474 = pneg %p473
      // Predicated region
      $region65: #{tpu_custom_call.1} parent=5 // pred_check
        _
      $region66: #{tpu_custom_call.1} parent=5 // pred_check_branch
        %476 = sbr.rel (%p473) target = $region68
      $region67: #{tpu_custom_call.1} parent=5 // pred_region
        %s477 = ssub.s32 %s27, 1
        %p478 = scmp.lt.s32.totalorder %s32, 0
        %s479 = scalar_select %p478, %s32, 0
        %s480 = smul.u32 64, %s479
        %p481 = scmp.lt.s32.totalorder %s480, 63
        %s482 = scalar_select %p481, %s480, 63
        %s483 = smul.addr %s482, 8
        %s484 = scalar_lea.vmem %s0, %s483
        %p485 = pneg %p57
        %p486 = pneg %p54
        %s487 = ssub.s32 %s32, 1
        %p488 = scmp.gt.s32.totalorder %s487, 0
        %s489 = scalar_select %p488, %s487, 0
        %s490 = smul.u32 64, %s489
        %p491 = scmp.lt.s32.totalorder %s490, 63
        %s492 = scalar_select %p491, %s490, 63
        %s493 = smul.addr %s492, 8
        %s494 = scalar_lea.vmem %s1, %s493
        %p495 = pneg %p89
        %p496 = pneg %p86
        %p497 = pneg %p110
        %p498 = pneg %p107
        %p499 = pneg %p131
        %p500 = pneg %p128
        %p501 = pneg %p152
        %p502 = pneg %p149
        %p503 = pneg %p173
        %p504 = pneg %p170
        %p505 = pneg %p194
        %p506 = pneg %p191
        %p507 = pneg %p215
        %p508 = pneg %p212
        %p509 = pneg %p236
        %p510 = pneg %p233
        %p511 = pneg %p257
        %p512 = pneg %p254
        %p513 = pneg %p278
        %p514 = pneg %p275
        %p515 = pneg %p299
        %p516 = pneg %p296
        %p517 = pneg %p320
        %p518 = pneg %p317
        %p519 = pneg %p352
        %p520 = pneg %p349
        %s521 = sand.u32 %s32, 1
        %s522 = scalar_lea.sflag [#allocation6], %s521
        %s523 = sand.u32 %s339, 1
        %s524 = smul.addr %s523, 32
        %s525 = scalar_lea.vmem [#allocation5], %s524
        %p526 = pneg %p373
        %p527 = pneg %p370
        %p528 = pneg %p394
        %p529 = pneg %p391
        %p530 = scmp.lt.s32.totalorder %s32, 0
        %s531 = scalar_select %p530, %s32, 0
        %s532 = smul.u32 64, %s531
        %p533 = scmp.lt.s32.totalorder %s532, 63
        %s534 = scalar_select %p533, %s532, 63
        %s535 = smul.addr %s534, 8
        %s536 = scalar_lea.vmem %s0, %s535
        %p537 = scmp.lt.s32.totalorder %s32, 0
        %s538 = scalar_select %p537, %s32, 0
        %s539 = smul.u32 64, %s538
        %s540 = ssub.s32 %s32, 1
        %p541 = scmp.gt.s32.totalorder %s540, 0
        %s542 = scalar_select %p541, %s540, 0
        %s543 = smul.u32 64, %s542
        %p544 = scmp.lt.s32.totalorder %s543, 63
        %s545 = scalar_select %p544, %s543, 63
        %s546 = smul.addr %s545, 8
        %s547 = scalar_lea.vmem %s1, %s546
        %s548 = ssub.s32 %s32, 1
        %p549 = scmp.gt.s32.totalorder %s548, 0
        %s550 = scalar_select %p549, %s548, 0
        %s551 = smul.u32 64, %s550
        %s552 = ssub.s32 %s32, 1
        %p553 = scmp.gt.s32.totalorder %s552, 0
        %s554 = scalar_select %p553, %s552, 0
        %s555 = smul.u32 4, %s554
        %p557 = scmp.eq.s32.totalorder %s32, 0
        // Predicated region
        $region69: #{tpu_custom_call.1} parent=67 // pred_check
          %p558 = pneg %p557
        $region70: #{tpu_custom_call.1} parent=67 // pred_check_branch
          %560 = sbr.rel (%p558) target = $region72
        $region71: #{tpu_custom_call.1} parent=67 // pred_region
          %vm561 = vcmask 64512
          %562 = vst.msk [vmem:[#allocation3] sm:$0xff] %vm561, 0.0
          %vm563 = vcmask 523264
          %564 = vst.msk [vmem:[#allocation2] sm:$0xff] %vm563, 0.0
        $region72: #{tpu_custom_call.1} parent=67 // pred_fallthru
          _
        %p565 = scmp.lt.s32.totalorder %s32, 1
        // Predicated region
        $region73: #{tpu_custom_call.1} parent=67 // pred_check
          %p566 = pneg %p565
        $region74: #{tpu_custom_call.1} parent=67 // pred_check_branch
          %568 = sbr.rel (%p566) target = $region76
        $region75: #{tpu_custom_call.1} parent=67 // pred_region
          %v569 = vld [vmem:[%s536] sm:$0xff]
          %v570 = vld [vmem:[%s536 + $0x8] sm:$0xff]
          %v571 = vld [vmem:[%s536 + $0x10] sm:$0xff]
          %v572 = vld [vmem:[%s536 + $0x18] sm:$0xff]
          %v573 = vld [vmem:[%s536 + $0x20] sm:$0xff]
          %v574 = vld [vmem:[%s536 + $0x28] sm:$0xff]
          %v575 = vld [vmem:[%s536 + $0x30] sm:$0xff]
          %v576 = vld [vmem:[%s536 + $0x38] sm:$0xff]
          %v577 = vld [vmem:[%s536 + $0x40] sm:$0xff]
          %v578 = vld [vmem:[%s536 + $0x48] sm:$0xff]
          %v579 = vld [vmem:[%s536 + $0x50] sm:$0xff]
          %v580 = vld [vmem:[%s536 + $0x58] sm:$0xff]
          %v581 = vld [vmem:[%s536 + $0x60] sm:$0xff]
          %v582 = vld [vmem:[%s536 + $0x68] sm:$0xff]
          %v583 = vld [vmem:[%s536 + $0x70] sm:$0xff]
          %v584 = vld [vmem:[%s536 + $0x78] sm:$0xff]
          %v585 = vld [vmem:[%s536 + $0x80] sm:$0xff]
          %v586 = vld [vmem:[%s536 + $0x88] sm:$0xff]
          %v587 = vld [vmem:[%s536 + $0x90] sm:$0xff]
          %v588 = vld [vmem:[%s536 + $0x98] sm:$0xff]
          %v589 = vld [vmem:[%s536 + $0xa0] sm:$0xff]
          %v590 = vld [vmem:[%s536 + $0xa8] sm:$0xff]
          %v591 = vld [vmem:[%s536 + $0xb0] sm:$0xff]
          %v592 = vld [vmem:[%s536 + $0xb8] sm:$0xff]
          %v593 = vld [vmem:[%s536 + $0xc0] sm:$0xff]
          %v594 = vld [vmem:[%s536 + $0xc8] sm:$0xff]
          %v595 = vld [vmem:[%s536 + $0xd0] sm:$0xff]
          %v596 = vld [vmem:[%s536 + $0xd8] sm:$0xff]
          %v597 = vld [vmem:[%s536 + $0xe0] sm:$0xff]
          %v598 = vld [vmem:[%s536 + $0xe8] sm:$0xff]
          %v599 = vld [vmem:[%s536 + $0xf0] sm:$0xff]
          %v600 = vld [vmem:[%s536 + $0xf8] sm:$0xff]
          %v601 = vld [vmem:[%s536 + $0x100] sm:$0xff]
          %v602 = vld [vmem:[%s536 + $0x108] sm:$0xff]
          %v603 = vld [vmem:[%s536 + $0x110] sm:$0xff]
          %v604 = vld [vmem:[%s536 + $0x118] sm:$0xff]
          %v605 = vld [vmem:[%s536 + $0x120] sm:$0xff]
          %v606 = vld [vmem:[%s536 + $0x128] sm:$0xff]
          %v607 = vld [vmem:[%s536 + $0x130] sm:$0xff]
          %v608 = vld [vmem:[%s536 + $0x138] sm:$0xff]
          %v609 = vld [vmem:[%s536 + $0x140] sm:$0xff]
          %v610 = vld [vmem:[%s536 + $0x148] sm:$0xff]
          %v611 = vld [vmem:[%s536 + $0x150] sm:$0xff]
          %v612 = vld [vmem:[%s536 + $0x158] sm:$0xff]
          %v613 = vld [vmem:[%s536 + $0x160] sm:$0xff]
          %v614 = vld [vmem:[%s536 + $0x168] sm:$0xff]
          %v615 = vld [vmem:[%s536 + $0x170] sm:$0xff]
          %v616 = vld [vmem:[%s536 + $0x178] sm:$0xff]
          %v617 = vld [vmem:[%s536 + $0x180] sm:$0xff]
          %v618 = vld [vmem:[%s536 + $0x188] sm:$0xff]
          %v619 = vld [vmem:[%s536 + $0x190] sm:$0xff]
          %v620 = vld [vmem:[%s536 + $0x198] sm:$0xff]
          %v621 = vld [vmem:[%s536 + $0x1a0] sm:$0xff]
          %v622 = vld [vmem:[%s536 + $0x1a8] sm:$0xff]
          %v623 = vld [vmem:[%s536 + $0x1b0] sm:$0xff]
          %v624 = vld [vmem:[%s536 + $0x1b8] sm:$0xff]
          %v625 = vld [vmem:[%s536 + $0x1c0] sm:$0xff]
          %v626 = vld [vmem:[%s536 + $0x1c8] sm:$0xff]
          %v627 = vld [vmem:[%s536 + $0x1d0] sm:$0xff]
          %v628 = vld [vmem:[%s536 + $0x1d8] sm:$0xff]
          %v629 = vld [vmem:[%s536 + $0x1e0] sm:$0xff]
          %v630 = vld [vmem:[%s536 + $0x1e8] sm:$0xff]
          %v631 = vld [vmem:[%s536 + $0x1f0] sm:$0xff]
          %v632 = vld [vmem:[%s536 + $0x1f8] sm:$0xff]
          %v633 = vcvt.f32.s32.to.zero.pseudo %v569
          %v634 = vcvt.f32.s32.to.zero.pseudo %v570
          %v635 = vcvt.f32.s32.to.zero.pseudo %v571
          %v636 = vcvt.f32.s32.to.zero.pseudo %v572
          %v637 = vcvt.f32.s32.to.zero.pseudo %v573
          %v638 = vcvt.f32.s32.to.zero.pseudo %v574
          %v639 = vcvt.f32.s32.to.zero.pseudo %v575
          %v640 = vcvt.f32.s32.to.zero.pseudo %v576
          %v641 = vcvt.f32.s32.to.zero.pseudo %v577
          %v642 = vcvt.f32.s32.to.zero.pseudo %v578
          %v643 = vcvt.f32.s32.to.zero.pseudo %v579
          %v644 = vcvt.f32.s32.to.zero.pseudo %v580
          %v645 = vcvt.f32.s32.to.zero.pseudo %v581
          %v646 = vcvt.f32.s32.to.zero.pseudo %v582
          %v647 = vcvt.f32.s32.to.zero.pseudo %v583
          %v648 = vcvt.f32.s32.to.zero.pseudo %v584
          %v649 = vcvt.f32.s32.to.zero.pseudo %v585
          %v650 = vcvt.f32.s32.to.zero.pseudo %v586
          %v651 = vcvt.f32.s32.to.zero.pseudo %v587
          %v652 = vcvt.f32.s32.to.zero.pseudo %v588
          %v653 = vcvt.f32.s32.to.zero.pseudo %v589
          %v654 = vcvt.f32.s32.to.zero.pseudo %v590
          %v655 = vcvt.f32.s32.to.zero.pseudo %v591
          %v656 = vcvt.f32.s32.to.zero.pseudo %v592
          %v657 = vcvt.f32.s32.to.zero.pseudo %v593
          %v658 = vcvt.f32.s32.to.zero.pseudo %v594
          %v659 = vcvt.f32.s32.to.zero.pseudo %v595
          %v660 = vcvt.f32.s32.to.zero.pseudo %v596
          %v661 = vcvt.f32.s32.to.zero.pseudo %v597
          %v662 = vcvt.f32.s32.to.zero.pseudo %v598
          %v663 = vcvt.f32.s32.to.zero.pseudo %v599
          %v664 = vcvt.f32.s32.to.zero.pseudo %v600
          %v665 = vcvt.f32.s32.to.zero.pseudo %v601
          %v666 = vcvt.f32.s32.to.zero.pseudo %v602
          %v667 = vcvt.f32.s32.to.zero.pseudo %v603
          %v668 = vcvt.f32.s32.to.zero.pseudo %v604
          %v669 = vcvt.f32.s32.to.zero.pseudo %v605
          %v670 = vcvt.f32.s32.to.zero.pseudo %v606
          %v671 = vcvt.f32.s32.to.zero.pseudo %v607
          %v672 = vcvt.f32.s32.to.zero.pseudo %v608
          %v673 = vcvt.f32.s32.to.zero.pseudo %v609
          %v674 = vcvt.f32.s32.to.zero.pseudo %v610
          %v675 = vcvt.f32.s32.to.zero.pseudo %v611
          %v676 = vcvt.f32.s32.to.zero.pseudo %v612
          %v677 = vcvt.f32.s32.to.zero.pseudo %v613
          %v678 = vcvt.f32.s32.to.zero.pseudo %v614
          %v679 = vcvt.f32.s32.to.zero.pseudo %v615
          %v680 = vcvt.f32.s32.to.zero.pseudo %v616
          %v681 = vcvt.f32.s32.to.zero.pseudo %v617
          %v682 = vcvt.f32.s32.to.zero.pseudo %v618
          %v683 = vcvt.f32.s32.to.zero.pseudo %v619
          %v684 = vcvt.f32.s32.to.zero.pseudo %v620
          %v685 = vcvt.f32.s32.to.zero.pseudo %v621
          %v686 = vcvt.f32.s32.to.zero.pseudo %v622
          %v687 = vcvt.f32.s32.to.zero.pseudo %v623
          %v688 = vcvt.f32.s32.to.zero.pseudo %v624
          %v689 = vcvt.f32.s32.to.zero.pseudo %v625
          %v690 = vcvt.f32.s32.to.zero.pseudo %v626
          %v691 = vcvt.f32.s32.to.zero.pseudo %v627
          %v692 = vcvt.f32.s32.to.zero.pseudo %v628
          %v693 = vcvt.f32.s32.to.zero.pseudo %v629
          %v694 = vcvt.f32.s32.to.zero.pseudo %v630
          %v695 = vcvt.f32.s32.to.zero.pseudo %v631
          %v696 = vcvt.f32.s32.to.zero.pseudo %v632
          %v697 = vlaneseq
          %v698 = vand.u32 %v697, 127
          %699 = vset.pattern.permute.xlu0 5
          %700 = vperm.xlu0 %699, %v633
          %v701 = vpop.permute.xlu0 %700
          %702 = vset.pattern.permute.xlu0 5
          %703 = vperm.xlu0 %702, %v634
          %v704 = vpop.permute.xlu0 %703
          %705 = vset.pattern.permute.xlu0 5
          %706 = vperm.xlu0 %705, %v635
          %v707 = vpop.permute.xlu0 %706
          %708 = vset.pattern.permute.xlu0 5
          %709 = vperm.xlu0 %708, %v636
          %v710 = vpop.permute.xlu0 %709
          %711 = vset.pattern.permute.xlu0 5
          %712 = vperm.xlu0 %711, %v637
          %v713 = vpop.permute.xlu0 %712
          %714 = vset.pattern.permute.xlu0 5
          %715 = vperm.xlu0 %714, %v638
          %v716 = vpop.permute.xlu0 %715
          %717 = vset.pattern.permute.xlu0 5
          %718 = vperm.xlu0 %717, %v639
          %v719 = vpop.permute.xlu0 %718
          %720 = vset.pattern.permute.xlu0 5
          %721 = vperm.xlu0 %720, %v640
          %v722 = vpop.permute.xlu0 %721
          %723 = vset.pattern.permute.xlu0 5
          %724 = vperm.xlu0 %723, %v641
          %v725 = vpop.permute.xlu0 %724
          %726 = vset.pattern.permute.xlu0 5
          %727 = vperm.xlu0 %726, %v642
          %v728 = vpop.permute.xlu0 %727
          %729 = vset.pattern.permute.xlu0 5
          %730 = vperm.xlu0 %729, %v643
          %v731 = vpop.permute.xlu0 %730
          %732 = vset.pattern.permute.xlu0 5
          %733 = vperm.xlu0 %732, %v644
          %v734 = vpop.permute.xlu0 %733
          %735 = vset.pattern.permute.xlu0 5
          %736 = vperm.xlu0 %735, %v645
          %v737 = vpop.permute.xlu0 %736
          %738 = vset.pattern.permute.xlu0 5
          %739 = vperm.xlu0 %738, %v646
          %v740 = vpop.permute.xlu0 %739
          %741 = vset.pattern.permute.xlu0 5
          %742 = vperm.xlu0 %741, %v647
          %v743 = vpop.permute.xlu0 %742
          %744 = vset.pattern.permute.xlu0 5
          %745 = vperm.xlu0 %744, %v648
          %v746 = vpop.permute.xlu0 %745
          %747 = vset.pattern.permute.xlu0 5
          %748 = vperm.xlu0 %747, %v649
          %v749 = vpop.permute.xlu0 %748
          %750 = vset.pattern.permute.xlu0 5
          %751 = vperm.xlu0 %750, %v650
          %v752 = vpop.permute.xlu0 %751
          %753 = vset.pattern.permute.xlu0 5
          %754 = vperm.xlu0 %753, %v651
          %v755 = vpop.permute.xlu0 %754
          %756 = vset.pattern.permute.xlu0 5
          %757 = vperm.xlu0 %756, %v652
          %v758 = vpop.permute.xlu0 %757
          %759 = vset.pattern.permute.xlu0 5
          %760 = vperm.xlu0 %759, %v653
          %v761 = vpop.permute.xlu0 %760
          %762 = vset.pattern.permute.xlu0 5
          %763 = vperm.xlu0 %762, %v654
          %v764 = vpop.permute.xlu0 %763
          %765 = vset.pattern.permute.xlu0 5
          %766 = vperm.xlu0 %765, %v655
          %v767 = vpop.permute.xlu0 %766
          %768 = vset.pattern.permute.xlu0 5
          %769 = vperm.xlu0 %768, %v656
          %v770 = vpop.permute.xlu0 %769
          %771 = vset.pattern.permute.xlu0 5
          %772 = vperm.xlu0 %771, %v657
          %v773 = vpop.permute.xlu0 %772
          %774 = vset.pattern.permute.xlu0 5
          %775 = vperm.xlu0 %774, %v658
          %v776 = vpop.permute.xlu0 %775
          %777 = vset.pattern.permute.xlu0 5
          %778 = vperm.xlu0 %777, %v659
          %v779 = vpop.permute.xlu0 %778
          %780 = vset.pattern.permute.xlu0 5
          %781 = vperm.xlu0 %780, %v660
          %v782 = vpop.permute.xlu0 %781
          %783 = vset.pattern.permute.xlu0 5
          %784 = vperm.xlu0 %783, %v661
          %v785 = vpop.permute.xlu0 %784
          %786 = vset.pattern.permute.xlu0 5
          %787 = vperm.xlu0 %786, %v662
          %v788 = vpop.permute.xlu0 %787
          %789 = vset.pattern.permute.xlu0 5
          %790 = vperm.xlu0 %789, %v663
          %v791 = vpop.permute.xlu0 %790
          %792 = vset.pattern.permute.xlu0 5
          %793 = vperm.xlu0 %792, %v664
          %v794 = vpop.permute.xlu0 %793
          %795 = vset.pattern.permute.xlu0 5
          %796 = vperm.xlu0 %795, %v665
          %v797 = vpop.permute.xlu0 %796
          %798 = vset.pattern.permute.xlu0 5
          %799 = vperm.xlu0 %798, %v666
          %v800 = vpop.permute.xlu0 %799
          %801 = vset.pattern.permute.xlu0 5
          %802 = vperm.xlu0 %801, %v667
          %v803 = vpop.permute.xlu0 %802
          %804 = vset.pattern.permute.xlu0 5
          %805 = vperm.xlu0 %804, %v668
          %v806 = vpop.permute.xlu0 %805
          %807 = vset.pattern.permute.xlu0 5
          %808 = vperm.xlu0 %807, %v669
          %v809 = vpop.permute.xlu0 %808
          %810 = vset.pattern.permute.xlu0 5
          %811 = vperm.xlu0 %810, %v670
          %v812 = vpop.permute.xlu0 %811
          %813 = vset.pattern.permute.xlu0 5
          %814 = vperm.xlu0 %813, %v671
          %v815 = vpop.permute.xlu0 %814
          %816 = vset.pattern.permute.xlu0 5
          %817 = vperm.xlu0 %816, %v672
          %v818 = vpop.permute.xlu0 %817
          %819 = vset.pattern.permute.xlu0 5
          %820 = vperm.xlu0 %819, %v673
          %v821 = vpop.permute.xlu0 %820
          %822 = vset.pattern.permute.xlu0 5
          %823 = vperm.xlu0 %822, %v674
          %v824 = vpop.permute.xlu0 %823
          %825 = vset.pattern.permute.xlu0 5
          %826 = vperm.xlu0 %825, %v675
          %v827 = vpop.permute.xlu0 %826
          %828 = vset.pattern.permute.xlu0 5
          %829 = vperm.xlu0 %828, %v676
          %v830 = vpop.permute.xlu0 %829
          %831 = vset.pattern.permute.xlu0 5
          %832 = vperm.xlu0 %831, %v677
          %v833 = vpop.permute.xlu0 %832
          %834 = vset.pattern.permute.xlu0 5
          %835 = vperm.xlu0 %834, %v678
          %v836 = vpop.permute.xlu0 %835
          %837 = vset.pattern.permute.xlu0 5
          %838 = vperm.xlu0 %837, %v679
          %v839 = vpop.permute.xlu0 %838
          %840 = vset.pattern.permute.xlu0 5
          %841 = vperm.xlu0 %840, %v680
          %v842 = vpop.permute.xlu0 %841
          %843 = vset.pattern.permute.xlu0 5
          %844 = vperm.xlu0 %843, %v681
          %v845 = vpop.permute.xlu0 %844
          %846 = vset.pattern.permute.xlu0 5
          %847 = vperm.xlu0 %846, %v682
          %v848 = vpop.permute.xlu0 %847
          %849 = vset.pattern.permute.xlu0 5
          %850 = vperm.xlu0 %849, %v683
          %v851 = vpop.permute.xlu0 %850
          %852 = vset.pattern.permute.xlu0 5
          %853 = vperm.xlu0 %852, %v684
          %v854 = vpop.permute.xlu0 %853
          %855 = vset.pattern.permute.xlu0 5
          %856 = vperm.xlu0 %855, %v685
          %v857 = vpop.permute.xlu0 %856
          %858 = vset.pattern.permute.xlu0 5
          %859 = vperm.xlu0 %858, %v686
          %v860 = vpop.permute.xlu0 %859
          %861 = vset.pattern.permute.xlu0 5
          %862 = vperm.xlu0 %861, %v687
          %v863 = vpop.permute.xlu0 %862
          %864 = vset.pattern.permute.xlu0 5
          %865 = vperm.xlu0 %864, %v688
          %v866 = vpop.permute.xlu0 %865
          %867 = vset.pattern.permute.xlu0 5
          %868 = vperm.xlu0 %867, %v689
          %v869 = vpop.permute.xlu0 %868
          %870 = vset.pattern.permute.xlu0 5
          %871 = vperm.xlu0 %870, %v690
          %v872 = vpop.permute.xlu0 %871
          %873 = vset.pattern.permute.xlu0 5
          %874 = vperm.xlu0 %873, %v691
          %v875 = vpop.permute.xlu0 %874
          %876 = vset.pattern.permute.xlu0 5
          %877 = vperm.xlu0 %876, %v692
          %v878 = vpop.permute.xlu0 %877
          %879 = vset.pattern.permute.xlu0 5
          %880 = vperm.xlu0 %879, %v693
          %v881 = vpop.permute.xlu0 %880
          %882 = vset.pattern.permute.xlu0 5
          %883 = vperm.xlu0 %882, %v694
          %v884 = vpop.permute.xlu0 %883
          %885 = vset.pattern.permute.xlu0 5
          %886 = vperm.xlu0 %885, %v695
          %v887 = vpop.permute.xlu0 %886
          %888 = vset.pattern.permute.xlu0 5
          %889 = vperm.xlu0 %888, %v696
          %v890 = vpop.permute.xlu0 %889
          %vm891 = vcmp.eq.s32.totalorder %v698, %v701
          %vm892 = vcmp.eq.s32.totalorder %v698, %v704
          %vm893 = vcmp.eq.s32.totalorder %v698, %v707
          %vm894 = vcmp.eq.s32.totalorder %v698, %v710
          %vm895 = vcmp.eq.s32.totalorder %v698, %v713
          %vm896 = vcmp.eq.s32.totalorder %v698, %v716
          %vm897 = vcmp.eq.s32.totalorder %v698, %v719
          %vm898 = vcmp.eq.s32.totalorder %v698, %v722
          %vm899 = vcmp.eq.s32.totalorder %v698, %v725
          %vm900 = vcmp.eq.s32.totalorder %v698, %v728
          %vm901 = vcmp.eq.s32.totalorder %v698, %v731
          %vm902 = vcmp.eq.s32.totalorder %v698, %v734
          %vm903 = vcmp.eq.s32.totalorder %v698, %v737
          %vm904 = vcmp.eq.s32.totalorder %v698, %v740
          %vm905 = vcmp.eq.s32.totalorder %v698, %v743
          %vm906 = vcmp.eq.s32.totalorder %v698, %v746
          %vm907 = vcmp.eq.s32.totalorder %v698, %v749
          %vm908 = vcmp.eq.s32.totalorder %v698, %v752
          %vm909 = vcmp.eq.s32.totalorder %v698, %v755
          %vm910 = vcmp.eq.s32.totalorder %v698, %v758
          %vm911 = vcmp.eq.s32.totalorder %v698, %v761
          %vm912 = vcmp.eq.s32.totalorder %v698, %v764
          %vm913 = vcmp.eq.s32.totalorder %v698, %v767
          %vm914 = vcmp.eq.s32.totalorder %v698, %v770
          %vm915 = vcmp.eq.s32.totalorder %v698, %v773
          %vm916 = vcmp.eq.s32.totalorder %v698, %v776
          %vm917 = vcmp.eq.s32.totalorder %v698, %v779
          %vm918 = vcmp.eq.s32.totalorder %v698, %v782
          %vm919 = vcmp.eq.s32.totalorder %v698, %v785
          %vm920 = vcmp.eq.s32.totalorder %v698, %v788
          %vm921 = vcmp.eq.s32.totalorder %v698, %v791
          %vm922 = vcmp.eq.s32.totalorder %v698, %v794
          %vm923 = vcmp.eq.s32.totalorder %v698, %v797
          %vm924 = vcmp.eq.s32.totalorder %v698, %v800
          %vm925 = vcmp.eq.s32.totalorder %v698, %v803
          %vm926 = vcmp.eq.s32.totalorder %v698, %v806
          %vm927 = vcmp.eq.s32.totalorder %v698, %v809
          %vm928 = vcmp.eq.s32.totalorder %v698, %v812
          %vm929 = vcmp.eq.s32.totalorder %v698, %v815
          %vm930 = vcmp.eq.s32.totalorder %v698, %v818
          %vm931 = vcmp.eq.s32.totalorder %v698, %v821
          %vm932 = vcmp.eq.s32.totalorder %v698, %v824
          %vm933 = vcmp.eq.s32.totalorder %v698, %v827
          %vm934 = vcmp.eq.s32.totalorder %v698, %v830
          %vm935 = vcmp.eq.s32.totalorder %v698, %v833
          %vm936 = vcmp.eq.s32.totalorder %v698, %v836
          %vm937 = vcmp.eq.s32.totalorder %v698, %v839
          %vm938 = vcmp.eq.s32.totalorder %v698, %v842
          %vm939 = vcmp.eq.s32.totalorder %v698, %v845
          %vm940 = vcmp.eq.s32.totalorder %v698, %v848
          %vm941 = vcmp.eq.s32.totalorder %v698, %v851
          %vm942 = vcmp.eq.s32.totalorder %v698, %v854
          %vm943 = vcmp.eq.s32.totalorder %v698, %v857
          %vm944 = vcmp.eq.s32.totalorder %v698, %v860
          %vm945 = vcmp.eq.s32.totalorder %v698, %v863
          %vm946 = vcmp.eq.s32.totalorder %v698, %v866
          %vm947 = vcmp.eq.s32.totalorder %v698, %v869
          %vm948 = vcmp.eq.s32.totalorder %v698, %v872
          %vm949 = vcmp.eq.s32.totalorder %v698, %v875
          %vm950 = vcmp.eq.s32.totalorder %v698, %v878
          %vm951 = vcmp.eq.s32.totalorder %v698, %v881
          %vm952 = vcmp.eq.s32.totalorder %v698, %v884
          %vm953 = vcmp.eq.s32.totalorder %v698, %v887
          %vm954 = vcmp.eq.s32.totalorder %v698, %v890
          %v955 = vsel %vm891, 1, 0
          %v956 = vsel %vm892, 1, 0
          %v957 = vsel %vm893, 1, 0
          %v958 = vsel %vm894, 1, 0
          %v959 = vsel %vm895, 1, 0
          %v960 = vsel %vm896, 1, 0
          %v961 = vsel %vm897, 1, 0
          %v962 = vsel %vm898, 1, 0
          %v963 = vsel %vm899, 1, 0
          %v964 = vsel %vm900, 1, 0
          %v965 = vsel %vm901, 1, 0
          %v966 = vsel %vm902, 1, 0
          %v967 = vsel %vm903, 1, 0
          %v968 = vsel %vm904, 1, 0
          %v969 = vsel %vm905, 1, 0
          %v970 = vsel %vm906, 1, 0
          %v971 = vsel %vm907, 1, 0
          %v972 = vsel %vm908, 1, 0
          %v973 = vsel %vm909, 1, 0
          %v974 = vsel %vm910, 1, 0
          %v975 = vsel %vm911, 1, 0
          %v976 = vsel %vm912, 1, 0
          %v977 = vsel %vm913, 1, 0
          %v978 = vsel %vm914, 1, 0
          %v979 = vsel %vm915, 1, 0
          %v980 = vsel %vm916, 1, 0
          %v981 = vsel %vm917, 1, 0
          %v982 = vsel %vm918, 1, 0
          %v983 = vsel %vm919, 1, 0
          %v984 = vsel %vm920, 1, 0
          %v985 = vsel %vm921, 1, 0
          %v986 = vsel %vm922, 1, 0
          %v987 = vsel %vm923, 1, 0
          %v988 = vsel %vm924, 1, 0
          %v989 = vsel %vm925, 1, 0
          %v990 = vsel %vm926, 1, 0
          %v991 = vsel %vm927, 1, 0
          %v992 = vsel %vm928, 1, 0
          %v993 = vsel %vm929, 1, 0
          %v994 = vsel %vm930, 1, 0
          %v995 = vsel %vm931, 1, 0
          %v996 = vsel %vm932, 1, 0
          %v997 = vsel %vm933, 1, 0
          %v998 = vsel %vm934, 1, 0
          %v999 = vsel %vm935, 1, 0
          %v1000 = vsel %vm936, 1, 0
          %v1001 = vsel %vm937, 1, 0
          %v1002 = vsel %vm938, 1, 0
          %v1003 = vsel %vm939, 1, 0
          %v1004 = vsel %vm940, 1, 0
          %v1005 = vsel %vm941, 1, 0
          %v1006 = vsel %vm942, 1, 0
          %v1007 = vsel %vm943, 1, 0
          %v1008 = vsel %vm944, 1, 0
          %v1009 = vsel %vm945, 1, 0
          %v1010 = vsel %vm946, 1, 0
          %v1011 = vsel %vm947, 1, 0
          %v1012 = vsel %vm948, 1, 0
          %v1013 = vsel %vm949, 1, 0
          %v1014 = vsel %vm950, 1, 0
          %v1015 = vsel %vm951, 1, 0
          %v1016 = vsel %vm952, 1, 0
          %v1017 = vsel %vm953, 1, 0
          %v1018 = vsel %vm954, 1, 0
          %v1019 = vcvt.s32.f32 %v955
          %v1020 = vcvt.s32.f32 %v956
          %v1021 = vcvt.s32.f32 %v957
          %v1022 = vcvt.s32.f32 %v958
          %v1023 = vcvt.s32.f32 %v959
          %v1024 = vcvt.s32.f32 %v960
          %v1025 = vcvt.s32.f32 %v961
          %v1026 = vcvt.s32.f32 %v962
          %v1027 = vcvt.s32.f32 %v963
          %v1028 = vcvt.s32.f32 %v964
          %v1029 = vcvt.s32.f32 %v965
          %v1030 = vcvt.s32.f32 %v966
          %v1031 = vcvt.s32.f32 %v967
          %v1032 = vcvt.s32.f32 %v968
          %v1033 = vcvt.s32.f32 %v969
          %v1034 = vcvt.s32.f32 %v970
          %v1035 = vcvt.s32.f32 %v971
          %v1036 = vcvt.s32.f32 %v972
          %v1037 = vcvt.s32.f32 %v973
          %v1038 = vcvt.s32.f32 %v974
          %v1039 = vcvt.s32.f32 %v975
          %v1040 = vcvt.s32.f32 %v976
          %v1041 = vcvt.s32.f32 %v977
          %v1042 = vcvt.s32.f32 %v978
          %v1043 = vcvt.s32.f32 %v979
          %v1044 = vcvt.s32.f32 %v980
          %v1045 = vcvt.s32.f32 %v981
          %v1046 = vcvt.s32.f32 %v982
          %v1047 = vcvt.s32.f32 %v983
          %v1048 = vcvt.s32.f32 %v984
          %v1049 = vcvt.s32.f32 %v985
          %v1050 = vcvt.s32.f32 %v986
          %v1051 = vcvt.s32.f32 %v987
          %v1052 = vcvt.s32.f32 %v988
          %v1053 = vcvt.s32.f32 %v989
          %v1054 = vcvt.s32.f32 %v990
          %v1055 = vcvt.s32.f32 %v991
          %v1056 = vcvt.s32.f32 %v992
          %v1057 = vcvt.s32.f32 %v993
          %v1058 = vcvt.s32.f32 %v994
          %v1059 = vcvt.s32.f32 %v995
          %v1060 = vcvt.s32.f32 %v996
          %v1061 = vcvt.s32.f32 %v997
          %v1062 = vcvt.s32.f32 %v998
          %v1063 = vcvt.s32.f32 %v999
          %v1064 = vcvt.s32.f32 %v1000
          %v1065 = vcvt.s32.f32 %v1001
          %v1066 = vcvt.s32.f32 %v1002
          %v1067 = vcvt.s32.f32 %v1003
          %v1068 = vcvt.s32.f32 %v1004
          %v1069 = vcvt.s32.f32 %v1005
          %v1070 = vcvt.s32.f32 %v1006
          %v1071 = vcvt.s32.f32 %v1007
          %v1072 = vcvt.s32.f32 %v1008
          %v1073 = vcvt.s32.f32 %v1009
          %v1074 = vcvt.s32.f32 %v1010
          %v1075 = vcvt.s32.f32 %v1011
          %v1076 = vcvt.s32.f32 %v1012
          %v1077 = vcvt.s32.f32 %v1013
          %v1078 = vcvt.s32.f32 %v1014
          %v1079 = vcvt.s32.f32 %v1015
          %v1080 = vcvt.s32.f32 %v1016
          %v1081 = vcvt.s32.f32 %v1017
          %v1082 = vcvt.s32.f32 %v1018
          %v1083 = vld [vmem:[#allocation3] sm:$0xff]
          %1084 = vxpose.xlu0.b32.start [1/16] %v1019, 128
          %1085 = vxpose.xlu0.b32.cont [2/16] %v1020, 128
          %1086 = vxpose.xlu0.b32.cont [3/16] %v1021, 128
          %1087 = vxpose.xlu0.b32.cont [4/16] %v1022, 128
          %1088 = vxpose.xlu0.b32.cont [5/16] %v1023, 128
          %1089 = vxpose.xlu0.b32.cont [6/16] %v1024, 128
          %1090 = vxpose.xlu0.b32.cont [7/16] %v1025, 128
          %1091 = vxpose.xlu0.b32.cont [8/16] %v1026, 128
          %1092 = vxpose.xlu0.b32.cont [9/16] %v1027, 128
          %1093 = vxpose.xlu0.b32.cont [10/16] %v1028, 128
          %1094 = vxpose.xlu0.b32.cont [11/16] %v1029, 128
          %1095 = vxpose.xlu0.b32.cont [12/16] %v1030, 128
          %1096 = vxpose.xlu0.b32.cont [13/16] %v1031, 128
          %1097 = vxpose.xlu0.b32.cont [14/16] %v1032, 128
          %1098 = vxpose.xlu0.b32.cont [15/16] %v1033, 128
          %1099 = vxpose.xlu0.b32.end [16/16] %v1034, 128
          %v1100 = vpop.trf.xlu0
          %v1101 = vpop.trf.xlu0
          %v1102 = vpop.trf.xlu0
          %v1103 = vpop.trf.xlu0
          %v1104 = vpop.trf.xlu0
          %v1105 = vpop.trf.xlu0
          %v1106 = vpop.trf.xlu0
          %v1107 = vpop.trf.xlu0
          %v1108 = vpop.trf.xlu0
          %v1109 = vpop.trf.xlu0
          %v1110 = vpop.trf.xlu0
          %v1111 = vpop.trf.xlu0
          %v1112 = vpop.trf.xlu0
          %v1113 = vpop.trf.xlu0
          %v1114 = vpop.trf.xlu0
          %v1115 = vpop.trf.xlu0
          %1116 = vxpose.xlu0.b32.start [1/16] %v1035, 128
          %1117 = vxpose.xlu0.b32.cont [2/16] %v1036, 128
          %1118 = vxpose.xlu0.b32.cont [3/16] %v1037, 128
          %1119 = vxpose.xlu0.b32.cont [4/16] %v1038, 128
          %1120 = vxpose.xlu0.b32.cont [5/16] %v1039, 128
          %1121 = vxpose.xlu0.b32.cont [6/16] %v1040, 128
          %1122 = vxpose.xlu0.b32.cont [7/16] %v1041, 128
          %1123 = vxpose.xlu0.b32.cont [8/16] %v1042, 128
          %1124 = vxpose.xlu0.b32.cont [9/16] %v1043, 128
          %1125 = vxpose.xlu0.b32.cont [10/16] %v1044, 128
          %1126 = vxpose.xlu0.b32.cont [11/16] %v1045, 128
          %1127 = vxpose.xlu0.b32.cont [12/16] %v1046, 128
          %1128 = vxpose.xlu0.b32.cont [13/16] %v1047, 128
          %1129 = vxpose.xlu0.b32.cont [14/16] %v1048, 128
          %1130 = vxpose.xlu0.b32.cont [15/16] %v1049, 128
          %1131 = vxpose.xlu0.b32.end [16/16] %v1050, 128
          %v1132 = vpop.trf.xlu0
          %v1133 = vpop.trf.xlu0
          %v1134 = vpop.trf.xlu0
          %v1135 = vpop.trf.xlu0
          %v1136 = vpop.trf.xlu0
          %v1137 = vpop.trf.xlu0
          %v1138 = vpop.trf.xlu0
          %v1139 = vpop.trf.xlu0
          %v1140 = vpop.trf.xlu0
          %v1141 = vpop.trf.xlu0
          %v1142 = vpop.trf.xlu0
          %v1143 = vpop.trf.xlu0
          %v1144 = vpop.trf.xlu0
          %v1145 = vpop.trf.xlu0
          %v1146 = vpop.trf.xlu0
          %v1147 = vpop.trf.xlu0
          %1148 = vxpose.xlu0.b32.start [1/16] %v1051, 128
          %1149 = vxpose.xlu0.b32.cont [2/16] %v1052, 128
          %1150 = vxpose.xlu0.b32.cont [3/16] %v1053, 128
          %1151 = vxpose.xlu0.b32.cont [4/16] %v1054, 128
          %1152 = vxpose.xlu0.b32.cont [5/16] %v1055, 128
          %1153 = vxpose.xlu0.b32.cont [6/16] %v1056, 128
          %1154 = vxpose.xlu0.b32.cont [7/16] %v1057, 128
          %1155 = vxpose.xlu0.b32.cont [8/16] %v1058, 128
          %1156 = vxpose.xlu0.b32.cont [9/16] %v1059, 128
          %1157 = vxpose.xlu0.b32.cont [10/16] %v1060, 128
          %1158 = vxpose.xlu0.b32.cont [11/16] %v1061, 128
          %1159 = vxpose.xlu0.b32.cont [12/16] %v1062, 128
          %1160 = vxpose.xlu0.b32.cont [13/16] %v1063, 128
          %1161 = vxpose.xlu0.b32.cont [14/16] %v1064, 128
          %1162 = vxpose.xlu0.b32.cont [15/16] %v1065, 128
          %1163 = vxpose.xlu0.b32.end [16/16] %v1066, 128
          %v1164 = vpop.trf.xlu0
          %v1165 = vpop.trf.xlu0
          %v1166 = vpop.trf.xlu0
          %v1167 = vpop.trf.xlu0
          %v1168 = vpop.trf.xlu0
          %v1169 = vpop.trf.xlu0
          %v1170 = vpop.trf.xlu0
          %v1171 = vpop.trf.xlu0
          %v1172 = vpop.trf.xlu0
          %v1173 = vpop.trf.xlu0
          %v1174 = vpop.trf.xlu0
          %v1175 = vpop.trf.xlu0
          %v1176 = vpop.trf.xlu0
          %v1177 = vpop.trf.xlu0
          %v1178 = vpop.trf.xlu0
          %v1179 = vpop.trf.xlu0
          %1180 = vxpose.xlu0.b32.start [1/16] %v1067, 128
          %1181 = vxpose.xlu0.b32.cont [2/16] %v1068, 128
          %1182 = vxpose.xlu0.b32.cont [3/16] %v1069, 128
          %1183 = vxpose.xlu0.b32.cont [4/16] %v1070, 128
          %1184 = vxpose.xlu0.b32.cont [5/16] %v1071, 128
          %1185 = vxpose.xlu0.b32.cont [6/16] %v1072, 128
          %1186 = vxpose.xlu0.b32.cont [7/16] %v1073, 128
          %1187 = vxpose.xlu0.b32.cont [8/16] %v1074, 128
          %1188 = vxpose.xlu0.b32.cont [9/16] %v1075, 128
          %1189 = vxpose.xlu0.b32.cont [10/16] %v1076, 128
          %1190 = vxpose.xlu0.b32.cont [11/16] %v1077, 128
          %1191 = vxpose.xlu0.b32.cont [12/16] %v1078, 128
          %1192 = vxpose.xlu0.b32.cont [13/16] %v1079, 128
          %1193 = vxpose.xlu0.b32.cont [14/16] %v1080, 128
          %1194 = vxpose.xlu0.b32.cont [15/16] %v1081, 128
          %1195 = vxpose.xlu0.b32.end [16/16] %v1082, 128
          %v1196 = vpop.trf.xlu0
          %v1197 = vpop.trf.xlu0
          %v1198 = vpop.trf.xlu0
          %v1199 = vpop.trf.xlu0
          %v1200 = vpop.trf.xlu0
          %v1201 = vpop.trf.xlu0
          %v1202 = vpop.trf.xlu0
          %v1203 = vpop.trf.xlu0
          %v1204 = vpop.trf.xlu0
          %v1205 = vpop.trf.xlu0
          %v1206 = vpop.trf.xlu0
          %v1207 = vpop.trf.xlu0
          %v1208 = vpop.trf.xlu0
          %v1209 = vpop.trf.xlu0
          %v1210 = vpop.trf.xlu0
          %v1211 = vpop.trf.xlu0
          %1212 = vmatpush.msra.mxu0 %v584
          %1213 = vmatpush.msra.mxu0 %v583
          %1214 = vmatpush.msra.mxu0 %v582
          %1215 = vmatpush.msra.mxu0 %v581
          %1216 = vmatpush.msra.mxu0 %v580
          %1217 = vmatpush.msra.mxu0 %v579
          %1218 = vmatpush.msra.mxu0 %v578
          %1219 = vmatpush.msra.mxu0 %v577
          %1220 = vmatpush.msra.mxu0 %v576
          %1221 = vmatpush.msra.mxu0 %v575
          %1222 = vmatpush.msra.mxu0 %v574
          %1223 = vmatpush.msra.mxu0 %v573
          %1224 = vmatpush.msra.mxu0 %v572
          %1225 = vmatpush.msra.mxu0 %v571
          %1226 = vmatpush.msra.mxu0 %v570
          %1227 = vmatpush.msra.mxu0 %v569
          %1228 = vmatmul.f32.gmra.mxu0 %v1100
          %v1229 = vpop.f32.mrf.mxu0
          %v1230 = vadd.f32 0.0, %v1229
          %1231 = vdwg.mxu0
          %1232 = vmatpush.msra.mxu0 %v600
          %1233 = vmatpush.msra.mxu0 %v599
          %1234 = vmatpush.msra.mxu0 %v598
          %1235 = vmatpush.msra.mxu0 %v597
          %1236 = vmatpush.msra.mxu0 %v596
          %1237 = vmatpush.msra.mxu0 %v595
          %1238 = vmatpush.msra.mxu0 %v594
          %1239 = vmatpush.msra.mxu0 %v593
          %1240 = vmatpush.msra.mxu0 %v592
          %1241 = vmatpush.msra.mxu0 %v591
          %1242 = vmatpush.msra.mxu0 %v590
          %1243 = vmatpush.msra.mxu0 %v589
          %1244 = vmatpush.msra.mxu0 %v588
          %1245 = vmatpush.msra.mxu0 %v587
          %1246 = vmatpush.msra.mxu0 %v586
          %1247 = vmatpush.msra.mxu0 %v585
          %1248 = vmatmul.f32.gmra.mxu0 %v1132
          %v1249 = vpop.f32.mrf.mxu0
          %v1250 = vadd.f32 %v1230, %v1249
          %1251 = vdwg.mxu0
          %1252 = vmatpush.msra.mxu0 %v616
          %1253 = vmatpush.msra.mxu0 %v615
          %1254 = vmatpush.msra.mxu0 %v614
          %1255 = vmatpush.msra.mxu0 %v613
          %1256 = vmatpush.msra.mxu0 %v612
          %1257 = vmatpush.msra.mxu0 %v611
          %1258 = vmatpush.msra.mxu0 %v610
          %1259 = vmatpush.msra.mxu0 %v609
          %1260 = vmatpush.msra.mxu0 %v608
          %1261 = vmatpush.msra.mxu0 %v607
          %1262 = vmatpush.msra.mxu0 %v606
          %1263 = vmatpush.msra.mxu0 %v605
          %1264 = vmatpush.msra.mxu0 %v604
          %1265 = vmatpush.msra.mxu0 %v603
          %1266 = vmatpush.msra.mxu0 %v602
          %1267 = vmatpush.msra.mxu0 %v601
          %1268 = vmatmul.f32.gmra.mxu0 %v1164
          %v1269 = vpop.f32.mrf.mxu0
          %v1270 = vadd.f32 %v1250, %v1269
          %1271 = vdwg.mxu0
          %1272 = vmatpush.msra.mxu0 %v632
          %1273 = vmatpush.msra.mxu0 %v631
          %1274 = vmatpush.msra.mxu0 %v630
          %1275 = vmatpush.msra.mxu0 %v629
          %1276 = vmatpush.msra.mxu0 %v628
          %1277 = vmatpush.msra.mxu0 %v627
          %1278 = vmatpush.msra.mxu0 %v626
          %1279 = vmatpush.msra.mxu0 %v625
          %1280 = vmatpush.msra.mxu0 %v624
          %1281 = vmatpush.msra.mxu0 %v623
          %1282 = vmatpush.msra.mxu0 %v622
          %1283 = vmatpush.msra.mxu0 %v621
          %1284 = vmatpush.msra.mxu0 %v620
          %1285 = vmatpush.msra.mxu0 %v619
          %1286 = vmatpush.msra.mxu0 %v618
          %1287 = vmatpush.msra.mxu0 %v617
          %1288 = vmatmul.f32.gmra.mxu0 %v1196
          %v1289 = vpop.f32.mrf.mxu0
          %v1290 = vadd.f32 %v1270, %v1289
          %1291 = vdwg.mxu0
          %v1292 = vadd.f32 %v1083, %v1290
          %vm1293 = vcmask 64512
          %1294 = vst.msk [vmem:[#allocation3] sm:$0xff] %vm1293, %v1292
        $region76: #{tpu_custom_call.1} parent=67 // pred_fallthru
          _
        // Predicated region
        $region77: #{tpu_custom_call.1} parent=67 // pred_check
          %p1295 = pneg %p557
        $region78: #{tpu_custom_call.1} parent=67 // pred_check_branch
          %1297 = sbr.rel (%p1295) target = $region80
        $region79: #{tpu_custom_call.1} parent=67 // pred_region
          %v1298 = vld [vmem:[#allocation3] sm:$0xff]
          %v1299 = vmax.f32 %v1298, 1.0
          %v1300 = vrcp.pop %v1299
          %v1301 = vmul.f32 %v1299, %v1300
          %v1302 = vsub.f32 1.0, %v1301
          %v1303 = vmul.f32 %v1300, %v1302
          %v1304 = vadd.f32 %v1300, %v1303
          %vm1305 = vweird.f32 %v1299
          %vm1306 = vweird.f32 %v1300
          %vm1307 = vmor %vm1305, %vm1306
          %v1308 = vsel %vm1307, %v1300, %v1304
          %v1309 = vand.u32 2147483647, %v1299
          %vm1310 = vcmp.eq.f32.partialorder %v1309, 8.507059e+37
          %v1311 = vand.u32 %v1299, 2147483648
          %v1312 = vor.u32 1.1754944e-38, %v1311
          %v1313 = vsel %vm1310, %v1312, %v1308
          %v1314 = vmul.f32 1.0, %v1313
          %1316 = vset.pattern.permute.xlu0 4
          %1317 = vperm.xlu0 %1316, %v1314
          %v1318 = vpop.permute.xlu0 %1317
          %v1320 = vmul.f32 %v1298, %v1318
          %vm1321 = vcmask 31744
          %v1322 = vsel %vm1321, %v1320, %v1298
          %vm1323 = vcmask 39936
          %v1324 = vsel %vm1323, %v1322, 0.0
          %vm1325 = vcmask 64512
          %1326 = vst.msk [vmem:[#allocation3] sm:$0xff] %vm1325, %v1324
        $region80: #{tpu_custom_call.1} parent=67 // pred_fallthru
          _
        %p1327 = scmp.ge.s32.totalorder %s32, 1
        // Predicated region
        $region81: #{tpu_custom_call.1} parent=67 // pred_check
          %p1328 = pneg %p1327
        $region82: #{tpu_custom_call.1} parent=67 // pred_check_branch
          %1330 = sbr.rel (%p1328) target = $region84
        $region83: #{tpu_custom_call.1} parent=67 // pred_region
          %v1331 = vld [vmem:[#allocation3] sm:$0xff]
          %v1332 = vld [vmem:[%s547] sm:$0xff]
          %v1333 = vld [vmem:[%s547 + $0x8] sm:$0xff]
          %v1334 = vld [vmem:[%s547 + $0x10] sm:$0xff]
          %v1335 = vld [vmem:[%s547 + $0x18] sm:$0xff]
          %v1336 = vld [vmem:[%s547 + $0x20] sm:$0xff]
          %v1337 = vld [vmem:[%s547 + $0x28] sm:$0xff]
          %v1338 = vld [vmem:[%s547 + $0x30] sm:$0xff]
          %v1339 = vld [vmem:[%s547 + $0x38] sm:$0xff]
          %v1340 = vld [vmem:[%s547 + $0x40] sm:$0xff]
          %v1341 = vld [vmem:[%s547 + $0x48] sm:$0xff]
          %v1342 = vld [vmem:[%s547 + $0x50] sm:$0xff]
          %v1343 = vld [vmem:[%s547 + $0x58] sm:$0xff]
          %v1344 = vld [vmem:[%s547 + $0x60] sm:$0xff]
          %v1345 = vld [vmem:[%s547 + $0x68] sm:$0xff]
          %v1346 = vld [vmem:[%s547 + $0x70] sm:$0xff]
          %v1347 = vld [vmem:[%s547 + $0x78] sm:$0xff]
          %v1348 = vld [vmem:[%s547 + $0x80] sm:$0xff]
          %v1349 = vld [vmem:[%s547 + $0x88] sm:$0xff]
          %v1350 = vld [vmem:[%s547 + $0x90] sm:$0xff]
          %v1351 = vld [vmem:[%s547 + $0x98] sm:$0xff]
          %v1352 = vld [vmem:[%s547 + $0xa0] sm:$0xff]
          %v1353 = vld [vmem:[%s547 + $0xa8] sm:$0xff]
          %v1354 = vld [vmem:[%s547 + $0xb0] sm:$0xff]
          %v1355 = vld [vmem:[%s547 + $0xb8] sm:$0xff]
          %v1356 = vld [vmem:[%s547 + $0xc0] sm:$0xff]
          %v1357 = vld [vmem:[%s547 + $0xc8] sm:$0xff]
          %v1358 = vld [vmem:[%s547 + $0xd0] sm:$0xff]
          %v1359 = vld [vmem:[%s547 + $0xd8] sm:$0xff]
          %v1360 = vld [vmem:[%s547 + $0xe0] sm:$0xff]
          %v1361 = vld [vmem:[%s547 + $0xe8] sm:$0xff]
          %v1362 = vld [vmem:[%s547 + $0xf0] sm:$0xff]
          %v1363 = vld [vmem:[%s547 + $0xf8] sm:$0xff]
          %v1364 = vld [vmem:[%s547 + $0x100] sm:$0xff]
          %v1365 = vld [vmem:[%s547 + $0x108] sm:$0xff]
          %v1366 = vld [vmem:[%s547 + $0x110] sm:$0xff]
          %v1367 = vld [vmem:[%s547 + $0x118] sm:$0xff]
          %v1368 = vld [vmem:[%s547 + $0x120] sm:$0xff]
          %v1369 = vld [vmem:[%s547 + $0x128] sm:$0xff]
          %v1370 = vld [vmem:[%s547 + $0x130] sm:$0xff]
          %v1371 = vld [vmem:[%s547 + $0x138] sm:$0xff]
          %v1372 = vld [vmem:[%s547 + $0x140] sm:$0xff]
          %v1373 = vld [vmem:[%s547 + $0x148] sm:$0xff]
          %v1374 = vld [vmem:[%s547 + $0x150] sm:$0xff]
          %v1375 = vld [vmem:[%s547 + $0x158] sm:$0xff]
          %v1376 = vld [vmem:[%s547 + $0x160] sm:$0xff]
          %v1377 = vld [vmem:[%s547 + $0x168] sm:$0xff]
          %v1378 = vld [vmem:[%s547 + $0x170] sm:$0xff]
          %v1379 = vld [vmem:[%s547 + $0x178] sm:$0xff]
          %v1380 = vld [vmem:[%s547 + $0x180] sm:$0xff]
          %v1381 = vld [vmem:[%s547 + $0x188] sm:$0xff]
          %v1382 = vld [vmem:[%s547 + $0x190] sm:$0xff]
          %v1383 = vld [vmem:[%s547 + $0x198] sm:$0xff]
          %v1384 = vld [vmem:[%s547 + $0x1a0] sm:$0xff]
          %v1385 = vld [vmem:[%s547 + $0x1a8] sm:$0xff]
          %v1386 = vld [vmem:[%s547 + $0x1b0] sm:$0xff]
          %v1387 = vld [vmem:[%s547 + $0x1b8] sm:$0xff]
          %v1388 = vld [vmem:[%s547 + $0x1c0] sm:$0xff]
          %v1389 = vld [vmem:[%s547 + $0x1c8] sm:$0xff]
          %v1390 = vld [vmem:[%s547 + $0x1d0] sm:$0xff]
          %v1391 = vld [vmem:[%s547 + $0x1d8] sm:$0xff]
          %v1392 = vld [vmem:[%s547 + $0x1e0] sm:$0xff]
          %v1393 = vld [vmem:[%s547 + $0x1e8] sm:$0xff]
          %v1394 = vld [vmem:[%s547 + $0x1f0] sm:$0xff]
          %v1395 = vld [vmem:[%s547 + $0x1f8] sm:$0xff]
          %1396 = vrot.lane.b32.xlu0 %v1332, 127
          %v1397 = vpop.permute.xlu0 %1396
          %1398 = vrot.lane.b32.xlu0 %v1333, 127
          %v1399 = vpop.permute.xlu0 %1398
          %1400 = vrot.lane.b32.xlu0 %v1334, 127
          %v1401 = vpop.permute.xlu0 %1400
          %1402 = vrot.lane.b32.xlu0 %v1335, 127
          %v1403 = vpop.permute.xlu0 %1402
          %1404 = vrot.lane.b32.xlu0 %v1336, 127
          %v1405 = vpop.permute.xlu0 %1404
          %1406 = vrot.lane.b32.xlu0 %v1337, 127
          %v1407 = vpop.permute.xlu0 %1406
          %1408 = vrot.lane.b32.xlu0 %v1338, 127
          %v1409 = vpop.permute.xlu0 %1408
          %1410 = vrot.lane.b32.xlu0 %v1339, 127
          %v1411 = vpop.permute.xlu0 %1410
          %1412 = vrot.lane.b32.xlu0 %v1340, 127
          %v1413 = vpop.permute.xlu0 %1412
          %1414 = vrot.lane.b32.xlu0 %v1341, 127
          %v1415 = vpop.permute.xlu0 %1414
          %1416 = vrot.lane.b32.xlu0 %v1342, 127
          %v1417 = vpop.permute.xlu0 %1416
          %1418 = vrot.lane.b32.xlu0 %v1343, 127
          %v1419 = vpop.permute.xlu0 %1418
          %1420 = vrot.lane.b32.xlu0 %v1344, 127
          %v1421 = vpop.permute.xlu0 %1420
          %1422 = vrot.lane.b32.xlu0 %v1345, 127
          %v1423 = vpop.permute.xlu0 %1422
          %1424 = vrot.lane.b32.xlu0 %v1346, 127
          %v1425 = vpop.permute.xlu0 %1424
          %1426 = vrot.lane.b32.xlu0 %v1347, 127
          %v1427 = vpop.permute.xlu0 %1426
          %1428 = vrot.lane.b32.xlu0 %v1348, 127
          %v1429 = vpop.permute.xlu0 %1428
          %1430 = vrot.lane.b32.xlu0 %v1349, 127
          %v1431 = vpop.permute.xlu0 %1430
          %1432 = vrot.lane.b32.xlu0 %v1350, 127
          %v1433 = vpop.permute.xlu0 %1432
          %1434 = vrot.lane.b32.xlu0 %v1351, 127
          %v1435 = vpop.permute.xlu0 %1434
          %1436 = vrot.lane.b32.xlu0 %v1352, 127
          %v1437 = vpop.permute.xlu0 %1436
          %1438 = vrot.lane.b32.xlu0 %v1353, 127
          %v1439 = vpop.permute.xlu0 %1438
          %1440 = vrot.lane.b32.xlu0 %v1354, 127
          %v1441 = vpop.permute.xlu0 %1440
          %1442 = vrot.lane.b32.xlu0 %v1355, 127
          %v1443 = vpop.permute.xlu0 %1442
          %1444 = vrot.lane.b32.xlu0 %v1356, 127
          %v1445 = vpop.permute.xlu0 %1444
          %1446 = vrot.lane.b32.xlu0 %v1357, 127
          %v1447 = vpop.permute.xlu0 %1446
          %1448 = vrot.lane.b32.xlu0 %v1358, 127
          %v1449 = vpop.permute.xlu0 %1448
          %1450 = vrot.lane.b32.xlu0 %v1359, 127
          %v1451 = vpop.permute.xlu0 %1450
          %1452 = vrot.lane.b32.xlu0 %v1360, 127
          %v1453 = vpop.permute.xlu0 %1452
          %1454 = vrot.lane.b32.xlu0 %v1361, 127
          %v1455 = vpop.permute.xlu0 %1454
          %1456 = vrot.lane.b32.xlu0 %v1362, 127
          %v1457 = vpop.permute.xlu0 %1456
          %1458 = vrot.lane.b32.xlu0 %v1363, 127
          %v1459 = vpop.permute.xlu0 %1458
          %1460 = vrot.lane.b32.xlu0 %v1364, 127
          %v1461 = vpop.permute.xlu0 %1460
          %1462 = vrot.lane.b32.xlu0 %v1365, 127
          %v1463 = vpop.permute.xlu0 %1462
          %1464 = vrot.lane.b32.xlu0 %v1366, 127
          %v1465 = vpop.permute.xlu0 %1464
          %1466 = vrot.lane.b32.xlu0 %v1367, 127
          %v1467 = vpop.permute.xlu0 %1466
          %1468 = vrot.lane.b32.xlu0 %v1368, 127
          %v1469 = vpop.permute.xlu0 %1468
          %1470 = vrot.lane.b32.xlu0 %v1369, 127
          %v1471 = vpop.permute.xlu0 %1470
          %1472 = vrot.lane.b32.xlu0 %v1370, 127
          %v1473 = vpop.permute.xlu0 %1472
          %1474 = vrot.lane.b32.xlu0 %v1371, 127
          %v1475 = vpop.permute.xlu0 %1474
          %1476 = vrot.lane.b32.xlu0 %v1372, 127
          %v1477 = vpop.permute.xlu0 %1476
          %1478 = vrot.lane.b32.xlu0 %v1373, 127
          %v1479 = vpop.permute.xlu0 %1478
          %1480 = vrot.lane.b32.xlu0 %v1374, 127
          %v1481 = vpop.permute.xlu0 %1480
          %1482 = vrot.lane.b32.xlu0 %v1375, 127
          %v1483 = vpop.permute.xlu0 %1482
          %1484 = vrot.lane.b32.xlu0 %v1376, 127
          %v1485 = vpop.permute.xlu0 %1484
          %1486 = vrot.lane.b32.xlu0 %v1377, 127
          %v1487 = vpop.permute.xlu0 %1486
          %1488 = vrot.lane.b32.xlu0 %v1378, 127
          %v1489 = vpop.permute.xlu0 %1488
          %1490 = vrot.lane.b32.xlu0 %v1379, 127
          %v1491 = vpop.permute.xlu0 %1490
          %1492 = vrot.lane.b32.xlu0 %v1380, 127
          %v1493 = vpop.permute.xlu0 %1492
          %1494 = vrot.lane.b32.xlu0 %v1381, 127
          %v1495 = vpop.permute.xlu0 %1494
          %1496 = vrot.lane.b32.xlu0 %v1382, 127
          %v1497 = vpop.permute.xlu0 %1496
          %1498 = vrot.lane.b32.xlu0 %v1383, 127
          %v1499 = vpop.permute.xlu0 %1498
          %1500 = vrot.lane.b32.xlu0 %v1384, 127
          %v1501 = vpop.permute.xlu0 %1500
          %1502 = vrot.lane.b32.xlu0 %v1385, 127
          %v1503 = vpop.permute.xlu0 %1502
          %1504 = vrot.lane.b32.xlu0 %v1386, 127
          %v1505 = vpop.permute.xlu0 %1504
          %1506 = vrot.lane.b32.xlu0 %v1387, 127
          %v1507 = vpop.permute.xlu0 %1506
          %1508 = vrot.lane.b32.xlu0 %v1388, 127
          %v1509 = vpop.permute.xlu0 %1508
          %1510 = vrot.lane.b32.xlu0 %v1389, 127
          %v1511 = vpop.permute.xlu0 %1510
          %1512 = vrot.lane.b32.xlu0 %v1390, 127
          %v1513 = vpop.permute.xlu0 %1512
          %1514 = vrot.lane.b32.xlu0 %v1391, 127
          %v1515 = vpop.permute.xlu0 %1514
          %1516 = vrot.lane.b32.xlu0 %v1392, 127
          %v1517 = vpop.permute.xlu0 %1516
          %1518 = vrot.lane.b32.xlu0 %v1393, 127
          %v1519 = vpop.permute.xlu0 %1518
          %1520 = vrot.lane.b32.xlu0 %v1394, 127
          %v1521 = vpop.permute.xlu0 %1520
          %1522 = vrot.lane.b32.xlu0 %v1395, 127
          %v1523 = vpop.permute.xlu0 %1522
          %v1524 = vlaneseq
          %v1525 = vand.u32 %v1524, 127
          %1526 = vset.pattern.permute.xlu0 0
          %1527 = vperm.xlu0 %1526, %v1332
          %v1528 = vpop.permute.xlu0 %1527
          %1529 = vset.pattern.permute.xlu0 0
          %1530 = vperm.xlu0 %1529, %v1333
          %v1531 = vpop.permute.xlu0 %1530
          %1532 = vset.pattern.permute.xlu0 0
          %1533 = vperm.xlu0 %1532, %v1334
          %v1534 = vpop.permute.xlu0 %1533
          %1535 = vset.pattern.permute.xlu0 0
          %1536 = vperm.xlu0 %1535, %v1335
          %v1537 = vpop.permute.xlu0 %1536
          %1538 = vset.pattern.permute.xlu0 0
          %1539 = vperm.xlu0 %1538, %v1336
          %v1540 = vpop.permute.xlu0 %1539
          %1541 = vset.pattern.permute.xlu0 0
          %1542 = vperm.xlu0 %1541, %v1337
          %v1543 = vpop.permute.xlu0 %1542
          %1544 = vset.pattern.permute.xlu0 0
          %1545 = vperm.xlu0 %1544, %v1338
          %v1546 = vpop.permute.xlu0 %1545
          %1547 = vset.pattern.permute.xlu0 0
          %1548 = vperm.xlu0 %1547, %v1339
          %v1549 = vpop.permute.xlu0 %1548
          %1550 = vset.pattern.permute.xlu0 0
          %1551 = vperm.xlu0 %1550, %v1340
          %v1552 = vpop.permute.xlu0 %1551
          %1553 = vset.pattern.permute.xlu0 0
          %1554 = vperm.xlu0 %1553, %v1341
          %v1555 = vpop.permute.xlu0 %1554
          %1556 = vset.pattern.permute.xlu0 0
          %1557 = vperm.xlu0 %1556, %v1342
          %v1558 = vpop.permute.xlu0 %1557
          %1559 = vset.pattern.permute.xlu0 0
          %1560 = vperm.xlu0 %1559, %v1343
          %v1561 = vpop.permute.xlu0 %1560
          %1562 = vset.pattern.permute.xlu0 0
          %1563 = vperm.xlu0 %1562, %v1344
          %v1564 = vpop.permute.xlu0 %1563
          %1565 = vset.pattern.permute.xlu0 0
          %1566 = vperm.xlu0 %1565, %v1345
          %v1567 = vpop.permute.xlu0 %1566
          %1568 = vset.pattern.permute.xlu0 0
          %1569 = vperm.xlu0 %1568, %v1346
          %v1570 = vpop.permute.xlu0 %1569
          %1571 = vset.pattern.permute.xlu0 0
          %1572 = vperm.xlu0 %1571, %v1347
          %v1573 = vpop.permute.xlu0 %1572
          %1574 = vset.pattern.permute.xlu0 0
          %1575 = vperm.xlu0 %1574, %v1348
          %v1576 = vpop.permute.xlu0 %1575
          %1577 = vset.pattern.permute.xlu0 0
          %1578 = vperm.xlu0 %1577, %v1349
          %v1579 = vpop.permute.xlu0 %1578
          %1580 = vset.pattern.permute.xlu0 0
          %1581 = vperm.xlu0 %1580, %v1350
          %v1582 = vpop.permute.xlu0 %1581
          %1583 = vset.pattern.permute.xlu0 0
          %1584 = vperm.xlu0 %1583, %v1351
          %v1585 = vpop.permute.xlu0 %1584
          %1586 = vset.pattern.permute.xlu0 0
          %1587 = vperm.xlu0 %1586, %v1352
          %v1588 = vpop.permute.xlu0 %1587
          %1589 = vset.pattern.permute.xlu0 0
          %1590 = vperm.xlu0 %1589, %v1353
          %v1591 = vpop.permute.xlu0 %1590
          %1592 = vset.pattern.permute.xlu0 0
          %1593 = vperm.xlu0 %1592, %v1354
          %v1594 = vpop.permute.xlu0 %1593
          %1595 = vset.pattern.permute.xlu0 0
          %1596 = vperm.xlu0 %1595, %v1355
          %v1597 = vpop.permute.xlu0 %1596
          %1598 = vset.pattern.permute.xlu0 0
          %1599 = vperm.xlu0 %1598, %v1356
          %v1600 = vpop.permute.xlu0 %1599
          %1601 = vset.pattern.permute.xlu0 0
          %1602 = vperm.xlu0 %1601, %v1357
          %v1603 = vpop.permute.xlu0 %1602
          %1604 = vset.pattern.permute.xlu0 0
          %1605 = vperm.xlu0 %1604, %v1358
          %v1606 = vpop.permute.xlu0 %1605
          %1607 = vset.pattern.permute.xlu0 0
          %1608 = vperm.xlu0 %1607, %v1359
          %v1609 = vpop.permute.xlu0 %1608
          %1610 = vset.pattern.permute.xlu0 0
          %1611 = vperm.xlu0 %1610, %v1360
          %v1612 = vpop.permute.xlu0 %1611
          %1613 = vset.pattern.permute.xlu0 0
          %1614 = vperm.xlu0 %1613, %v1361
          %v1615 = vpop.permute.xlu0 %1614
          %1616 = vset.pattern.permute.xlu0 0
          %1617 = vperm.xlu0 %1616, %v1362
          %v1618 = vpop.permute.xlu0 %1617
          %1619 = vset.pattern.permute.xlu0 0
          %1620 = vperm.xlu0 %1619, %v1363
          %v1621 = vpop.permute.xlu0 %1620
          %1622 = vset.pattern.permute.xlu0 0
          %1623 = vperm.xlu0 %1622, %v1364
          %v1624 = vpop.permute.xlu0 %1623
          %1625 = vset.pattern.permute.xlu0 0
          %1626 = vperm.xlu0 %1625, %v1365
          %v1627 = vpop.permute.xlu0 %1626
          %1628 = vset.pattern.permute.xlu0 0
          %1629 = vperm.xlu0 %1628, %v1366
          %v1630 = vpop.permute.xlu0 %1629
          %1631 = vset.pattern.permute.xlu0 0
          %1632 = vperm.xlu0 %1631, %v1367
          %v1633 = vpop.permute.xlu0 %1632
          %1634 = vset.pattern.permute.xlu0 0
          %1635 = vperm.xlu0 %1634, %v1368
          %v1636 = vpop.permute.xlu0 %1635
          %1637 = vset.pattern.permute.xlu0 0
          %1638 = vperm.xlu0 %1637, %v1369
          %v1639 = vpop.permute.xlu0 %1638
          %1640 = vset.pattern.permute.xlu0 0
          %1641 = vperm.xlu0 %1640, %v1370
          %v1642 = vpop.permute.xlu0 %1641
          %1643 = vset.pattern.permute.xlu0 0
          %1644 = vperm.xlu0 %1643, %v1371
          %v1645 = vpop.permute.xlu0 %1644
          %1646 = vset.pattern.permute.xlu0 0
          %1647 = vperm.xlu0 %1646, %v1372
          %v1648 = vpop.permute.xlu0 %1647
          %1649 = vset.pattern.permute.xlu0 0
          %1650 = vperm.xlu0 %1649, %v1373
          %v1651 = vpop.permute.xlu0 %1650
          %1652 = vset.pattern.permute.xlu0 0
          %1653 = vperm.xlu0 %1652, %v1374
          %v1654 = vpop.permute.xlu0 %1653
          %1655 = vset.pattern.permute.xlu0 0
          %1656 = vperm.xlu0 %1655, %v1375
          %v1657 = vpop.permute.xlu0 %1656
          %1658 = vset.pattern.permute.xlu0 0
          %1659 = vperm.xlu0 %1658, %v1376
          %v1660 = vpop.permute.xlu0 %1659
          %1661 = vset.pattern.permute.xlu0 0
          %1662 = vperm.xlu0 %1661, %v1377
          %v1663 = vpop.permute.xlu0 %1662
          %1664 = vset.pattern.permute.xlu0 0
          %1665 = vperm.xlu0 %1664, %v1378
          %v1666 = vpop.permute.xlu0 %1665
          %1667 = vset.pattern.permute.xlu0 0
          %1668 = vperm.xlu0 %1667, %v1379
          %v1669 = vpop.permute.xlu0 %1668
          %1670 = vset.pattern.permute.xlu0 0
          %1671 = vperm.xlu0 %1670, %v1380
          %v1672 = vpop.permute.xlu0 %1671
          %1673 = vset.pattern.permute.xlu0 0
          %1674 = vperm.xlu0 %1673, %v1381
          %v1675 = vpop.permute.xlu0 %1674
          %1676 = vset.pattern.permute.xlu0 0
          %1677 = vperm.xlu0 %1676, %v1382
          %v1678 = vpop.permute.xlu0 %1677
          %1679 = vset.pattern.permute.xlu0 0
          %1680 = vperm.xlu0 %1679, %v1383
          %v1681 = vpop.permute.xlu0 %1680
          %1682 = vset.pattern.permute.xlu0 0
          %1683 = vperm.xlu0 %1682, %v1384
          %v1684 = vpop.permute.xlu0 %1683
          %1685 = vset.pattern.permute.xlu0 0
          %1686 = vperm.xlu0 %1685, %v1385
          %v1687 = vpop.permute.xlu0 %1686
          %1688 = vset.pattern.permute.xlu0 0
          %1689 = vperm.xlu0 %1688, %v1386
          %v1690 = vpop.permute.xlu0 %1689
          %1691 = vset.pattern.permute.xlu0 0
          %1692 = vperm.xlu0 %1691, %v1387
          %v1693 = vpop.permute.xlu0 %1692
          %1694 = vset.pattern.permute.xlu0 0
          %1695 = vperm.xlu0 %1694, %v1388
          %v1696 = vpop.permute.xlu0 %1695
          %1697 = vset.pattern.permute.xlu0 0
          %1698 = vperm.xlu0 %1697, %v1389
          %v1699 = vpop.permute.xlu0 %1698
          %1700 = vset.pattern.permute.xlu0 0
          %1701 = vperm.xlu0 %1700, %v1390
          %v1702 = vpop.permute.xlu0 %1701
          %1703 = vset.pattern.permute.xlu0 0
          %1704 = vperm.xlu0 %1703, %v1391
          %v1705 = vpop.permute.xlu0 %1704
          %1706 = vset.pattern.permute.xlu0 0
          %1707 = vperm.xlu0 %1706, %v1392
          %v1708 = vpop.permute.xlu0 %1707
          %1709 = vset.pattern.permute.xlu0 0
          %1710 = vperm.xlu0 %1709, %v1393
          %v1711 = vpop.permute.xlu0 %1710
          %1712 = vset.pattern.permute.xlu0 0
          %1713 = vperm.xlu0 %1712, %v1394
          %v1714 = vpop.permute.xlu0 %1713
          %1715 = vset.pattern.permute.xlu0 0
          %1716 = vperm.xlu0 %1715, %v1395
          %v1717 = vpop.permute.xlu0 %1716
          %1718 = vset.pattern.permute.xlu0 0
          %1719 = vperm.xlu0 %1718, %v1397
          %v1720 = vpop.permute.xlu0 %1719
          %1721 = vset.pattern.permute.xlu0 0
          %1722 = vperm.xlu0 %1721, %v1399
          %v1723 = vpop.permute.xlu0 %1722
          %1724 = vset.pattern.permute.xlu0 0
          %1725 = vperm.xlu0 %1724, %v1401
          %v1726 = vpop.permute.xlu0 %1725
          %1727 = vset.pattern.permute.xlu0 0
          %1728 = vperm.xlu0 %1727, %v1403
          %v1729 = vpop.permute.xlu0 %1728
          %1730 = vset.pattern.permute.xlu0 0
          %1731 = vperm.xlu0 %1730, %v1405
          %v1732 = vpop.permute.xlu0 %1731
          %1733 = vset.pattern.permute.xlu0 0
          %1734 = vperm.xlu0 %1733, %v1407
          %v1735 = vpop.permute.xlu0 %1734
          %1736 = vset.pattern.permute.xlu0 0
          %1737 = vperm.xlu0 %1736, %v1409
          %v1738 = vpop.permute.xlu0 %1737
          %1739 = vset.pattern.permute.xlu0 0
          %1740 = vperm.xlu0 %1739, %v1411
          %v1741 = vpop.permute.xlu0 %1740
          %1742 = vset.pattern.permute.xlu0 0
          %1743 = vperm.xlu0 %1742, %v1413
          %v1744 = vpop.permute.xlu0 %1743
          %1745 = vset.pattern.permute.xlu0 0
          %1746 = vperm.xlu0 %1745, %v1415
          %v1747 = vpop.permute.xlu0 %1746
          %1748 = vset.pattern.permute.xlu0 0
          %1749 = vperm.xlu0 %1748, %v1417
          %v1750 = vpop.permute.xlu0 %1749
          %1751 = vset.pattern.permute.xlu0 0
          %1752 = vperm.xlu0 %1751, %v1419
          %v1753 = vpop.permute.xlu0 %1752
          %1754 = vset.pattern.permute.xlu0 0
          %1755 = vperm.xlu0 %1754, %v1421
          %v1756 = vpop.permute.xlu0 %1755
          %1757 = vset.pattern.permute.xlu0 0
          %1758 = vperm.xlu0 %1757, %v1423
          %v1759 = vpop.permute.xlu0 %1758
          %1760 = vset.pattern.permute.xlu0 0
          %1761 = vperm.xlu0 %1760, %v1425
          %v1762 = vpop.permute.xlu0 %1761
          %1763 = vset.pattern.permute.xlu0 0
          %1764 = vperm.xlu0 %1763, %v1427
          %v1765 = vpop.permute.xlu0 %1764
          %1766 = vset.pattern.permute.xlu0 0
          %1767 = vperm.xlu0 %1766, %v1429
          %v1768 = vpop.permute.xlu0 %1767
          %1769 = vset.pattern.permute.xlu0 0
          %1770 = vperm.xlu0 %1769, %v1431
          %v1771 = vpop.permute.xlu0 %1770
          %1772 = vset.pattern.permute.xlu0 0
          %1773 = vperm.xlu0 %1772, %v1433
          %v1774 = vpop.permute.xlu0 %1773
          %1775 = vset.pattern.permute.xlu0 0
          %1776 = vperm.xlu0 %1775, %v1435
          %v1777 = vpop.permute.xlu0 %1776
          %1778 = vset.pattern.permute.xlu0 0
          %1779 = vperm.xlu0 %1778, %v1437
          %v1780 = vpop.permute.xlu0 %1779
          %1781 = vset.pattern.permute.xlu0 0
          %1782 = vperm.xlu0 %1781, %v1439
          %v1783 = vpop.permute.xlu0 %1782
          %1784 = vset.pattern.permute.xlu0 0
          %1785 = vperm.xlu0 %1784, %v1441
          %v1786 = vpop.permute.xlu0 %1785
          %1787 = vset.pattern.permute.xlu0 0
          %1788 = vperm.xlu0 %1787, %v1443
          %v1789 = vpop.permute.xlu0 %1788
          %1790 = vset.pattern.permute.xlu0 0
          %1791 = vperm.xlu0 %1790, %v1445
          %v1792 = vpop.permute.xlu0 %1791
          %1793 = vset.pattern.permute.xlu0 0
          %1794 = vperm.xlu0 %1793, %v1447
          %v1795 = vpop.permute.xlu0 %1794
          %1796 = vset.pattern.permute.xlu0 0
          %1797 = vperm.xlu0 %1796, %v1449
          %v1798 = vpop.permute.xlu0 %1797
          %1799 = vset.pattern.permute.xlu0 0
          %1800 = vperm.xlu0 %1799, %v1451
          %v1801 = vpop.permute.xlu0 %1800
          %1802 = vset.pattern.permute.xlu0 0
          %1803 = vperm.xlu0 %1802, %v1453
          %v1804 = vpop.permute.xlu0 %1803
          %1805 = vset.pattern.permute.xlu0 0
          %1806 = vperm.xlu0 %1805, %v1455
          %v1807 = vpop.permute.xlu0 %1806
          %1808 = vset.pattern.permute.xlu0 0
          %1809 = vperm.xlu0 %1808, %v1457
          %v1810 = vpop.permute.xlu0 %1809
          %1811 = vset.pattern.permute.xlu0 0
          %1812 = vperm.xlu0 %1811, %v1459
          %v1813 = vpop.permute.xlu0 %1812
          %1814 = vset.pattern.permute.xlu0 0
          %1815 = vperm.xlu0 %1814, %v1461
          %v1816 = vpop.permute.xlu0 %1815
          %1817 = vset.pattern.permute.xlu0 0
          %1818 = vperm.xlu0 %1817, %v1463
          %v1819 = vpop.permute.xlu0 %1818
          %1820 = vset.pattern.permute.xlu0 0
          %1821 = vperm.xlu0 %1820, %v1465
          %v1822 = vpop.permute.xlu0 %1821
          %1823 = vset.pattern.permute.xlu0 0
          %1824 = vperm.xlu0 %1823, %v1467
          %v1825 = vpop.permute.xlu0 %1824
          %1826 = vset.pattern.permute.xlu0 0
          %1827 = vperm.xlu0 %1826, %v1469
          %v1828 = vpop.permute.xlu0 %1827
          %1829 = vset.pattern.permute.xlu0 0
          %1830 = vperm.xlu0 %1829, %v1471
          %v1831 = vpop.permute.xlu0 %1830
          %1832 = vset.pattern.permute.xlu0 0
          %1833 = vperm.xlu0 %1832, %v1473
          %v1834 = vpop.permute.xlu0 %1833
          %1835 = vset.pattern.permute.xlu0 0
          %1836 = vperm.xlu0 %1835, %v1475
          %v1837 = vpop.permute.xlu0 %1836
          %1838 = vset.pattern.permute.xlu0 0
          %1839 = vperm.xlu0 %1838, %v1477
          %v1840 = vpop.permute.xlu0 %1839
          %1841 = vset.pattern.permute.xlu0 0
          %1842 = vperm.xlu0 %1841, %v1479
          %v1843 = vpop.permute.xlu0 %1842
          %1844 = vset.pattern.permute.xlu0 0
          %1845 = vperm.xlu0 %1844, %v1481
          %v1846 = vpop.permute.xlu0 %1845
          %1847 = vset.pattern.permute.xlu0 0
          %1848 = vperm.xlu0 %1847, %v1483
          %v1849 = vpop.permute.xlu0 %1848
          %1850 = vset.pattern.permute.xlu0 0
          %1851 = vperm.xlu0 %1850, %v1485
          %v1852 = vpop.permute.xlu0 %1851
          %1853 = vset.pattern.permute.xlu0 0
          %1854 = vperm.xlu0 %1853, %v1487
          %v1855 = vpop.permute.xlu0 %1854
          %1856 = vset.pattern.permute.xlu0 0
          %1857 = vperm.xlu0 %1856, %v1489
          %v1858 = vpop.permute.xlu0 %1857
          %1859 = vset.pattern.permute.xlu0 0
          %1860 = vperm.xlu0 %1859, %v1491
          %v1861 = vpop.permute.xlu0 %1860
          %1862 = vset.pattern.permute.xlu0 0
          %1863 = vperm.xlu0 %1862, %v1493
          %v1864 = vpop.permute.xlu0 %1863
          %1865 = vset.pattern.permute.xlu0 0
          %1866 = vperm.xlu0 %1865, %v1495
          %v1867 = vpop.permute.xlu0 %1866
          %1868 = vset.pattern.permute.xlu0 0
          %1869 = vperm.xlu0 %1868, %v1497
          %v1870 = vpop.permute.xlu0 %1869
          %1871 = vset.pattern.permute.xlu0 0
          %1872 = vperm.xlu0 %1871, %v1499
          %v1873 = vpop.permute.xlu0 %1872
          %1874 = vset.pattern.permute.xlu0 0
          %1875 = vperm.xlu0 %1874, %v1501
          %v1876 = vpop.permute.xlu0 %1875
          %1877 = vset.pattern.permute.xlu0 0
          %1878 = vperm.xlu0 %1877, %v1503
          %v1879 = vpop.permute.xlu0 %1878
          %1880 = vset.pattern.permute.xlu0 0
          %1881 = vperm.xlu0 %1880, %v1505
          %v1882 = vpop.permute.xlu0 %1881
          %1883 = vset.pattern.permute.xlu0 0
          %1884 = vperm.xlu0 %1883, %v1507
          %v1885 = vpop.permute.xlu0 %1884
          %1886 = vset.pattern.permute.xlu0 0
          %1887 = vperm.xlu0 %1886, %v1509
          %v1888 = vpop.permute.xlu0 %1887
          %1889 = vset.pattern.permute.xlu0 0
          %1890 = vperm.xlu0 %1889, %v1511
          %v1891 = vpop.permute.xlu0 %1890
          %1892 = vset.pattern.permute.xlu0 0
          %1893 = vperm.xlu0 %1892, %v1513
          %v1894 = vpop.permute.xlu0 %1893
          %1895 = vset.pattern.permute.xlu0 0
          %1896 = vperm.xlu0 %1895, %v1515
          %v1897 = vpop.permute.xlu0 %1896
          %1898 = vset.pattern.permute.xlu0 0
          %1899 = vperm.xlu0 %1898, %v1517
          %v1900 = vpop.permute.xlu0 %1899
          %1901 = vset.pattern.permute.xlu0 0
          %1902 = vperm.xlu0 %1901, %v1519
          %v1903 = vpop.permute.xlu0 %1902
          %1904 = vset.pattern.permute.xlu0 0
          %1905 = vperm.xlu0 %1904, %v1521
          %v1906 = vpop.permute.xlu0 %1905
          %1907 = vset.pattern.permute.xlu0 0
          %1908 = vperm.xlu0 %1907, %v1523
          %v1909 = vpop.permute.xlu0 %1908
          %vm1910 = vcmp.eq.s32.totalorder %v1525, %v1528
          %vm1911 = vcmp.eq.s32.totalorder %v1525, %v1531
          %vm1912 = vcmp.eq.s32.totalorder %v1525, %v1534
          %vm1913 = vcmp.eq.s32.totalorder %v1525, %v1537
          %vm1914 = vcmp.eq.s32.totalorder %v1525, %v1540
          %vm1915 = vcmp.eq.s32.totalorder %v1525, %v1543
          %vm1916 = vcmp.eq.s32.totalorder %v1525, %v1546
          %vm1917 = vcmp.eq.s32.totalorder %v1525, %v1549
          %vm1918 = vcmp.eq.s32.totalorder %v1525, %v1552
          %vm1919 = vcmp.eq.s32.totalorder %v1525, %v1555
          %vm1920 = vcmp.eq.s32.totalorder %v1525, %v1558
          %vm1921 = vcmp.eq.s32.totalorder %v1525, %v1561
          %vm1922 = vcmp.eq.s32.totalorder %v1525, %v1564
          %vm1923 = vcmp.eq.s32.totalorder %v1525, %v1567
          %vm1924 = vcmp.eq.s32.totalorder %v1525, %v1570
          %vm1925 = vcmp.eq.s32.totalorder %v1525, %v1573
          %vm1926 = vcmp.eq.s32.totalorder %v1525, %v1576
          %vm1927 = vcmp.eq.s32.totalorder %v1525, %v1579
          %vm1928 = vcmp.eq.s32.totalorder %v1525, %v1582
          %vm1929 = vcmp.eq.s32.totalorder %v1525, %v1585
          %vm1930 = vcmp.eq.s32.totalorder %v1525, %v1588
          %vm1931 = vcmp.eq.s32.totalorder %v1525, %v1591
          %vm1932 = vcmp.eq.s32.totalorder %v1525, %v1594
          %vm1933 = vcmp.eq.s32.totalorder %v1525, %v1597
          %vm1934 = vcmp.eq.s32.totalorder %v1525, %v1600
          %vm1935 = vcmp.eq.s32.totalorder %v1525, %v1603
          %vm1936 = vcmp.eq.s32.totalorder %v1525, %v1606
          %vm1937 = vcmp.eq.s32.totalorder %v1525, %v1609
          %vm1938 = vcmp.eq.s32.totalorder %v1525, %v1612
          %vm1939 = vcmp.eq.s32.totalorder %v1525, %v1615
          %vm1940 = vcmp.eq.s32.totalorder %v1525, %v1618
          %vm1941 = vcmp.eq.s32.totalorder %v1525, %v1621
          %vm1942 = vcmp.eq.s32.totalorder %v1525, %v1624
          %vm1943 = vcmp.eq.s32.totalorder %v1525, %v1627
          %vm1944 = vcmp.eq.s32.totalorder %v1525, %v1630
          %vm1945 = vcmp.eq.s32.totalorder %v1525, %v1633
          %vm1946 = vcmp.eq.s32.totalorder %v1525, %v1636
          %vm1947 = vcmp.eq.s32.totalorder %v1525, %v1639
          %vm1948 = vcmp.eq.s32.totalorder %v1525, %v1642
          %vm1949 = vcmp.eq.s32.totalorder %v1525, %v1645
          %vm1950 = vcmp.eq.s32.totalorder %v1525, %v1648
          %vm1951 = vcmp.eq.s32.totalorder %v1525, %v1651
          %vm1952 = vcmp.eq.s32.totalorder %v1525, %v1654
          %vm1953 = vcmp.eq.s32.totalorder %v1525, %v1657
          %vm1954 = vcmp.eq.s32.totalorder %v1525, %v1660
          %vm1955 = vcmp.eq.s32.totalorder %v1525, %v1663
          %vm1956 = vcmp.eq.s32.totalorder %v1525, %v1666
          %vm1957 = vcmp.eq.s32.totalorder %v1525, %v1669
          %vm1958 = vcmp.eq.s32.totalorder %v1525, %v1672
          %vm1959 = vcmp.eq.s32.totalorder %v1525, %v1675
          %vm1960 = vcmp.eq.s32.totalorder %v1525, %v1678
          %vm1961 = vcmp.eq.s32.totalorder %v1525, %v1681
          %vm1962 = vcmp.eq.s32.totalorder %v1525, %v1684
          %vm1963 = vcmp.eq.s32.totalorder %v1525, %v1687
          %vm1964 = vcmp.eq.s32.totalorder %v1525, %v1690
          %vm1965 = vcmp.eq.s32.totalorder %v1525, %v1693
          %vm1966 = vcmp.eq.s32.totalorder %v1525, %v1696
          %vm1967 = vcmp.eq.s32.totalorder %v1525, %v1699
          %vm1968 = vcmp.eq.s32.totalorder %v1525, %v1702
          %vm1969 = vcmp.eq.s32.totalorder %v1525, %v1705
          %vm1970 = vcmp.eq.s32.totalorder %v1525, %v1708
          %vm1971 = vcmp.eq.s32.totalorder %v1525, %v1711
          %vm1972 = vcmp.eq.s32.totalorder %v1525, %v1714
          %vm1973 = vcmp.eq.s32.totalorder %v1525, %v1717
          %vm1974 = vcmp.eq.s32.totalorder %v1525, %v1720
          %vm1975 = vcmp.eq.s32.totalorder %v1525, %v1723
          %vm1976 = vcmp.eq.s32.totalorder %v1525, %v1726
          %vm1977 = vcmp.eq.s32.totalorder %v1525, %v1729
          %vm1978 = vcmp.eq.s32.totalorder %v1525, %v1732
          %vm1979 = vcmp.eq.s32.totalorder %v1525, %v1735
          %vm1980 = vcmp.eq.s32.totalorder %v1525, %v1738
          %vm1981 = vcmp.eq.s32.totalorder %v1525, %v1741
          %vm1982 = vcmp.eq.s32.totalorder %v1525, %v1744
          %vm1983 = vcmp.eq.s32.totalorder %v1525, %v1747
          %vm1984 = vcmp.eq.s32.totalorder %v1525, %v1750
          %vm1985 = vcmp.eq.s32.totalorder %v1525, %v1753
          %vm1986 = vcmp.eq.s32.totalorder %v1525, %v1756
          %vm1987 = vcmp.eq.s32.totalorder %v1525, %v1759
          %vm1988 = vcmp.eq.s32.totalorder %v1525, %v1762
          %vm1989 = vcmp.eq.s32.totalorder %v1525, %v1765
          %vm1990 = vcmp.eq.s32.totalorder %v1525, %v1768
          %vm1991 = vcmp.eq.s32.totalorder %v1525, %v1771
          %vm1992 = vcmp.eq.s32.totalorder %v1525, %v1774
          %vm1993 = vcmp.eq.s32.totalorder %v1525, %v1777
          %vm1994 = vcmp.eq.s32.totalorder %v1525, %v1780
          %vm1995 = vcmp.eq.s32.totalorder %v1525, %v1783
          %vm1996 = vcmp.eq.s32.totalorder %v1525, %v1786
          %vm1997 = vcmp.eq.s32.totalorder %v1525, %v1789
          %vm1998 = vcmp.eq.s32.totalorder %v1525, %v1792
          %vm1999 = vcmp.eq.s32.totalorder %v1525, %v1795
          %vm2000 = vcmp.eq.s32.totalorder %v1525, %v1798
          %vm2001 = vcmp.eq.s32.totalorder %v1525, %v1801
          %vm2002 = vcmp.eq.s32.totalorder %v1525, %v1804
          %vm2003 = vcmp.eq.s32.totalorder %v1525, %v1807
          %vm2004 = vcmp.eq.s32.totalorder %v1525, %v1810
          %vm2005 = vcmp.eq.s32.totalorder %v1525, %v1813
          %vm2006 = vcmp.eq.s32.totalorder %v1525, %v1816
          %vm2007 = vcmp.eq.s32.totalorder %v1525, %v1819
          %vm2008 = vcmp.eq.s32.totalorder %v1525, %v1822
          %vm2009 = vcmp.eq.s32.totalorder %v1525, %v1825
          %vm2010 = vcmp.eq.s32.totalorder %v1525, %v1828
          %vm2011 = vcmp.eq.s32.totalorder %v1525, %v1831
          %vm2012 = vcmp.eq.s32.totalorder %v1525, %v1834
          %vm2013 = vcmp.eq.s32.totalorder %v1525, %v1837
          %vm2014 = vcmp.eq.s32.totalorder %v1525, %v1840
          %vm2015 = vcmp.eq.s32.totalorder %v1525, %v1843
          %vm2016 = vcmp.eq.s32.totalorder %v1525, %v1846
          %vm2017 = vcmp.eq.s32.totalorder %v1525, %v1849
          %vm2018 = vcmp.eq.s32.totalorder %v1525, %v1852
          %vm2019 = vcmp.eq.s32.totalorder %v1525, %v1855
          %vm2020 = vcmp.eq.s32.totalorder %v1525, %v1858
          %vm2021 = vcmp.eq.s32.totalorder %v1525, %v1861
          %vm2022 = vcmp.eq.s32.totalorder %v1525, %v1864
          %vm2023 = vcmp.eq.s32.totalorder %v1525, %v1867
          %vm2024 = vcmp.eq.s32.totalorder %v1525, %v1870
          %vm2025 = vcmp.eq.s32.totalorder %v1525, %v1873
          %vm2026 = vcmp.eq.s32.totalorder %v1525, %v1876
          %vm2027 = vcmp.eq.s32.totalorder %v1525, %v1879
          %vm2028 = vcmp.eq.s32.totalorder %v1525, %v1882
          %vm2029 = vcmp.eq.s32.totalorder %v1525, %v1885
          %vm2030 = vcmp.eq.s32.totalorder %v1525, %v1888
          %vm2031 = vcmp.eq.s32.totalorder %v1525, %v1891
          %vm2032 = vcmp.eq.s32.totalorder %v1525, %v1894
          %vm2033 = vcmp.eq.s32.totalorder %v1525, %v1897
          %vm2034 = vcmp.eq.s32.totalorder %v1525, %v1900
          %vm2035 = vcmp.eq.s32.totalorder %v1525, %v1903
          %vm2036 = vcmp.eq.s32.totalorder %v1525, %v1906
          %vm2037 = vcmp.eq.s32.totalorder %v1525, %v1909
          %v2038 = vsel %vm1910, 1, 0
          %v2039 = vsel %vm1911, 1, 0
          %v2040 = vsel %vm1912, 1, 0
          %v2041 = vsel %vm1913, 1, 0
          %v2042 = vsel %vm1914, 1, 0
          %v2043 = vsel %vm1915, 1, 0
          %v2044 = vsel %vm1916, 1, 0
          %v2045 = vsel %vm1917, 1, 0
          %v2046 = vsel %vm1918, 1, 0
          %v2047 = vsel %vm1919, 1, 0
          %v2048 = vsel %vm1920, 1, 0
          %v2049 = vsel %vm1921, 1, 0
          %v2050 = vsel %vm1922, 1, 0
          %v2051 = vsel %vm1923, 1, 0
          %v2052 = vsel %vm1924, 1, 0
          %v2053 = vsel %vm1925, 1, 0
          %v2054 = vsel %vm1926, 1, 0
          %v2055 = vsel %vm1927, 1, 0
          %v2056 = vsel %vm1928, 1, 0
          %v2057 = vsel %vm1929, 1, 0
          %v2058 = vsel %vm1930, 1, 0
          %v2059 = vsel %vm1931, 1, 0
          %v2060 = vsel %vm1932, 1, 0
          %v2061 = vsel %vm1933, 1, 0
          %v2062 = vsel %vm1934, 1, 0
          %v2063 = vsel %vm1935, 1, 0
          %v2064 = vsel %vm1936, 1, 0
          %v2065 = vsel %vm1937, 1, 0
          %v2066 = vsel %vm1938, 1, 0
          %v2067 = vsel %vm1939, 1, 0
          %v2068 = vsel %vm1940, 1, 0
          %v2069 = vsel %vm1941, 1, 0
          %v2070 = vsel %vm1942, 1, 0
          %v2071 = vsel %vm1943, 1, 0
          %v2072 = vsel %vm1944, 1, 0
          %v2073 = vsel %vm1945, 1, 0
          %v2074 = vsel %vm1946, 1, 0
          %v2075 = vsel %vm1947, 1, 0
          %v2076 = vsel %vm1948, 1, 0
          %v2077 = vsel %vm1949, 1, 0
          %v2078 = vsel %vm1950, 1, 0
          %v2079 = vsel %vm1951, 1, 0
          %v2080 = vsel %vm1952, 1, 0
          %v2081 = vsel %vm1953, 1, 0
          %v2082 = vsel %vm1954, 1, 0
          %v2083 = vsel %vm1955, 1, 0
          %v2084 = vsel %vm1956, 1, 0
          %v2085 = vsel %vm1957, 1, 0
          %v2086 = vsel %vm1958, 1, 0
          %v2087 = vsel %vm1959, 1, 0
          %v2088 = vsel %vm1960, 1, 0
          %v2089 = vsel %vm1961, 1, 0
          %v2090 = vsel %vm1962, 1, 0
          %v2091 = vsel %vm1963, 1, 0
          %v2092 = vsel %vm1964, 1, 0
          %v2093 = vsel %vm1965, 1, 0
          %v2094 = vsel %vm1966, 1, 0
          %v2095 = vsel %vm1967, 1, 0
          %v2096 = vsel %vm1968, 1, 0
          %v2097 = vsel %vm1969, 1, 0
          %v2098 = vsel %vm1970, 1, 0
          %v2099 = vsel %vm1971, 1, 0
          %v2100 = vsel %vm1972, 1, 0
          %v2101 = vsel %vm1973, 1, 0
          %v2102 = vsel %vm1974, 1, 0
          %v2103 = vsel %vm1975, 1, 0
          %v2104 = vsel %vm1976, 1, 0
          %v2105 = vsel %vm1977, 1, 0
          %v2106 = vsel %vm1978, 1, 0
          %v2107 = vsel %vm1979, 1, 0
          %v2108 = vsel %vm1980, 1, 0
          %v2109 = vsel %vm1981, 1, 0
          %v2110 = vsel %vm1982, 1, 0
          %v2111 = vsel %vm1983, 1, 0
          %v2112 = vsel %vm1984, 1, 0
          %v2113 = vsel %vm1985, 1, 0
          %v2114 = vsel %vm1986, 1, 0
          %v2115 = vsel %vm1987, 1, 0
          %v2116 = vsel %vm1988, 1, 0
          %v2117 = vsel %vm1989, 1, 0
          %v2118 = vsel %vm1990, 1, 0
          %v2119 = vsel %vm1991, 1, 0
          %v2120 = vsel %vm1992, 1, 0
          %v2121 = vsel %vm1993, 1, 0
          %v2122 = vsel %vm1994, 1, 0
          %v2123 = vsel %vm1995, 1, 0
          %v2124 = vsel %vm1996, 1, 0
          %v2125 = vsel %vm1997, 1, 0
          %v2126 = vsel %vm1998, 1, 0
          %v2127 = vsel %vm1999, 1, 0
          %v2128 = vsel %vm2000, 1, 0
          %v2129 = vsel %vm2001, 1, 0
          %v2130 = vsel %vm2002, 1, 0
          %v2131 = vsel %vm2003, 1, 0
          %v2132 = vsel %vm2004, 1, 0
          %v2133 = vsel %vm2005, 1, 0
          %v2134 = vsel %vm2006, 1, 0
          %v2135 = vsel %vm2007, 1, 0
          %v2136 = vsel %vm2008, 1, 0
          %v2137 = vsel %vm2009, 1, 0
          %v2138 = vsel %vm2010, 1, 0
          %v2139 = vsel %vm2011, 1, 0
          %v2140 = vsel %vm2012, 1, 0
          %v2141 = vsel %vm2013, 1, 0
          %v2142 = vsel %vm2014, 1, 0
          %v2143 = vsel %vm2015, 1, 0
          %v2144 = vsel %vm2016, 1, 0
          %v2145 = vsel %vm2017, 1, 0
          %v2146 = vsel %vm2018, 1, 0
          %v2147 = vsel %vm2019, 1, 0
          %v2148 = vsel %vm2020, 1, 0
          %v2149 = vsel %vm2021, 1, 0
          %v2150 = vsel %vm2022, 1, 0
          %v2151 = vsel %vm2023, 1, 0
          %v2152 = vsel %vm2024, 1, 0
          %v2153 = vsel %vm2025, 1, 0
          %v2154 = vsel %vm2026, 1, 0
          %v2155 = vsel %vm2027, 1, 0
          %v2156 = vsel %vm2028, 1, 0
          %v2157 = vsel %vm2029, 1, 0
          %v2158 = vsel %vm2030, 1, 0
          %v2159 = vsel %vm2031, 1, 0
          %v2160 = vsel %vm2032, 1, 0
          %v2161 = vsel %vm2033, 1, 0
          %v2162 = vsel %vm2034, 1, 0
          %v2163 = vsel %vm2035, 1, 0
          %v2164 = vsel %vm2036, 1, 0
          %v2165 = vsel %vm2037, 1, 0
          %v2166 = vcvt.s32.f32 %v2038
          %v2167 = vcvt.s32.f32 %v2039
          %v2168 = vcvt.s32.f32 %v2040
          %v2169 = vcvt.s32.f32 %v2041
          %v2170 = vcvt.s32.f32 %v2042
          %v2171 = vcvt.s32.f32 %v2043
          %v2172 = vcvt.s32.f32 %v2044
          %v2173 = vcvt.s32.f32 %v2045
          %v2174 = vcvt.s32.f32 %v2046
          %v2175 = vcvt.s32.f32 %v2047
          %v2176 = vcvt.s32.f32 %v2048
          %v2177 = vcvt.s32.f32 %v2049
          %v2178 = vcvt.s32.f32 %v2050
          %v2179 = vcvt.s32.f32 %v2051
          %v2180 = vcvt.s32.f32 %v2052
          %v2181 = vcvt.s32.f32 %v2053
          %v2182 = vcvt.s32.f32 %v2054
          %v2183 = vcvt.s32.f32 %v2055
          %v2184 = vcvt.s32.f32 %v2056
          %v2185 = vcvt.s32.f32 %v2057
          %v2186 = vcvt.s32.f32 %v2058
          %v2187 = vcvt.s32.f32 %v2059
          %v2188 = vcvt.s32.f32 %v2060
          %v2189 = vcvt.s32.f32 %v2061
          %v2190 = vcvt.s32.f32 %v2062
          %v2191 = vcvt.s32.f32 %v2063
          %v2192 = vcvt.s32.f32 %v2064
          %v2193 = vcvt.s32.f32 %v2065
          %v2194 = vcvt.s32.f32 %v2066
          %v2195 = vcvt.s32.f32 %v2067
          %v2196 = vcvt.s32.f32 %v2068
          %v2197 = vcvt.s32.f32 %v2069
          %v2198 = vcvt.s32.f32 %v2070
          %v2199 = vcvt.s32.f32 %v2071
          %v2200 = vcvt.s32.f32 %v2072
          %v2201 = vcvt.s32.f32 %v2073
          %v2202 = vcvt.s32.f32 %v2074
          %v2203 = vcvt.s32.f32 %v2075
          %v2204 = vcvt.s32.f32 %v2076
          %v2205 = vcvt.s32.f32 %v2077
          %v2206 = vcvt.s32.f32 %v2078
          %v2207 = vcvt.s32.f32 %v2079
          %v2208 = vcvt.s32.f32 %v2080
          %v2209 = vcvt.s32.f32 %v2081
          %v2210 = vcvt.s32.f32 %v2082
          %v2211 = vcvt.s32.f32 %v2083
          %v2212 = vcvt.s32.f32 %v2084
          %v2213 = vcvt.s32.f32 %v2085
          %v2214 = vcvt.s32.f32 %v2086
          %v2215 = vcvt.s32.f32 %v2087
          %v2216 = vcvt.s32.f32 %v2088
          %v2217 = vcvt.s32.f32 %v2089
          %v2218 = vcvt.s32.f32 %v2090
          %v2219 = vcvt.s32.f32 %v2091
          %v2220 = vcvt.s32.f32 %v2092
          %v2221 = vcvt.s32.f32 %v2093
          %v2222 = vcvt.s32.f32 %v2094
          %v2223 = vcvt.s32.f32 %v2095
          %v2224 = vcvt.s32.f32 %v2096
          %v2225 = vcvt.s32.f32 %v2097
          %v2226 = vcvt.s32.f32 %v2098
          %v2227 = vcvt.s32.f32 %v2099
          %v2228 = vcvt.s32.f32 %v2100
          %v2229 = vcvt.s32.f32 %v2101
          %v2230 = vcvt.s32.f32 %v2102
          %v2231 = vcvt.s32.f32 %v2103
          %v2232 = vcvt.s32.f32 %v2104
          %v2233 = vcvt.s32.f32 %v2105
          %v2234 = vcvt.s32.f32 %v2106
          %v2235 = vcvt.s32.f32 %v2107
          %v2236 = vcvt.s32.f32 %v2108
          %v2237 = vcvt.s32.f32 %v2109
          %v2238 = vcvt.s32.f32 %v2110
          %v2239 = vcvt.s32.f32 %v2111
          %v2240 = vcvt.s32.f32 %v2112
          %v2241 = vcvt.s32.f32 %v2113
          %v2242 = vcvt.s32.f32 %v2114
          %v2243 = vcvt.s32.f32 %v2115
          %v2244 = vcvt.s32.f32 %v2116
          %v2245 = vcvt.s32.f32 %v2117
          %v2246 = vcvt.s32.f32 %v2118
          %v2247 = vcvt.s32.f32 %v2119
          %v2248 = vcvt.s32.f32 %v2120
          %v2249 = vcvt.s32.f32 %v2121
          %v2250 = vcvt.s32.f32 %v2122
          %v2251 = vcvt.s32.f32 %v2123
          %v2252 = vcvt.s32.f32 %v2124
          %v2253 = vcvt.s32.f32 %v2125
          %v2254 = vcvt.s32.f32 %v2126
          %v2255 = vcvt.s32.f32 %v2127
          %v2256 = vcvt.s32.f32 %v2128
          %v2257 = vcvt.s32.f32 %v2129
          %v2258 = vcvt.s32.f32 %v2130
          %v2259 = vcvt.s32.f32 %v2131
          %v2260 = vcvt.s32.f32 %v2132
          %v2261 = vcvt.s32.f32 %v2133
          %v2262 = vcvt.s32.f32 %v2134
          %v2263 = vcvt.s32.f32 %v2135
          %v2264 = vcvt.s32.f32 %v2136
          %v2265 = vcvt.s32.f32 %v2137
          %v2266 = vcvt.s32.f32 %v2138
          %v2267 = vcvt.s32.f32 %v2139
          %v2268 = vcvt.s32.f32 %v2140
          %v2269 = vcvt.s32.f32 %v2141
          %v2270 = vcvt.s32.f32 %v2142
          %v2271 = vcvt.s32.f32 %v2143
          %v2272 = vcvt.s32.f32 %v2144
          %v2273 = vcvt.s32.f32 %v2145
          %v2274 = vcvt.s32.f32 %v2146
          %v2275 = vcvt.s32.f32 %v2147
          %v2276 = vcvt.s32.f32 %v2148
          %v2277 = vcvt.s32.f32 %v2149
          %v2278 = vcvt.s32.f32 %v2150
          %v2279 = vcvt.s32.f32 %v2151
          %v2280 = vcvt.s32.f32 %v2152
          %v2281 = vcvt.s32.f32 %v2153
          %v2282 = vcvt.s32.f32 %v2154
          %v2283 = vcvt.s32.f32 %v2155
          %v2284 = vcvt.s32.f32 %v2156
          %v2285 = vcvt.s32.f32 %v2157
          %v2286 = vcvt.s32.f32 %v2158
          %v2287 = vcvt.s32.f32 %v2159
          %v2288 = vcvt.s32.f32 %v2160
          %v2289 = vcvt.s32.f32 %v2161
          %v2290 = vcvt.s32.f32 %v2162
          %v2291 = vcvt.s32.f32 %v2163
          %v2292 = vcvt.s32.f32 %v2164
          %v2293 = vcvt.s32.f32 %v2165
          %vm2294 = vcmask 64512
          %v2296 = vsel %vm2294, %v2166, 0
          %v2299 = vsel %vm2294, %v2167, 0
          %v2302 = vsel %vm2294, %v2168, 0
          %v2305 = vsel %vm2294, %v2169, 0
          %v2308 = vsel %vm2294, %v2170, 0
          %v2311 = vsel %vm2294, %v2171, 0
          %v2314 = vsel %vm2294, %v2172, 0
          %v2317 = vsel %vm2294, %v2173, 0
          %v2320 = vsel %vm2294, %v2174, 0
          %v2323 = vsel %vm2294, %v2175, 0
          %v2326 = vsel %vm2294, %v2176, 0
          %v2329 = vsel %vm2294, %v2177, 0
          %v2332 = vsel %vm2294, %v2178, 0
          %v2335 = vsel %vm2294, %v2179, 0
          %v2338 = vsel %vm2294, %v2180, 0
          %v2341 = vsel %vm2294, %v2181, 0
          %v2344 = vsel %vm2294, %v2182, 0
          %v2347 = vsel %vm2294, %v2183, 0
          %v2350 = vsel %vm2294, %v2184, 0
          %v2353 = vsel %vm2294, %v2185, 0
          %v2356 = vsel %vm2294, %v2186, 0
          %v2359 = vsel %vm2294, %v2187, 0
          %v2362 = vsel %vm2294, %v2188, 0
          %v2365 = vsel %vm2294, %v2189, 0
          %v2368 = vsel %vm2294, %v2190, 0
          %v2371 = vsel %vm2294, %v2191, 0
          %v2374 = vsel %vm2294, %v2192, 0
          %v2377 = vsel %vm2294, %v2193, 0
          %v2380 = vsel %vm2294, %v2194, 0
          %v2383 = vsel %vm2294, %v2195, 0
          %v2386 = vsel %vm2294, %v2196, 0
          %v2389 = vsel %vm2294, %v2197, 0
          %v2392 = vsel %vm2294, %v2198, 0
          %v2395 = vsel %vm2294, %v2199, 0
          %v2398 = vsel %vm2294, %v2200, 0
          %v2401 = vsel %vm2294, %v2201, 0
          %v2404 = vsel %vm2294, %v2202, 0
          %v2407 = vsel %vm2294, %v2203, 0
          %v2410 = vsel %vm2294, %v2204, 0
          %v2413 = vsel %vm2294, %v2205, 0
          %v2416 = vsel %vm2294, %v2206, 0
          %v2419 = vsel %vm2294, %v2207, 0
          %v2422 = vsel %vm2294, %v2208, 0
          %v2425 = vsel %vm2294, %v2209, 0
          %v2428 = vsel %vm2294, %v2210, 0
          %v2431 = vsel %vm2294, %v2211, 0
          %v2434 = vsel %vm2294, %v2212, 0
          %v2437 = vsel %vm2294, %v2213, 0
          %v2440 = vsel %vm2294, %v2214, 0
          %v2443 = vsel %vm2294, %v2215, 0
          %v2446 = vsel %vm2294, %v2216, 0
          %v2449 = vsel %vm2294, %v2217, 0
          %v2452 = vsel %vm2294, %v2218, 0
          %v2455 = vsel %vm2294, %v2219, 0
          %v2458 = vsel %vm2294, %v2220, 0
          %v2461 = vsel %vm2294, %v2221, 0
          %v2464 = vsel %vm2294, %v2222, 0
          %v2467 = vsel %vm2294, %v2223, 0
          %v2470 = vsel %vm2294, %v2224, 0
          %v2473 = vsel %vm2294, %v2225, 0
          %v2476 = vsel %vm2294, %v2226, 0
          %v2479 = vsel %vm2294, %v2227, 0
          %v2482 = vsel %vm2294, %v2228, 0
          %v2485 = vsel %vm2294, %v2229, 0
          %v2488 = vsel %vm2294, %v2230, 0
          %v2491 = vsel %vm2294, %v2231, 0
          %v2494 = vsel %vm2294, %v2232, 0
          %v2497 = vsel %vm2294, %v2233, 0
          %v2500 = vsel %vm2294, %v2234, 0
          %v2503 = vsel %vm2294, %v2235, 0
          %v2506 = vsel %vm2294, %v2236, 0
          %v2509 = vsel %vm2294, %v2237, 0
          %v2512 = vsel %vm2294, %v2238, 0
          %v2515 = vsel %vm2294, %v2239, 0
          %v2518 = vsel %vm2294, %v2240, 0
          %v2521 = vsel %vm2294, %v2241, 0
          %v2524 = vsel %vm2294, %v2242, 0
          %v2527 = vsel %vm2294, %v2243, 0
          %v2530 = vsel %vm2294, %v2244, 0
          %v2533 = vsel %vm2294, %v2245, 0
          %v2536 = vsel %vm2294, %v2246, 0
          %v2539 = vsel %vm2294, %v2247, 0
          %v2542 = vsel %vm2294, %v2248, 0
          %v2545 = vsel %vm2294, %v2249, 0
          %v2548 = vsel %vm2294, %v2250, 0
          %v2551 = vsel %vm2294, %v2251, 0
          %v2554 = vsel %vm2294, %v2252, 0
          %v2557 = vsel %vm2294, %v2253, 0
          %v2560 = vsel %vm2294, %v2254, 0
          %v2563 = vsel %vm2294, %v2255, 0
          %v2566 = vsel %vm2294, %v2256, 0
          %v2569 = vsel %vm2294, %v2257, 0
          %v2572 = vsel %vm2294, %v2258, 0
          %v2575 = vsel %vm2294, %v2259, 0
          %v2578 = vsel %vm2294, %v2260, 0
          %v2581 = vsel %vm2294, %v2261, 0
          %v2584 = vsel %vm2294, %v2262, 0
          %v2587 = vsel %vm2294, %v2263, 0
          %v2590 = vsel %vm2294, %v2264, 0
          %v2593 = vsel %vm2294, %v2265, 0
          %v2596 = vsel %vm2294, %v2266, 0
          %v2599 = vsel %vm2294, %v2267, 0
          %v2602 = vsel %vm2294, %v2268, 0
          %v2605 = vsel %vm2294, %v2269, 0
          %v2608 = vsel %vm2294, %v2270, 0
          %v2611 = vsel %vm2294, %v2271, 0
          %v2614 = vsel %vm2294, %v2272, 0
          %v2617 = vsel %vm2294, %v2273, 0
          %v2620 = vsel %vm2294, %v2274, 0
          %v2623 = vsel %vm2294, %v2275, 0
          %v2626 = vsel %vm2294, %v2276, 0
          %v2629 = vsel %vm2294, %v2277, 0
          %v2632 = vsel %vm2294, %v2278, 0
          %v2635 = vsel %vm2294, %v2279, 0
          %v2638 = vsel %vm2294, %v2280, 0
          %v2641 = vsel %vm2294, %v2281, 0
          %v2644 = vsel %vm2294, %v2282, 0
          %v2647 = vsel %vm2294, %v2283, 0
          %v2650 = vsel %vm2294, %v2284, 0
          %v2653 = vsel %vm2294, %v2285, 0
          %v2656 = vsel %vm2294, %v2286, 0
          %v2659 = vsel %vm2294, %v2287, 0
          %v2662 = vsel %vm2294, %v2288, 0
          %v2665 = vsel %vm2294, %v2289, 0
          %v2668 = vsel %vm2294, %v2290, 0
          %v2671 = vsel %vm2294, %v2291, 0
          %v2674 = vsel %vm2294, %v2292, 0
          %v2677 = vsel %vm2294, %v2293, 0
          %2679 = vmatpush.msra.mxu0 0.0
          %2680 = vmatpush.msra.mxu0 0.0
          %2681 = vmatpush.msra.mxu0 0.0
          %2682 = vmatpush.msra.mxu0 0.0
          %2683 = vmatpush.msra.mxu0 0.0
          %2684 = vmatpush.msra.mxu0 0.0
          %2685 = vmatpush.msra.mxu0 0.0
          %2686 = vmatpush.msra.mxu0 0.0
          %2687 = vmatpush.msra.mxu0 0.0
          %2688 = vmatpush.msra.mxu0 0.0
          %2689 = vmatpush.msra.mxu0 0.0
          %2690 = vmatpush.msra.mxu0 0.0
          %2691 = vmatpush.msra.mxu0 0.0
          %2692 = vmatpush.msra.mxu0 0.0
          %2693 = vmatpush.msra.mxu0 0.0
          %2694 = vmatpush.msra.mxu0 %v1331
          %2695 = vmatmul.f32.gmra.mxu0 %v2296
          %v2696 = vpop.f32.mrf.mxu0
          %v2697 = vadd.f32 0.0, %v2696
          %2698 = vmatmul.f32.gmra.mxu0 %v2299
          %v2699 = vpop.f32.mrf.mxu0
          %v2700 = vadd.f32 0.0, %v2699
          %2701 = vmatmul.f32.gmra.mxu0 %v2302
          %v2702 = vpop.f32.mrf.mxu0
          %v2703 = vadd.f32 0.0, %v2702
          %2704 = vmatmul.f32.gmra.mxu0 %v2305
          %v2705 = vpop.f32.mrf.mxu0
          %v2706 = vadd.f32 0.0, %v2705
          %2707 = vmatmul.f32.gmra.mxu0 %v2308
          %v2708 = vpop.f32.mrf.mxu0
          %v2709 = vadd.f32 0.0, %v2708
          %2710 = vmatmul.f32.gmra.mxu0 %v2311
          %v2711 = vpop.f32.mrf.mxu0
          %v2712 = vadd.f32 0.0, %v2711
          %2713 = vmatmul.f32.gmra.mxu0 %v2314
          %v2714 = vpop.f32.mrf.mxu0
          %v2715 = vadd.f32 0.0, %v2714
          %2716 = vmatmul.f32.gmra.mxu0 %v2317
          %v2717 = vpop.f32.mrf.mxu0
          %v2718 = vadd.f32 0.0, %v2717
          %2719 = vmatmul.f32.gmra.mxu0 %v2320
          %v2720 = vpop.f32.mrf.mxu0
          %v2721 = vadd.f32 0.0, %v2720
          %2722 = vmatmul.f32.gmra.mxu0 %v2323
          %v2723 = vpop.f32.mrf.mxu0
          %v2724 = vadd.f32 0.0, %v2723
          %2725 = vmatmul.f32.gmra.mxu0 %v2326
          %v2726 = vpop.f32.mrf.mxu0
          %v2727 = vadd.f32 0.0, %v2726
          %2728 = vmatmul.f32.gmra.mxu0 %v2329
          %v2729 = vpop.f32.mrf.mxu0
          %v2730 = vadd.f32 0.0, %v2729
          %2731 = vmatmul.f32.gmra.mxu0 %v2332
          %v2732 = vpop.f32.mrf.mxu0
          %v2733 = vadd.f32 0.0, %v2732
          %2734 = vmatmul.f32.gmra.mxu0 %v2335
          %v2735 = vpop.f32.mrf.mxu0
          %v2736 = vadd.f32 0.0, %v2735
          %2737 = vmatmul.f32.gmra.mxu0 %v2338
          %v2738 = vpop.f32.mrf.mxu0
          %v2739 = vadd.f32 0.0, %v2738
          %2740 = vmatmul.f32.gmra.mxu0 %v2341
          %v2741 = vpop.f32.mrf.mxu0
          %v2742 = vadd.f32 0.0, %v2741
          %2743 = vmatmul.f32.gmra.mxu0 %v2344
          %v2744 = vpop.f32.mrf.mxu0
          %v2745 = vadd.f32 0.0, %v2744
          %2746 = vmatmul.f32.gmra.mxu0 %v2347
          %v2747 = vpop.f32.mrf.mxu0
          %v2748 = vadd.f32 0.0, %v2747
          %2749 = vmatmul.f32.gmra.mxu0 %v2350
          %v2750 = vpop.f32.mrf.mxu0
          %v2751 = vadd.f32 0.0, %v2750
          %2752 = vmatmul.f32.gmra.mxu0 %v2353
          %v2753 = vpop.f32.mrf.mxu0
          %v2754 = vadd.f32 0.0, %v2753
          %2755 = vmatmul.f32.gmra.mxu0 %v2356
          %v2756 = vpop.f32.mrf.mxu0
          %v2757 = vadd.f32 0.0, %v2756
          %2758 = vmatmul.f32.gmra.mxu0 %v2359
          %v2759 = vpop.f32.mrf.mxu0
          %v2760 = vadd.f32 0.0, %v2759
          %2761 = vmatmul.f32.gmra.mxu0 %v2362
          %v2762 = vpop.f32.mrf.mxu0
          %v2763 = vadd.f32 0.0, %v2762
          %2764 = vmatmul.f32.gmra.mxu0 %v2365
          %v2765 = vpop.f32.mrf.mxu0
          %v2766 = vadd.f32 0.0, %v2765
          %2767 = vmatmul.f32.gmra.mxu0 %v2368
          %v2768 = vpop.f32.mrf.mxu0
          %v2769 = vadd.f32 0.0, %v2768
          %2770 = vmatmul.f32.gmra.mxu0 %v2371
          %v2771 = vpop.f32.mrf.mxu0
          %v2772 = vadd.f32 0.0, %v2771
          %2773 = vmatmul.f32.gmra.mxu0 %v2374
          %v2774 = vpop.f32.mrf.mxu0
          %v2775 = vadd.f32 0.0, %v2774
          %2776 = vmatmul.f32.gmra.mxu0 %v2377
          %v2777 = vpop.f32.mrf.mxu0
          %v2778 = vadd.f32 0.0, %v2777
          %2779 = vmatmul.f32.gmra.mxu0 %v2380
          %v2780 = vpop.f32.mrf.mxu0
          %v2781 = vadd.f32 0.0, %v2780
          %2782 = vmatmul.f32.gmra.mxu0 %v2383
          %v2783 = vpop.f32.mrf.mxu0
          %v2784 = vadd.f32 0.0, %v2783
          %2785 = vmatmul.f32.gmra.mxu0 %v2386
          %v2786 = vpop.f32.mrf.mxu0
          %v2787 = vadd.f32 0.0, %v2786
          %2788 = vmatmul.f32.gmra.mxu0 %v2389
          %v2789 = vpop.f32.mrf.mxu0
          %v2790 = vadd.f32 0.0, %v2789
          %2791 = vmatmul.f32.gmra.mxu0 %v2392
          %v2792 = vpop.f32.mrf.mxu0
          %v2793 = vadd.f32 0.0, %v2792
          %2794 = vmatmul.f32.gmra.mxu0 %v2395
          %v2795 = vpop.f32.mrf.mxu0
          %v2796 = vadd.f32 0.0, %v2795
          %2797 = vmatmul.f32.gmra.mxu0 %v2398
          %v2798 = vpop.f32.mrf.mxu0
          %v2799 = vadd.f32 0.0, %v2798
          %2800 = vmatmul.f32.gmra.mxu0 %v2401
          %v2801 = vpop.f32.mrf.mxu0
          %v2802 = vadd.f32 0.0, %v2801
          %2803 = vmatmul.f32.gmra.mxu0 %v2404
          %v2804 = vpop.f32.mrf.mxu0
          %v2805 = vadd.f32 0.0, %v2804
          %2806 = vmatmul.f32.gmra.mxu0 %v2407
          %v2807 = vpop.f32.mrf.mxu0
          %v2808 = vadd.f32 0.0, %v2807
          %2809 = vmatmul.f32.gmra.mxu0 %v2410
          %v2810 = vpop.f32.mrf.mxu0
          %v2811 = vadd.f32 0.0, %v2810
          %2812 = vmatmul.f32.gmra.mxu0 %v2413
          %v2813 = vpop.f32.mrf.mxu0
          %v2814 = vadd.f32 0.0, %v2813
          %2815 = vmatmul.f32.gmra.mxu0 %v2416
          %v2816 = vpop.f32.mrf.mxu0
          %v2817 = vadd.f32 0.0, %v2816
          %2818 = vmatmul.f32.gmra.mxu0 %v2419
          %v2819 = vpop.f32.mrf.mxu0
          %v2820 = vadd.f32 0.0, %v2819
          %2821 = vmatmul.f32.gmra.mxu0 %v2422
          %v2822 = vpop.f32.mrf.mxu0
          %v2823 = vadd.f32 0.0, %v2822
          %2824 = vmatmul.f32.gmra.mxu0 %v2425
          %v2825 = vpop.f32.mrf.mxu0
          %v2826 = vadd.f32 0.0, %v2825
          %2827 = vmatmul.f32.gmra.mxu0 %v2428
          %v2828 = vpop.f32.mrf.mxu0
          %v2829 = vadd.f32 0.0, %v2828
          %2830 = vmatmul.f32.gmra.mxu0 %v2431
          %v2831 = vpop.f32.mrf.mxu0
          %v2832 = vadd.f32 0.0, %v2831
          %2833 = vmatmul.f32.gmra.mxu0 %v2434
          %v2834 = vpop.f32.mrf.mxu0
          %v2835 = vadd.f32 0.0, %v2834
          %2836 = vmatmul.f32.gmra.mxu0 %v2437
          %v2837 = vpop.f32.mrf.mxu0
          %v2838 = vadd.f32 0.0, %v2837
          %2839 = vmatmul.f32.gmra.mxu0 %v2440
          %v2840 = vpop.f32.mrf.mxu0
          %v2841 = vadd.f32 0.0, %v2840
          %2842 = vmatmul.f32.gmra.mxu0 %v2443
          %v2843 = vpop.f32.mrf.mxu0
          %v2844 = vadd.f32 0.0, %v2843
          %2845 = vmatmul.f32.gmra.mxu0 %v2446
          %v2846 = vpop.f32.mrf.mxu0
          %v2847 = vadd.f32 0.0, %v2846
          %2848 = vmatmul.f32.gmra.mxu0 %v2449
          %v2849 = vpop.f32.mrf.mxu0
          %v2850 = vadd.f32 0.0, %v2849
          %2851 = vmatmul.f32.gmra.mxu0 %v2452
          %v2852 = vpop.f32.mrf.mxu0
          %v2853 = vadd.f32 0.0, %v2852
          %2854 = vmatmul.f32.gmra.mxu0 %v2455
          %v2855 = vpop.f32.mrf.mxu0
          %v2856 = vadd.f32 0.0, %v2855
          %2857 = vmatmul.f32.gmra.mxu0 %v2458
          %v2858 = vpop.f32.mrf.mxu0
          %v2859 = vadd.f32 0.0, %v2858
          %2860 = vmatmul.f32.gmra.mxu0 %v2461
          %v2861 = vpop.f32.mrf.mxu0
          %v2862 = vadd.f32 0.0, %v2861
          %2863 = vmatmul.f32.gmra.mxu0 %v2464
          %v2864 = vpop.f32.mrf.mxu0
          %v2865 = vadd.f32 0.0, %v2864
          %2866 = vmatmul.f32.gmra.mxu0 %v2467
          %v2867 = vpop.f32.mrf.mxu0
          %v2868 = vadd.f32 0.0, %v2867
          %2869 = vmatmul.f32.gmra.mxu0 %v2470
          %v2870 = vpop.f32.mrf.mxu0
          %v2871 = vadd.f32 0.0, %v2870
          %2872 = vmatmul.f32.gmra.mxu0 %v2473
          %v2873 = vpop.f32.mrf.mxu0
          %v2874 = vadd.f32 0.0, %v2873
          %2875 = vmatmul.f32.gmra.mxu0 %v2476
          %v2876 = vpop.f32.mrf.mxu0
          %v2877 = vadd.f32 0.0, %v2876
          %2878 = vmatmul.f32.gmra.mxu0 %v2479
          %v2879 = vpop.f32.mrf.mxu0
          %v2880 = vadd.f32 0.0, %v2879
          %2881 = vmatmul.f32.gmra.mxu0 %v2482
          %v2882 = vpop.f32.mrf.mxu0
          %v2883 = vadd.f32 0.0, %v2882
          %2884 = vmatmul.f32.gmra.mxu0 %v2485
          %v2885 = vpop.f32.mrf.mxu0
          %v2886 = vadd.f32 0.0, %v2885
          %2887 = vmatmul.f32.gmra.mxu0 %v2488
          %v2888 = vpop.f32.mrf.mxu0
          %v2889 = vadd.f32 0.0, %v2888
          %2890 = vmatmul.f32.gmra.mxu0 %v2491
          %v2891 = vpop.f32.mrf.mxu0
          %v2892 = vadd.f32 0.0, %v2891
          %2893 = vmatmul.f32.gmra.mxu0 %v2494
          %v2894 = vpop.f32.mrf.mxu0
          %v2895 = vadd.f32 0.0, %v2894
          %2896 = vmatmul.f32.gmra.mxu0 %v2497
          %v2897 = vpop.f32.mrf.mxu0
          %v2898 = vadd.f32 0.0, %v2897
          %2899 = vmatmul.f32.gmra.mxu0 %v2500
          %v2900 = vpop.f32.mrf.mxu0
          %v2901 = vadd.f32 0.0, %v2900
          %2902 = vmatmul.f32.gmra.mxu0 %v2503
          %v2903 = vpop.f32.mrf.mxu0
          %v2904 = vadd.f32 0.0, %v2903
          %2905 = vmatmul.f32.gmra.mxu0 %v2506
          %v2906 = vpop.f32.mrf.mxu0
          %v2907 = vadd.f32 0.0, %v2906
          %2908 = vmatmul.f32.gmra.mxu0 %v2509
          %v2909 = vpop.f32.mrf.mxu0
          %v2910 = vadd.f32 0.0, %v2909
          %2911 = vmatmul.f32.gmra.mxu0 %v2512
          %v2912 = vpop.f32.mrf.mxu0
          %v2913 = vadd.f32 0.0, %v2912
          %2914 = vmatmul.f32.gmra.mxu0 %v2515
          %v2915 = vpop.f32.mrf.mxu0
          %v2916 = vadd.f32 0.0, %v2915
          %2917 = vmatmul.f32.gmra.mxu0 %v2518
          %v2918 = vpop.f32.mrf.mxu0
          %v2919 = vadd.f32 0.0, %v2918
          %2920 = vmatmul.f32.gmra.mxu0 %v2521
          %v2921 = vpop.f32.mrf.mxu0
          %v2922 = vadd.f32 0.0, %v2921
          %2923 = vmatmul.f32.gmra.mxu0 %v2524
          %v2924 = vpop.f32.mrf.mxu0
          %v2925 = vadd.f32 0.0, %v2924
          %2926 = vmatmul.f32.gmra.mxu0 %v2527
          %v2927 = vpop.f32.mrf.mxu0
          %v2928 = vadd.f32 0.0, %v2927
          %2929 = vmatmul.f32.gmra.mxu0 %v2530
          %v2930 = vpop.f32.mrf.mxu0
          %v2931 = vadd.f32 0.0, %v2930
          %2932 = vmatmul.f32.gmra.mxu0 %v2533
          %v2933 = vpop.f32.mrf.mxu0
          %v2934 = vadd.f32 0.0, %v2933
          %2935 = vmatmul.f32.gmra.mxu0 %v2536
          %v2936 = vpop.f32.mrf.mxu0
          %v2937 = vadd.f32 0.0, %v2936
          %2938 = vmatmul.f32.gmra.mxu0 %v2539
          %v2939 = vpop.f32.mrf.mxu0
          %v2940 = vadd.f32 0.0, %v2939
          %2941 = vmatmul.f32.gmra.mxu0 %v2542
          %v2942 = vpop.f32.mrf.mxu0
          %v2943 = vadd.f32 0.0, %v2942
          %2944 = vmatmul.f32.gmra.mxu0 %v2545
          %v2945 = vpop.f32.mrf.mxu0
          %v2946 = vadd.f32 0.0, %v2945
          %2947 = vmatmul.f32.gmra.mxu0 %v2548
          %v2948 = vpop.f32.mrf.mxu0
          %v2949 = vadd.f32 0.0, %v2948
          %2950 = vmatmul.f32.gmra.mxu0 %v2551
          %v2951 = vpop.f32.mrf.mxu0
          %v2952 = vadd.f32 0.0, %v2951
          %2953 = vmatmul.f32.gmra.mxu0 %v2554
          %v2954 = vpop.f32.mrf.mxu0
          %v2955 = vadd.f32 0.0, %v2954
          %2956 = vmatmul.f32.gmra.mxu0 %v2557
          %v2957 = vpop.f32.mrf.mxu0
          %v2958 = vadd.f32 0.0, %v2957
          %2959 = vmatmul.f32.gmra.mxu0 %v2560
          %v2960 = vpop.f32.mrf.mxu0
          %v2961 = vadd.f32 0.0, %v2960
          %2962 = vmatmul.f32.gmra.mxu0 %v2563
          %v2963 = vpop.f32.mrf.mxu0
          %v2964 = vadd.f32 0.0, %v2963
          %2965 = vmatmul.f32.gmra.mxu0 %v2566
          %v2966 = vpop.f32.mrf.mxu0
          %v2967 = vadd.f32 0.0, %v2966
          %2968 = vmatmul.f32.gmra.mxu0 %v2569
          %v2969 = vpop.f32.mrf.mxu0
          %v2970 = vadd.f32 0.0, %v2969
          %2971 = vmatmul.f32.gmra.mxu0 %v2572
          %v2972 = vpop.f32.mrf.mxu0
          %v2973 = vadd.f32 0.0, %v2972
          %2974 = vmatmul.f32.gmra.mxu0 %v2575
          %v2975 = vpop.f32.mrf.mxu0
          %v2976 = vadd.f32 0.0, %v2975
          %2977 = vmatmul.f32.gmra.mxu0 %v2578
          %v2978 = vpop.f32.mrf.mxu0
          %v2979 = vadd.f32 0.0, %v2978
          %2980 = vmatmul.f32.gmra.mxu0 %v2581
          %v2981 = vpop.f32.mrf.mxu0
          %v2982 = vadd.f32 0.0, %v2981
          %2983 = vmatmul.f32.gmra.mxu0 %v2584
          %v2984 = vpop.f32.mrf.mxu0
          %v2985 = vadd.f32 0.0, %v2984
          %2986 = vmatmul.f32.gmra.mxu0 %v2587
          %v2987 = vpop.f32.mrf.mxu0
          %v2988 = vadd.f32 0.0, %v2987
          %2989 = vmatmul.f32.gmra.mxu0 %v2590
          %v2990 = vpop.f32.mrf.mxu0
          %v2991 = vadd.f32 0.0, %v2990
          %2992 = vmatmul.f32.gmra.mxu0 %v2593
          %v2993 = vpop.f32.mrf.mxu0
          %v2994 = vadd.f32 0.0, %v2993
          %2995 = vmatmul.f32.gmra.mxu0 %v2596
          %v2996 = vpop.f32.mrf.mxu0
          %v2997 = vadd.f32 0.0, %v2996
          %2998 = vmatmul.f32.gmra.mxu0 %v2599
          %v2999 = vpop.f32.mrf.mxu0
          %v3000 = vadd.f32 0.0, %v2999
          %3001 = vmatmul.f32.gmra.mxu0 %v2602
          %v3002 = vpop.f32.mrf.mxu0
          %v3003 = vadd.f32 0.0, %v3002
          %3004 = vmatmul.f32.gmra.mxu0 %v2605
          %v3005 = vpop.f32.mrf.mxu0
          %v3006 = vadd.f32 0.0, %v3005
          %3007 = vmatmul.f32.gmra.mxu0 %v2608
          %v3008 = vpop.f32.mrf.mxu0
          %v3009 = vadd.f32 0.0, %v3008
          %3010 = vmatmul.f32.gmra.mxu0 %v2611
          %v3011 = vpop.f32.mrf.mxu0
          %v3012 = vadd.f32 0.0, %v3011
          %3013 = vmatmul.f32.gmra.mxu0 %v2614
          %v3014 = vpop.f32.mrf.mxu0
          %v3015 = vadd.f32 0.0, %v3014
          %3016 = vmatmul.f32.gmra.mxu0 %v2617
          %v3017 = vpop.f32.mrf.mxu0
          %v3018 = vadd.f32 0.0, %v3017
          %3019 = vmatmul.f32.gmra.mxu0 %v2620
          %v3020 = vpop.f32.mrf.mxu0
          %v3021 = vadd.f32 0.0, %v3020
          %3022 = vmatmul.f32.gmra.mxu0 %v2623
          %v3023 = vpop.f32.mrf.mxu0
          %v3024 = vadd.f32 0.0, %v3023
          %3025 = vmatmul.f32.gmra.mxu0 %v2626
          %v3026 = vpop.f32.mrf.mxu0
          %v3027 = vadd.f32 0.0, %v3026
          %3028 = vmatmul.f32.gmra.mxu0 %v2629
          %v3029 = vpop.f32.mrf.mxu0
          %v3030 = vadd.f32 0.0, %v3029
          %3031 = vmatmul.f32.gmra.mxu0 %v2632
          %v3032 = vpop.f32.mrf.mxu0
          %v3033 = vadd.f32 0.0, %v3032
          %3034 = vmatmul.f32.gmra.mxu0 %v2635
          %v3035 = vpop.f32.mrf.mxu0
          %v3036 = vadd.f32 0.0, %v3035
          %3037 = vmatmul.f32.gmra.mxu0 %v2638
          %v3038 = vpop.f32.mrf.mxu0
          %v3039 = vadd.f32 0.0, %v3038
          %3040 = vmatmul.f32.gmra.mxu0 %v2641
          %v3041 = vpop.f32.mrf.mxu0
          %v3042 = vadd.f32 0.0, %v3041
          %3043 = vmatmul.f32.gmra.mxu0 %v2644
          %v3044 = vpop.f32.mrf.mxu0
          %v3045 = vadd.f32 0.0, %v3044
          %3046 = vmatmul.f32.gmra.mxu0 %v2647
          %v3047 = vpop.f32.mrf.mxu0
          %v3048 = vadd.f32 0.0, %v3047
          %3049 = vmatmul.f32.gmra.mxu0 %v2650
          %v3050 = vpop.f32.mrf.mxu0
          %v3051 = vadd.f32 0.0, %v3050
          %3052 = vmatmul.f32.gmra.mxu0 %v2653
          %v3053 = vpop.f32.mrf.mxu0
          %v3054 = vadd.f32 0.0, %v3053
          %3055 = vmatmul.f32.gmra.mxu0 %v2656
          %v3056 = vpop.f32.mrf.mxu0
          %v3057 = vadd.f32 0.0, %v3056
          %3058 = vmatmul.f32.gmra.mxu0 %v2659
          %v3059 = vpop.f32.mrf.mxu0
          %v3060 = vadd.f32 0.0, %v3059
          %3061 = vmatmul.f32.gmra.mxu0 %v2662
          %v3062 = vpop.f32.mrf.mxu0
          %v3063 = vadd.f32 0.0, %v3062
          %3064 = vmatmul.f32.gmra.mxu0 %v2665
          %v3065 = vpop.f32.mrf.mxu0
          %v3066 = vadd.f32 0.0, %v3065
          %3067 = vmatmul.f32.gmra.mxu0 %v2668
          %v3068 = vpop.f32.mrf.mxu0
          %v3069 = vadd.f32 0.0, %v3068
          %3070 = vmatmul.f32.gmra.mxu0 %v2671
          %v3071 = vpop.f32.mrf.mxu0
          %v3072 = vadd.f32 0.0, %v3071
          %3073 = vmatmul.f32.gmra.mxu0 %v2674
          %v3074 = vpop.f32.mrf.mxu0
          %v3075 = vadd.f32 0.0, %v3074
          %3076 = vmatmul.f32.gmra.mxu0 %v2677
          %v3077 = vpop.f32.mrf.mxu0
          %v3078 = vadd.f32 0.0, %v3077
          %3079 = vdwg.mxu0
          %v3080 = vsub.f32 %v2889, %v2697
          %v3081 = vsub.f32 %v2892, %v2700
          %v3082 = vsub.f32 %v2895, %v2703
          %v3083 = vsub.f32 %v2898, %v2706
          %v3084 = vsub.f32 %v2901, %v2709
          %v3085 = vsub.f32 %v2904, %v2712
          %v3086 = vsub.f32 %v2907, %v2715
          %v3087 = vsub.f32 %v2910, %v2718
          %v3088 = vsub.f32 %v2913, %v2721
          %v3089 = vsub.f32 %v2916, %v2724
          %v3090 = vsub.f32 %v2919, %v2727
          %v3091 = vsub.f32 %v2922, %v2730
          %v3092 = vsub.f32 %v2925, %v2733
          %v3093 = vsub.f32 %v2928, %v2736
          %v3094 = vsub.f32 %v2931, %v2739
          %v3095 = vsub.f32 %v2934, %v2742
          %v3096 = vsub.f32 %v2937, %v2745
          %v3097 = vsub.f32 %v2940, %v2748
          %v3098 = vsub.f32 %v2943, %v2751
          %v3099 = vsub.f32 %v2946, %v2754
          %v3100 = vsub.f32 %v2949, %v2757
          %v3101 = vsub.f32 %v2952, %v2760
          %v3102 = vsub.f32 %v2955, %v2763
          %v3103 = vsub.f32 %v2958, %v2766
          %v3104 = vsub.f32 %v2961, %v2769
          %v3105 = vsub.f32 %v2964, %v2772
          %v3106 = vsub.f32 %v2967, %v2775
          %v3107 = vsub.f32 %v2970, %v2778
          %v3108 = vsub.f32 %v2973, %v2781
          %v3109 = vsub.f32 %v2976, %v2784
          %v3110 = vsub.f32 %v2979, %v2787
          %v3111 = vsub.f32 %v2982, %v2790
          %v3112 = vsub.f32 %v2985, %v2793
          %v3113 = vsub.f32 %v2988, %v2796
          %v3114 = vsub.f32 %v2991, %v2799
          %v3115 = vsub.f32 %v2994, %v2802
          %v3116 = vsub.f32 %v2997, %v2805
          %v3117 = vsub.f32 %v3000, %v2808
          %v3118 = vsub.f32 %v3003, %v2811
          %v3119 = vsub.f32 %v3006, %v2814
          %v3120 = vsub.f32 %v3009, %v2817
          %v3121 = vsub.f32 %v3012, %v2820
          %v3122 = vsub.f32 %v3015, %v2823
          %v3123 = vsub.f32 %v3018, %v2826
          %v3124 = vsub.f32 %v3021, %v2829
          %v3125 = vsub.f32 %v3024, %v2832
          %v3126 = vsub.f32 %v3027, %v2835
          %v3127 = vsub.f32 %v3030, %v2838
          %v3128 = vsub.f32 %v3033, %v2841
          %v3129 = vsub.f32 %v3036, %v2844
          %v3130 = vsub.f32 %v3039, %v2847
          %v3131 = vsub.f32 %v3042, %v2850
          %v3132 = vsub.f32 %v3045, %v2853
          %v3133 = vsub.f32 %v3048, %v2856
          %v3134 = vsub.f32 %v3051, %v2859
          %v3135 = vsub.f32 %v3054, %v2862
          %v3136 = vsub.f32 %v3057, %v2865
          %v3137 = vsub.f32 %v3060, %v2868
          %v3138 = vsub.f32 %v3063, %v2871
          %v3139 = vsub.f32 %v3066, %v2874
          %v3140 = vsub.f32 %v3069, %v2877
          %v3141 = vsub.f32 %v3072, %v2880
          %v3142 = vsub.f32 %v3075, %v2883
          %v3143 = vsub.f32 %v3078, %v2886
          %v3144 = vmul.f32 %v3080, %v3080
          %v3145 = vmul.f32 %v3081, %v3081
          %v3146 = vmul.f32 %v3082, %v3082
          %v3147 = vmul.f32 %v3083, %v3083
          %v3148 = vmul.f32 %v3084, %v3084
          %v3149 = vmul.f32 %v3085, %v3085
          %v3150 = vmul.f32 %v3086, %v3086
          %v3151 = vmul.f32 %v3087, %v3087
          %v3152 = vmul.f32 %v3088, %v3088
          %v3153 = vmul.f32 %v3089, %v3089
          %v3154 = vmul.f32 %v3090, %v3090
          %v3155 = vmul.f32 %v3091, %v3091
          %v3156 = vmul.f32 %v3092, %v3092
          %v3157 = vmul.f32 %v3093, %v3093
          %v3158 = vmul.f32 %v3094, %v3094
          %v3159 = vmul.f32 %v3095, %v3095
          %v3160 = vmul.f32 %v3096, %v3096
          %v3161 = vmul.f32 %v3097, %v3097
          %v3162 = vmul.f32 %v3098, %v3098
          %v3163 = vmul.f32 %v3099, %v3099
          %v3164 = vmul.f32 %v3100, %v3100
          %v3165 = vmul.f32 %v3101, %v3101
          %v3166 = vmul.f32 %v3102, %v3102
          %v3167 = vmul.f32 %v3103, %v3103
          %v3168 = vmul.f32 %v3104, %v3104
          %v3169 = vmul.f32 %v3105, %v3105
          %v3170 = vmul.f32 %v3106, %v3106
          %v3171 = vmul.f32 %v3107, %v3107
          %v3172 = vmul.f32 %v3108, %v3108
          %v3173 = vmul.f32 %v3109, %v3109
          %v3174 = vmul.f32 %v3110, %v3110
          %v3175 = vmul.f32 %v3111, %v3111
          %v3176 = vmul.f32 %v3112, %v3112
          %v3177 = vmul.f32 %v3113, %v3113
          %v3178 = vmul.f32 %v3114, %v3114
          %v3179 = vmul.f32 %v3115, %v3115
          %v3180 = vmul.f32 %v3116, %v3116
          %v3181 = vmul.f32 %v3117, %v3117
          %v3182 = vmul.f32 %v3118, %v3118
          %v3183 = vmul.f32 %v3119, %v3119
          %v3184 = vmul.f32 %v3120, %v3120
          %v3185 = vmul.f32 %v3121, %v3121
          %v3186 = vmul.f32 %v3122, %v3122
          %v3187 = vmul.f32 %v3123, %v3123
          %v3188 = vmul.f32 %v3124, %v3124
          %v3189 = vmul.f32 %v3125, %v3125
          %v3190 = vmul.f32 %v3126, %v3126
          %v3191 = vmul.f32 %v3127, %v3127
          %v3192 = vmul.f32 %v3128, %v3128
          %v3193 = vmul.f32 %v3129, %v3129
          %v3194 = vmul.f32 %v3130, %v3130
          %v3195 = vmul.f32 %v3131, %v3131
          %v3196 = vmul.f32 %v3132, %v3132
          %v3197 = vmul.f32 %v3133, %v3133
          %v3198 = vmul.f32 %v3134, %v3134
          %v3199 = vmul.f32 %v3135, %v3135
          %v3200 = vmul.f32 %v3136, %v3136
          %v3201 = vmul.f32 %v3137, %v3137
          %v3202 = vmul.f32 %v3138, %v3138
          %v3203 = vmul.f32 %v3139, %v3139
          %v3204 = vmul.f32 %v3140, %v3140
          %v3205 = vmul.f32 %v3141, %v3141
          %v3206 = vmul.f32 %v3142, %v3142
          %v3207 = vmul.f32 %v3143, %v3143
          %vm3208 = vcmask 23552
          %v3209 = vsel %vm3208, %v3144, 0.0
          %3210 = vadd.xlane.f32.xlu0 %v3209
          %v3211 = vpop.xlane.xlu0 %3210
          %v3212 = vsel %vm3208, %v3145, 0.0
          %3213 = vadd.xlane.f32.xlu0 %v3212
          %v3214 = vpop.xlane.xlu0 %3213
          %v3215 = vsel %vm3208, %v3146, 0.0
          %3216 = vadd.xlane.f32.xlu0 %v3215
          %v3217 = vpop.xlane.xlu0 %3216
          %v3218 = vsel %vm3208, %v3147, 0.0
          %3219 = vadd.xlane.f32.xlu0 %v3218
          %v3220 = vpop.xlane.xlu0 %3219
          %v3221 = vsel %vm3208, %v3148, 0.0
          %3222 = vadd.xlane.f32.xlu0 %v3221
          %v3223 = vpop.xlane.xlu0 %3222
          %v3224 = vsel %vm3208, %v3149, 0.0
          %3225 = vadd.xlane.f32.xlu0 %v3224
          %v3226 = vpop.xlane.xlu0 %3225
          %v3227 = vsel %vm3208, %v3150, 0.0
          %3228 = vadd.xlane.f32.xlu0 %v3227
          %v3229 = vpop.xlane.xlu0 %3228
          %v3230 = vsel %vm3208, %v3151, 0.0
          %3231 = vadd.xlane.f32.xlu0 %v3230
          %v3232 = vpop.xlane.xlu0 %3231
          %v3233 = vsel %vm3208, %v3152, 0.0
          %3234 = vadd.xlane.f32.xlu0 %v3233
          %v3235 = vpop.xlane.xlu0 %3234
          %v3236 = vsel %vm3208, %v3153, 0.0
          %3237 = vadd.xlane.f32.xlu0 %v3236
          %v3238 = vpop.xlane.xlu0 %3237
          %v3239 = vsel %vm3208, %v3154, 0.0
          %3240 = vadd.xlane.f32.xlu0 %v3239
          %v3241 = vpop.xlane.xlu0 %3240
          %v3242 = vsel %vm3208, %v3155, 0.0
          %3243 = vadd.xlane.f32.xlu0 %v3242
          %v3244 = vpop.xlane.xlu0 %3243
          %v3245 = vsel %vm3208, %v3156, 0.0
          %3246 = vadd.xlane.f32.xlu0 %v3245
          %v3247 = vpop.xlane.xlu0 %3246
          %v3248 = vsel %vm3208, %v3157, 0.0
          %3249 = vadd.xlane.f32.xlu0 %v3248
          %v3250 = vpop.xlane.xlu0 %3249
          %v3251 = vsel %vm3208, %v3158, 0.0
          %3252 = vadd.xlane.f32.xlu0 %v3251
          %v3253 = vpop.xlane.xlu0 %3252
          %v3254 = vsel %vm3208, %v3159, 0.0
          %3255 = vadd.xlane.f32.xlu0 %v3254
          %v3256 = vpop.xlane.xlu0 %3255
          %v3257 = vsel %vm3208, %v3160, 0.0
          %3258 = vadd.xlane.f32.xlu0 %v3257
          %v3259 = vpop.xlane.xlu0 %3258
          %v3260 = vsel %vm3208, %v3161, 0.0
          %3261 = vadd.xlane.f32.xlu0 %v3260
          %v3262 = vpop.xlane.xlu0 %3261
          %v3263 = vsel %vm3208, %v3162, 0.0
          %3264 = vadd.xlane.f32.xlu0 %v3263
          %v3265 = vpop.xlane.xlu0 %3264
          %v3266 = vsel %vm3208, %v3163, 0.0
          %3267 = vadd.xlane.f32.xlu0 %v3266
          %v3268 = vpop.xlane.xlu0 %3267
          %v3269 = vsel %vm3208, %v3164, 0.0
          %3270 = vadd.xlane.f32.xlu0 %v3269
          %v3271 = vpop.xlane.xlu0 %3270
          %v3272 = vsel %vm3208, %v3165, 0.0
          %3273 = vadd.xlane.f32.xlu0 %v3272
          %v3274 = vpop.xlane.xlu0 %3273
          %v3275 = vsel %vm3208, %v3166, 0.0
          %3276 = vadd.xlane.f32.xlu0 %v3275
          %v3277 = vpop.xlane.xlu0 %3276
          %v3278 = vsel %vm3208, %v3167, 0.0
          %3279 = vadd.xlane.f32.xlu0 %v3278
          %v3280 = vpop.xlane.xlu0 %3279
          %v3281 = vsel %vm3208, %v3168, 0.0
          %3282 = vadd.xlane.f32.xlu0 %v3281
          %v3283 = vpop.xlane.xlu0 %3282
          %v3284 = vsel %vm3208, %v3169, 0.0
          %3285 = vadd.xlane.f32.xlu0 %v3284
          %v3286 = vpop.xlane.xlu0 %3285
          %v3287 = vsel %vm3208, %v3170, 0.0
          %3288 = vadd.xlane.f32.xlu0 %v3287
          %v3289 = vpop.xlane.xlu0 %3288
          %v3290 = vsel %vm3208, %v3171, 0.0
          %3291 = vadd.xlane.f32.xlu0 %v3290
          %v3292 = vpop.xlane.xlu0 %3291
          %v3293 = vsel %vm3208, %v3172, 0.0
          %3294 = vadd.xlane.f32.xlu0 %v3293
          %v3295 = vpop.xlane.xlu0 %3294
          %v3296 = vsel %vm3208, %v3173, 0.0
          %3297 = vadd.xlane.f32.xlu0 %v3296
          %v3298 = vpop.xlane.xlu0 %3297
          %v3299 = vsel %vm3208, %v3174, 0.0
          %3300 = vadd.xlane.f32.xlu0 %v3299
          %v3301 = vpop.xlane.xlu0 %3300
          %v3302 = vsel %vm3208, %v3175, 0.0
          %3303 = vadd.xlane.f32.xlu0 %v3302
          %v3304 = vpop.xlane.xlu0 %3303
          %v3305 = vsel %vm3208, %v3176, 0.0
          %3306 = vadd.xlane.f32.xlu0 %v3305
          %v3307 = vpop.xlane.xlu0 %3306
          %v3308 = vsel %vm3208, %v3177, 0.0
          %3309 = vadd.xlane.f32.xlu0 %v3308
          %v3310 = vpop.xlane.xlu0 %3309
          %v3311 = vsel %vm3208, %v3178, 0.0
          %3312 = vadd.xlane.f32.xlu0 %v3311
          %v3313 = vpop.xlane.xlu0 %3312
          %v3314 = vsel %vm3208, %v3179, 0.0
          %3315 = vadd.xlane.f32.xlu0 %v3314
          %v3316 = vpop.xlane.xlu0 %3315
          %v3317 = vsel %vm3208, %v3180, 0.0
          %3318 = vadd.xlane.f32.xlu0 %v3317
          %v3319 = vpop.xlane.xlu0 %3318
          %v3320 = vsel %vm3208, %v3181, 0.0
          %3321 = vadd.xlane.f32.xlu0 %v3320
          %v3322 = vpop.xlane.xlu0 %3321
          %v3323 = vsel %vm3208, %v3182, 0.0
          %3324 = vadd.xlane.f32.xlu0 %v3323
          %v3325 = vpop.xlane.xlu0 %3324
          %v3326 = vsel %vm3208, %v3183, 0.0
          %3327 = vadd.xlane.f32.xlu0 %v3326
          %v3328 = vpop.xlane.xlu0 %3327
          %v3329 = vsel %vm3208, %v3184, 0.0
          %3330 = vadd.xlane.f32.xlu0 %v3329
          %v3331 = vpop.xlane.xlu0 %3330
          %v3332 = vsel %vm3208, %v3185, 0.0
          %3333 = vadd.xlane.f32.xlu0 %v3332
          %v3334 = vpop.xlane.xlu0 %3333
          %v3335 = vsel %vm3208, %v3186, 0.0
          %3336 = vadd.xlane.f32.xlu0 %v3335
          %v3337 = vpop.xlane.xlu0 %3336
          %v3338 = vsel %vm3208, %v3187, 0.0
          %3339 = vadd.xlane.f32.xlu0 %v3338
          %v3340 = vpop.xlane.xlu0 %3339
          %v3341 = vsel %vm3208, %v3188, 0.0
          %3342 = vadd.xlane.f32.xlu0 %v3341
          %v3343 = vpop.xlane.xlu0 %3342
          %v3344 = vsel %vm3208, %v3189, 0.0
          %3345 = vadd.xlane.f32.xlu0 %v3344
          %v3346 = vpop.xlane.xlu0 %3345
          %v3347 = vsel %vm3208, %v3190, 0.0
          %3348 = vadd.xlane.f32.xlu0 %v3347
          %v3349 = vpop.xlane.xlu0 %3348
          %v3350 = vsel %vm3208, %v3191, 0.0
          %3351 = vadd.xlane.f32.xlu0 %v3350
          %v3352 = vpop.xlane.xlu0 %3351
          %v3353 = vsel %vm3208, %v3192, 0.0
          %3354 = vadd.xlane.f32.xlu0 %v3353
          %v3355 = vpop.xlane.xlu0 %3354
          %v3356 = vsel %vm3208, %v3193, 0.0
          %3357 = vadd.xlane.f32.xlu0 %v3356
          %v3358 = vpop.xlane.xlu0 %3357
          %v3359 = vsel %vm3208, %v3194, 0.0
          %3360 = vadd.xlane.f32.xlu0 %v3359
          %v3361 = vpop.xlane.xlu0 %3360
          %v3362 = vsel %vm3208, %v3195, 0.0
          %3363 = vadd.xlane.f32.xlu0 %v3362
          %v3364 = vpop.xlane.xlu0 %3363
          %v3365 = vsel %vm3208, %v3196, 0.0
          %3366 = vadd.xlane.f32.xlu0 %v3365
          %v3367 = vpop.xlane.xlu0 %3366
          %v3368 = vsel %vm3208, %v3197, 0.0
          %3369 = vadd.xlane.f32.xlu0 %v3368
          %v3370 = vpop.xlane.xlu0 %3369
          %v3371 = vsel %vm3208, %v3198, 0.0
          %3372 = vadd.xlane.f32.xlu0 %v3371
          %v3373 = vpop.xlane.xlu0 %3372
          %v3374 = vsel %vm3208, %v3199, 0.0
          %3375 = vadd.xlane.f32.xlu0 %v3374
          %v3376 = vpop.xlane.xlu0 %3375
          %v3377 = vsel %vm3208, %v3200, 0.0
          %3378 = vadd.xlane.f32.xlu0 %v3377
          %v3379 = vpop.xlane.xlu0 %3378
          %v3380 = vsel %vm3208, %v3201, 0.0
          %3381 = vadd.xlane.f32.xlu0 %v3380
          %v3382 = vpop.xlane.xlu0 %3381
          %v3383 = vsel %vm3208, %v3202, 0.0
          %3384 = vadd.xlane.f32.xlu0 %v3383
          %v3385 = vpop.xlane.xlu0 %3384
          %v3386 = vsel %vm3208, %v3203, 0.0
          %3387 = vadd.xlane.f32.xlu0 %v3386
          %v3388 = vpop.xlane.xlu0 %3387
          %v3389 = vsel %vm3208, %v3204, 0.0
          %3390 = vadd.xlane.f32.xlu0 %v3389
          %v3391 = vpop.xlane.xlu0 %3390
          %v3392 = vsel %vm3208, %v3205, 0.0
          %3393 = vadd.xlane.f32.xlu0 %v3392
          %v3394 = vpop.xlane.xlu0 %3393
          %v3395 = vsel %vm3208, %v3206, 0.0
          %3396 = vadd.xlane.f32.xlu0 %v3395
          %v3397 = vpop.xlane.xlu0 %3396
          %v3398 = vsel %vm3208, %v3207, 0.0
          %3399 = vadd.xlane.f32.xlu0 %v3398
          %v3400 = vpop.xlane.xlu0 %3399
          %v3401 = vrsqrt.pop %v3211
          %v3402 = vmul.f32 %v3401, %v3211
          %v3403 = vmul.f32 %v3402, %v3401
          %v3404 = vmul.f32 0.5, %v3403
          %v3405 = vsub.f32 1.5, %v3404
          %v3406 = vmul.f32 %v3401, %v3405
          %v3407 = vmul.f32 %v3211, %v3406
          %vm3408 = vcmp.eq.f32.partialorder %v3211, inf
          %v3409 = vsel %vm3408, %v3211, %v3407
          %vm3410 = vcmp.eq.f32.partialorder %v3211, 0.0
          %v3411 = vand.u32 %v3211, 2147483648
          %v3412 = vsel %vm3410, %v3411, %v3409
          %v3413 = vrsqrt.pop %v3214
          %v3414 = vmul.f32 %v3413, %v3214
          %v3415 = vmul.f32 %v3414, %v3413
          %v3416 = vmul.f32 0.5, %v3415
          %v3417 = vsub.f32 1.5, %v3416
          %v3418 = vmul.f32 %v3413, %v3417
          %v3419 = vmul.f32 %v3214, %v3418
          %vm3420 = vcmp.eq.f32.partialorder %v3214, inf
          %v3421 = vsel %vm3420, %v3214, %v3419
          %vm3422 = vcmp.eq.f32.partialorder %v3214, 0.0
          %v3423 = vand.u32 %v3214, 2147483648
          %v3424 = vsel %vm3422, %v3423, %v3421
          %v3425 = vrsqrt.pop %v3217
          %v3426 = vmul.f32 %v3425, %v3217
          %v3427 = vmul.f32 %v3426, %v3425
          %v3428 = vmul.f32 0.5, %v3427
          %v3429 = vsub.f32 1.5, %v3428
          %v3430 = vmul.f32 %v3425, %v3429
          %v3431 = vmul.f32 %v3217, %v3430
          %vm3432 = vcmp.eq.f32.partialorder %v3217, inf
          %v3433 = vsel %vm3432, %v3217, %v3431
          %vm3434 = vcmp.eq.f32.partialorder %v3217, 0.0
          %v3435 = vand.u32 %v3217, 2147483648
          %v3436 = vsel %vm3434, %v3435, %v3433
          %v3437 = vrsqrt.pop %v3220
          %v3438 = vmul.f32 %v3437, %v3220
          %v3439 = vmul.f32 %v3438, %v3437
          %v3440 = vmul.f32 0.5, %v3439
          %v3441 = vsub.f32 1.5, %v3440
          %v3442 = vmul.f32 %v3437, %v3441
          %v3443 = vmul.f32 %v3220, %v3442
          %vm3444 = vcmp.eq.f32.partialorder %v3220, inf
          %v3445 = vsel %vm3444, %v3220, %v3443
          %vm3446 = vcmp.eq.f32.partialorder %v3220, 0.0
          %v3447 = vand.u32 %v3220, 2147483648
          %v3448 = vsel %vm3446, %v3447, %v3445
          %v3449 = vrsqrt.pop %v3223
          %v3450 = vmul.f32 %v3449, %v3223
          %v3451 = vmul.f32 %v3450, %v3449
          %v3452 = vmul.f32 0.5, %v3451
          %v3453 = vsub.f32 1.5, %v3452
          %v3454 = vmul.f32 %v3449, %v3453
          %v3455 = vmul.f32 %v3223, %v3454
          %vm3456 = vcmp.eq.f32.partialorder %v3223, inf
          %v3457 = vsel %vm3456, %v3223, %v3455
          %vm3458 = vcmp.eq.f32.partialorder %v3223, 0.0
          %v3459 = vand.u32 %v3223, 2147483648
          %v3460 = vsel %vm3458, %v3459, %v3457
          %v3461 = vrsqrt.pop %v3226
          %v3462 = vmul.f32 %v3461, %v3226
          %v3463 = vmul.f32 %v3462, %v3461
          %v3464 = vmul.f32 0.5, %v3463
          %v3465 = vsub.f32 1.5, %v3464
          %v3466 = vmul.f32 %v3461, %v3465
          %v3467 = vmul.f32 %v3226, %v3466
          %vm3468 = vcmp.eq.f32.partialorder %v3226, inf
          %v3469 = vsel %vm3468, %v3226, %v3467
          %vm3470 = vcmp.eq.f32.partialorder %v3226, 0.0
          %v3471 = vand.u32 %v3226, 2147483648
          %v3472 = vsel %vm3470, %v3471, %v3469
          %v3473 = vrsqrt.pop %v3229
          %v3474 = vmul.f32 %v3473, %v3229
          %v3475 = vmul.f32 %v3474, %v3473
          %v3476 = vmul.f32 0.5, %v3475
          %v3477 = vsub.f32 1.5, %v3476
          %v3478 = vmul.f32 %v3473, %v3477
          %v3479 = vmul.f32 %v3229, %v3478
          %vm3480 = vcmp.eq.f32.partialorder %v3229, inf
          %v3481 = vsel %vm3480, %v3229, %v3479
          %vm3482 = vcmp.eq.f32.partialorder %v3229, 0.0
          %v3483 = vand.u32 %v3229, 2147483648
          %v3484 = vsel %vm3482, %v3483, %v3481
          %v3485 = vrsqrt.pop %v3232
          %v3486 = vmul.f32 %v3485, %v3232
          %v3487 = vmul.f32 %v3486, %v3485
          %v3488 = vmul.f32 0.5, %v3487
          %v3489 = vsub.f32 1.5, %v3488
          %v3490 = vmul.f32 %v3485, %v3489
          %v3491 = vmul.f32 %v3232, %v3490
          %vm3492 = vcmp.eq.f32.partialorder %v3232, inf
          %v3493 = vsel %vm3492, %v3232, %v3491
          %vm3494 = vcmp.eq.f32.partialorder %v3232, 0.0
          %v3495 = vand.u32 %v3232, 2147483648
          %v3496 = vsel %vm3494, %v3495, %v3493
          %v3497 = vrsqrt.pop %v3235
          %v3498 = vmul.f32 %v3497, %v3235
          %v3499 = vmul.f32 %v3498, %v3497
          %v3500 = vmul.f32 0.5, %v3499
          %v3501 = vsub.f32 1.5, %v3500
          %v3502 = vmul.f32 %v3497, %v3501
          %v3503 = vmul.f32 %v3235, %v3502
          %vm3504 = vcmp.eq.f32.partialorder %v3235, inf
          %v3505 = vsel %vm3504, %v3235, %v3503
          %vm3506 = vcmp.eq.f32.partialorder %v3235, 0.0
          %v3507 = vand.u32 %v3235, 2147483648
          %v3508 = vsel %vm3506, %v3507, %v3505
          %v3509 = vrsqrt.pop %v3238
          %v3510 = vmul.f32 %v3509, %v3238
          %v3511 = vmul.f32 %v3510, %v3509
          %v3512 = vmul.f32 0.5, %v3511
          %v3513 = vsub.f32 1.5, %v3512
          %v3514 = vmul.f32 %v3509, %v3513
          %v3515 = vmul.f32 %v3238, %v3514
          %vm3516 = vcmp.eq.f32.partialorder %v3238, inf
          %v3517 = vsel %vm3516, %v3238, %v3515
          %vm3518 = vcmp.eq.f32.partialorder %v3238, 0.0
          %v3519 = vand.u32 %v3238, 2147483648
          %v3520 = vsel %vm3518, %v3519, %v3517
          %v3521 = vrsqrt.pop %v3241
          %v3522 = vmul.f32 %v3521, %v3241
          %v3523 = vmul.f32 %v3522, %v3521
          %v3524 = vmul.f32 0.5, %v3523
          %v3525 = vsub.f32 1.5, %v3524
          %v3526 = vmul.f32 %v3521, %v3525
          %v3527 = vmul.f32 %v3241, %v3526
          %vm3528 = vcmp.eq.f32.partialorder %v3241, inf
          %v3529 = vsel %vm3528, %v3241, %v3527
          %vm3530 = vcmp.eq.f32.partialorder %v3241, 0.0
          %v3531 = vand.u32 %v3241, 2147483648
          %v3532 = vsel %vm3530, %v3531, %v3529
          %v3533 = vrsqrt.pop %v3244
          %v3534 = vmul.f32 %v3533, %v3244
          %v3535 = vmul.f32 %v3534, %v3533
          %v3536 = vmul.f32 0.5, %v3535
          %v3537 = vsub.f32 1.5, %v3536
          %v3538 = vmul.f32 %v3533, %v3537
          %v3539 = vmul.f32 %v3244, %v3538
          %vm3540 = vcmp.eq.f32.partialorder %v3244, inf
          %v3541 = vsel %vm3540, %v3244, %v3539
          %vm3542 = vcmp.eq.f32.partialorder %v3244, 0.0
          %v3543 = vand.u32 %v3244, 2147483648
          %v3544 = vsel %vm3542, %v3543, %v3541
          %v3545 = vrsqrt.pop %v3247
          %v3546 = vmul.f32 %v3545, %v3247
          %v3547 = vmul.f32 %v3546, %v3545
          %v3548 = vmul.f32 0.5, %v3547
          %v3549 = vsub.f32 1.5, %v3548
          %v3550 = vmul.f32 %v3545, %v3549
          %v3551 = vmul.f32 %v3247, %v3550
          %vm3552 = vcmp.eq.f32.partialorder %v3247, inf
          %v3553 = vsel %vm3552, %v3247, %v3551
          %vm3554 = vcmp.eq.f32.partialorder %v3247, 0.0
          %v3555 = vand.u32 %v3247, 2147483648
          %v3556 = vsel %vm3554, %v3555, %v3553
          %v3557 = vrsqrt.pop %v3250
          %v3558 = vmul.f32 %v3557, %v3250
          %v3559 = vmul.f32 %v3558, %v3557
          %v3560 = vmul.f32 0.5, %v3559
          %v3561 = vsub.f32 1.5, %v3560
          %v3562 = vmul.f32 %v3557, %v3561
          %v3563 = vmul.f32 %v3250, %v3562
          %vm3564 = vcmp.eq.f32.partialorder %v3250, inf
          %v3565 = vsel %vm3564, %v3250, %v3563
          %vm3566 = vcmp.eq.f32.partialorder %v3250, 0.0
          %v3567 = vand.u32 %v3250, 2147483648
          %v3568 = vsel %vm3566, %v3567, %v3565
          %v3569 = vrsqrt.pop %v3253
          %v3570 = vmul.f32 %v3569, %v3253
          %v3571 = vmul.f32 %v3570, %v3569
          %v3572 = vmul.f32 0.5, %v3571
          %v3573 = vsub.f32 1.5, %v3572
          %v3574 = vmul.f32 %v3569, %v3573
          %v3575 = vmul.f32 %v3253, %v3574
          %vm3576 = vcmp.eq.f32.partialorder %v3253, inf
          %v3577 = vsel %vm3576, %v3253, %v3575
          %vm3578 = vcmp.eq.f32.partialorder %v3253, 0.0
          %v3579 = vand.u32 %v3253, 2147483648
          %v3580 = vsel %vm3578, %v3579, %v3577
          %v3581 = vrsqrt.pop %v3256
          %v3582 = vmul.f32 %v3581, %v3256
          %v3583 = vmul.f32 %v3582, %v3581
          %v3584 = vmul.f32 0.5, %v3583
          %v3585 = vsub.f32 1.5, %v3584
          %v3586 = vmul.f32 %v3581, %v3585
          %v3587 = vmul.f32 %v3256, %v3586
          %vm3588 = vcmp.eq.f32.partialorder %v3256, inf
          %v3589 = vsel %vm3588, %v3256, %v3587
          %vm3590 = vcmp.eq.f32.partialorder %v3256, 0.0
          %v3591 = vand.u32 %v3256, 2147483648
          %v3592 = vsel %vm3590, %v3591, %v3589
          %v3593 = vrsqrt.pop %v3259
          %v3594 = vmul.f32 %v3593, %v3259
          %v3595 = vmul.f32 %v3594, %v3593
          %v3596 = vmul.f32 0.5, %v3595
          %v3597 = vsub.f32 1.5, %v3596
          %v3598 = vmul.f32 %v3593, %v3597
          %v3599 = vmul.f32 %v3259, %v3598
          %vm3600 = vcmp.eq.f32.partialorder %v3259, inf
          %v3601 = vsel %vm3600, %v3259, %v3599
          %vm3602 = vcmp.eq.f32.partialorder %v3259, 0.0
          %v3603 = vand.u32 %v3259, 2147483648
          %v3604 = vsel %vm3602, %v3603, %v3601
          %v3605 = vrsqrt.pop %v3262
          %v3606 = vmul.f32 %v3605, %v3262
          %v3607 = vmul.f32 %v3606, %v3605
          %v3608 = vmul.f32 0.5, %v3607
          %v3609 = vsub.f32 1.5, %v3608
          %v3610 = vmul.f32 %v3605, %v3609
          %v3611 = vmul.f32 %v3262, %v3610
          %vm3612 = vcmp.eq.f32.partialorder %v3262, inf
          %v3613 = vsel %vm3612, %v3262, %v3611
          %vm3614 = vcmp.eq.f32.partialorder %v3262, 0.0
          %v3615 = vand.u32 %v3262, 2147483648
          %v3616 = vsel %vm3614, %v3615, %v3613
          %v3617 = vrsqrt.pop %v3265
          %v3618 = vmul.f32 %v3617, %v3265
          %v3619 = vmul.f32 %v3618, %v3617
          %v3620 = vmul.f32 0.5, %v3619
          %v3621 = vsub.f32 1.5, %v3620
          %v3622 = vmul.f32 %v3617, %v3621
          %v3623 = vmul.f32 %v3265, %v3622
          %vm3624 = vcmp.eq.f32.partialorder %v3265, inf
          %v3625 = vsel %vm3624, %v3265, %v3623
          %vm3626 = vcmp.eq.f32.partialorder %v3265, 0.0
          %v3627 = vand.u32 %v3265, 2147483648
          %v3628 = vsel %vm3626, %v3627, %v3625
          %v3629 = vrsqrt.pop %v3268
          %v3630 = vmul.f32 %v3629, %v3268
          %v3631 = vmul.f32 %v3630, %v3629
          %v3632 = vmul.f32 0.5, %v3631
          %v3633 = vsub.f32 1.5, %v3632
          %v3634 = vmul.f32 %v3629, %v3633
          %v3635 = vmul.f32 %v3268, %v3634
          %vm3636 = vcmp.eq.f32.partialorder %v3268, inf
          %v3637 = vsel %vm3636, %v3268, %v3635
          %vm3638 = vcmp.eq.f32.partialorder %v3268, 0.0
          %v3639 = vand.u32 %v3268, 2147483648
          %v3640 = vsel %vm3638, %v3639, %v3637
          %v3641 = vrsqrt.pop %v3271
          %v3642 = vmul.f32 %v3641, %v3271
          %v3643 = vmul.f32 %v3642, %v3641
          %v3644 = vmul.f32 0.5, %v3643
          %v3645 = vsub.f32 1.5, %v3644
          %v3646 = vmul.f32 %v3641, %v3645
          %v3647 = vmul.f32 %v3271, %v3646
          %vm3648 = vcmp.eq.f32.partialorder %v3271, inf
          %v3649 = vsel %vm3648, %v3271, %v3647
          %vm3650 = vcmp.eq.f32.partialorder %v3271, 0.0
          %v3651 = vand.u32 %v3271, 2147483648
          %v3652 = vsel %vm3650, %v3651, %v3649
          %v3653 = vrsqrt.pop %v3274
          %v3654 = vmul.f32 %v3653, %v3274
          %v3655 = vmul.f32 %v3654, %v3653
          %v3656 = vmul.f32 0.5, %v3655
          %v3657 = vsub.f32 1.5, %v3656
          %v3658 = vmul.f32 %v3653, %v3657
          %v3659 = vmul.f32 %v3274, %v3658
          %vm3660 = vcmp.eq.f32.partialorder %v3274, inf
          %v3661 = vsel %vm3660, %v3274, %v3659
          %vm3662 = vcmp.eq.f32.partialorder %v3274, 0.0
          %v3663 = vand.u32 %v3274, 2147483648
          %v3664 = vsel %vm3662, %v3663, %v3661
          %v3665 = vrsqrt.pop %v3277
          %v3666 = vmul.f32 %v3665, %v3277
          %v3667 = vmul.f32 %v3666, %v3665
          %v3668 = vmul.f32 0.5, %v3667
          %v3669 = vsub.f32 1.5, %v3668
          %v3670 = vmul.f32 %v3665, %v3669
          %v3671 = vmul.f32 %v3277, %v3670
          %vm3672 = vcmp.eq.f32.partialorder %v3277, inf
          %v3673 = vsel %vm3672, %v3277, %v3671
          %vm3674 = vcmp.eq.f32.partialorder %v3277, 0.0
          %v3675 = vand.u32 %v3277, 2147483648
          %v3676 = vsel %vm3674, %v3675, %v3673
          %v3677 = vrsqrt.pop %v3280
          %v3678 = vmul.f32 %v3677, %v3280
          %v3679 = vmul.f32 %v3678, %v3677
          %v3680 = vmul.f32 0.5, %v3679
          %v3681 = vsub.f32 1.5, %v3680
          %v3682 = vmul.f32 %v3677, %v3681
          %v3683 = vmul.f32 %v3280, %v3682
          %vm3684 = vcmp.eq.f32.partialorder %v3280, inf
          %v3685 = vsel %vm3684, %v3280, %v3683
          %vm3686 = vcmp.eq.f32.partialorder %v3280, 0.0
          %v3687 = vand.u32 %v3280, 2147483648
          %v3688 = vsel %vm3686, %v3687, %v3685
          %v3689 = vrsqrt.pop %v3283
          %v3690 = vmul.f32 %v3689, %v3283
          %v3691 = vmul.f32 %v3690, %v3689
          %v3692 = vmul.f32 0.5, %v3691
          %v3693 = vsub.f32 1.5, %v3692
          %v3694 = vmul.f32 %v3689, %v3693
          %v3695 = vmul.f32 %v3283, %v3694
          %vm3696 = vcmp.eq.f32.partialorder %v3283, inf
          %v3697 = vsel %vm3696, %v3283, %v3695
          %vm3698 = vcmp.eq.f32.partialorder %v3283, 0.0
          %v3699 = vand.u32 %v3283, 2147483648
          %v3700 = vsel %vm3698, %v3699, %v3697
          %v3701 = vrsqrt.pop %v3286
          %v3702 = vmul.f32 %v3701, %v3286
          %v3703 = vmul.f32 %v3702, %v3701
          %v3704 = vmul.f32 0.5, %v3703
          %v3705 = vsub.f32 1.5, %v3704
          %v3706 = vmul.f32 %v3701, %v3705
          %v3707 = vmul.f32 %v3286, %v3706
          %vm3708 = vcmp.eq.f32.partialorder %v3286, inf
          %v3709 = vsel %vm3708, %v3286, %v3707
          %vm3710 = vcmp.eq.f32.partialorder %v3286, 0.0
          %v3711 = vand.u32 %v3286, 2147483648
          %v3712 = vsel %vm3710, %v3711, %v3709
          %v3713 = vrsqrt.pop %v3289
          %v3714 = vmul.f32 %v3713, %v3289
          %v3715 = vmul.f32 %v3714, %v3713
          %v3716 = vmul.f32 0.5, %v3715
          %v3717 = vsub.f32 1.5, %v3716
          %v3718 = vmul.f32 %v3713, %v3717
          %v3719 = vmul.f32 %v3289, %v3718
          %vm3720 = vcmp.eq.f32.partialorder %v3289, inf
          %v3721 = vsel %vm3720, %v3289, %v3719
          %vm3722 = vcmp.eq.f32.partialorder %v3289, 0.0
          %v3723 = vand.u32 %v3289, 2147483648
          %v3724 = vsel %vm3722, %v3723, %v3721
          %v3725 = vrsqrt.pop %v3292
          %v3726 = vmul.f32 %v3725, %v3292
          %v3727 = vmul.f32 %v3726, %v3725
          %v3728 = vmul.f32 0.5, %v3727
          %v3729 = vsub.f32 1.5, %v3728
          %v3730 = vmul.f32 %v3725, %v3729
          %v3731 = vmul.f32 %v3292, %v3730
          %vm3732 = vcmp.eq.f32.partialorder %v3292, inf
          %v3733 = vsel %vm3732, %v3292, %v3731
          %vm3734 = vcmp.eq.f32.partialorder %v3292, 0.0
          %v3735 = vand.u32 %v3292, 2147483648
          %v3736 = vsel %vm3734, %v3735, %v3733
          %v3737 = vrsqrt.pop %v3295
          %v3738 = vmul.f32 %v3737, %v3295
          %v3739 = vmul.f32 %v3738, %v3737
          %v3740 = vmul.f32 0.5, %v3739
          %v3741 = vsub.f32 1.5, %v3740
          %v3742 = vmul.f32 %v3737, %v3741
          %v3743 = vmul.f32 %v3295, %v3742
          %vm3744 = vcmp.eq.f32.partialorder %v3295, inf
          %v3745 = vsel %vm3744, %v3295, %v3743
          %vm3746 = vcmp.eq.f32.partialorder %v3295, 0.0
          %v3747 = vand.u32 %v3295, 2147483648
          %v3748 = vsel %vm3746, %v3747, %v3745
          %v3749 = vrsqrt.pop %v3298
          %v3750 = vmul.f32 %v3749, %v3298
          %v3751 = vmul.f32 %v3750, %v3749
          %v3752 = vmul.f32 0.5, %v3751
          %v3753 = vsub.f32 1.5, %v3752
          %v3754 = vmul.f32 %v3749, %v3753
          %v3755 = vmul.f32 %v3298, %v3754
          %vm3756 = vcmp.eq.f32.partialorder %v3298, inf
          %v3757 = vsel %vm3756, %v3298, %v3755
          %vm3758 = vcmp.eq.f32.partialorder %v3298, 0.0
          %v3759 = vand.u32 %v3298, 2147483648
          %v3760 = vsel %vm3758, %v3759, %v3757
          %v3761 = vrsqrt.pop %v3301
          %v3762 = vmul.f32 %v3761, %v3301
          %v3763 = vmul.f32 %v3762, %v3761
          %v3764 = vmul.f32 0.5, %v3763
          %v3765 = vsub.f32 1.5, %v3764
          %v3766 = vmul.f32 %v3761, %v3765
          %v3767 = vmul.f32 %v3301, %v3766
          %vm3768 = vcmp.eq.f32.partialorder %v3301, inf
          %v3769 = vsel %vm3768, %v3301, %v3767
          %vm3770 = vcmp.eq.f32.partialorder %v3301, 0.0
          %v3771 = vand.u32 %v3301, 2147483648
          %v3772 = vsel %vm3770, %v3771, %v3769
          %v3773 = vrsqrt.pop %v3304
          %v3774 = vmul.f32 %v3773, %v3304
          %v3775 = vmul.f32 %v3774, %v3773
          %v3776 = vmul.f32 0.5, %v3775
          %v3777 = vsub.f32 1.5, %v3776
          %v3778 = vmul.f32 %v3773, %v3777
          %v3779 = vmul.f32 %v3304, %v3778
          %vm3780 = vcmp.eq.f32.partialorder %v3304, inf
          %v3781 = vsel %vm3780, %v3304, %v3779
          %vm3782 = vcmp.eq.f32.partialorder %v3304, 0.0
          %v3783 = vand.u32 %v3304, 2147483648
          %v3784 = vsel %vm3782, %v3783, %v3781
          %v3785 = vrsqrt.pop %v3307
          %v3786 = vmul.f32 %v3785, %v3307
          %v3787 = vmul.f32 %v3786, %v3785
          %v3788 = vmul.f32 0.5, %v3787
          %v3789 = vsub.f32 1.5, %v3788
          %v3790 = vmul.f32 %v3785, %v3789
          %v3791 = vmul.f32 %v3307, %v3790
          %vm3792 = vcmp.eq.f32.partialorder %v3307, inf
          %v3793 = vsel %vm3792, %v3307, %v3791
          %vm3794 = vcmp.eq.f32.partialorder %v3307, 0.0
          %v3795 = vand.u32 %v3307, 2147483648
          %v3796 = vsel %vm3794, %v3795, %v3793
          %v3797 = vrsqrt.pop %v3310
          %v3798 = vmul.f32 %v3797, %v3310
          %v3799 = vmul.f32 %v3798, %v3797
          %v3800 = vmul.f32 0.5, %v3799
          %v3801 = vsub.f32 1.5, %v3800
          %v3802 = vmul.f32 %v3797, %v3801
          %v3803 = vmul.f32 %v3310, %v3802
          %vm3804 = vcmp.eq.f32.partialorder %v3310, inf
          %v3805 = vsel %vm3804, %v3310, %v3803
          %vm3806 = vcmp.eq.f32.partialorder %v3310, 0.0
          %v3807 = vand.u32 %v3310, 2147483648
          %v3808 = vsel %vm3806, %v3807, %v3805
          %v3809 = vrsqrt.pop %v3313
          %v3810 = vmul.f32 %v3809, %v3313
          %v3811 = vmul.f32 %v3810, %v3809
          %v3812 = vmul.f32 0.5, %v3811
          %v3813 = vsub.f32 1.5, %v3812
          %v3814 = vmul.f32 %v3809, %v3813
          %v3815 = vmul.f32 %v3313, %v3814
          %vm3816 = vcmp.eq.f32.partialorder %v3313, inf
          %v3817 = vsel %vm3816, %v3313, %v3815
          %vm3818 = vcmp.eq.f32.partialorder %v3313, 0.0
          %v3819 = vand.u32 %v3313, 2147483648
          %v3820 = vsel %vm3818, %v3819, %v3817
          %v3821 = vrsqrt.pop %v3316
          %v3822 = vmul.f32 %v3821, %v3316
          %v3823 = vmul.f32 %v3822, %v3821
          %v3824 = vmul.f32 0.5, %v3823
          %v3825 = vsub.f32 1.5, %v3824
          %v3826 = vmul.f32 %v3821, %v3825
          %v3827 = vmul.f32 %v3316, %v3826
          %vm3828 = vcmp.eq.f32.partialorder %v3316, inf
          %v3829 = vsel %vm3828, %v3316, %v3827
          %vm3830 = vcmp.eq.f32.partialorder %v3316, 0.0
          %v3831 = vand.u32 %v3316, 2147483648
          %v3832 = vsel %vm3830, %v3831, %v3829
          %v3833 = vrsqrt.pop %v3319
          %v3834 = vmul.f32 %v3833, %v3319
          %v3835 = vmul.f32 %v3834, %v3833
          %v3836 = vmul.f32 0.5, %v3835
          %v3837 = vsub.f32 1.5, %v3836
          %v3838 = vmul.f32 %v3833, %v3837
          %v3839 = vmul.f32 %v3319, %v3838
          %vm3840 = vcmp.eq.f32.partialorder %v3319, inf
          %v3841 = vsel %vm3840, %v3319, %v3839
          %vm3842 = vcmp.eq.f32.partialorder %v3319, 0.0
          %v3843 = vand.u32 %v3319, 2147483648
          %v3844 = vsel %vm3842, %v3843, %v3841
          %v3845 = vrsqrt.pop %v3322
          %v3846 = vmul.f32 %v3845, %v3322
          %v3847 = vmul.f32 %v3846, %v3845
          %v3848 = vmul.f32 0.5, %v3847
          %v3849 = vsub.f32 1.5, %v3848
          %v3850 = vmul.f32 %v3845, %v3849
          %v3851 = vmul.f32 %v3322, %v3850
          %vm3852 = vcmp.eq.f32.partialorder %v3322, inf
          %v3853 = vsel %vm3852, %v3322, %v3851
          %vm3854 = vcmp.eq.f32.partialorder %v3322, 0.0
          %v3855 = vand.u32 %v3322, 2147483648
          %v3856 = vsel %vm3854, %v3855, %v3853
          %v3857 = vrsqrt.pop %v3325
          %v3858 = vmul.f32 %v3857, %v3325
          %v3859 = vmul.f32 %v3858, %v3857
          %v3860 = vmul.f32 0.5, %v3859
          %v3861 = vsub.f32 1.5, %v3860
          %v3862 = vmul.f32 %v3857, %v3861
          %v3863 = vmul.f32 %v3325, %v3862
          %vm3864 = vcmp.eq.f32.partialorder %v3325, inf
          %v3865 = vsel %vm3864, %v3325, %v3863
          %vm3866 = vcmp.eq.f32.partialorder %v3325, 0.0
          %v3867 = vand.u32 %v3325, 2147483648
          %v3868 = vsel %vm3866, %v3867, %v3865
          %v3869 = vrsqrt.pop %v3328
          %v3870 = vmul.f32 %v3869, %v3328
          %v3871 = vmul.f32 %v3870, %v3869
          %v3872 = vmul.f32 0.5, %v3871
          %v3873 = vsub.f32 1.5, %v3872
          %v3874 = vmul.f32 %v3869, %v3873
          %v3875 = vmul.f32 %v3328, %v3874
          %vm3876 = vcmp.eq.f32.partialorder %v3328, inf
          %v3877 = vsel %vm3876, %v3328, %v3875
          %vm3878 = vcmp.eq.f32.partialorder %v3328, 0.0
          %v3879 = vand.u32 %v3328, 2147483648
          %v3880 = vsel %vm3878, %v3879, %v3877
          %v3881 = vrsqrt.pop %v3331
          %v3882 = vmul.f32 %v3881, %v3331
          %v3883 = vmul.f32 %v3882, %v3881
          %v3884 = vmul.f32 0.5, %v3883
          %v3885 = vsub.f32 1.5, %v3884
          %v3886 = vmul.f32 %v3881, %v3885
          %v3887 = vmul.f32 %v3331, %v3886
          %vm3888 = vcmp.eq.f32.partialorder %v3331, inf
          %v3889 = vsel %vm3888, %v3331, %v3887
          %vm3890 = vcmp.eq.f32.partialorder %v3331, 0.0
          %v3891 = vand.u32 %v3331, 2147483648
          %v3892 = vsel %vm3890, %v3891, %v3889
          %v3893 = vrsqrt.pop %v3334
          %v3894 = vmul.f32 %v3893, %v3334
          %v3895 = vmul.f32 %v3894, %v3893
          %v3896 = vmul.f32 0.5, %v3895
          %v3897 = vsub.f32 1.5, %v3896
          %v3898 = vmul.f32 %v3893, %v3897
          %v3899 = vmul.f32 %v3334, %v3898
          %vm3900 = vcmp.eq.f32.partialorder %v3334, inf
          %v3901 = vsel %vm3900, %v3334, %v3899
          %vm3902 = vcmp.eq.f32.partialorder %v3334, 0.0
          %v3903 = vand.u32 %v3334, 2147483648
          %v3904 = vsel %vm3902, %v3903, %v3901
          %v3905 = vrsqrt.pop %v3337
          %v3906 = vmul.f32 %v3905, %v3337
          %v3907 = vmul.f32 %v3906, %v3905
          %v3908 = vmul.f32 0.5, %v3907
          %v3909 = vsub.f32 1.5, %v3908
          %v3910 = vmul.f32 %v3905, %v3909
          %v3911 = vmul.f32 %v3337, %v3910
          %vm3912 = vcmp.eq.f32.partialorder %v3337, inf
          %v3913 = vsel %vm3912, %v3337, %v3911
          %vm3914 = vcmp.eq.f32.partialorder %v3337, 0.0
          %v3915 = vand.u32 %v3337, 2147483648
          %v3916 = vsel %vm3914, %v3915, %v3913
          %v3917 = vrsqrt.pop %v3340
          %v3918 = vmul.f32 %v3917, %v3340
          %v3919 = vmul.f32 %v3918, %v3917
          %v3920 = vmul.f32 0.5, %v3919
          %v3921 = vsub.f32 1.5, %v3920
          %v3922 = vmul.f32 %v3917, %v3921
          %v3923 = vmul.f32 %v3340, %v3922
          %vm3924 = vcmp.eq.f32.partialorder %v3340, inf
          %v3925 = vsel %vm3924, %v3340, %v3923
          %vm3926 = vcmp.eq.f32.partialorder %v3340, 0.0
          %v3927 = vand.u32 %v3340, 2147483648
          %v3928 = vsel %vm3926, %v3927, %v3925
          %v3929 = vrsqrt.pop %v3343
          %v3930 = vmul.f32 %v3929, %v3343
          %v3931 = vmul.f32 %v3930, %v3929
          %v3932 = vmul.f32 0.5, %v3931
          %v3933 = vsub.f32 1.5, %v3932
          %v3934 = vmul.f32 %v3929, %v3933
          %v3935 = vmul.f32 %v3343, %v3934
          %vm3936 = vcmp.eq.f32.partialorder %v3343, inf
          %v3937 = vsel %vm3936, %v3343, %v3935
          %vm3938 = vcmp.eq.f32.partialorder %v3343, 0.0
          %v3939 = vand.u32 %v3343, 2147483648
          %v3940 = vsel %vm3938, %v3939, %v3937
          %v3941 = vrsqrt.pop %v3346
          %v3942 = vmul.f32 %v3941, %v3346
          %v3943 = vmul.f32 %v3942, %v3941
          %v3944 = vmul.f32 0.5, %v3943
          %v3945 = vsub.f32 1.5, %v3944
          %v3946 = vmul.f32 %v3941, %v3945
          %v3947 = vmul.f32 %v3346, %v3946
          %vm3948 = vcmp.eq.f32.partialorder %v3346, inf
          %v3949 = vsel %vm3948, %v3346, %v3947
          %vm3950 = vcmp.eq.f32.partialorder %v3346, 0.0
          %v3951 = vand.u32 %v3346, 2147483648
          %v3952 = vsel %vm3950, %v3951, %v3949
          %v3953 = vrsqrt.pop %v3349
          %v3954 = vmul.f32 %v3953, %v3349
          %v3955 = vmul.f32 %v3954, %v3953
          %v3956 = vmul.f32 0.5, %v3955
          %v3957 = vsub.f32 1.5, %v3956
          %v3958 = vmul.f32 %v3953, %v3957
          %v3959 = vmul.f32 %v3349, %v3958
          %vm3960 = vcmp.eq.f32.partialorder %v3349, inf
          %v3961 = vsel %vm3960, %v3349, %v3959
          %vm3962 = vcmp.eq.f32.partialorder %v3349, 0.0
          %v3963 = vand.u32 %v3349, 2147483648
          %v3964 = vsel %vm3962, %v3963, %v3961
          %v3965 = vrsqrt.pop %v3352
          %v3966 = vmul.f32 %v3965, %v3352
          %v3967 = vmul.f32 %v3966, %v3965
          %v3968 = vmul.f32 0.5, %v3967
          %v3969 = vsub.f32 1.5, %v3968
          %v3970 = vmul.f32 %v3965, %v3969
          %v3971 = vmul.f32 %v3352, %v3970
          %vm3972 = vcmp.eq.f32.partialorder %v3352, inf
          %v3973 = vsel %vm3972, %v3352, %v3971
          %vm3974 = vcmp.eq.f32.partialorder %v3352, 0.0
          %v3975 = vand.u32 %v3352, 2147483648
          %v3976 = vsel %vm3974, %v3975, %v3973
          %v3977 = vrsqrt.pop %v3355
          %v3978 = vmul.f32 %v3977, %v3355
          %v3979 = vmul.f32 %v3978, %v3977
          %v3980 = vmul.f32 0.5, %v3979
          %v3981 = vsub.f32 1.5, %v3980
          %v3982 = vmul.f32 %v3977, %v3981
          %v3983 = vmul.f32 %v3355, %v3982
          %vm3984 = vcmp.eq.f32.partialorder %v3355, inf
          %v3985 = vsel %vm3984, %v3355, %v3983
          %vm3986 = vcmp.eq.f32.partialorder %v3355, 0.0
          %v3987 = vand.u32 %v3355, 2147483648
          %v3988 = vsel %vm3986, %v3987, %v3985
          %v3989 = vrsqrt.pop %v3358
          %v3990 = vmul.f32 %v3989, %v3358
          %v3991 = vmul.f32 %v3990, %v3989
          %v3992 = vmul.f32 0.5, %v3991
          %v3993 = vsub.f32 1.5, %v3992
          %v3994 = vmul.f32 %v3989, %v3993
          %v3995 = vmul.f32 %v3358, %v3994
          %vm3996 = vcmp.eq.f32.partialorder %v3358, inf
          %v3997 = vsel %vm3996, %v3358, %v3995
          %vm3998 = vcmp.eq.f32.partialorder %v3358, 0.0
          %v3999 = vand.u32 %v3358, 2147483648
          %v4000 = vsel %vm3998, %v3999, %v3997
          %v4001 = vrsqrt.pop %v3361
          %v4002 = vmul.f32 %v4001, %v3361
          %v4003 = vmul.f32 %v4002, %v4001
          %v4004 = vmul.f32 0.5, %v4003
          %v4005 = vsub.f32 1.5, %v4004
          %v4006 = vmul.f32 %v4001, %v4005
          %v4007 = vmul.f32 %v3361, %v4006
          %vm4008 = vcmp.eq.f32.partialorder %v3361, inf
          %v4009 = vsel %vm4008, %v3361, %v4007
          %vm4010 = vcmp.eq.f32.partialorder %v3361, 0.0
          %v4011 = vand.u32 %v3361, 2147483648
          %v4012 = vsel %vm4010, %v4011, %v4009
          %v4013 = vrsqrt.pop %v3364
          %v4014 = vmul.f32 %v4013, %v3364
          %v4015 = vmul.f32 %v4014, %v4013
          %v4016 = vmul.f32 0.5, %v4015
          %v4017 = vsub.f32 1.5, %v4016
          %v4018 = vmul.f32 %v4013, %v4017
          %v4019 = vmul.f32 %v3364, %v4018
          %vm4020 = vcmp.eq.f32.partialorder %v3364, inf
          %v4021 = vsel %vm4020, %v3364, %v4019
          %vm4022 = vcmp.eq.f32.partialorder %v3364, 0.0
          %v4023 = vand.u32 %v3364, 2147483648
          %v4024 = vsel %vm4022, %v4023, %v4021
          %v4025 = vrsqrt.pop %v3367
          %v4026 = vmul.f32 %v4025, %v3367
          %v4027 = vmul.f32 %v4026, %v4025
          %v4028 = vmul.f32 0.5, %v4027
          %v4029 = vsub.f32 1.5, %v4028
          %v4030 = vmul.f32 %v4025, %v4029
          %v4031 = vmul.f32 %v3367, %v4030
          %vm4032 = vcmp.eq.f32.partialorder %v3367, inf
          %v4033 = vsel %vm4032, %v3367, %v4031
          %vm4034 = vcmp.eq.f32.partialorder %v3367, 0.0
          %v4035 = vand.u32 %v3367, 2147483648
          %v4036 = vsel %vm4034, %v4035, %v4033
          %v4037 = vrsqrt.pop %v3370
          %v4038 = vmul.f32 %v4037, %v3370
          %v4039 = vmul.f32 %v4038, %v4037
          %v4040 = vmul.f32 0.5, %v4039
          %v4041 = vsub.f32 1.5, %v4040
          %v4042 = vmul.f32 %v4037, %v4041
          %v4043 = vmul.f32 %v3370, %v4042
          %vm4044 = vcmp.eq.f32.partialorder %v3370, inf
          %v4045 = vsel %vm4044, %v3370, %v4043
          %vm4046 = vcmp.eq.f32.partialorder %v3370, 0.0
          %v4047 = vand.u32 %v3370, 2147483648
          %v4048 = vsel %vm4046, %v4047, %v4045
          %v4049 = vrsqrt.pop %v3373
          %v4050 = vmul.f32 %v4049, %v3373
          %v4051 = vmul.f32 %v4050, %v4049
          %v4052 = vmul.f32 0.5, %v4051
          %v4053 = vsub.f32 1.5, %v4052
          %v4054 = vmul.f32 %v4049, %v4053
          %v4055 = vmul.f32 %v3373, %v4054
          %vm4056 = vcmp.eq.f32.partialorder %v3373, inf
          %v4057 = vsel %vm4056, %v3373, %v4055
          %vm4058 = vcmp.eq.f32.partialorder %v3373, 0.0
          %v4059 = vand.u32 %v3373, 2147483648
          %v4060 = vsel %vm4058, %v4059, %v4057
          %v4061 = vrsqrt.pop %v3376
          %v4062 = vmul.f32 %v4061, %v3376
          %v4063 = vmul.f32 %v4062, %v4061
          %v4064 = vmul.f32 0.5, %v4063
          %v4065 = vsub.f32 1.5, %v4064
          %v4066 = vmul.f32 %v4061, %v4065
          %v4067 = vmul.f32 %v3376, %v4066
          %vm4068 = vcmp.eq.f32.partialorder %v3376, inf
          %v4069 = vsel %vm4068, %v3376, %v4067
          %vm4070 = vcmp.eq.f32.partialorder %v3376, 0.0
          %v4071 = vand.u32 %v3376, 2147483648
          %v4072 = vsel %vm4070, %v4071, %v4069
          %v4073 = vrsqrt.pop %v3379
          %v4074 = vmul.f32 %v4073, %v3379
          %v4075 = vmul.f32 %v4074, %v4073
          %v4076 = vmul.f32 0.5, %v4075
          %v4077 = vsub.f32 1.5, %v4076
          %v4078 = vmul.f32 %v4073, %v4077
          %v4079 = vmul.f32 %v3379, %v4078
          %vm4080 = vcmp.eq.f32.partialorder %v3379, inf
          %v4081 = vsel %vm4080, %v3379, %v4079
          %vm4082 = vcmp.eq.f32.partialorder %v3379, 0.0
          %v4083 = vand.u32 %v3379, 2147483648
          %v4084 = vsel %vm4082, %v4083, %v4081
          %v4085 = vrsqrt.pop %v3382
          %v4086 = vmul.f32 %v4085, %v3382
          %v4087 = vmul.f32 %v4086, %v4085
          %v4088 = vmul.f32 0.5, %v4087
          %v4089 = vsub.f32 1.5, %v4088
          %v4090 = vmul.f32 %v4085, %v4089
          %v4091 = vmul.f32 %v3382, %v4090
          %vm4092 = vcmp.eq.f32.partialorder %v3382, inf
          %v4093 = vsel %vm4092, %v3382, %v4091
          %vm4094 = vcmp.eq.f32.partialorder %v3382, 0.0
          %v4095 = vand.u32 %v3382, 2147483648
          %v4096 = vsel %vm4094, %v4095, %v4093
          %v4097 = vrsqrt.pop %v3385
          %v4098 = vmul.f32 %v4097, %v3385
          %v4099 = vmul.f32 %v4098, %v4097
          %v4100 = vmul.f32 0.5, %v4099
          %v4101 = vsub.f32 1.5, %v4100
          %v4102 = vmul.f32 %v4097, %v4101
          %v4103 = vmul.f32 %v3385, %v4102
          %vm4104 = vcmp.eq.f32.partialorder %v3385, inf
          %v4105 = vsel %vm4104, %v3385, %v4103
          %vm4106 = vcmp.eq.f32.partialorder %v3385, 0.0
          %v4107 = vand.u32 %v3385, 2147483648
          %v4108 = vsel %vm4106, %v4107, %v4105
          %v4109 = vrsqrt.pop %v3388
          %v4110 = vmul.f32 %v4109, %v3388
          %v4111 = vmul.f32 %v4110, %v4109
          %v4112 = vmul.f32 0.5, %v4111
          %v4113 = vsub.f32 1.5, %v4112
          %v4114 = vmul.f32 %v4109, %v4113
          %v4115 = vmul.f32 %v3388, %v4114
          %vm4116 = vcmp.eq.f32.partialorder %v3388, inf
          %v4117 = vsel %vm4116, %v3388, %v4115
          %vm4118 = vcmp.eq.f32.partialorder %v3388, 0.0
          %v4119 = vand.u32 %v3388, 2147483648
          %v4120 = vsel %vm4118, %v4119, %v4117
          %v4121 = vrsqrt.pop %v3391
          %v4122 = vmul.f32 %v4121, %v3391
          %v4123 = vmul.f32 %v4122, %v4121
          %v4124 = vmul.f32 0.5, %v4123
          %v4125 = vsub.f32 1.5, %v4124
          %v4126 = vmul.f32 %v4121, %v4125
          %v4127 = vmul.f32 %v3391, %v4126
          %vm4128 = vcmp.eq.f32.partialorder %v3391, inf
          %v4129 = vsel %vm4128, %v3391, %v4127
          %vm4130 = vcmp.eq.f32.partialorder %v3391, 0.0
          %v4131 = vand.u32 %v3391, 2147483648
          %v4132 = vsel %vm4130, %v4131, %v4129
          %v4133 = vrsqrt.pop %v3394
          %v4134 = vmul.f32 %v4133, %v3394
          %v4135 = vmul.f32 %v4134, %v4133
          %v4136 = vmul.f32 0.5, %v4135
          %v4137 = vsub.f32 1.5, %v4136
          %v4138 = vmul.f32 %v4133, %v4137
          %v4139 = vmul.f32 %v3394, %v4138
          %vm4140 = vcmp.eq.f32.partialorder %v3394, inf
          %v4141 = vsel %vm4140, %v3394, %v4139
          %vm4142 = vcmp.eq.f32.partialorder %v3394, 0.0
          %v4143 = vand.u32 %v3394, 2147483648
          %v4144 = vsel %vm4142, %v4143, %v4141
          %v4145 = vrsqrt.pop %v3397
          %v4146 = vmul.f32 %v4145, %v3397
          %v4147 = vmul.f32 %v4146, %v4145
          %v4148 = vmul.f32 0.5, %v4147
          %v4149 = vsub.f32 1.5, %v4148
          %v4150 = vmul.f32 %v4145, %v4149
          %v4151 = vmul.f32 %v3397, %v4150
          %vm4152 = vcmp.eq.f32.partialorder %v3397, inf
          %v4153 = vsel %vm4152, %v3397, %v4151
          %vm4154 = vcmp.eq.f32.partialorder %v3397, 0.0
          %v4155 = vand.u32 %v3397, 2147483648
          %v4156 = vsel %vm4154, %v4155, %v4153
          %v4157 = vrsqrt.pop %v3400
          %v4158 = vmul.f32 %v4157, %v3400
          %v4159 = vmul.f32 %v4158, %v4157
          %v4160 = vmul.f32 0.5, %v4159
          %v4161 = vsub.f32 1.5, %v4160
          %v4162 = vmul.f32 %v4157, %v4161
          %v4163 = vmul.f32 %v3400, %v4162
          %vm4164 = vcmp.eq.f32.partialorder %v3400, inf
          %v4165 = vsel %vm4164, %v3400, %v4163
          %vm4166 = vcmp.eq.f32.partialorder %v3400, 0.0
          %v4167 = vand.u32 %v3400, 2147483648
          %v4168 = vsel %vm4166, %v4167, %v4165
          %v4169 = vsel %vm3208, %v3080, %v3412
          %v4170 = vsel %vm3208, %v3081, %v3424
          %v4171 = vsel %vm3208, %v3082, %v3436
          %v4172 = vsel %vm3208, %v3083, %v3448
          %v4173 = vsel %vm3208, %v3084, %v3460
          %v4174 = vsel %vm3208, %v3085, %v3472
          %v4175 = vsel %vm3208, %v3086, %v3484
          %v4176 = vsel %vm3208, %v3087, %v3496
          %v4177 = vsel %vm3208, %v3088, %v3508
          %v4178 = vsel %vm3208, %v3089, %v3520
          %v4179 = vsel %vm3208, %v3090, %v3532
          %v4180 = vsel %vm3208, %v3091, %v3544
          %v4181 = vsel %vm3208, %v3092, %v3556
          %v4182 = vsel %vm3208, %v3093, %v3568
          %v4183 = vsel %vm3208, %v3094, %v3580
          %v4184 = vsel %vm3208, %v3095, %v3592
          %v4185 = vsel %vm3208, %v3096, %v3604
          %v4186 = vsel %vm3208, %v3097, %v3616
          %v4187 = vsel %vm3208, %v3098, %v3628
          %v4188 = vsel %vm3208, %v3099, %v3640
          %v4189 = vsel %vm3208, %v3100, %v3652
          %v4190 = vsel %vm3208, %v3101, %v3664
          %v4191 = vsel %vm3208, %v3102, %v3676
          %v4192 = vsel %vm3208, %v3103, %v3688
          %v4193 = vsel %vm3208, %v3104, %v3700
          %v4194 = vsel %vm3208, %v3105, %v3712
          %v4195 = vsel %vm3208, %v3106, %v3724
          %v4196 = vsel %vm3208, %v3107, %v3736
          %v4197 = vsel %vm3208, %v3108, %v3748
          %v4198 = vsel %vm3208, %v3109, %v3760
          %v4199 = vsel %vm3208, %v3110, %v3772
          %v4200 = vsel %vm3208, %v3111, %v3784
          %v4201 = vsel %vm3208, %v3112, %v3796
          %v4202 = vsel %vm3208, %v3113, %v3808
          %v4203 = vsel %vm3208, %v3114, %v3820
          %v4204 = vsel %vm3208, %v3115, %v3832
          %v4205 = vsel %vm3208, %v3116, %v3844
          %v4206 = vsel %vm3208, %v3117, %v3856
          %v4207 = vsel %vm3208, %v3118, %v3868
          %v4208 = vsel %vm3208, %v3119, %v3880
          %v4209 = vsel %vm3208, %v3120, %v3892
          %v4210 = vsel %vm3208, %v3121, %v3904
          %v4211 = vsel %vm3208, %v3122, %v3916
          %v4212 = vsel %vm3208, %v3123, %v3928
          %v4213 = vsel %vm3208, %v3124, %v3940
          %v4214 = vsel %vm3208, %v3125, %v3952
          %v4215 = vsel %vm3208, %v3126, %v3964
          %v4216 = vsel %vm3208, %v3127, %v3976
          %v4217 = vsel %vm3208, %v3128, %v3988
          %v4218 = vsel %vm3208, %v3129, %v4000
          %v4219 = vsel %vm3208, %v3130, %v4012
          %v4220 = vsel %vm3208, %v3131, %v4024
          %v4221 = vsel %vm3208, %v3132, %v4036
          %v4222 = vsel %vm3208, %v3133, %v4048
          %v4223 = vsel %vm3208, %v3134, %v4060
          %v4224 = vsel %vm3208, %v3135, %v4072
          %v4225 = vsel %vm3208, %v3136, %v4084
          %v4226 = vsel %vm3208, %v3137, %v4096
          %v4227 = vsel %vm3208, %v3138, %v4108
          %v4228 = vsel %vm3208, %v3139, %v4120
          %v4229 = vsel %vm3208, %v3140, %v4132
          %v4230 = vsel %vm3208, %v3141, %v4144
          %v4231 = vsel %vm3208, %v3142, %v4156
          %v4232 = vsel %vm3208, %v3143, %v4168
          %4297 = vrot.lane.b32.xlu0 %v2889, 8
          %v4298 = vpop.permute.xlu0 %4297
          %4299 = vrot.lane.b32.xlu0 %v2892, 8
          %v4300 = vpop.permute.xlu0 %4299
          %4301 = vrot.lane.b32.xlu0 %v2895, 8
          %v4302 = vpop.permute.xlu0 %4301
          %4303 = vrot.lane.b32.xlu0 %v2898, 8
          %v4304 = vpop.permute.xlu0 %4303
          %4305 = vrot.lane.b32.xlu0 %v2901, 8
          %v4306 = vpop.permute.xlu0 %4305
          %4307 = vrot.lane.b32.xlu0 %v2904, 8
          %v4308 = vpop.permute.xlu0 %4307
          %4309 = vrot.lane.b32.xlu0 %v2907, 8
          %v4310 = vpop.permute.xlu0 %4309
          %4311 = vrot.lane.b32.xlu0 %v2910, 8
          %v4312 = vpop.permute.xlu0 %4311
          %4313 = vrot.lane.b32.xlu0 %v2913, 8
          %v4314 = vpop.permute.xlu0 %4313
          %4315 = vrot.lane.b32.xlu0 %v2916, 8
          %v4316 = vpop.permute.xlu0 %4315
          %4317 = vrot.lane.b32.xlu0 %v2919, 8
          %v4318 = vpop.permute.xlu0 %4317
          %4319 = vrot.lane.b32.xlu0 %v2922, 8
          %v4320 = vpop.permute.xlu0 %4319
          %4321 = vrot.lane.b32.xlu0 %v2925, 8
          %v4322 = vpop.permute.xlu0 %4321
          %4323 = vrot.lane.b32.xlu0 %v2928, 8
          %v4324 = vpop.permute.xlu0 %4323
          %4325 = vrot.lane.b32.xlu0 %v2931, 8
          %v4326 = vpop.permute.xlu0 %4325
          %4327 = vrot.lane.b32.xlu0 %v2934, 8
          %v4328 = vpop.permute.xlu0 %4327
          %4329 = vrot.lane.b32.xlu0 %v2937, 8
          %v4330 = vpop.permute.xlu0 %4329
          %4331 = vrot.lane.b32.xlu0 %v2940, 8
          %v4332 = vpop.permute.xlu0 %4331
          %4333 = vrot.lane.b32.xlu0 %v2943, 8
          %v4334 = vpop.permute.xlu0 %4333
          %4335 = vrot.lane.b32.xlu0 %v2946, 8
          %v4336 = vpop.permute.xlu0 %4335
          %4337 = vrot.lane.b32.xlu0 %v2949, 8
          %v4338 = vpop.permute.xlu0 %4337
          %4339 = vrot.lane.b32.xlu0 %v2952, 8
          %v4340 = vpop.permute.xlu0 %4339
          %4341 = vrot.lane.b32.xlu0 %v2955, 8
          %v4342 = vpop.permute.xlu0 %4341
          %4343 = vrot.lane.b32.xlu0 %v2958, 8
          %v4344 = vpop.permute.xlu0 %4343
          %4345 = vrot.lane.b32.xlu0 %v2961, 8
          %v4346 = vpop.permute.xlu0 %4345
          %4347 = vrot.lane.b32.xlu0 %v2964, 8
          %v4348 = vpop.permute.xlu0 %4347
          %4349 = vrot.lane.b32.xlu0 %v2967, 8
          %v4350 = vpop.permute.xlu0 %4349
          %4351 = vrot.lane.b32.xlu0 %v2970, 8
          %v4352 = vpop.permute.xlu0 %4351
          %4353 = vrot.lane.b32.xlu0 %v2973, 8
          %v4354 = vpop.permute.xlu0 %4353
          %4355 = vrot.lane.b32.xlu0 %v2976, 8
          %v4356 = vpop.permute.xlu0 %4355
          %4357 = vrot.lane.b32.xlu0 %v2979, 8
          %v4358 = vpop.permute.xlu0 %4357
          %4359 = vrot.lane.b32.xlu0 %v2982, 8
          %v4360 = vpop.permute.xlu0 %4359
          %4361 = vrot.lane.b32.xlu0 %v2985, 8
          %v4362 = vpop.permute.xlu0 %4361
          %4363 = vrot.lane.b32.xlu0 %v2988, 8
          %v4364 = vpop.permute.xlu0 %4363
          %4365 = vrot.lane.b32.xlu0 %v2991, 8
          %v4366 = vpop.permute.xlu0 %4365
          %4367 = vrot.lane.b32.xlu0 %v2994, 8
          %v4368 = vpop.permute.xlu0 %4367
          %4369 = vrot.lane.b32.xlu0 %v2997, 8
          %v4370 = vpop.permute.xlu0 %4369
          %4371 = vrot.lane.b32.xlu0 %v3000, 8
          %v4372 = vpop.permute.xlu0 %4371
          %4373 = vrot.lane.b32.xlu0 %v3003, 8
          %v4374 = vpop.permute.xlu0 %4373
          %4375 = vrot.lane.b32.xlu0 %v3006, 8
          %v4376 = vpop.permute.xlu0 %4375
          %4377 = vrot.lane.b32.xlu0 %v3009, 8
          %v4378 = vpop.permute.xlu0 %4377
          %4379 = vrot.lane.b32.xlu0 %v3012, 8
          %v4380 = vpop.permute.xlu0 %4379
          %4381 = vrot.lane.b32.xlu0 %v3015, 8
          %v4382 = vpop.permute.xlu0 %4381
          %4383 = vrot.lane.b32.xlu0 %v3018, 8
          %v4384 = vpop.permute.xlu0 %4383
          %4385 = vrot.lane.b32.xlu0 %v3021, 8
          %v4386 = vpop.permute.xlu0 %4385
          %4387 = vrot.lane.b32.xlu0 %v3024, 8
          %v4388 = vpop.permute.xlu0 %4387
          %4389 = vrot.lane.b32.xlu0 %v3027, 8
          %v4390 = vpop.permute.xlu0 %4389
          %4391 = vrot.lane.b32.xlu0 %v3030, 8
          %v4392 = vpop.permute.xlu0 %4391
          %4393 = vrot.lane.b32.xlu0 %v3033, 8
          %v4394 = vpop.permute.xlu0 %4393
          %4395 = vrot.lane.b32.xlu0 %v3036, 8
          %v4396 = vpop.permute.xlu0 %4395
          %4397 = vrot.lane.b32.xlu0 %v3039, 8
          %v4398 = vpop.permute.xlu0 %4397
          %4399 = vrot.lane.b32.xlu0 %v3042, 8
          %v4400 = vpop.permute.xlu0 %4399
          %4401 = vrot.lane.b32.xlu0 %v3045, 8
          %v4402 = vpop.permute.xlu0 %4401
          %4403 = vrot.lane.b32.xlu0 %v3048, 8
          %v4404 = vpop.permute.xlu0 %4403
          %4405 = vrot.lane.b32.xlu0 %v3051, 8
          %v4406 = vpop.permute.xlu0 %4405
          %4407 = vrot.lane.b32.xlu0 %v3054, 8
          %v4408 = vpop.permute.xlu0 %4407
          %4409 = vrot.lane.b32.xlu0 %v3057, 8
          %v4410 = vpop.permute.xlu0 %4409
          %4411 = vrot.lane.b32.xlu0 %v3060, 8
          %v4412 = vpop.permute.xlu0 %4411
          %4413 = vrot.lane.b32.xlu0 %v3063, 8
          %v4414 = vpop.permute.xlu0 %4413
          %4415 = vrot.lane.b32.xlu0 %v3066, 8
          %v4416 = vpop.permute.xlu0 %4415
          %4417 = vrot.lane.b32.xlu0 %v3069, 8
          %v4418 = vpop.permute.xlu0 %4417
          %4419 = vrot.lane.b32.xlu0 %v3072, 8
          %v4420 = vpop.permute.xlu0 %4419
          %4421 = vrot.lane.b32.xlu0 %v3075, 8
          %v4422 = vpop.permute.xlu0 %4421
          %4423 = vrot.lane.b32.xlu0 %v3078, 8
          %v4424 = vpop.permute.xlu0 %4423
          %4553 = vrot.lane.b32.xlu0 %v4169, 16
          %v4554 = vpop.permute.xlu0 %4553
          %4555 = vrot.lane.b32.xlu0 %v4170, 16
          %v4556 = vpop.permute.xlu0 %4555
          %4557 = vrot.lane.b32.xlu0 %v4171, 16
          %v4558 = vpop.permute.xlu0 %4557
          %4559 = vrot.lane.b32.xlu0 %v4172, 16
          %v4560 = vpop.permute.xlu0 %4559
          %4561 = vrot.lane.b32.xlu0 %v4173, 16
          %v4562 = vpop.permute.xlu0 %4561
          %4563 = vrot.lane.b32.xlu0 %v4174, 16
          %v4564 = vpop.permute.xlu0 %4563
          %4565 = vrot.lane.b32.xlu0 %v4175, 16
          %v4566 = vpop.permute.xlu0 %4565
          %4567 = vrot.lane.b32.xlu0 %v4176, 16
          %v4568 = vpop.permute.xlu0 %4567
          %4569 = vrot.lane.b32.xlu0 %v4177, 16
          %v4570 = vpop.permute.xlu0 %4569
          %4571 = vrot.lane.b32.xlu0 %v4178, 16
          %v4572 = vpop.permute.xlu0 %4571
          %4573 = vrot.lane.b32.xlu0 %v4179, 16
          %v4574 = vpop.permute.xlu0 %4573
          %4575 = vrot.lane.b32.xlu0 %v4180, 16
          %v4576 = vpop.permute.xlu0 %4575
          %4577 = vrot.lane.b32.xlu0 %v4181, 16
          %v4578 = vpop.permute.xlu0 %4577
          %4579 = vrot.lane.b32.xlu0 %v4182, 16
          %v4580 = vpop.permute.xlu0 %4579
          %4581 = vrot.lane.b32.xlu0 %v4183, 16
          %v4582 = vpop.permute.xlu0 %4581
          %4583 = vrot.lane.b32.xlu0 %v4184, 16
          %v4584 = vpop.permute.xlu0 %4583
          %4585 = vrot.lane.b32.xlu0 %v4185, 16
          %v4586 = vpop.permute.xlu0 %4585
          %4587 = vrot.lane.b32.xlu0 %v4186, 16
          %v4588 = vpop.permute.xlu0 %4587
          %4589 = vrot.lane.b32.xlu0 %v4187, 16
          %v4590 = vpop.permute.xlu0 %4589
          %4591 = vrot.lane.b32.xlu0 %v4188, 16
          %v4592 = vpop.permute.xlu0 %4591
          %4593 = vrot.lane.b32.xlu0 %v4189, 16
          %v4594 = vpop.permute.xlu0 %4593
          %4595 = vrot.lane.b32.xlu0 %v4190, 16
          %v4596 = vpop.permute.xlu0 %4595
          %4597 = vrot.lane.b32.xlu0 %v4191, 16
          %v4598 = vpop.permute.xlu0 %4597
          %4599 = vrot.lane.b32.xlu0 %v4192, 16
          %v4600 = vpop.permute.xlu0 %4599
          %4601 = vrot.lane.b32.xlu0 %v4193, 16
          %v4602 = vpop.permute.xlu0 %4601
          %4603 = vrot.lane.b32.xlu0 %v4194, 16
          %v4604 = vpop.permute.xlu0 %4603
          %4605 = vrot.lane.b32.xlu0 %v4195, 16
          %v4606 = vpop.permute.xlu0 %4605
          %4607 = vrot.lane.b32.xlu0 %v4196, 16
          %v4608 = vpop.permute.xlu0 %4607
          %4609 = vrot.lane.b32.xlu0 %v4197, 16
          %v4610 = vpop.permute.xlu0 %4609
          %4611 = vrot.lane.b32.xlu0 %v4198, 16
          %v4612 = vpop.permute.xlu0 %4611
          %4613 = vrot.lane.b32.xlu0 %v4199, 16
          %v4614 = vpop.permute.xlu0 %4613
          %4615 = vrot.lane.b32.xlu0 %v4200, 16
          %v4616 = vpop.permute.xlu0 %4615
          %4617 = vrot.lane.b32.xlu0 %v4201, 16
          %v4618 = vpop.permute.xlu0 %4617
          %4619 = vrot.lane.b32.xlu0 %v4202, 16
          %v4620 = vpop.permute.xlu0 %4619
          %4621 = vrot.lane.b32.xlu0 %v4203, 16
          %v4622 = vpop.permute.xlu0 %4621
          %4623 = vrot.lane.b32.xlu0 %v4204, 16
          %v4624 = vpop.permute.xlu0 %4623
          %4625 = vrot.lane.b32.xlu0 %v4205, 16
          %v4626 = vpop.permute.xlu0 %4625
          %4627 = vrot.lane.b32.xlu0 %v4206, 16
          %v4628 = vpop.permute.xlu0 %4627
          %4629 = vrot.lane.b32.xlu0 %v4207, 16
          %v4630 = vpop.permute.xlu0 %4629
          %4631 = vrot.lane.b32.xlu0 %v4208, 16
          %v4632 = vpop.permute.xlu0 %4631
          %4633 = vrot.lane.b32.xlu0 %v4209, 16
          %v4634 = vpop.permute.xlu0 %4633
          %4635 = vrot.lane.b32.xlu0 %v4210, 16
          %v4636 = vpop.permute.xlu0 %4635
          %4637 = vrot.lane.b32.xlu0 %v4211, 16
          %v4638 = vpop.permute.xlu0 %4637
          %4639 = vrot.lane.b32.xlu0 %v4212, 16
          %v4640 = vpop.permute.xlu0 %4639
          %4641 = vrot.lane.b32.xlu0 %v4213, 16
          %v4642 = vpop.permute.xlu0 %4641
          %4643 = vrot.lane.b32.xlu0 %v4214, 16
          %v4644 = vpop.permute.xlu0 %4643
          %4645 = vrot.lane.b32.xlu0 %v4215, 16
          %v4646 = vpop.permute.xlu0 %4645
          %4647 = vrot.lane.b32.xlu0 %v4216, 16
          %v4648 = vpop.permute.xlu0 %4647
          %4649 = vrot.lane.b32.xlu0 %v4217, 16
          %v4650 = vpop.permute.xlu0 %4649
          %4651 = vrot.lane.b32.xlu0 %v4218, 16
          %v4652 = vpop.permute.xlu0 %4651
          %4653 = vrot.lane.b32.xlu0 %v4219, 16
          %v4654 = vpop.permute.xlu0 %4653
          %4655 = vrot.lane.b32.xlu0 %v4220, 16
          %v4656 = vpop.permute.xlu0 %4655
          %4657 = vrot.lane.b32.xlu0 %v4221, 16
          %v4658 = vpop.permute.xlu0 %4657
          %4659 = vrot.lane.b32.xlu0 %v4222, 16
          %v4660 = vpop.permute.xlu0 %4659
          %4661 = vrot.lane.b32.xlu0 %v4223, 16
          %v4662 = vpop.permute.xlu0 %4661
          %4663 = vrot.lane.b32.xlu0 %v4224, 16
          %v4664 = vpop.permute.xlu0 %4663
          %4665 = vrot.lane.b32.xlu0 %v4225, 16
          %v4666 = vpop.permute.xlu0 %4665
          %4667 = vrot.lane.b32.xlu0 %v4226, 16
          %v4668 = vpop.permute.xlu0 %4667
          %4669 = vrot.lane.b32.xlu0 %v4227, 16
          %v4670 = vpop.permute.xlu0 %4669
          %4671 = vrot.lane.b32.xlu0 %v4228, 16
          %v4672 = vpop.permute.xlu0 %4671
          %4673 = vrot.lane.b32.xlu0 %v4229, 16
          %v4674 = vpop.permute.xlu0 %4673
          %4675 = vrot.lane.b32.xlu0 %v4230, 16
          %v4676 = vpop.permute.xlu0 %4675
          %4677 = vrot.lane.b32.xlu0 %v4231, 16
          %v4678 = vpop.permute.xlu0 %4677
          %4679 = vrot.lane.b32.xlu0 %v4232, 16
          %v4680 = vpop.permute.xlu0 %4679
          %v4745 = vsel %vm2294, %v2697, %v4298
          %v4746 = vsel %vm2294, %v2700, %v4300
          %v4747 = vsel %vm2294, %v2703, %v4302
          %v4748 = vsel %vm2294, %v2706, %v4304
          %v4749 = vsel %vm2294, %v2709, %v4306
          %v4750 = vsel %vm2294, %v2712, %v4308
          %v4751 = vsel %vm2294, %v2715, %v4310
          %v4752 = vsel %vm2294, %v2718, %v4312
          %v4753 = vsel %vm2294, %v2721, %v4314
          %v4754 = vsel %vm2294, %v2724, %v4316
          %v4755 = vsel %vm2294, %v2727, %v4318
          %v4756 = vsel %vm2294, %v2730, %v4320
          %v4757 = vsel %vm2294, %v2733, %v4322
          %v4758 = vsel %vm2294, %v2736, %v4324
          %v4759 = vsel %vm2294, %v2739, %v4326
          %v4760 = vsel %vm2294, %v2742, %v4328
          %v4761 = vsel %vm2294, %v2745, %v4330
          %v4762 = vsel %vm2294, %v2748, %v4332
          %v4763 = vsel %vm2294, %v2751, %v4334
          %v4764 = vsel %vm2294, %v2754, %v4336
          %v4765 = vsel %vm2294, %v2757, %v4338
          %v4766 = vsel %vm2294, %v2760, %v4340
          %v4767 = vsel %vm2294, %v2763, %v4342
          %v4768 = vsel %vm2294, %v2766, %v4344
          %v4769 = vsel %vm2294, %v2769, %v4346
          %v4770 = vsel %vm2294, %v2772, %v4348
          %v4771 = vsel %vm2294, %v2775, %v4350
          %v4772 = vsel %vm2294, %v2778, %v4352
          %v4773 = vsel %vm2294, %v2781, %v4354
          %v4774 = vsel %vm2294, %v2784, %v4356
          %v4775 = vsel %vm2294, %v2787, %v4358
          %v4776 = vsel %vm2294, %v2790, %v4360
          %v4777 = vsel %vm2294, %v2793, %v4362
          %v4778 = vsel %vm2294, %v2796, %v4364
          %v4779 = vsel %vm2294, %v2799, %v4366
          %v4780 = vsel %vm2294, %v2802, %v4368
          %v4781 = vsel %vm2294, %v2805, %v4370
          %v4782 = vsel %vm2294, %v2808, %v4372
          %v4783 = vsel %vm2294, %v2811, %v4374
          %v4784 = vsel %vm2294, %v2814, %v4376
          %v4785 = vsel %vm2294, %v2817, %v4378
          %v4786 = vsel %vm2294, %v2820, %v4380
          %v4787 = vsel %vm2294, %v2823, %v4382
          %v4788 = vsel %vm2294, %v2826, %v4384
          %v4789 = vsel %vm2294, %v2829, %v4386
          %v4790 = vsel %vm2294, %v2832, %v4388
          %v4791 = vsel %vm2294, %v2835, %v4390
          %v4792 = vsel %vm2294, %v2838, %v4392
          %v4793 = vsel %vm2294, %v2841, %v4394
          %v4794 = vsel %vm2294, %v2844, %v4396
          %v4795 = vsel %vm2294, %v2847, %v4398
          %v4796 = vsel %vm2294, %v2850, %v4400
          %v4797 = vsel %vm2294, %v2853, %v4402
          %v4798 = vsel %vm2294, %v2856, %v4404
          %v4799 = vsel %vm2294, %v2859, %v4406
          %v4800 = vsel %vm2294, %v2862, %v4408
          %v4801 = vsel %vm2294, %v2865, %v4410
          %v4802 = vsel %vm2294, %v2868, %v4412
          %v4803 = vsel %vm2294, %v2871, %v4414
          %v4804 = vsel %vm2294, %v2874, %v4416
          %v4805 = vsel %vm2294, %v2877, %v4418
          %v4806 = vsel %vm2294, %v2880, %v4420
          %v4807 = vsel %vm2294, %v2883, %v4422
          %v4808 = vsel %vm2294, %v2886, %v4424
          %vm4809 = vcmask 130048
          %v4810 = vsel %vm4809, %v4745, %v4554
          %v4811 = vsel %vm4809, %v4746, %v4556
          %v4812 = vsel %vm4809, %v4747, %v4558
          %v4813 = vsel %vm4809, %v4748, %v4560
          %v4814 = vsel %vm4809, %v4749, %v4562
          %v4815 = vsel %vm4809, %v4750, %v4564
          %v4816 = vsel %vm4809, %v4751, %v4566
          %v4817 = vsel %vm4809, %v4752, %v4568
          %v4818 = vsel %vm4809, %v4753, %v4570
          %v4819 = vsel %vm4809, %v4754, %v4572
          %v4820 = vsel %vm4809, %v4755, %v4574
          %v4821 = vsel %vm4809, %v4756, %v4576
          %v4822 = vsel %vm4809, %v4757, %v4578
          %v4823 = vsel %vm4809, %v4758, %v4580
          %v4824 = vsel %vm4809, %v4759, %v4582
          %v4825 = vsel %vm4809, %v4760, %v4584
          %v4826 = vsel %vm4809, %v4761, %v4586
          %v4827 = vsel %vm4809, %v4762, %v4588
          %v4828 = vsel %vm4809, %v4763, %v4590
          %v4829 = vsel %vm4809, %v4764, %v4592
          %v4830 = vsel %vm4809, %v4765, %v4594
          %v4831 = vsel %vm4809, %v4766, %v4596
          %v4832 = vsel %vm4809, %v4767, %v4598
          %v4833 = vsel %vm4809, %v4768, %v4600
          %v4834 = vsel %vm4809, %v4769, %v4602
          %v4835 = vsel %vm4809, %v4770, %v4604
          %v4836 = vsel %vm4809, %v4771, %v4606
          %v4837 = vsel %vm4809, %v4772, %v4608
          %v4838 = vsel %vm4809, %v4773, %v4610
          %v4839 = vsel %vm4809, %v4774, %v4612
          %v4840 = vsel %vm4809, %v4775, %v4614
          %v4841 = vsel %vm4809, %v4776, %v4616
          %v4842 = vsel %vm4809, %v4777, %v4618
          %v4843 = vsel %vm4809, %v4778, %v4620
          %v4844 = vsel %vm4809, %v4779, %v4622
          %v4845 = vsel %vm4809, %v4780, %v4624
          %v4846 = vsel %vm4809, %v4781, %v4626
          %v4847 = vsel %vm4809, %v4782, %v4628
          %v4848 = vsel %vm4809, %v4783, %v4630
          %v4849 = vsel %vm4809, %v4784, %v4632
          %v4850 = vsel %vm4809, %v4785, %v4634
          %v4851 = vsel %vm4809, %v4786, %v4636
          %v4852 = vsel %vm4809, %v4787, %v4638
          %v4853 = vsel %vm4809, %v4788, %v4640
          %v4854 = vsel %vm4809, %v4789, %v4642
          %v4855 = vsel %vm4809, %v4790, %v4644
          %v4856 = vsel %vm4809, %v4791, %v4646
          %v4857 = vsel %vm4809, %v4792, %v4648
          %v4858 = vsel %vm4809, %v4793, %v4650
          %v4859 = vsel %vm4809, %v4794, %v4652
          %v4860 = vsel %vm4809, %v4795, %v4654
          %v4861 = vsel %vm4809, %v4796, %v4656
          %v4862 = vsel %vm4809, %v4797, %v4658
          %v4863 = vsel %vm4809, %v4798, %v4660
          %v4864 = vsel %vm4809, %v4799, %v4662
          %v4865 = vsel %vm4809, %v4800, %v4664
          %v4866 = vsel %vm4809, %v4801, %v4666
          %v4867 = vsel %vm4809, %v4802, %v4668
          %v4868 = vsel %vm4809, %v4803, %v4670
          %v4869 = vsel %vm4809, %v4804, %v4672
          %v4870 = vsel %vm4809, %v4805, %v4674
          %v4871 = vsel %vm4809, %v4806, %v4676
          %v4872 = vsel %vm4809, %v4807, %v4678
          %v4873 = vsel %vm4809, %v4808, %v4680
          %v4874 = vpack.c.bf16 %v4811, %v4810
          %v4875 = vpack.c.bf16 %v4813, %v4812
          %v4876 = vpack.c.bf16 %v4815, %v4814
          %v4877 = vpack.c.bf16 %v4817, %v4816
          %v4878 = vpack.c.bf16 %v4819, %v4818
          %v4879 = vpack.c.bf16 %v4821, %v4820
          %v4880 = vpack.c.bf16 %v4823, %v4822
          %v4881 = vpack.c.bf16 %v4825, %v4824
          %v4882 = vpack.c.bf16 %v4827, %v4826
          %v4883 = vpack.c.bf16 %v4829, %v4828
          %v4884 = vpack.c.bf16 %v4831, %v4830
          %v4885 = vpack.c.bf16 %v4833, %v4832
          %v4886 = vpack.c.bf16 %v4835, %v4834
          %v4887 = vpack.c.bf16 %v4837, %v4836
          %v4888 = vpack.c.bf16 %v4839, %v4838
          %v4889 = vpack.c.bf16 %v4841, %v4840
          %v4890 = vpack.c.bf16 %v4843, %v4842
          %v4891 = vpack.c.bf16 %v4845, %v4844
          %v4892 = vpack.c.bf16 %v4847, %v4846
          %v4893 = vpack.c.bf16 %v4849, %v4848
          %v4894 = vpack.c.bf16 %v4851, %v4850
          %v4895 = vpack.c.bf16 %v4853, %v4852
          %v4896 = vpack.c.bf16 %v4855, %v4854
          %v4897 = vpack.c.bf16 %v4857, %v4856
          %v4898 = vpack.c.bf16 %v4859, %v4858
          %v4899 = vpack.c.bf16 %v4861, %v4860
          %v4900 = vpack.c.bf16 %v4863, %v4862
          %v4901 = vpack.c.bf16 %v4865, %v4864
          %v4902 = vpack.c.bf16 %v4867, %v4866
          %v4903 = vpack.c.bf16 %v4869, %v4868
          %v4904 = vpack.c.bf16 %v4871, %v4870
          %v4905 = vpack.c.bf16 %v4873, %v4872
          %v4906 = vld [vmem:[%s2] sm:$0xf]
          %v4907 = vld [vmem:[%s2 + $0x4] sm:$0xf]
          %v4908 = vld [vmem:[%s2 + $0x8] sm:$0x3]
          %v4909 = vld [vmem:[%s3] sm:$0x1]
          %v4911 = vperm.slane %v4909, 0
          %v4916 = vunpack.c.l.b16 %v4906
          %v4917 = vunpack.c.l.b16 %v4907
          %v4918 = vunpack.c.l.b16 %v4908
          %v4919 = vpack.c.b16 %v4917, %v4916
          %v4920 = vpack.c.b16 %v4918, %v4918
          %vm4922 = vcmask 162816
          %v4924 = vsel %vm4922, %v4874, 0
          %v4927 = vsel %vm4922, %v4875, 0
          %v4930 = vsel %vm4922, %v4876, 0
          %v4933 = vsel %vm4922, %v4877, 0
          %v4936 = vsel %vm4922, %v4878, 0
          %v4939 = vsel %vm4922, %v4879, 0
          %v4942 = vsel %vm4922, %v4880, 0
          %v4945 = vsel %vm4922, %v4881, 0
          %v4948 = vsel %vm4922, %v4882, 0
          %v4951 = vsel %vm4922, %v4883, 0
          %v4954 = vsel %vm4922, %v4884, 0
          %v4957 = vsel %vm4922, %v4885, 0
          %v4960 = vsel %vm4922, %v4886, 0
          %v4963 = vsel %vm4922, %v4887, 0
          %v4966 = vsel %vm4922, %v4888, 0
          %v4969 = vsel %vm4922, %v4889, 0
          %v4972 = vsel %vm4922, %v4890, 0
          %v4975 = vsel %vm4922, %v4891, 0
          %v4978 = vsel %vm4922, %v4892, 0
          %v4981 = vsel %vm4922, %v4893, 0
          %v4984 = vsel %vm4922, %v4894, 0
          %v4987 = vsel %vm4922, %v4895, 0
          %v4990 = vsel %vm4922, %v4896, 0
          %v4993 = vsel %vm4922, %v4897, 0
          %v4996 = vsel %vm4922, %v4898, 0
          %v4999 = vsel %vm4922, %v4899, 0
          %v5002 = vsel %vm4922, %v4900, 0
          %v5005 = vsel %vm4922, %v4901, 0
          %v5008 = vsel %vm4922, %v4902, 0
          %v5011 = vsel %vm4922, %v4903, 0
          %v5014 = vsel %vm4922, %v4904, 0
          %v5017 = vsel %vm4922, %v4905, 0
          %vm5019 = vcmask 1041408
          %v5021 = vsel %vm5019, %v4920, 0
          %5023 = vmatpush.bf16.msra.mxu0 0
          %5024 = vmatpush.bf16.msra.mxu0 0
          %5025 = vmatpush.bf16.msra.mxu0 0
          %5026 = vmatpush.bf16.msra.mxu0 0
          %5027 = vmatpush.bf16.msra.mxu0 0
          %5028 = vmatpush.bf16.msra.mxu0 0
          %5029 = vmatpush.bf16.msra.mxu0 %v5021
          %5030 = vmatpush.bf16.msra.mxu0 %v4919
          %5031 = vmatmul.bf16.gmra.mxu0 %v4924
          %v5032 = vpop.f32.mrf.mxu0
          %v5033 = vadd.f32 %v4911, %v5032
          %v5034 = vpop.f32.mrf.mxu0
          %v5035 = vadd.f32 %v4911, %v5034
          %5036 = vmatmul.bf16.gmra.mxu0 %v4927
          %v5037 = vpop.f32.mrf.mxu0
          %v5038 = vadd.f32 %v4911, %v5037
          %v5039 = vpop.f32.mrf.mxu0
          %v5040 = vadd.f32 %v4911, %v5039
          %5041 = vmatmul.bf16.gmra.mxu0 %v4930
          %v5042 = vpop.f32.mrf.mxu0
          %v5043 = vadd.f32 %v4911, %v5042
          %v5044 = vpop.f32.mrf.mxu0
          %v5045 = vadd.f32 %v4911, %v5044
          %5046 = vmatmul.bf16.gmra.mxu0 %v4933
          %v5047 = vpop.f32.mrf.mxu0
          %v5048 = vadd.f32 %v4911, %v5047
          %v5049 = vpop.f32.mrf.mxu0
          %v5050 = vadd.f32 %v4911, %v5049
          %5051 = vmatmul.bf16.gmra.mxu0 %v4936
          %v5052 = vpop.f32.mrf.mxu0
          %v5053 = vadd.f32 %v4911, %v5052
          %v5054 = vpop.f32.mrf.mxu0
          %v5055 = vadd.f32 %v4911, %v5054
          %5056 = vmatmul.bf16.gmra.mxu0 %v4939
          %v5057 = vpop.f32.mrf.mxu0
          %v5058 = vadd.f32 %v4911, %v5057
          %v5059 = vpop.f32.mrf.mxu0
          %v5060 = vadd.f32 %v4911, %v5059
          %5061 = vmatmul.bf16.gmra.mxu0 %v4942
          %v5062 = vpop.f32.mrf.mxu0
          %v5063 = vadd.f32 %v4911, %v5062
          %v5064 = vpop.f32.mrf.mxu0
          %v5065 = vadd.f32 %v4911, %v5064
          %5066 = vmatmul.bf16.gmra.mxu0 %v4945
          %v5067 = vpop.f32.mrf.mxu0
          %v5068 = vadd.f32 %v4911, %v5067
          %v5069 = vpop.f32.mrf.mxu0
          %v5070 = vadd.f32 %v4911, %v5069
          %5071 = vmatmul.bf16.gmra.mxu0 %v4948
          %v5072 = vpop.f32.mrf.mxu0
          %v5073 = vadd.f32 %v4911, %v5072
          %v5074 = vpop.f32.mrf.mxu0
          %v5075 = vadd.f32 %v4911, %v5074
          %5076 = vmatmul.bf16.gmra.mxu0 %v4951
          %v5077 = vpop.f32.mrf.mxu0
          %v5078 = vadd.f32 %v4911, %v5077
          %v5079 = vpop.f32.mrf.mxu0
          %v5080 = vadd.f32 %v4911, %v5079
          %5081 = vmatmul.bf16.gmra.mxu0 %v4954
          %v5082 = vpop.f32.mrf.mxu0
          %v5083 = vadd.f32 %v4911, %v5082
          %v5084 = vpop.f32.mrf.mxu0
          %v5085 = vadd.f32 %v4911, %v5084
          %5086 = vmatmul.bf16.gmra.mxu0 %v4957
          %v5087 = vpop.f32.mrf.mxu0
          %v5088 = vadd.f32 %v4911, %v5087
          %v5089 = vpop.f32.mrf.mxu0
          %v5090 = vadd.f32 %v4911, %v5089
          %5091 = vmatmul.bf16.gmra.mxu0 %v4960
          %v5092 = vpop.f32.mrf.mxu0
          %v5093 = vadd.f32 %v4911, %v5092
          %v5094 = vpop.f32.mrf.mxu0
          %v5095 = vadd.f32 %v4911, %v5094
          %5096 = vmatmul.bf16.gmra.mxu0 %v4963
          %v5097 = vpop.f32.mrf.mxu0
          %v5098 = vadd.f32 %v4911, %v5097
          %v5099 = vpop.f32.mrf.mxu0
          %v5100 = vadd.f32 %v4911, %v5099
          %5101 = vmatmul.bf16.gmra.mxu0 %v4966
          %v5102 = vpop.f32.mrf.mxu0
          %v5103 = vadd.f32 %v4911, %v5102
          %v5104 = vpop.f32.mrf.mxu0
          %v5105 = vadd.f32 %v4911, %v5104
          %5106 = vmatmul.bf16.gmra.mxu0 %v4969
          %v5107 = vpop.f32.mrf.mxu0
          %v5108 = vadd.f32 %v4911, %v5107
          %v5109 = vpop.f32.mrf.mxu0
          %v5110 = vadd.f32 %v4911, %v5109
          %5111 = vmatmul.bf16.gmra.mxu0 %v4972
          %v5112 = vpop.f32.mrf.mxu0
          %v5113 = vadd.f32 %v4911, %v5112
          %v5114 = vpop.f32.mrf.mxu0
          %v5115 = vadd.f32 %v4911, %v5114
          %5116 = vmatmul.bf16.gmra.mxu0 %v4975
          %v5117 = vpop.f32.mrf.mxu0
          %v5118 = vadd.f32 %v4911, %v5117
          %v5119 = vpop.f32.mrf.mxu0
          %v5120 = vadd.f32 %v4911, %v5119
          %5121 = vmatmul.bf16.gmra.mxu0 %v4978
          %v5122 = vpop.f32.mrf.mxu0
          %v5123 = vadd.f32 %v4911, %v5122
          %v5124 = vpop.f32.mrf.mxu0
          %v5125 = vadd.f32 %v4911, %v5124
          %5126 = vmatmul.bf16.gmra.mxu0 %v4981
          %v5127 = vpop.f32.mrf.mxu0
          %v5128 = vadd.f32 %v4911, %v5127
          %v5129 = vpop.f32.mrf.mxu0
          %v5130 = vadd.f32 %v4911, %v5129
          %5131 = vmatmul.bf16.gmra.mxu0 %v4984
          %v5132 = vpop.f32.mrf.mxu0
          %v5133 = vadd.f32 %v4911, %v5132
          %v5134 = vpop.f32.mrf.mxu0
          %v5135 = vadd.f32 %v4911, %v5134
          %5136 = vmatmul.bf16.gmra.mxu0 %v4987
          %v5137 = vpop.f32.mrf.mxu0
          %v5138 = vadd.f32 %v4911, %v5137
          %v5139 = vpop.f32.mrf.mxu0
          %v5140 = vadd.f32 %v4911, %v5139
          %5141 = vmatmul.bf16.gmra.mxu0 %v4990
          %v5142 = vpop.f32.mrf.mxu0
          %v5143 = vadd.f32 %v4911, %v5142
          %v5144 = vpop.f32.mrf.mxu0
          %v5145 = vadd.f32 %v4911, %v5144
          %5146 = vmatmul.bf16.gmra.mxu0 %v4993
          %v5147 = vpop.f32.mrf.mxu0
          %v5148 = vadd.f32 %v4911, %v5147
          %v5149 = vpop.f32.mrf.mxu0
          %v5150 = vadd.f32 %v4911, %v5149
          %5151 = vmatmul.bf16.gmra.mxu0 %v4996
          %v5152 = vpop.f32.mrf.mxu0
          %v5153 = vadd.f32 %v4911, %v5152
          %v5154 = vpop.f32.mrf.mxu0
          %v5155 = vadd.f32 %v4911, %v5154
          %5156 = vmatmul.bf16.gmra.mxu0 %v4999
          %v5157 = vpop.f32.mrf.mxu0
          %v5158 = vadd.f32 %v4911, %v5157
          %v5159 = vpop.f32.mrf.mxu0
          %v5160 = vadd.f32 %v4911, %v5159
          %5161 = vmatmul.bf16.gmra.mxu0 %v5002
          %v5162 = vpop.f32.mrf.mxu0
          %v5163 = vadd.f32 %v4911, %v5162
          %v5164 = vpop.f32.mrf.mxu0
          %v5165 = vadd.f32 %v4911, %v5164
          %5166 = vmatmul.bf16.gmra.mxu0 %v5005
          %v5167 = vpop.f32.mrf.mxu0
          %v5168 = vadd.f32 %v4911, %v5167
          %v5169 = vpop.f32.mrf.mxu0
          %v5170 = vadd.f32 %v4911, %v5169
          %5171 = vmatmul.bf16.gmra.mxu0 %v5008
          %v5172 = vpop.f32.mrf.mxu0
          %v5173 = vadd.f32 %v4911, %v5172
          %v5174 = vpop.f32.mrf.mxu0
          %v5175 = vadd.f32 %v4911, %v5174
          %5176 = vmatmul.bf16.gmra.mxu0 %v5011
          %v5177 = vpop.f32.mrf.mxu0
          %v5178 = vadd.f32 %v4911, %v5177
          %v5179 = vpop.f32.mrf.mxu0
          %v5180 = vadd.f32 %v4911, %v5179
          %5181 = vmatmul.bf16.gmra.mxu0 %v5014
          %v5182 = vpop.f32.mrf.mxu0
          %v5183 = vadd.f32 %v4911, %v5182
          %v5184 = vpop.f32.mrf.mxu0
          %v5185 = vadd.f32 %v4911, %v5184
          %5186 = vmatmul.bf16.gmra.mxu0 %v5017
          %v5187 = vpop.f32.mrf.mxu0
          %v5188 = vadd.f32 %v4911, %v5187
          %v5189 = vpop.f32.mrf.mxu0
          %v5190 = vadd.f32 %v4911, %v5189
          %5191 = vdwg.mxu0
          %vm5192 = vcmp.gt.f32.partialorder %v5033, 0.0
          %vm5193 = vcmp.gt.f32.partialorder %v5035, 0.0
          %vm5194 = vcmp.gt.f32.partialorder %v5038, 0.0
          %vm5195 = vcmp.gt.f32.partialorder %v5040, 0.0
          %vm5196 = vcmp.gt.f32.partialorder %v5043, 0.0
          %vm5197 = vcmp.gt.f32.partialorder %v5045, 0.0
          %vm5198 = vcmp.gt.f32.partialorder %v5048, 0.0
          %vm5199 = vcmp.gt.f32.partialorder %v5050, 0.0
          %vm5200 = vcmp.gt.f32.partialorder %v5053, 0.0
          %vm5201 = vcmp.gt.f32.partialorder %v5055, 0.0
          %vm5202 = vcmp.gt.f32.partialorder %v5058, 0.0
          %vm5203 = vcmp.gt.f32.partialorder %v5060, 0.0
          %vm5204 = vcmp.gt.f32.partialorder %v5063, 0.0
          %vm5205 = vcmp.gt.f32.partialorder %v5065, 0.0
          %vm5206 = vcmp.gt.f32.partialorder %v5068, 0.0
          %vm5207 = vcmp.gt.f32.partialorder %v5070, 0.0
          %vm5208 = vcmp.gt.f32.partialorder %v5073, 0.0
          %vm5209 = vcmp.gt.f32.partialorder %v5075, 0.0
          %vm5210 = vcmp.gt.f32.partialorder %v5078, 0.0
          %vm5211 = vcmp.gt.f32.partialorder %v5080, 0.0
          %vm5212 = vcmp.gt.f32.partialorder %v5083, 0.0
          %vm5213 = vcmp.gt.f32.partialorder %v5085, 0.0
          %vm5214 = vcmp.gt.f32.partialorder %v5088, 0.0
          %vm5215 = vcmp.gt.f32.partialorder %v5090, 0.0
          %vm5216 = vcmp.gt.f32.partialorder %v5093, 0.0
          %vm5217 = vcmp.gt.f32.partialorder %v5095, 0.0
          %vm5218 = vcmp.gt.f32.partialorder %v5098, 0.0
          %vm5219 = vcmp.gt.f32.partialorder %v5100, 0.0
          %vm5220 = vcmp.gt.f32.partialorder %v5103, 0.0
          %vm5221 = vcmp.gt.f32.partialorder %v5105, 0.0
          %vm5222 = vcmp.gt.f32.partialorder %v5108, 0.0
          %vm5223 = vcmp.gt.f32.partialorder %v5110, 0.0
          %vm5224 = vcmp.gt.f32.partialorder %v5113, 0.0
          %vm5225 = vcmp.gt.f32.partialorder %v5115, 0.0
          %vm5226 = vcmp.gt.f32.partialorder %v5118, 0.0
          %vm5227 = vcmp.gt.f32.partialorder %v5120, 0.0
          %vm5228 = vcmp.gt.f32.partialorder %v5123, 0.0
          %vm5229 = vcmp.gt.f32.partialorder %v5125, 0.0
          %vm5230 = vcmp.gt.f32.partialorder %v5128, 0.0
          %vm5231 = vcmp.gt.f32.partialorder %v5130, 0.0
          %vm5232 = vcmp.gt.f32.partialorder %v5133, 0.0
          %vm5233 = vcmp.gt.f32.partialorder %v5135, 0.0
          %vm5234 = vcmp.gt.f32.partialorder %v5138, 0.0
          %vm5235 = vcmp.gt.f32.partialorder %v5140, 0.0
          %vm5236 = vcmp.gt.f32.partialorder %v5143, 0.0
          %vm5237 = vcmp.gt.f32.partialorder %v5145, 0.0
          %vm5238 = vcmp.gt.f32.partialorder %v5148, 0.0
          %vm5239 = vcmp.gt.f32.partialorder %v5150, 0.0
          %vm5240 = vcmp.gt.f32.partialorder %v5153, 0.0
          %vm5241 = vcmp.gt.f32.partialorder %v5155, 0.0
          %vm5242 = vcmp.gt.f32.partialorder %v5158, 0.0
          %vm5243 = vcmp.gt.f32.partialorder %v5160, 0.0
          %vm5244 = vcmp.gt.f32.partialorder %v5163, 0.0
          %vm5245 = vcmp.gt.f32.partialorder %v5165, 0.0
          %vm5246 = vcmp.gt.f32.partialorder %v5168, 0.0
          %vm5247 = vcmp.gt.f32.partialorder %v5170, 0.0
          %vm5248 = vcmp.gt.f32.partialorder %v5173, 0.0
          %vm5249 = vcmp.gt.f32.partialorder %v5175, 0.0
          %vm5250 = vcmp.gt.f32.partialorder %v5178, 0.0
          %vm5251 = vcmp.gt.f32.partialorder %v5180, 0.0
          %vm5252 = vcmp.gt.f32.partialorder %v5183, 0.0
          %vm5253 = vcmp.gt.f32.partialorder %v5185, 0.0
          %vm5254 = vcmp.gt.f32.partialorder %v5188, 0.0
          %vm5255 = vcmp.gt.f32.partialorder %v5190, 0.0
          %v5256 = vmul.f32 %v5033, 0.01
          %v5257 = vmul.f32 %v5035, 0.01
          %v5258 = vmul.f32 %v5038, 0.01
          %v5259 = vmul.f32 %v5040, 0.01
          %v5260 = vmul.f32 %v5043, 0.01
          %v5261 = vmul.f32 %v5045, 0.01
          %v5262 = vmul.f32 %v5048, 0.01
          %v5263 = vmul.f32 %v5050, 0.01
          %v5264 = vmul.f32 %v5053, 0.01
          %v5265 = vmul.f32 %v5055, 0.01
          %v5266 = vmul.f32 %v5058, 0.01
          %v5267 = vmul.f32 %v5060, 0.01
          %v5268 = vmul.f32 %v5063, 0.01
          %v5269 = vmul.f32 %v5065, 0.01
          %v5270 = vmul.f32 %v5068, 0.01
          %v5271 = vmul.f32 %v5070, 0.01
          %v5272 = vmul.f32 %v5073, 0.01
          %v5273 = vmul.f32 %v5075, 0.01
          %v5274 = vmul.f32 %v5078, 0.01
          %v5275 = vmul.f32 %v5080, 0.01
          %v5276 = vmul.f32 %v5083, 0.01
          %v5277 = vmul.f32 %v5085, 0.01
          %v5278 = vmul.f32 %v5088, 0.01
          %v5279 = vmul.f32 %v5090, 0.01
          %v5280 = vmul.f32 %v5093, 0.01
          %v5281 = vmul.f32 %v5095, 0.01
          %v5282 = vmul.f32 %v5098, 0.01
          %v5283 = vmul.f32 %v5100, 0.01
          %v5284 = vmul.f32 %v5103, 0.01
          %v5285 = vmul.f32 %v5105, 0.01
          %v5286 = vmul.f32 %v5108, 0.01
          %v5287 = vmul.f32 %v5110, 0.01
          %v5288 = vmul.f32 %v5113, 0.01
          %v5289 = vmul.f32 %v5115, 0.01
          %v5290 = vmul.f32 %v5118, 0.01
          %v5291 = vmul.f32 %v5120, 0.01
          %v5292 = vmul.f32 %v5123, 0.01
          %v5293 = vmul.f32 %v5125, 0.01
          %v5294 = vmul.f32 %v5128, 0.01
          %v5295 = vmul.f32 %v5130, 0.01
          %v5296 = vmul.f32 %v5133, 0.01
          %v5297 = vmul.f32 %v5135, 0.01
          %v5298 = vmul.f32 %v5138, 0.01
          %v5299 = vmul.f32 %v5140, 0.01
          %v5300 = vmul.f32 %v5143, 0.01
          %v5301 = vmul.f32 %v5145, 0.01
          %v5302 = vmul.f32 %v5148, 0.01
          %v5303 = vmul.f32 %v5150, 0.01
          %v5304 = vmul.f32 %v5153, 0.01
          %v5305 = vmul.f32 %v5155, 0.01
          %v5306 = vmul.f32 %v5158, 0.01
          %v5307 = vmul.f32 %v5160, 0.01
          %v5308 = vmul.f32 %v5163, 0.01
          %v5309 = vmul.f32 %v5165, 0.01
          %v5310 = vmul.f32 %v5168, 0.01
          %v5311 = vmul.f32 %v5170, 0.01
          %v5312 = vmul.f32 %v5173, 0.01
          %v5313 = vmul.f32 %v5175, 0.01
          %v5314 = vmul.f32 %v5178, 0.01
          %v5315 = vmul.f32 %v5180, 0.01
          %v5316 = vmul.f32 %v5183, 0.01
          %v5317 = vmul.f32 %v5185, 0.01
          %v5318 = vmul.f32 %v5188, 0.01
          %v5319 = vmul.f32 %v5190, 0.01
          %v5320 = vsel %vm5192, %v5033, %v5256
          %v5321 = vsel %vm5193, %v5035, %v5257
          %v5322 = vsel %vm5194, %v5038, %v5258
          %v5323 = vsel %vm5195, %v5040, %v5259
          %v5324 = vsel %vm5196, %v5043, %v5260
          %v5325 = vsel %vm5197, %v5045, %v5261
          %v5326 = vsel %vm5198, %v5048, %v5262
          %v5327 = vsel %vm5199, %v5050, %v5263
          %v5328 = vsel %vm5200, %v5053, %v5264
          %v5329 = vsel %vm5201, %v5055, %v5265
          %v5330 = vsel %vm5202, %v5058, %v5266
          %v5331 = vsel %vm5203, %v5060, %v5267
          %v5332 = vsel %vm5204, %v5063, %v5268
          %v5333 = vsel %vm5205, %v5065, %v5269
          %v5334 = vsel %vm5206, %v5068, %v5270
          %v5335 = vsel %vm5207, %v5070, %v5271
          %v5336 = vsel %vm5208, %v5073, %v5272
          %v5337 = vsel %vm5209, %v5075, %v5273
          %v5338 = vsel %vm5210, %v5078, %v5274
          %v5339 = vsel %vm5211, %v5080, %v5275
          %v5340 = vsel %vm5212, %v5083, %v5276
          %v5341 = vsel %vm5213, %v5085, %v5277
          %v5342 = vsel %vm5214, %v5088, %v5278
          %v5343 = vsel %vm5215, %v5090, %v5279
          %v5344 = vsel %vm5216, %v5093, %v5280
          %v5345 = vsel %vm5217, %v5095, %v5281
          %v5346 = vsel %vm5218, %v5098, %v5282
          %v5347 = vsel %vm5219, %v5100, %v5283
          %v5348 = vsel %vm5220, %v5103, %v5284
          %v5349 = vsel %vm5221, %v5105, %v5285
          %v5350 = vsel %vm5222, %v5108, %v5286
          %v5351 = vsel %vm5223, %v5110, %v5287
          %v5352 = vsel %vm5224, %v5113, %v5288
          %v5353 = vsel %vm5225, %v5115, %v5289
          %v5354 = vsel %vm5226, %v5118, %v5290
          %v5355 = vsel %vm5227, %v5120, %v5291
          %v5356 = vsel %vm5228, %v5123, %v5292
          %v5357 = vsel %vm5229, %v5125, %v5293
          %v5358 = vsel %vm5230, %v5128, %v5294
          %v5359 = vsel %vm5231, %v5130, %v5295
          %v5360 = vsel %vm5232, %v5133, %v5296
          %v5361 = vsel %vm5233, %v5135, %v5297
          %v5362 = vsel %vm5234, %v5138, %v5298
          %v5363 = vsel %vm5235, %v5140, %v5299
          %v5364 = vsel %vm5236, %v5143, %v5300
          %v5365 = vsel %vm5237, %v5145, %v5301
          %v5366 = vsel %vm5238, %v5148, %v5302
          %v5367 = vsel %vm5239, %v5150, %v5303
          %v5368 = vsel %vm5240, %v5153, %v5304
          %v5369 = vsel %vm5241, %v5155, %v5305
          %v5370 = vsel %vm5242, %v5158, %v5306
          %v5371 = vsel %vm5243, %v5160, %v5307
          %v5372 = vsel %vm5244, %v5163, %v5308
          %v5373 = vsel %vm5245, %v5165, %v5309
          %v5374 = vsel %vm5246, %v5168, %v5310
          %v5375 = vsel %vm5247, %v5170, %v5311
          %v5376 = vsel %vm5248, %v5173, %v5312
          %v5377 = vsel %vm5249, %v5175, %v5313
          %v5378 = vsel %vm5250, %v5178, %v5314
          %v5379 = vsel %vm5251, %v5180, %v5315
          %v5380 = vsel %vm5252, %v5183, %v5316
          %v5381 = vsel %vm5253, %v5185, %v5317
          %v5382 = vsel %vm5254, %v5188, %v5318
          %v5383 = vsel %vm5255, %v5190, %v5319
          %v5384 = vpack.c.bf16 %v5321, %v5320
          %v5385 = vpack.c.bf16 %v5323, %v5322
          %v5386 = vpack.c.bf16 %v5325, %v5324
          %v5387 = vpack.c.bf16 %v5327, %v5326
          %v5388 = vpack.c.bf16 %v5329, %v5328
          %v5389 = vpack.c.bf16 %v5331, %v5330
          %v5390 = vpack.c.bf16 %v5333, %v5332
          %v5391 = vpack.c.bf16 %v5335, %v5334
          %v5392 = vpack.c.bf16 %v5337, %v5336
          %v5393 = vpack.c.bf16 %v5339, %v5338
          %v5394 = vpack.c.bf16 %v5341, %v5340
          %v5395 = vpack.c.bf16 %v5343, %v5342
          %v5396 = vpack.c.bf16 %v5345, %v5344
          %v5397 = vpack.c.bf16 %v5347, %v5346
          %v5398 = vpack.c.bf16 %v5349, %v5348
          %v5399 = vpack.c.bf16 %v5351, %v5350
          %v5400 = vpack.c.bf16 %v5353, %v5352
          %v5401 = vpack.c.bf16 %v5355, %v5354
          %v5402 = vpack.c.bf16 %v5357, %v5356
          %v5403 = vpack.c.bf16 %v5359, %v5358
          %v5404 = vpack.c.bf16 %v5361, %v5360
          %v5405 = vpack.c.bf16 %v5363, %v5362
          %v5406 = vpack.c.bf16 %v5365, %v5364
          %v5407 = vpack.c.bf16 %v5367, %v5366
          %v5408 = vpack.c.bf16 %v5369, %v5368
          %v5409 = vpack.c.bf16 %v5371, %v5370
          %v5410 = vpack.c.bf16 %v5373, %v5372
          %v5411 = vpack.c.bf16 %v5375, %v5374
          %v5412 = vpack.c.bf16 %v5377, %v5376
          %v5413 = vpack.c.bf16 %v5379, %v5378
          %v5414 = vpack.c.bf16 %v5381, %v5380
          %v5415 = vpack.c.bf16 %v5383, %v5382
          %v5416 = vld [vmem:[%s4] sm:$0xf]
          %v5417 = vld [vmem:[%s4 + $0x4] sm:$0xf]
          %v5418 = vld [vmem:[%s4 + $0x8] sm:$0xf]
          %v5419 = vld [vmem:[%s4 + $0xc] sm:$0xf]
          %v5420 = vld [vmem:[%s4 + $0x10] sm:$0xf]
          %v5421 = vld [vmem:[%s4 + $0x14] sm:$0xf]
          %v5422 = vld [vmem:[%s4 + $0x18] sm:$0xf]
          %v5423 = vld [vmem:[%s4 + $0x1c] sm:$0xf]
          %v5424 = vld [vmem:[%s5] sm:$0x1]
          %v5426 = vperm.slane %v5424, 0
          %v5436 = vunpack.c.l.b16 %v5416
          %v5437 = vunpack.c.l.b16 %v5417
          %v5438 = vunpack.c.l.b16 %v5418
          %v5439 = vunpack.c.l.b16 %v5419
          %v5440 = vunpack.c.l.b16 %v5420
          %v5441 = vunpack.c.l.b16 %v5421
          %v5442 = vunpack.c.l.b16 %v5422
          %v5443 = vunpack.c.l.b16 %v5423
          %v5444 = vpack.c.b16 %v5437, %v5436
          %v5445 = vpack.c.b16 %v5439, %v5438
          %v5446 = vpack.c.b16 %v5441, %v5440
          %v5447 = vpack.c.b16 %v5443, %v5442
          %vm5452 = vcmask 523264
          %v5454 = vsel %vm5452, %v5384, 0
          %v5457 = vsel %vm5452, %v5385, 0
          %v5460 = vsel %vm5452, %v5386, 0
          %v5463 = vsel %vm5452, %v5387, 0
          %v5466 = vsel %vm5452, %v5388, 0
          %v5469 = vsel %vm5452, %v5389, 0
          %v5472 = vsel %vm5452, %v5390, 0
          %v5475 = vsel %vm5452, %v5391, 0
          %v5478 = vsel %vm5452, %v5392, 0
          %v5481 = vsel %vm5452, %v5393, 0
          %v5484 = vsel %vm5452, %v5394, 0
          %v5487 = vsel %vm5452, %v5395, 0
          %v5490 = vsel %vm5452, %v5396, 0
          %v5493 = vsel %vm5452, %v5397, 0
          %v5496 = vsel %vm5452, %v5398, 0
          %v5499 = vsel %vm5452, %v5399, 0
          %v5502 = vsel %vm5452, %v5400, 0
          %v5505 = vsel %vm5452, %v5401, 0
          %v5508 = vsel %vm5452, %v5402, 0
          %v5511 = vsel %vm5452, %v5403, 0
          %v5514 = vsel %vm5452, %v5404, 0
          %v5517 = vsel %vm5452, %v5405, 0
          %v5520 = vsel %vm5452, %v5406, 0
          %v5523 = vsel %vm5452, %v5407, 0
          %v5526 = vsel %vm5452, %v5408, 0
          %v5529 = vsel %vm5452, %v5409, 0
          %v5532 = vsel %vm5452, %v5410, 0
          %v5535 = vsel %vm5452, %v5411, 0
          %v5538 = vsel %vm5452, %v5412, 0
          %v5541 = vsel %vm5452, %v5413, 0
          %v5544 = vsel %vm5452, %v5414, 0
          %v5547 = vsel %vm5452, %v5415, 0
          %5549 = vmatpush.bf16.msra.mxu0 0
          %5550 = vmatpush.bf16.msra.mxu0 0
          %5551 = vmatpush.bf16.msra.mxu0 0
          %5552 = vmatpush.bf16.msra.mxu0 0
          %5553 = vmatpush.bf16.msra.mxu0 %v5447
          %5554 = vmatpush.bf16.msra.mxu0 %v5446
          %5555 = vmatpush.bf16.msra.mxu0 %v5445
          %5556 = vmatpush.bf16.msra.mxu0 %v5444
          %5557 = vmatmul.bf16.gmra.mxu0 %v5454
          %v5558 = vpop.f32.mrf.mxu0
          %v5559 = vadd.f32 %v5426, %v5558
          %v5560 = vpop.f32.mrf.mxu0
          %v5561 = vadd.f32 %v5426, %v5560
          %5562 = vmatmul.bf16.gmra.mxu0 %v5457
          %v5563 = vpop.f32.mrf.mxu0
          %v5564 = vadd.f32 %v5426, %v5563
          %v5565 = vpop.f32.mrf.mxu0
          %v5566 = vadd.f32 %v5426, %v5565
          %5567 = vmatmul.bf16.gmra.mxu0 %v5460
          %v5568 = vpop.f32.mrf.mxu0
          %v5569 = vadd.f32 %v5426, %v5568
          %v5570 = vpop.f32.mrf.mxu0
          %v5571 = vadd.f32 %v5426, %v5570
          %5572 = vmatmul.bf16.gmra.mxu0 %v5463
          %v5573 = vpop.f32.mrf.mxu0
          %v5574 = vadd.f32 %v5426, %v5573
          %v5575 = vpop.f32.mrf.mxu0
          %v5576 = vadd.f32 %v5426, %v5575
          %5577 = vmatmul.bf16.gmra.mxu0 %v5466
          %v5578 = vpop.f32.mrf.mxu0
          %v5579 = vadd.f32 %v5426, %v5578
          %v5580 = vpop.f32.mrf.mxu0
          %v5581 = vadd.f32 %v5426, %v5580
          %5582 = vmatmul.bf16.gmra.mxu0 %v5469
          %v5583 = vpop.f32.mrf.mxu0
          %v5584 = vadd.f32 %v5426, %v5583
          %v5585 = vpop.f32.mrf.mxu0
          %v5586 = vadd.f32 %v5426, %v5585
          %5587 = vmatmul.bf16.gmra.mxu0 %v5472
          %v5588 = vpop.f32.mrf.mxu0
          %v5589 = vadd.f32 %v5426, %v5588
          %v5590 = vpop.f32.mrf.mxu0
          %v5591 = vadd.f32 %v5426, %v5590
          %5592 = vmatmul.bf16.gmra.mxu0 %v5475
          %v5593 = vpop.f32.mrf.mxu0
          %v5594 = vadd.f32 %v5426, %v5593
          %v5595 = vpop.f32.mrf.mxu0
          %v5596 = vadd.f32 %v5426, %v5595
          %5597 = vmatmul.bf16.gmra.mxu0 %v5478
          %v5598 = vpop.f32.mrf.mxu0
          %v5599 = vadd.f32 %v5426, %v5598
          %v5600 = vpop.f32.mrf.mxu0
          %v5601 = vadd.f32 %v5426, %v5600
          %5602 = vmatmul.bf16.gmra.mxu0 %v5481
          %v5603 = vpop.f32.mrf.mxu0
          %v5604 = vadd.f32 %v5426, %v5603
          %v5605 = vpop.f32.mrf.mxu0
          %v5606 = vadd.f32 %v5426, %v5605
          %5607 = vmatmul.bf16.gmra.mxu0 %v5484
          %v5608 = vpop.f32.mrf.mxu0
          %v5609 = vadd.f32 %v5426, %v5608
          %v5610 = vpop.f32.mrf.mxu0
          %v5611 = vadd.f32 %v5426, %v5610
          %5612 = vmatmul.bf16.gmra.mxu0 %v5487
          %v5613 = vpop.f32.mrf.mxu0
          %v5614 = vadd.f32 %v5426, %v5613
          %v5615 = vpop.f32.mrf.mxu0
          %v5616 = vadd.f32 %v5426, %v5615
          %5617 = vmatmul.bf16.gmra.mxu0 %v5490
          %v5618 = vpop.f32.mrf.mxu0
          %v5619 = vadd.f32 %v5426, %v5618
          %v5620 = vpop.f32.mrf.mxu0
          %v5621 = vadd.f32 %v5426, %v5620
          %5622 = vmatmul.bf16.gmra.mxu0 %v5493
          %v5623 = vpop.f32.mrf.mxu0
          %v5624 = vadd.f32 %v5426, %v5623
          %v5625 = vpop.f32.mrf.mxu0
          %v5626 = vadd.f32 %v5426, %v5625
          %5627 = vmatmul.bf16.gmra.mxu0 %v5496
          %v5628 = vpop.f32.mrf.mxu0
          %v5629 = vadd.f32 %v5426, %v5628
          %v5630 = vpop.f32.mrf.mxu0
          %v5631 = vadd.f32 %v5426, %v5630
          %5632 = vmatmul.bf16.gmra.mxu0 %v5499
          %v5633 = vpop.f32.mrf.mxu0
          %v5634 = vadd.f32 %v5426, %v5633
          %v5635 = vpop.f32.mrf.mxu0
          %v5636 = vadd.f32 %v5426, %v5635
          %5637 = vmatmul.bf16.gmra.mxu0 %v5502
          %v5638 = vpop.f32.mrf.mxu0
          %v5639 = vadd.f32 %v5426, %v5638
          %v5640 = vpop.f32.mrf.mxu0
          %v5641 = vadd.f32 %v5426, %v5640
          %5642 = vmatmul.bf16.gmra.mxu0 %v5505
          %v5643 = vpop.f32.mrf.mxu0
          %v5644 = vadd.f32 %v5426, %v5643
          %v5645 = vpop.f32.mrf.mxu0
          %v5646 = vadd.f32 %v5426, %v5645
          %5647 = vmatmul.bf16.gmra.mxu0 %v5508
          %v5648 = vpop.f32.mrf.mxu0
          %v5649 = vadd.f32 %v5426, %v5648
          %v5650 = vpop.f32.mrf.mxu0
          %v5651 = vadd.f32 %v5426, %v5650
          %5652 = vmatmul.bf16.gmra.mxu0 %v5511
          %v5653 = vpop.f32.mrf.mxu0
          %v5654 = vadd.f32 %v5426, %v5653
          %v5655 = vpop.f32.mrf.mxu0
          %v5656 = vadd.f32 %v5426, %v5655
          %5657 = vmatmul.bf16.gmra.mxu0 %v5514
          %v5658 = vpop.f32.mrf.mxu0
          %v5659 = vadd.f32 %v5426, %v5658
          %v5660 = vpop.f32.mrf.mxu0
          %v5661 = vadd.f32 %v5426, %v5660
          %5662 = vmatmul.bf16.gmra.mxu0 %v5517
          %v5663 = vpop.f32.mrf.mxu0
          %v5664 = vadd.f32 %v5426, %v5663
          %v5665 = vpop.f32.mrf.mxu0
          %v5666 = vadd.f32 %v5426, %v5665
          %5667 = vmatmul.bf16.gmra.mxu0 %v5520
          %v5668 = vpop.f32.mrf.mxu0
          %v5669 = vadd.f32 %v5426, %v5668
          %v5670 = vpop.f32.mrf.mxu0
          %v5671 = vadd.f32 %v5426, %v5670
          %5672 = vmatmul.bf16.gmra.mxu0 %v5523
          %v5673 = vpop.f32.mrf.mxu0
          %v5674 = vadd.f32 %v5426, %v5673
          %v5675 = vpop.f32.mrf.mxu0
          %v5676 = vadd.f32 %v5426, %v5675
          %5677 = vmatmul.bf16.gmra.mxu0 %v5526
          %v5678 = vpop.f32.mrf.mxu0
          %v5679 = vadd.f32 %v5426, %v5678
          %v5680 = vpop.f32.mrf.mxu0
          %v5681 = vadd.f32 %v5426, %v5680
          %5682 = vmatmul.bf16.gmra.mxu0 %v5529
          %v5683 = vpop.f32.mrf.mxu0
          %v5684 = vadd.f32 %v5426, %v5683
          %v5685 = vpop.f32.mrf.mxu0
          %v5686 = vadd.f32 %v5426, %v5685
          %5687 = vmatmul.bf16.gmra.mxu0 %v5532
          %v5688 = vpop.f32.mrf.mxu0
          %v5689 = vadd.f32 %v5426, %v5688
          %v5690 = vpop.f32.mrf.mxu0
          %v5691 = vadd.f32 %v5426, %v5690
          %5692 = vmatmul.bf16.gmra.mxu0 %v5535
          %v5693 = vpop.f32.mrf.mxu0
          %v5694 = vadd.f32 %v5426, %v5693
          %v5695 = vpop.f32.mrf.mxu0
          %v5696 = vadd.f32 %v5426, %v5695
          %5697 = vmatmul.bf16.gmra.mxu0 %v5538
          %v5698 = vpop.f32.mrf.mxu0
          %v5699 = vadd.f32 %v5426, %v5698
          %v5700 = vpop.f32.mrf.mxu0
          %v5701 = vadd.f32 %v5426, %v5700
          %5702 = vmatmul.bf16.gmra.mxu0 %v5541
          %v5703 = vpop.f32.mrf.mxu0
          %v5704 = vadd.f32 %v5426, %v5703
          %v5705 = vpop.f32.mrf.mxu0
          %v5706 = vadd.f32 %v5426, %v5705
          %5707 = vmatmul.bf16.gmra.mxu0 %v5544
          %v5708 = vpop.f32.mrf.mxu0
          %v5709 = vadd.f32 %v5426, %v5708
          %v5710 = vpop.f32.mrf.mxu0
          %v5711 = vadd.f32 %v5426, %v5710
          %5712 = vmatmul.bf16.gmra.mxu0 %v5547
          %v5713 = vpop.f32.mrf.mxu0
          %v5714 = vadd.f32 %v5426, %v5713
          %v5715 = vpop.f32.mrf.mxu0
          %v5716 = vadd.f32 %v5426, %v5715
          %5717 = vdwg.mxu0
          %5782 = vrot.lane.b32.xlu0 %v5559, 4
          %v5783 = vpop.permute.xlu0 %5782
          %5784 = vrot.lane.b32.xlu0 %v5561, 4
          %v5785 = vpop.permute.xlu0 %5784
          %5786 = vrot.lane.b32.xlu0 %v5564, 4
          %v5787 = vpop.permute.xlu0 %5786
          %5788 = vrot.lane.b32.xlu0 %v5566, 4
          %v5789 = vpop.permute.xlu0 %5788
          %5790 = vrot.lane.b32.xlu0 %v5569, 4
          %v5791 = vpop.permute.xlu0 %5790
          %5792 = vrot.lane.b32.xlu0 %v5571, 4
          %v5793 = vpop.permute.xlu0 %5792
          %5794 = vrot.lane.b32.xlu0 %v5574, 4
          %v5795 = vpop.permute.xlu0 %5794
          %5796 = vrot.lane.b32.xlu0 %v5576, 4
          %v5797 = vpop.permute.xlu0 %5796
          %5798 = vrot.lane.b32.xlu0 %v5579, 4
          %v5799 = vpop.permute.xlu0 %5798
          %5800 = vrot.lane.b32.xlu0 %v5581, 4
          %v5801 = vpop.permute.xlu0 %5800
          %5802 = vrot.lane.b32.xlu0 %v5584, 4
          %v5803 = vpop.permute.xlu0 %5802
          %5804 = vrot.lane.b32.xlu0 %v5586, 4
          %v5805 = vpop.permute.xlu0 %5804
          %5806 = vrot.lane.b32.xlu0 %v5589, 4
          %v5807 = vpop.permute.xlu0 %5806
          %5808 = vrot.lane.b32.xlu0 %v5591, 4
          %v5809 = vpop.permute.xlu0 %5808
          %5810 = vrot.lane.b32.xlu0 %v5594, 4
          %v5811 = vpop.permute.xlu0 %5810
          %5812 = vrot.lane.b32.xlu0 %v5596, 4
          %v5813 = vpop.permute.xlu0 %5812
          %5814 = vrot.lane.b32.xlu0 %v5599, 4
          %v5815 = vpop.permute.xlu0 %5814
          %5816 = vrot.lane.b32.xlu0 %v5601, 4
          %v5817 = vpop.permute.xlu0 %5816
          %5818 = vrot.lane.b32.xlu0 %v5604, 4
          %v5819 = vpop.permute.xlu0 %5818
          %5820 = vrot.lane.b32.xlu0 %v5606, 4
          %v5821 = vpop.permute.xlu0 %5820
          %5822 = vrot.lane.b32.xlu0 %v5609, 4
          %v5823 = vpop.permute.xlu0 %5822
          %5824 = vrot.lane.b32.xlu0 %v5611, 4
          %v5825 = vpop.permute.xlu0 %5824
          %5826 = vrot.lane.b32.xlu0 %v5614, 4
          %v5827 = vpop.permute.xlu0 %5826
          %5828 = vrot.lane.b32.xlu0 %v5616, 4
          %v5829 = vpop.permute.xlu0 %5828
          %5830 = vrot.lane.b32.xlu0 %v5619, 4
          %v5831 = vpop.permute.xlu0 %5830
          %5832 = vrot.lane.b32.xlu0 %v5621, 4
          %v5833 = vpop.permute.xlu0 %5832
          %5834 = vrot.lane.b32.xlu0 %v5624, 4
          %v5835 = vpop.permute.xlu0 %5834
          %5836 = vrot.lane.b32.xlu0 %v5626, 4
          %v5837 = vpop.permute.xlu0 %5836
          %5838 = vrot.lane.b32.xlu0 %v5629, 4
          %v5839 = vpop.permute.xlu0 %5838
          %5840 = vrot.lane.b32.xlu0 %v5631, 4
          %v5841 = vpop.permute.xlu0 %5840
          %5842 = vrot.lane.b32.xlu0 %v5634, 4
          %v5843 = vpop.permute.xlu0 %5842
          %5844 = vrot.lane.b32.xlu0 %v5636, 4
          %v5845 = vpop.permute.xlu0 %5844
          %5846 = vrot.lane.b32.xlu0 %v5639, 4
          %v5847 = vpop.permute.xlu0 %5846
          %5848 = vrot.lane.b32.xlu0 %v5641, 4
          %v5849 = vpop.permute.xlu0 %5848
          %5850 = vrot.lane.b32.xlu0 %v5644, 4
          %v5851 = vpop.permute.xlu0 %5850
          %5852 = vrot.lane.b32.xlu0 %v5646, 4
          %v5853 = vpop.permute.xlu0 %5852
          %5854 = vrot.lane.b32.xlu0 %v5649, 4
          %v5855 = vpop.permute.xlu0 %5854
          %5856 = vrot.lane.b32.xlu0 %v5651, 4
          %v5857 = vpop.permute.xlu0 %5856
          %5858 = vrot.lane.b32.xlu0 %v5654, 4
          %v5859 = vpop.permute.xlu0 %5858
          %5860 = vrot.lane.b32.xlu0 %v5656, 4
          %v5861 = vpop.permute.xlu0 %5860
          %5862 = vrot.lane.b32.xlu0 %v5659, 4
          %v5863 = vpop.permute.xlu0 %5862
          %5864 = vrot.lane.b32.xlu0 %v5661, 4
          %v5865 = vpop.permute.xlu0 %5864
          %5866 = vrot.lane.b32.xlu0 %v5664, 4
          %v5867 = vpop.permute.xlu0 %5866
          %5868 = vrot.lane.b32.xlu0 %v5666, 4
          %v5869 = vpop.permute.xlu0 %5868
          %5870 = vrot.lane.b32.xlu0 %v5669, 4
          %v5871 = vpop.permute.xlu0 %5870
          %5872 = vrot.lane.b32.xlu0 %v5671, 4
          %v5873 = vpop.permute.xlu0 %5872
          %5874 = vrot.lane.b32.xlu0 %v5674, 4
          %v5875 = vpop.permute.xlu0 %5874
          %5876 = vrot.lane.b32.xlu0 %v5676, 4
          %v5877 = vpop.permute.xlu0 %5876
          %5878 = vrot.lane.b32.xlu0 %v5679, 4
          %v5879 = vpop.permute.xlu0 %5878
          %5880 = vrot.lane.b32.xlu0 %v5681, 4
          %v5881 = vpop.permute.xlu0 %5880
          %5882 = vrot.lane.b32.xlu0 %v5684, 4
          %v5883 = vpop.permute.xlu0 %5882
          %5884 = vrot.lane.b32.xlu0 %v5686, 4
          %v5885 = vpop.permute.xlu0 %5884
          %5886 = vrot.lane.b32.xlu0 %v5689, 4
          %v5887 = vpop.permute.xlu0 %5886
          %5888 = vrot.lane.b32.xlu0 %v5691, 4
          %v5889 = vpop.permute.xlu0 %5888
          %5890 = vrot.lane.b32.xlu0 %v5694, 4
          %v5891 = vpop.permute.xlu0 %5890
          %5892 = vrot.lane.b32.xlu0 %v5696, 4
          %v5893 = vpop.permute.xlu0 %5892
          %5894 = vrot.lane.b32.xlu0 %v5699, 4
          %v5895 = vpop.permute.xlu0 %5894
          %5896 = vrot.lane.b32.xlu0 %v5701, 4
          %v5897 = vpop.permute.xlu0 %5896
          %5898 = vrot.lane.b32.xlu0 %v5704, 4
          %v5899 = vpop.permute.xlu0 %5898
          %5900 = vrot.lane.b32.xlu0 %v5706, 4
          %v5901 = vpop.permute.xlu0 %5900
          %5902 = vrot.lane.b32.xlu0 %v5709, 4
          %v5903 = vpop.permute.xlu0 %5902
          %5904 = vrot.lane.b32.xlu0 %v5711, 4
          %v5905 = vpop.permute.xlu0 %5904
          %5906 = vrot.lane.b32.xlu0 %v5714, 4
          %v5907 = vpop.permute.xlu0 %5906
          %5908 = vrot.lane.b32.xlu0 %v5716, 4
          %v5909 = vpop.permute.xlu0 %5908
          %vm5974 = vcmask 31744
          %v5975 = vsel %vm5974, %v4169, %v5783
          %v5976 = vsel %vm5974, %v4170, %v5785
          %v5977 = vsel %vm5974, %v4171, %v5787
          %v5978 = vsel %vm5974, %v4172, %v5789
          %v5979 = vsel %vm5974, %v4173, %v5791
          %v5980 = vsel %vm5974, %v4174, %v5793
          %v5981 = vsel %vm5974, %v4175, %v5795
          %v5982 = vsel %vm5974, %v4176, %v5797
          %v5983 = vsel %vm5974, %v4177, %v5799
          %v5984 = vsel %vm5974, %v4178, %v5801
          %v5985 = vsel %vm5974, %v4179, %v5803
          %v5986 = vsel %vm5974, %v4180, %v5805
          %v5987 = vsel %vm5974, %v4181, %v5807
          %v5988 = vsel %vm5974, %v4182, %v5809
          %v5989 = vsel %vm5974, %v4183, %v5811
          %v5990 = vsel %vm5974, %v4184, %v5813
          %v5991 = vsel %vm5974, %v4185, %v5815
          %v5992 = vsel %vm5974, %v4186, %v5817
          %v5993 = vsel %vm5974, %v4187, %v5819
          %v5994 = vsel %vm5974, %v4188, %v5821
          %v5995 = vsel %vm5974, %v4189, %v5823
          %v5996 = vsel %vm5974, %v4190, %v5825
          %v5997 = vsel %vm5974, %v4191, %v5827
          %v5998 = vsel %vm5974, %v4192, %v5829
          %v5999 = vsel %vm5974, %v4193, %v5831
          %v6000 = vsel %vm5974, %v4194, %v5833
          %v6001 = vsel %vm5974, %v4195, %v5835
          %v6002 = vsel %vm5974, %v4196, %v5837
          %v6003 = vsel %vm5974, %v4197, %v5839
          %v6004 = vsel %vm5974, %v4198, %v5841
          %v6005 = vsel %vm5974, %v4199, %v5843
          %v6006 = vsel %vm5974, %v4200, %v5845
          %v6007 = vsel %vm5974, %v4201, %v5847
          %v6008 = vsel %vm5974, %v4202, %v5849
          %v6009 = vsel %vm5974, %v4203, %v5851
          %v6010 = vsel %vm5974, %v4204, %v5853
          %v6011 = vsel %vm5974, %v4205, %v5855
          %v6012 = vsel %vm5974, %v4206, %v5857
          %v6013 = vsel %vm5974, %v4207, %v5859
          %v6014 = vsel %vm5974, %v4208, %v5861
          %v6015 = vsel %vm5974, %v4209, %v5863
          %v6016 = vsel %vm5974, %v4210, %v5865
          %v6017 = vsel %vm5974, %v4211, %v5867
          %v6018 = vsel %vm5974, %v4212, %v5869
          %v6019 = vsel %vm5974, %v4213, %v5871
          %v6020 = vsel %vm5974, %v4214, %v5873
          %v6021 = vsel %vm5974, %v4215, %v5875
          %v6022 = vsel %vm5974, %v4216, %v5877
          %v6023 = vsel %vm5974, %v4217, %v5879
          %v6024 = vsel %vm5974, %v4218, %v5881
          %v6025 = vsel %vm5974, %v4219, %v5883
          %v6026 = vsel %vm5974, %v4220, %v5885
          %v6027 = vsel %vm5974, %v4221, %v5887
          %v6028 = vsel %vm5974, %v4222, %v5889
          %v6029 = vsel %vm5974, %v4223, %v5891
          %v6030 = vsel %vm5974, %v4224, %v5893
          %v6031 = vsel %vm5974, %v4225, %v5895
          %v6032 = vsel %vm5974, %v4226, %v5897
          %v6033 = vsel %vm5974, %v4227, %v5899
          %v6034 = vsel %vm5974, %v4228, %v5901
          %v6035 = vsel %vm5974, %v4229, %v5903
          %v6036 = vsel %vm5974, %v4230, %v5905
          %v6037 = vsel %vm5974, %v4231, %v5907
          %v6038 = vsel %vm5974, %v4232, %v5909
          %v6039 = vlaneseq
          %v6040 = vshrl.u32 %v6039, 7
          %vm6041 = vcmp.eq.s32.totalorder %v6040, %v1525
          %v6042 = vsel %vm6041, 1, 0
          %v6043 = vcvt.s32.f32 %v6042
          %vm6044 = vcmask 48128
          %v6046 = vsel %vm6044, %v6043, 0
          %v6049 = vsel %vm6044, %v5975, 0
          %v6052 = vsel %vm6044, %v5976, 0
          %v6055 = vsel %vm6044, %v5977, 0
          %v6058 = vsel %vm6044, %v5978, 0
          %v6061 = vsel %vm6044, %v5979, 0
          %v6064 = vsel %vm6044, %v5980, 0
          %v6067 = vsel %vm6044, %v5981, 0
          %v6070 = vsel %vm6044, %v5982, 0
          %v6073 = vsel %vm6044, %v5983, 0
          %v6076 = vsel %vm6044, %v5984, 0
          %v6079 = vsel %vm6044, %v5985, 0
          %v6082 = vsel %vm6044, %v5986, 0
          %v6085 = vsel %vm6044, %v5987, 0
          %v6088 = vsel %vm6044, %v5988, 0
          %v6091 = vsel %vm6044, %v5989, 0
          %v6094 = vsel %vm6044, %v5990, 0
          %v6097 = vsel %vm6044, %v5991, 0
          %v6100 = vsel %vm6044, %v5992, 0
          %v6103 = vsel %vm6044, %v5993, 0
          %v6106 = vsel %vm6044, %v5994, 0
          %v6109 = vsel %vm6044, %v5995, 0
          %v6112 = vsel %vm6044, %v5996, 0
          %v6115 = vsel %vm6044, %v5997, 0
          %v6118 = vsel %vm6044, %v5998, 0
          %v6121 = vsel %vm6044, %v5999, 0
          %v6124 = vsel %vm6044, %v6000, 0
          %v6127 = vsel %vm6044, %v6001, 0
          %v6130 = vsel %vm6044, %v6002, 0
          %v6133 = vsel %vm6044, %v6003, 0
          %v6136 = vsel %vm6044, %v6004, 0
          %v6139 = vsel %vm6044, %v6005, 0
          %v6142 = vsel %vm6044, %v6006, 0
          %v6145 = vsel %vm6044, %v6007, 0
          %v6148 = vsel %vm6044, %v6008, 0
          %v6151 = vsel %vm6044, %v6009, 0
          %v6154 = vsel %vm6044, %v6010, 0
          %v6157 = vsel %vm6044, %v6011, 0
          %v6160 = vsel %vm6044, %v6012, 0
          %v6163 = vsel %vm6044, %v6013, 0
          %v6166 = vsel %vm6044, %v6014, 0
          %v6169 = vsel %vm6044, %v6015, 0
          %v6172 = vsel %vm6044, %v6016, 0
          %v6175 = vsel %vm6044, %v6017, 0
          %v6178 = vsel %vm6044, %v6018, 0
          %v6181 = vsel %vm6044, %v6019, 0
          %v6184 = vsel %vm6044, %v6020, 0
          %v6187 = vsel %vm6044, %v6021, 0
          %v6190 = vsel %vm6044, %v6022, 0
          %v6193 = vsel %vm6044, %v6023, 0
          %v6196 = vsel %vm6044, %v6024, 0
          %v6199 = vsel %vm6044, %v6025, 0
          %v6202 = vsel %vm6044, %v6026, 0
          %v6205 = vsel %vm6044, %v6027, 0
          %v6208 = vsel %vm6044, %v6028, 0
          %v6211 = vsel %vm6044, %v6029, 0
          %v6214 = vsel %vm6044, %v6030, 0
          %v6217 = vsel %vm6044, %v6031, 0
          %v6220 = vsel %vm6044, %v6032, 0
          %v6223 = vsel %vm6044, %v6033, 0
          %v6226 = vsel %vm6044, %v6034, 0
          %v6229 = vsel %vm6044, %v6035, 0
          %v6232 = vsel %vm6044, %v6036, 0
          %v6235 = vsel %vm6044, %v6037, 0
          %v6238 = vsel %vm6044, %v6038, 0
          %6240 = vmatpush.xpose.msra.mxu0 %v6094
          %6241 = vmatpush.xpose.msra.mxu0 %v6091
          %6242 = vmatpush.xpose.msra.mxu0 %v6088
          %6243 = vmatpush.xpose.msra.mxu0 %v6085
          %6244 = vmatpush.xpose.msra.mxu0 %v6082
          %6245 = vmatpush.xpose.msra.mxu0 %v6079
          %6246 = vmatpush.xpose.msra.mxu0 %v6076
          %6247 = vmatpush.xpose.msra.mxu0 %v6073
          %6248 = vmatpush.xpose.msra.mxu0 %v6070
          %6249 = vmatpush.xpose.msra.mxu0 %v6067
          %6250 = vmatpush.xpose.msra.mxu0 %v6064
          %6251 = vmatpush.xpose.msra.mxu0 %v6061
          %6252 = vmatpush.xpose.msra.mxu0 %v6058
          %6253 = vmatpush.xpose.msra.mxu0 %v6055
          %6254 = vmatpush.xpose.msra.mxu0 %v6052
          %6255 = vmatpush.xpose.msra.mxu0 %v6049
          %6256 = vmatmul.f32.gmra.mxu0 %v6046
          %v6257 = vpop.f32.mrf.mxu0
          %v6258 = vadd.f32 0.0, %v6257
          %6259 = vdwg.mxu0
          %6260 = vmatpush.xpose.msra.mxu0 %v6142
          %6261 = vmatpush.xpose.msra.mxu0 %v6139
          %6262 = vmatpush.xpose.msra.mxu0 %v6136
          %6263 = vmatpush.xpose.msra.mxu0 %v6133
          %6264 = vmatpush.xpose.msra.mxu0 %v6130
          %6265 = vmatpush.xpose.msra.mxu0 %v6127
          %6266 = vmatpush.xpose.msra.mxu0 %v6124
          %6267 = vmatpush.xpose.msra.mxu0 %v6121
          %6268 = vmatpush.xpose.msra.mxu0 %v6118
          %6269 = vmatpush.xpose.msra.mxu0 %v6115
          %6270 = vmatpush.xpose.msra.mxu0 %v6112
          %6271 = vmatpush.xpose.msra.mxu0 %v6109
          %6272 = vmatpush.xpose.msra.mxu0 %v6106
          %6273 = vmatpush.xpose.msra.mxu0 %v6103
          %6274 = vmatpush.xpose.msra.mxu0 %v6100
          %6275 = vmatpush.xpose.msra.mxu0 %v6097
          %6276 = vmatmul.f32.gmra.mxu0 %v6046
          %v6277 = vpop.f32.mrf.mxu0
          %v6278 = vadd.f32 0.0, %v6277
          %6279 = vdwg.mxu0
          %6280 = vmatpush.xpose.msra.mxu0 %v6190
          %6281 = vmatpush.xpose.msra.mxu0 %v6187
          %6282 = vmatpush.xpose.msra.mxu0 %v6184
          %6283 = vmatpush.xpose.msra.mxu0 %v6181
          %6284 = vmatpush.xpose.msra.mxu0 %v6178
          %6285 = vmatpush.xpose.msra.mxu0 %v6175
          %6286 = vmatpush.xpose.msra.mxu0 %v6172
          %6287 = vmatpush.xpose.msra.mxu0 %v6169
          %6288 = vmatpush.xpose.msra.mxu0 %v6166
          %6289 = vmatpush.xpose.msra.mxu0 %v6163
          %6290 = vmatpush.xpose.msra.mxu0 %v6160
          %6291 = vmatpush.xpose.msra.mxu0 %v6157
          %6292 = vmatpush.xpose.msra.mxu0 %v6154
          %6293 = vmatpush.xpose.msra.mxu0 %v6151
          %6294 = vmatpush.xpose.msra.mxu0 %v6148
          %6295 = vmatpush.xpose.msra.mxu0 %v6145
          %6296 = vmatmul.f32.gmra.mxu0 %v6046
          %v6297 = vpop.f32.mrf.mxu0
          %v6298 = vadd.f32 0.0, %v6297
          %6299 = vdwg.mxu0
          %6300 = vmatpush.xpose.msra.mxu0 %v6238
          %6301 = vmatpush.xpose.msra.mxu0 %v6235
          %6302 = vmatpush.xpose.msra.mxu0 %v6232
          %6303 = vmatpush.xpose.msra.mxu0 %v6229
          %6304 = vmatpush.xpose.msra.mxu0 %v6226
          %6305 = vmatpush.xpose.msra.mxu0 %v6223
          %6306 = vmatpush.xpose.msra.mxu0 %v6220
          %6307 = vmatpush.xpose.msra.mxu0 %v6217
          %6308 = vmatpush.xpose.msra.mxu0 %v6214
          %6309 = vmatpush.xpose.msra.mxu0 %v6211
          %6310 = vmatpush.xpose.msra.mxu0 %v6208
          %6311 = vmatpush.xpose.msra.mxu0 %v6205
          %6312 = vmatpush.xpose.msra.mxu0 %v6202
          %6313 = vmatpush.xpose.msra.mxu0 %v6199
          %6314 = vmatpush.xpose.msra.mxu0 %v6196
          %6315 = vmatpush.xpose.msra.mxu0 %v6193
          %6316 = vmatmul.f32.gmra.mxu0 %v6046
          %v6317 = vpop.f32.mrf.mxu0
          %v6318 = vadd.f32 0.0, %v6317
          %6319 = vdwg.mxu0
          %6320 = vst [vmem:[%s525] sm:$0xff] %v6258
          %6321 = vst [vmem:[%s525 + $0x8] sm:$0xff] %v6278
          %6322 = vst [vmem:[%s525 + $0x10] sm:$0xff] %v6298
          %6323 = vst [vmem:[%s525 + $0x18] sm:$0xff] %v6318
          %v6324 = vld [vmem:[#allocation2] sm:$0xff]
          %6325 = vxpose.xlu0.b32.start [1/16] %v2230, 128
          %6326 = vxpose.xlu0.b32.cont [2/16] %v2231, 128
          %6327 = vxpose.xlu0.b32.cont [3/16] %v2232, 128
          %6328 = vxpose.xlu0.b32.cont [4/16] %v2233, 128
          %6329 = vxpose.xlu0.b32.cont [5/16] %v2234, 128
          %6330 = vxpose.xlu0.b32.cont [6/16] %v2235, 128
          %6331 = vxpose.xlu0.b32.cont [7/16] %v2236, 128
          %6332 = vxpose.xlu0.b32.cont [8/16] %v2237, 128
          %6333 = vxpose.xlu0.b32.cont [9/16] %v2238, 128
          %6334 = vxpose.xlu0.b32.cont [10/16] %v2239, 128
          %6335 = vxpose.xlu0.b32.cont [11/16] %v2240, 128
          %6336 = vxpose.xlu0.b32.cont [12/16] %v2241, 128
          %6337 = vxpose.xlu0.b32.cont [13/16] %v2242, 128
          %6338 = vxpose.xlu0.b32.cont [14/16] %v2243, 128
          %6339 = vxpose.xlu0.b32.cont [15/16] %v2244, 128
          %6340 = vxpose.xlu0.b32.end [16/16] %v2245, 128
          %v6341 = vpop.trf.xlu0
          %v6342 = vpop.trf.xlu0
          %v6343 = vpop.trf.xlu0
          %v6344 = vpop.trf.xlu0
          %v6345 = vpop.trf.xlu0
          %v6346 = vpop.trf.xlu0
          %v6347 = vpop.trf.xlu0
          %v6348 = vpop.trf.xlu0
          %v6349 = vpop.trf.xlu0
          %v6350 = vpop.trf.xlu0
          %v6351 = vpop.trf.xlu0
          %v6352 = vpop.trf.xlu0
          %v6353 = vpop.trf.xlu0
          %v6354 = vpop.trf.xlu0
          %v6355 = vpop.trf.xlu0
          %v6356 = vpop.trf.xlu0
          %6357 = vxpose.xlu0.b32.start [1/16] %v2246, 128
          %6358 = vxpose.xlu0.b32.cont [2/16] %v2247, 128
          %6359 = vxpose.xlu0.b32.cont [3/16] %v2248, 128
          %6360 = vxpose.xlu0.b32.cont [4/16] %v2249, 128
          %6361 = vxpose.xlu0.b32.cont [5/16] %v2250, 128
          %6362 = vxpose.xlu0.b32.cont [6/16] %v2251, 128
          %6363 = vxpose.xlu0.b32.cont [7/16] %v2252, 128
          %6364 = vxpose.xlu0.b32.cont [8/16] %v2253, 128
          %6365 = vxpose.xlu0.b32.cont [9/16] %v2254, 128
          %6366 = vxpose.xlu0.b32.cont [10/16] %v2255, 128
          %6367 = vxpose.xlu0.b32.cont [11/16] %v2256, 128
          %6368 = vxpose.xlu0.b32.cont [12/16] %v2257, 128
          %6369 = vxpose.xlu0.b32.cont [13/16] %v2258, 128
          %6370 = vxpose.xlu0.b32.cont [14/16] %v2259, 128
          %6371 = vxpose.xlu0.b32.cont [15/16] %v2260, 128
          %6372 = vxpose.xlu0.b32.end [16/16] %v2261, 128
          %v6373 = vpop.trf.xlu0
          %v6374 = vpop.trf.xlu0
          %v6375 = vpop.trf.xlu0
          %v6376 = vpop.trf.xlu0
          %v6377 = vpop.trf.xlu0
          %v6378 = vpop.trf.xlu0
          %v6379 = vpop.trf.xlu0
          %v6380 = vpop.trf.xlu0
          %v6381 = vpop.trf.xlu0
          %v6382 = vpop.trf.xlu0
          %v6383 = vpop.trf.xlu0
          %v6384 = vpop.trf.xlu0
          %v6385 = vpop.trf.xlu0
          %v6386 = vpop.trf.xlu0
          %v6387 = vpop.trf.xlu0
          %v6388 = vpop.trf.xlu0
          %6389 = vxpose.xlu0.b32.start [1/16] %v2262, 128
          %6390 = vxpose.xlu0.b32.cont [2/16] %v2263, 128
          %6391 = vxpose.xlu0.b32.cont [3/16] %v2264, 128
          %6392 = vxpose.xlu0.b32.cont [4/16] %v2265, 128
          %6393 = vxpose.xlu0.b32.cont [5/16] %v2266, 128
          %6394 = vxpose.xlu0.b32.cont [6/16] %v2267, 128
          %6395 = vxpose.xlu0.b32.cont [7/16] %v2268, 128
          %6396 = vxpose.xlu0.b32.cont [8/16] %v2269, 128
          %6397 = vxpose.xlu0.b32.cont [9/16] %v2270, 128
          %6398 = vxpose.xlu0.b32.cont [10/16] %v2271, 128
          %6399 = vxpose.xlu0.b32.cont [11/16] %v2272, 128
          %6400 = vxpose.xlu0.b32.cont [12/16] %v2273, 128
          %6401 = vxpose.xlu0.b32.cont [13/16] %v2274, 128
          %6402 = vxpose.xlu0.b32.cont [14/16] %v2275, 128
          %6403 = vxpose.xlu0.b32.cont [15/16] %v2276, 128
          %6404 = vxpose.xlu0.b32.end [16/16] %v2277, 128
          %v6405 = vpop.trf.xlu0
          %v6406 = vpop.trf.xlu0
          %v6407 = vpop.trf.xlu0
          %v6408 = vpop.trf.xlu0
          %v6409 = vpop.trf.xlu0
          %v6410 = vpop.trf.xlu0
          %v6411 = vpop.trf.xlu0
          %v6412 = vpop.trf.xlu0
          %v6413 = vpop.trf.xlu0
          %v6414 = vpop.trf.xlu0
          %v6415 = vpop.trf.xlu0
          %v6416 = vpop.trf.xlu0
          %v6417 = vpop.trf.xlu0
          %v6418 = vpop.trf.xlu0
          %v6419 = vpop.trf.xlu0
          %v6420 = vpop.trf.xlu0
          %6421 = vxpose.xlu0.b32.start [1/16] %v2278, 128
          %6422 = vxpose.xlu0.b32.cont [2/16] %v2279, 128
          %6423 = vxpose.xlu0.b32.cont [3/16] %v2280, 128
          %6424 = vxpose.xlu0.b32.cont [4/16] %v2281, 128
          %6425 = vxpose.xlu0.b32.cont [5/16] %v2282, 128
          %6426 = vxpose.xlu0.b32.cont [6/16] %v2283, 128
          %6427 = vxpose.xlu0.b32.cont [7/16] %v2284, 128
          %6428 = vxpose.xlu0.b32.cont [8/16] %v2285, 128
          %6429 = vxpose.xlu0.b32.cont [9/16] %v2286, 128
          %6430 = vxpose.xlu0.b32.cont [10/16] %v2287, 128
          %6431 = vxpose.xlu0.b32.cont [11/16] %v2288, 128
          %6432 = vxpose.xlu0.b32.cont [12/16] %v2289, 128
          %6433 = vxpose.xlu0.b32.cont [13/16] %v2290, 128
          %6434 = vxpose.xlu0.b32.cont [14/16] %v2291, 128
          %6435 = vxpose.xlu0.b32.cont [15/16] %v2292, 128
          %6436 = vxpose.xlu0.b32.end [16/16] %v2293, 128
          %v6437 = vpop.trf.xlu0
          %v6438 = vpop.trf.xlu0
          %v6439 = vpop.trf.xlu0
          %v6440 = vpop.trf.xlu0
          %v6441 = vpop.trf.xlu0
          %v6442 = vpop.trf.xlu0
          %v6443 = vpop.trf.xlu0
          %v6444 = vpop.trf.xlu0
          %v6445 = vpop.trf.xlu0
          %v6446 = vpop.trf.xlu0
          %v6447 = vpop.trf.xlu0
          %v6448 = vpop.trf.xlu0
          %v6449 = vpop.trf.xlu0
          %v6450 = vpop.trf.xlu0
          %v6451 = vpop.trf.xlu0
          %v6452 = vpop.trf.xlu0
          %6453 = vmatpush.msra.mxu0 %v5335
          %6454 = vmatpush.msra.mxu0 %v5334
          %6455 = vmatpush.msra.mxu0 %v5333
          %6456 = vmatpush.msra.mxu0 %v5332
          %6457 = vmatpush.msra.mxu0 %v5331
          %6458 = vmatpush.msra.mxu0 %v5330
          %6459 = vmatpush.msra.mxu0 %v5329
          %6460 = vmatpush.msra.mxu0 %v5328
          %6461 = vmatpush.msra.mxu0 %v5327
          %6462 = vmatpush.msra.mxu0 %v5326
          %6463 = vmatpush.msra.mxu0 %v5325
          %6464 = vmatpush.msra.mxu0 %v5324
          %6465 = vmatpush.msra.mxu0 %v5323
          %6466 = vmatpush.msra.mxu0 %v5322
          %6467 = vmatpush.msra.mxu0 %v5321
          %6468 = vmatpush.msra.mxu0 %v5320
          %6469 = vmatmul.f32.gmra.mxu0 %v6341
          %v6470 = vpop.f32.mrf.mxu0
          %v6471 = vadd.f32 0.0, %v6470
          %6472 = vdwg.mxu0
          %6473 = vmatpush.msra.mxu0 %v5351
          %6474 = vmatpush.msra.mxu0 %v5350
          %6475 = vmatpush.msra.mxu0 %v5349
          %6476 = vmatpush.msra.mxu0 %v5348
          %6477 = vmatpush.msra.mxu0 %v5347
          %6478 = vmatpush.msra.mxu0 %v5346
          %6479 = vmatpush.msra.mxu0 %v5345
          %6480 = vmatpush.msra.mxu0 %v5344
          %6481 = vmatpush.msra.mxu0 %v5343
          %6482 = vmatpush.msra.mxu0 %v5342
          %6483 = vmatpush.msra.mxu0 %v5341
          %6484 = vmatpush.msra.mxu0 %v5340
          %6485 = vmatpush.msra.mxu0 %v5339
          %6486 = vmatpush.msra.mxu0 %v5338
          %6487 = vmatpush.msra.mxu0 %v5337
          %6488 = vmatpush.msra.mxu0 %v5336
          %6489 = vmatmul.f32.gmra.mxu0 %v6373
          %v6490 = vpop.f32.mrf.mxu0
          %v6491 = vadd.f32 %v6471, %v6490
          %6492 = vdwg.mxu0
          %6493 = vmatpush.msra.mxu0 %v5367
          %6494 = vmatpush.msra.mxu0 %v5366
          %6495 = vmatpush.msra.mxu0 %v5365
          %6496 = vmatpush.msra.mxu0 %v5364
          %6497 = vmatpush.msra.mxu0 %v5363
          %6498 = vmatpush.msra.mxu0 %v5362
          %6499 = vmatpush.msra.mxu0 %v5361
          %6500 = vmatpush.msra.mxu0 %v5360
          %6501 = vmatpush.msra.mxu0 %v5359
          %6502 = vmatpush.msra.mxu0 %v5358
          %6503 = vmatpush.msra.mxu0 %v5357
          %6504 = vmatpush.msra.mxu0 %v5356
          %6505 = vmatpush.msra.mxu0 %v5355
          %6506 = vmatpush.msra.mxu0 %v5354
          %6507 = vmatpush.msra.mxu0 %v5353
          %6508 = vmatpush.msra.mxu0 %v5352
          %6509 = vmatmul.f32.gmra.mxu0 %v6405
          %v6510 = vpop.f32.mrf.mxu0
          %v6511 = vadd.f32 %v6491, %v6510
          %6512 = vdwg.mxu0
          %6513 = vmatpush.msra.mxu0 %v5383
          %6514 = vmatpush.msra.mxu0 %v5382
          %6515 = vmatpush.msra.mxu0 %v5381
          %6516 = vmatpush.msra.mxu0 %v5380
          %6517 = vmatpush.msra.mxu0 %v5379
          %6518 = vmatpush.msra.mxu0 %v5378
          %6519 = vmatpush.msra.mxu0 %v5377
          %6520 = vmatpush.msra.mxu0 %v5376
          %6521 = vmatpush.msra.mxu0 %v5375
          %6522 = vmatpush.msra.mxu0 %v5374
          %6523 = vmatpush.msra.mxu0 %v5373
          %6524 = vmatpush.msra.mxu0 %v5372
          %6525 = vmatpush.msra.mxu0 %v5371
          %6526 = vmatpush.msra.mxu0 %v5370
          %6527 = vmatpush.msra.mxu0 %v5369
          %6528 = vmatpush.msra.mxu0 %v5368
          %6529 = vmatmul.f32.gmra.mxu0 %v6437
          %v6530 = vpop.f32.mrf.mxu0
          %v6531 = vadd.f32 %v6511, %v6530
          %6532 = vdwg.mxu0
          %v6533 = vadd.f32 %v6324, %v6531
          %6534 = vst.msk [vmem:[#allocation2] sm:$0xff] %vm5452, %v6533
        $region84: #{tpu_custom_call.1} parent=67 // pred_fallthru
          _
        %p6535 = scmp.eq.s32.totalorder %s32, 1
        // Predicated region
        $region85: #{tpu_custom_call.1} parent=67 // pred_check
          %p6536 = pneg %p6535
        $region86: #{tpu_custom_call.1} parent=67 // pred_check_branch
          %6538 = sbr.rel (%p6536) target = $region88
        $region87: #{tpu_custom_call.1} parent=67 // pred_region
          %v6539 = vld [vmem:[%s6] sm:$0xf]
          %v6540 = vld [vmem:[%s6 + $0x4] sm:$0xf]
          %v6541 = vld [vmem:[%s6 + $0x8] sm:$0xf]
          %v6542 = vld [vmem:[%s6 + $0xc] sm:$0xf]
          %v6543 = vld [vmem:[%s6 + $0x10] sm:$0xf]
          %v6544 = vld [vmem:[%s6 + $0x14] sm:$0xf]
          %v6545 = vld [vmem:[%s6 + $0x18] sm:$0xf]
          %v6546 = vld [vmem:[%s6 + $0x1c] sm:$0xf]
          %v6547 = vld [vmem:[%s6 + $0x20] sm:$0xf]
          %v6548 = vld [vmem:[%s7] sm:$0x1]
          %v6549 = vld [vmem:[%s8] sm:$0xff]
          %v6550 = vld [vmem:[%s8 + $0x8] sm:$0xf]
          %v6551 = vld [vmem:[%s8 + $0xc] sm:$0xff]
          %v6552 = vld [vmem:[%s8 + $0x14] sm:$0xf]
          %v6553 = vld [vmem:[%s8 + $0x18] sm:$0xff]
          %v6554 = vld [vmem:[%s8 + $0x20] sm:$0xf]
          %v6555 = vld [vmem:[%s8 + $0x24] sm:$0xff]
          %v6556 = vld [vmem:[%s8 + $0x2c] sm:$0xf]
          %v6557 = vld [vmem:[%s8 + $0x30] sm:$0xff]
          %v6558 = vld [vmem:[%s8 + $0x38] sm:$0xf]
          %v6559 = vld [vmem:[%s8 + $0x3c] sm:$0xff]
          %v6560 = vld [vmem:[%s8 + $0x44] sm:$0xf]
          %v6561 = vld [vmem:[%s8 + $0x48] sm:$0xff]
          %v6562 = vld [vmem:[%s8 + $0x50] sm:$0xf]
          %v6563 = vld [vmem:[%s8 + $0x54] sm:$0xff]
          %v6564 = vld [vmem:[%s8 + $0x5c] sm:$0xf]
          %v6565 = vld [vmem:[%s9] sm:$0x7]
          %v6566 = vld [vmem:[%s10] sm:$0xf]
          %v6567 = vld [vmem:[%s10 + $0x4] sm:$0xf]
          %v6568 = vld [vmem:[%s10 + $0x8] sm:$0xf]
          %v6569 = vld [vmem:[%s10 + $0xc] sm:$0xf]
          %v6570 = vld [vmem:[%s10 + $0x10] sm:$0xf]
          %v6571 = vld [vmem:[%s10 + $0x14] sm:$0xf]
          %v6572 = vld [vmem:[%s10 + $0x18] sm:$0xf]
          %v6573 = vld [vmem:[%s10 + $0x1c] sm:$0xf]
          %v6574 = vld [vmem:[%s10 + $0x20] sm:$0xf]
          %v6575 = vld [vmem:[%s10 + $0x24] sm:$0xf]
          %v6576 = vld [vmem:[%s10 + $0x28] sm:$0xf]
          %v6577 = vld [vmem:[%s10 + $0x2c] sm:$0xf]
          %v6578 = vld [vmem:[%s10 + $0x30] sm:$0xf]
          %v6579 = vld [vmem:[%s10 + $0x34] sm:$0xf]
          %v6580 = vld [vmem:[%s10 + $0x38] sm:$0xf]
          %v6581 = vld [vmem:[%s10 + $0x3c] sm:$0xf]
          %v6582 = vld [vmem:[%s10 + $0x40] sm:$0xf]
          %v6583 = vld [vmem:[%s10 + $0x44] sm:$0xf]
          %v6584 = vld [vmem:[%s10 + $0x48] sm:$0xf]
          %v6585 = vld [vmem:[%s10 + $0x4c] sm:$0xf]
          %v6586 = vld [vmem:[%s10 + $0x50] sm:$0xf]
          %v6587 = vld [vmem:[%s10 + $0x54] sm:$0xf]
          %v6588 = vld [vmem:[%s10 + $0x58] sm:$0xf]
          %v6589 = vld [vmem:[%s10 + $0x5c] sm:$0xf]
          %v6590 = vld [vmem:[%s10 + $0x60] sm:$0xf]
          %v6591 = vld [vmem:[%s10 + $0x64] sm:$0xf]
          %v6592 = vld [vmem:[%s10 + $0x68] sm:$0xf]
          %v6593 = vld [vmem:[%s10 + $0x6c] sm:$0xf]
          %v6594 = vld [vmem:[%s10 + $0x70] sm:$0xf]
          %v6595 = vld [vmem:[%s10 + $0x74] sm:$0xf]
          %v6596 = vld [vmem:[%s10 + $0x78] sm:$0xf]
          %v6597 = vld [vmem:[%s10 + $0x7c] sm:$0xf]
          %v6598 = vld [vmem:[%s11] sm:$0x1]
          %v6599 = vld [vmem:[#allocation3] sm:$0xff]
          %v6600 = vld [vmem:[#allocation2] sm:$0xff]
          %6602 = vrot.lane.b32.xlu0 %v6600, 8
          %v6603 = vpop.permute.xlu0 %6602
          %vm6605 = vcmask 64512
          %v6606 = vsel %vm6605, %v6599, %v6603
          %v6607 = vpack.c.bf16 %v6606, %v6606
          %v6609 = vperm.slane %v6548, 0
          %v6620 = vunpack.c.l.b16 %v6539
          %v6621 = vunpack.c.l.b16 %v6540
          %v6622 = vunpack.c.l.b16 %v6541
          %v6623 = vunpack.c.l.b16 %v6542
          %v6624 = vunpack.c.l.b16 %v6543
          %v6625 = vunpack.c.l.b16 %v6544
          %v6626 = vunpack.c.l.b16 %v6545
          %v6627 = vunpack.c.l.b16 %v6546
          %v6628 = vunpack.c.l.b16 %v6547
          %v6629 = vpack.c.b16 %v6621, %v6620
          %v6630 = vpack.c.b16 %v6623, %v6622
          %v6631 = vpack.c.b16 %v6625, %v6624
          %v6632 = vpack.c.b16 %v6627, %v6626
          %v6633 = vpack.c.b16 %v6628, %v6628
          %vm6638 = vcmask 588800
          %v6640 = vsel %vm6638, %v6607, 0
          %vm6642 = vcmask 1043456
          %v6644 = vsel %vm6642, %v6633, 0
          %6646 = vmatpush.bf16.msra.mxu0 0
          %6647 = vmatpush.bf16.msra.mxu0 0
          %6648 = vmatpush.bf16.msra.mxu0 0
          %6649 = vmatpush.bf16.msra.mxu0 %v6644
          %6650 = vmatpush.bf16.msra.mxu0 %v6632
          %6651 = vmatpush.bf16.msra.mxu0 %v6631
          %6652 = vmatpush.bf16.msra.mxu0 %v6630
          %6653 = vmatpush.bf16.msra.mxu0 %v6629
          %6654 = vmatmul.bf16.gmra.mxu0 %v6640
          %v6655 = vpop.f32.mrf.mxu0
          %v6656 = vadd.f32 %v6609, %v6655
          %v6657 = vpop.f32.mrf.mxu0
          %6658 = vdwg.mxu0
          %vm6659 = vcmp.gt.f32.partialorder %v6656, 0.0
          %v6660 = vmul.f32 %v6656, 0.01
          %v6661 = vsel %vm6659, %v6656, %v6660
          %vm6662 = vcmask 523264
          %6663 = vst.msk [vmem:[#allocation8] sm:$0xff] %vm6662, %v6661
          %v6664 = vpack.c.bf16 %v6661, %v6661
          %v6666 = vperm.slane %v6565, 0
          %v6667 = vperm.slane %v6565, 1
          %v6668 = vperm.slane %v6565, 2
          %v6688 = vunpack.c.l.b16 %v6549
          %v6689 = vunpack.c.h.b16 %v6549
          %v6690 = vunpack.c.l.b16 %v6550
          %v6691 = vunpack.c.l.b16 %v6551
          %v6692 = vunpack.c.h.b16 %v6551
          %v6693 = vunpack.c.l.b16 %v6552
          %v6694 = vunpack.c.l.b16 %v6553
          %v6695 = vunpack.c.h.b16 %v6553
          %v6696 = vunpack.c.l.b16 %v6554
          %v6697 = vunpack.c.l.b16 %v6555
          %v6698 = vunpack.c.h.b16 %v6555
          %v6699 = vunpack.c.l.b16 %v6556
          %v6700 = vunpack.c.l.b16 %v6557
          %v6701 = vunpack.c.h.b16 %v6557
          %v6702 = vunpack.c.l.b16 %v6558
          %v6703 = vunpack.c.l.b16 %v6559
          %v6704 = vunpack.c.h.b16 %v6559
          %v6705 = vunpack.c.l.b16 %v6560
          %v6706 = vunpack.c.l.b16 %v6561
          %v6707 = vunpack.c.h.b16 %v6561
          %v6708 = vunpack.c.l.b16 %v6562
          %v6709 = vunpack.c.l.b16 %v6563
          %v6710 = vunpack.c.h.b16 %v6563
          %v6711 = vunpack.c.l.b16 %v6564
          %v6712 = vpack.c.b16 %v6691, %v6688
          %v6713 = vpack.c.b16 %v6692, %v6689
          %v6714 = vpack.c.b16 %v6693, %v6690
          %v6715 = vpack.c.b16 %v6697, %v6694
          %v6716 = vpack.c.b16 %v6698, %v6695
          %v6717 = vpack.c.b16 %v6699, %v6696
          %v6718 = vpack.c.b16 %v6703, %v6700
          %v6719 = vpack.c.b16 %v6704, %v6701
          %v6720 = vpack.c.b16 %v6705, %v6702
          %v6721 = vpack.c.b16 %v6709, %v6706
          %v6722 = vpack.c.b16 %v6710, %v6707
          %v6723 = vpack.c.b16 %v6711, %v6708
          %v6737 = vsel %vm6662, %v6664, 0
          %6739 = vmatpush.bf16.msra.mxu0 0
          %6740 = vmatpush.bf16.msra.mxu0 0
          %6741 = vmatpush.bf16.msra.mxu0 0
          %6742 = vmatpush.bf16.msra.mxu0 0
          %6743 = vmatpush.bf16.msra.mxu0 %v6721
          %6744 = vmatpush.bf16.msra.mxu0 %v6718
          %6745 = vmatpush.bf16.msra.mxu0 %v6715
          %6746 = vmatpush.bf16.msra.mxu0 %v6712
          %6747 = vmatmul.bf16.gmra.mxu0 %v6737
          %v6748 = vpop.f32.mrf.mxu0
          %v6749 = vadd.f32 %v6666, %v6748
          %v6750 = vpop.f32.mrf.mxu0
          %6751 = vdwg.mxu0
          %6752 = vmatpush.bf16.msra.mxu0 0
          %6753 = vmatpush.bf16.msra.mxu0 0
          %6754 = vmatpush.bf16.msra.mxu0 0
          %6755 = vmatpush.bf16.msra.mxu0 0
          %6756 = vmatpush.bf16.msra.mxu0 %v6722
          %6757 = vmatpush.bf16.msra.mxu0 %v6719
          %6758 = vmatpush.bf16.msra.mxu0 %v6716
          %6759 = vmatpush.bf16.msra.mxu0 %v6713
          %6760 = vmatmul.bf16.gmra.mxu0 %v6737
          %v6761 = vpop.f32.mrf.mxu0
          %v6762 = vadd.f32 %v6667, %v6761
          %v6763 = vpop.f32.mrf.mxu0
          %6764 = vdwg.mxu0
          %6765 = vmatpush.bf16.msra.mxu0 0
          %6766 = vmatpush.bf16.msra.mxu0 0
          %6767 = vmatpush.bf16.msra.mxu0 0
          %6768 = vmatpush.bf16.msra.mxu0 0
          %6769 = vmatpush.bf16.msra.mxu0 %v6723
          %6770 = vmatpush.bf16.msra.mxu0 %v6720
          %6771 = vmatpush.bf16.msra.mxu0 %v6717
          %6772 = vmatpush.bf16.msra.mxu0 %v6714
          %6773 = vmatmul.bf16.gmra.mxu0 %v6737
          %v6774 = vpop.f32.mrf.mxu0
          %v6775 = vadd.f32 %v6668, %v6774
          %v6776 = vpop.f32.mrf.mxu0
          %6777 = vdwg.mxu0
          %vm6778 = vcmp.gt.f32.partialorder %v6749, 0.0
          %vm6779 = vcmp.gt.f32.partialorder %v6762, 0.0
          %v6780 = vmul.f32 %v6749, 0.01
          %v6781 = vmul.f32 %v6762, 0.01
          %v6782 = vsel %vm6778, %v6749, %v6780
          %v6783 = vsel %vm6779, %v6762, %v6781
          %v6784 = vpack.c.bf16 %v6782, %v6782
          %v6785 = vpack.c.bf16 %v6783, %v6783
          %v6787 = vperm.slane %v6598, 0
          %v6821 = vunpack.c.l.b16 %v6566
          %v6822 = vunpack.c.l.b16 %v6567
          %v6823 = vunpack.c.l.b16 %v6568
          %v6824 = vunpack.c.l.b16 %v6569
          %v6825 = vunpack.c.l.b16 %v6570
          %v6826 = vunpack.c.l.b16 %v6571
          %v6827 = vunpack.c.l.b16 %v6572
          %v6828 = vunpack.c.l.b16 %v6573
          %v6829 = vunpack.c.l.b16 %v6574
          %v6830 = vunpack.c.l.b16 %v6575
          %v6831 = vunpack.c.l.b16 %v6576
          %v6832 = vunpack.c.l.b16 %v6577
          %v6833 = vunpack.c.l.b16 %v6578
          %v6834 = vunpack.c.l.b16 %v6579
          %v6835 = vunpack.c.l.b16 %v6580
          %v6836 = vunpack.c.l.b16 %v6581
          %v6837 = vunpack.c.l.b16 %v6582
          %v6838 = vunpack.c.l.b16 %v6583
          %v6839 = vunpack.c.l.b16 %v6584
          %v6840 = vunpack.c.l.b16 %v6585
          %v6841 = vunpack.c.l.b16 %v6586
          %v6842 = vunpack.c.l.b16 %v6587
          %v6843 = vunpack.c.l.b16 %v6588
          %v6844 = vunpack.c.l.b16 %v6589
          %v6845 = vunpack.c.l.b16 %v6590
          %v6846 = vunpack.c.l.b16 %v6591
          %v6847 = vunpack.c.l.b16 %v6592
          %v6848 = vunpack.c.l.b16 %v6593
          %v6849 = vunpack.c.l.b16 %v6594
          %v6850 = vunpack.c.l.b16 %v6595
          %v6851 = vunpack.c.l.b16 %v6596
          %v6852 = vunpack.c.l.b16 %v6597
          %v6853 = vpack.c.b16 %v6822, %v6821
          %v6854 = vpack.c.b16 %v6824, %v6823
          %v6855 = vpack.c.b16 %v6826, %v6825
          %v6856 = vpack.c.b16 %v6828, %v6827
          %v6857 = vpack.c.b16 %v6830, %v6829
          %v6858 = vpack.c.b16 %v6832, %v6831
          %v6859 = vpack.c.b16 %v6834, %v6833
          %v6860 = vpack.c.b16 %v6836, %v6835
          %v6861 = vpack.c.b16 %v6838, %v6837
          %v6862 = vpack.c.b16 %v6840, %v6839
          %v6863 = vpack.c.b16 %v6842, %v6841
          %v6864 = vpack.c.b16 %v6844, %v6843
          %v6865 = vpack.c.b16 %v6846, %v6845
          %v6866 = vpack.c.b16 %v6848, %v6847
          %v6867 = vpack.c.b16 %v6850, %v6849
          %v6868 = vpack.c.b16 %v6852, %v6851
          %6885 = vmatpush.bf16.msra.mxu0 %v6860
          %6886 = vmatpush.bf16.msra.mxu0 %v6859
          %6887 = vmatpush.bf16.msra.mxu0 %v6858
          %6888 = vmatpush.bf16.msra.mxu0 %v6857
          %6889 = vmatpush.bf16.msra.mxu0 %v6856
          %6890 = vmatpush.bf16.msra.mxu0 %v6855
          %6891 = vmatpush.bf16.msra.mxu0 %v6854
          %6892 = vmatpush.bf16.msra.mxu0 %v6853
          %6893 = vmatmul.bf16.gmra.mxu0 %v6784
          %v6894 = vpop.f32.mrf.mxu0
          %v6895 = vadd.f32 %v6787, %v6894
          %v6896 = vpop.f32.mrf.mxu0
          %6897 = vdwg.mxu0
          %6898 = vmatpush.bf16.msra.mxu0 %v6868
          %6899 = vmatpush.bf16.msra.mxu0 %v6867
          %6900 = vmatpush.bf16.msra.mxu0 %v6866
          %6901 = vmatpush.bf16.msra.mxu0 %v6865
          %6902 = vmatpush.bf16.msra.mxu0 %v6864
          %6903 = vmatpush.bf16.msra.mxu0 %v6863
          %6904 = vmatpush.bf16.msra.mxu0 %v6862
          %6905 = vmatpush.bf16.msra.mxu0 %v6861
          %6906 = vmatmul.bf16.gmra.mxu0 %v6785
          %v6907 = vpop.f32.mrf.mxu0
          %v6908 = vadd.f32 %v6895, %v6907
          %v6909 = vpop.f32.mrf.mxu0
          %6910 = vdwg.mxu0
          %6912 = vrot.lane.b32.xlu0 %v6908, 2
          %v6913 = vpop.permute.xlu0 %6912
          %vm6915 = vcmask 15360
          %v6916 = vsel %vm6915, %v6775, %v6913
          %6917 = vst.msk [vmem:[#allocation7] sm:$0xff] %vm6605, %v6916
        $region88: #{tpu_custom_call.1} parent=67 // pred_fallthru
          _
        %s6918 = sand.u32 %s32, 1
        %s6919 = scalar_lea.sflag [#allocation6], %s6918
        %s6920 = sand.u32 %s339, 1
        %s6921 = smul.addr %s6920, 32
        %s6922 = scalar_lea.vmem [#allocation5], %s6921
        // Predicated region
        $region89: #{tpu_custom_call.1} parent=67 // pred_check
          %p6923 = pneg %p317
        $region90: #{tpu_custom_call.1} parent=67 // pred_check_branch
          %6925 = sbr.rel (%p6923) target = $region92
        $region91: #{tpu_custom_call.1} parent=67 // pred_region
          %6927 = vsyncadd [#allocation4], 0
          %s6929 = sshll.u32 [#allocation3], 4
          %s6930 = int_to_ptr.vmem [resolvable:$true] %s6929
          %s6931 = sshll.u32 %s12, 4
          %s6932 = int_to_ptr.hbm [resolvable:$true] %s6931
          %6934 = dma.vmem_to_hbm [thread:$0]  %s6930, 128, %s6932, [#allocation4]
        $region92: #{tpu_custom_call.1} parent=67 // pred_fallthru
          _
        // Predicated region
        $region93: #{tpu_custom_call.1} parent=67 // pred_check
          %p6935 = pneg %p349
        $region94: #{tpu_custom_call.1} parent=67 // pred_check_branch
          %6937 = sbr.rel (%p6935) target = $region96
        $region95: #{tpu_custom_call.1} parent=67 // pred_region
          %s6938 = ssub.s32 %s32, 1
          %p6939 = scmp.gt.s32.totalorder %s6938, 0
          %s6940 = scalar_select %p6939, %s6938, 0
          %s6941 = smul.u32 4, %s6940
          %6943 = vsyncadd %s6919, 0
          %s6944 = smul.addr %s6941, 8
          %s6945 = scalar_lea.hbm %s13, %s6944
          %s6947 = sshll.u32 %s6922, 4
          %s6948 = int_to_ptr.vmem [resolvable:$true] %s6947
          %s6949 = sshll.u32 %s6945, 4
          %s6950 = int_to_ptr.hbm [resolvable:$true] %s6949
          %6952 = dma.vmem_to_hbm [thread:$0]  %s6948, 512, %s6950, %s6919
        $region96: #{tpu_custom_call.1} parent=67 // pred_fallthru
          _
        // Predicated region
        $region97: #{tpu_custom_call.1} parent=67 // pred_check
          %p6953 = pneg %p370
        $region98: #{tpu_custom_call.1} parent=67 // pred_check_branch
          %6955 = sbr.rel (%p6953) target = $region100
        $region99: #{tpu_custom_call.1} parent=67 // pred_region
          %6957 = vsyncadd [#allocation6], 0
          %s6959 = sshll.u32 [#allocation7], 4
          %s6960 = int_to_ptr.vmem [resolvable:$true] %s6959
          %s6961 = sshll.u32 %s14, 4
          %s6962 = int_to_ptr.hbm [resolvable:$true] %s6961
          %6964 = dma.vmem_to_hbm [thread:$0]  %s6960, 128, %s6962, [#allocation6]
        $region100: #{tpu_custom_call.1} parent=67 // pred_fallthru
          _
        // Predicated region
        $region101: #{tpu_custom_call.1} parent=67 // pred_check
          %p6965 = pneg %p391
        $region102: #{tpu_custom_call.1} parent=67 // pred_check_branch
          %6967 = sbr.rel (%p6965) target = $region104
        $region103: #{tpu_custom_call.1} parent=67 // pred_region
          %6969 = vsyncadd [#allocation9], 0
          %s6971 = sshll.u32 [#allocation8], 4
          %s6972 = int_to_ptr.vmem [resolvable:$true] %s6971
          %s6973 = sshll.u32 %s15, 4
          %s6974 = int_to_ptr.hbm [resolvable:$true] %s6973
          %6976 = dma.vmem_to_hbm [thread:$0]  %s6972, 128, %s6974, [#allocation9]
        $region104: #{tpu_custom_call.1} parent=67 // pred_fallthru
          _
        // Predicated region
        $region105: #{tpu_custom_call.1} parent=67 // pred_check
          %p6977 = pneg %p317
        $region106: #{tpu_custom_call.1} parent=67 // pred_check_branch
          %6979 = sbr.rel (%p6977) target = $region108
        $region107: #{tpu_custom_call.1} parent=67 // pred_region
          %6981 = dma.done [#allocation4], 128
        $region108: #{tpu_custom_call.1} parent=67 // pred_fallthru
          _
        // Predicated region
        $region109: #{tpu_custom_call.1} parent=67 // pred_check
          %p6982 = pneg %p370
        $region110: #{tpu_custom_call.1} parent=67 // pred_check_branch
          %6984 = sbr.rel (%p6982) target = $region112
        $region111: #{tpu_custom_call.1} parent=67 // pred_region
          %6986 = dma.done [#allocation6], 128
        $region112: #{tpu_custom_call.1} parent=67 // pred_fallthru
          _
        // Predicated region
        $region113: #{tpu_custom_call.1} parent=67 // pred_check
          %p6987 = pneg %p391
        $region114: #{tpu_custom_call.1} parent=67 // pred_check_branch
          %6989 = sbr.rel (%p6987) target = $region116
        $region115: #{tpu_custom_call.1} parent=67 // pred_region
          %6991 = dma.done [#allocation9], 128
        $region116: #{tpu_custom_call.1} parent=67 // pred_fallthru
          _
      $region68: #{tpu_custom_call.1} parent=5 // pred_fallthru
        _
      %p6992 = scmp.le.s32.totalorder 2, %s27
      // Predicated region
      $region117: #{tpu_custom_call.1} parent=5 // pred_check
        %p6993 = pneg %p6992
      $region118: #{tpu_custom_call.1} parent=5 // pred_check_branch
        %6995 = sbr.rel (%p6993) target = $region120
      $region119: #{tpu_custom_call.1} parent=5 // pred_region
        %s6996 = ssub.s32 %s27, 2
        // Predicated region
        $region121: #{tpu_custom_call.1} parent=119 // pred_check
          %p6997 = pneg %p355
        $region122: #{tpu_custom_call.1} parent=119 // pred_check_branch
          %6999 = sbr.rel (%p6997) target = $region124
        $region123: #{tpu_custom_call.1} parent=119 // pred_region
          %s7000 = sand.u32 %s33, 1
          %s7001 = scalar_lea.sflag [#allocation6], %s7000
          %s7002 = sand.u32 %s340, 1
          %s7003 = smul.addr %s7002, 32
          %s7004 = scalar_lea.vmem [#allocation5], %s7003
          %7006 = dma.done %s7001, 512
        $region124: #{tpu_custom_call.1} parent=119 // pred_fallthru
          _
      $region120: #{tpu_custom_call.1} parent=5 // pred_fallthru
        _
    $region6: #{tpu_custom_call.1} parent=1 // loop_footer
      %s31 = sadd.s32 1, %s27
    $region7: #{tpu_custom_call.1} parent=1 // loop_footer_branch
      %26 = sbr.rel target = $region3
    $region8: #{tpu_custom_call.1} parent=1 // loop_exit
      _
    %7007 = vsyncpa [#allocation4], 1
    %s7008 = scalar_lea.sflag [#allocation4], 1
    %7009 = vsyncpa %s7008, 1
    %7010 = vsyncpa [#allocation6], 1
    %s7011 = scalar_lea.sflag [#allocation6], 1
    %7012 = vsyncpa %s7011, 1
    %7013 = vsyncpa [#allocation9], 1

</llo_original>
